<compile_context>
chip_gen: v6e
topology: v6e:2x2x1
jax: 0.10.0
libtpu: 0.0.40
codegen_flags: <defaults>
</compile_context>

<pallas_src>
import math

import jax
import jax.numpy as jnp
import numpy as np
from jax import lax
from jax.experimental import pallas as pl
from jax.experimental.pallas import tpu as pltpu

EPS = 1e-5      # nn.BatchNorm2d default eps
LANE = 128      # TPU lane width


def _round_up(x, m):
    return (x + m - 1) // m * m


def _tap_offsets(wp):
    # flat-row offset of tap (kh, kw) in the padded-width flattened image
    return [kh * wp + kw for kh in range(3) for kw in range(3)]


def _seam_mask(rows_s, wp, w):
    # 1.0 on valid output rows, 0.0 on the 2 seam columns of each spatial row
    q = lax.broadcasted_iota(jnp.int32, (rows_s, 1), 0)
    return ((q % wp) < w).astype(jnp.float32)


def _im2col_matmul(src_ref, w_ref, offsets, rows_s, c, kp):
    """Lane-pack the 9 contiguous tap windows of `src_ref` into one
    (rows_s, kp) bf16 operand and do ONE MXU matmul against the (kp, coutp)
    im2col weight.  Padding lanes are explicit zeros (never stale VMEM)."""
    taps = [src_ref[off:off + rows_s, :] for off in offsets]
    if kp > 9 * c:
        taps.append(jnp.zeros((rows_s, kp - 9 * c), jnp.bfloat16))
    col = jnp.concatenate(taps, axis=1)                     # (rows_s, kp)
    return jnp.dot(col, w_ref[...], preferred_element_type=jnp.float32)


# ---------------------------------------------------------------------------
# Pass A: conv1 (single im2col matmul) + BN1 partial [sum, sumsq]
# ---------------------------------------------------------------------------
def _make_conv_stats_kernel(h, w, c_in, c_out, kp):
    wp = w + 2
    rows_s = h * wp
    offsets = _tap_offsets(wp)

    def kernel(x_ref, w_ref, y_ref, st_ref):
        # x_ref : (rows_in, c_in)  bf16  padded, width-flattened image
        # w_ref : (kp, coutp)      bf16  im2col weight
        # y_ref : (rows_s, c_out)  bf16  seamed pre-BN conv output (real chans)
        # st_ref: (2, c_out)       f32   [sum; sumsq] over valid pixels
        acc = _im2col_matmul(x_ref, w_ref, offsets, rows_s, c_in, kp)
        r = acc[:, :c_out]
        m = _seam_mask(rows_s, wp, w)
        y_ref[...] = r.astype(y_ref.dtype)
        st_ref[...] = jnp.concatenate(
            [jnp.sum(r * m, axis=0, keepdims=True),
             jnp.sum(r * r * m, axis=0, keepdims=True)], axis=0)

    return kernel


# ---------------------------------------------------------------------------
# Pass B: BN1 + ReLU + conv2 (single im2col matmul) + BN2 partial stats, fused
# ---------------------------------------------------------------------------
def _make_bn_relu_conv_stats_kernel(h, w, c_mid, c_out, kp):
    wp = w + 2
    rows_s = h * wp
    rows_in = (h + 2) * wp + 2
    margin = wp + 1                 # layer-1 pixel q sits at a1p row q+margin
    offsets = _tap_offsets(wp)

    def kernel(y1_ref, ss_ref, w_ref, y2_ref, st_ref, a1p_ref):
        # y1_ref : (rows_s, c_mid) bf16  un-normalized conv1 output (seamed)
        # ss_ref : (2, c_mid)      f32   folded BN1 [scale; shift]
        # w_ref  : (kp, coutp)     bf16  im2col weight of conv2
        # y2_ref : (rows_s, c_out) bf16  seamed pre-BN conv2 output
        # st_ref : (2, c_out)      f32
        # a1p_ref: (rows_in, c_mid) bf16 scratch = layer-1 activation + zero halo
        m = _seam_mask(rows_s, wp, w)
        # layer-1 BN + ReLU; seam rows re-zeroed (they become conv2's L/R halo)
        a1 = jnp.maximum(y1_ref[...].astype(jnp.float32) * ss_ref[0:1, :]
                         + ss_ref[1:2, :], 0.0) * m
        a1p_ref[...] = jnp.zeros_like(a1p_ref)
        a1p_ref[margin:margin + rows_s, :] = a1.astype(jnp.bfloat16)

        acc = _im2col_matmul(a1p_ref, w_ref, offsets, rows_s, c_mid, kp)
        r = acc[:, :c_out]
        y2_ref[...] = r.astype(y2_ref.dtype)
        st_ref[...] = jnp.concatenate(
            [jnp.sum(r * m, axis=0, keepdims=True),
             jnp.sum(r * r * m, axis=0, keepdims=True)], axis=0)

    return kernel


# ---------------------------------------------------------------------------
# Pass C: BN2 + ReLU, drop the seam columns -> unpadded NHWC (real channels)
# ---------------------------------------------------------------------------
def _make_bn_relu_unseam_kernel(w):
    def kernel(y_ref, ss_ref, o_ref):
        # y_ref: (hb, wp, c) bf16;  ss_ref: (2, c) f32;  o_ref: (hb, w, c) f32
        ss = ss_ref[...]
        scale = ss[0:1, :].reshape(1, 1, -1)
        shift = ss[1:2, :].reshape(1, 1, -1)
        a = jnp.maximum(y_ref[...].astype(jnp.float32) * scale + shift, 0.0)
        o_ref[...] = a[:, :w, :].astype(o_ref.dtype)

    return kernel


def _fold_bn(stats, gamma, beta, count):
    """Reduce per-image [sum, sumsq] partials to a folded BN scale/shift
    (training mode, biased variance).  NOTE: E[x^2]-E[x]^2 in f32; fine at
    these sizes, use compensated / centered stats at very large N*H*W."""
    tot = jnp.sum(stats, axis=0)                               # (2, C)
    mean = tot[0] / count
    var = jnp.maximum(tot[1] / count - mean * mean, 0.0)
    scale = gamma.astype(jnp.float32) * lax.rsqrt(var + EPS)
    shift = beta.astype(jnp.float32) - mean * scale
    return jnp.stack([scale, shift], axis=0)                   # (2, C)


def double_conv2d_bn_forward(x_nchw, params):
    """Forward matching double_conv2d_bn.forward (NCHW in / NCHW out, f32).

    Conv biases are dropped on purpose: BatchNorm in training mode subtracts
    the batch mean, which cancels a per-channel pre-BN constant exactly.
    """
    n, c_in, h, w = x_nchw.shape
    c_out = params["g1"].shape[0]
    wp, hp = w + 2, h + 2
    rows_s = h * wp                      # seamed output rows per image
    rows_in = hp * wp + 2                # padded input rows (+2 tap overrun)
    kp1 = _round_up(9 * c_in, LANE)
    kp2 = _round_up(9 * c_out, LANE)
    coutp = _round_up(c_out, LANE)
    count = n * h * w                    # valid pixels for the BN statistics

    # ---- layer-1 input: NCHW -> NHWC, +1 spatial halo, width-flattened, bf16
    x = jnp.transpose(x_nchw, (0, 2, 3, 1)).astype(jnp.bfloat16)
    x = jnp.pad(x, ((0, 0), (1, 1), (1, 1), (0, 0))).reshape(n, hp * wp, c_in)
    x = jnp.pad(x, ((0, 0), (0, rows_in - hp * wp), (0, 0)))

    # ---- im2col weights: HWIO -> (9*Cin, Cout) -> zero-pad to (K, 128), bf16
    w1c = jnp.pad(params["w1"].astype(jnp.bfloat16).reshape(9 * c_in, c_out),
                  ((0, kp1 - 9 * c_in), (0, coutp - c_out)))
    w2c = jnp.pad(params["w2"].astype(jnp.bfloat16).reshape(9 * c_out, c_out),
                  ((0, kp2 - 9 * c_out), (0, coutp - c_out)))

    par = pltpu.CompilerParams(dimension_semantics=("parallel",))

    # ---- pass A: conv1 + BN1 partial stats (one image per grid step)
    # TODO(synk): for large H*W, add intra-image row tiling with a 1-row halo
    # (and per-tap matmuls once 9*C no longer fits one K tile) so blocks stay
    # inside v7x's 64 MiB VMEM and small/odd N still feeds both TensorCores.
    y1, st1 = pl.pallas_call(
        _make_conv_stats_kernel(h, w, c_in, c_out, kp1),
        out_shape=(jax.ShapeDtypeStruct((n, rows_s, c_out), jnp.bfloat16),
                   jax.ShapeDtypeStruct((n, 2, c_out), jnp.float32)),
        grid=(n,),
        in_specs=[
            pl.BlockSpec((None, rows_in, c_in), lambda i: (i, 0, 0)),
            pl.BlockSpec((kp1, coutp), lambda i: (0, 0)),
        ],
        out_specs=(
            pl.BlockSpec((None, rows_s, c_out), lambda i: (i, 0, 0)),
            pl.BlockSpec((None, 2, c_out), lambda i: (i, 0, 0)),
        ),
        compiler_params=par,
    )(x, w1c)
    ss1 = _fold_bn(st1, params["g1"], params["bt1"], count)

    # ---- pass B: BN1 + ReLU + conv2 + BN2 partial stats (fused)
    y2, st2 = pl.pallas_call(
        _make_bn_relu_conv_stats_kernel(h, w, c_out, c_out, kp2),
        out_shape=(jax.ShapeDtypeStruct((n, rows_s, c_out), jnp.bfloat16),
                   jax.ShapeDtypeStruct((n, 2, c_out), jnp.float32)),
        grid=(n,),
        in_specs=[
            pl.BlockSpec((None, rows_s, c_out), lambda i: (i, 0, 0)),
            pl.BlockSpec((2, c_out), lambda i: (0, 0)),
            pl.BlockSpec((kp2, coutp), lambda i: (0, 0)),
        ],
        out_specs=(
            pl.BlockSpec((None, rows_s, c_out), lambda i: (i, 0, 0)),
            pl.BlockSpec((None, 2, c_out), lambda i: (i, 0, 0)),
        ),
        scratch_shapes=[pltpu.VMEM((rows_in, c_out), jnp.bfloat16)],
        compiler_params=par,
    )(y1, ss1, w2c)
    ss2 = _fold_bn(st2, params["g2"], params["bt2"], count)

    # ---- pass C: BN2 + ReLU + de-seam -> unpadded NHWC (real channels only)
    n_hblk = 2 if (h % 2 == 0 and h >= 2) else 1     # >=4 parallel steps (v7x)
    hb = h // n_hblk
    y2_4d = y2.reshape(n, h, wp, c_out)              # free HBM metadata reshape
    out_nhwc = pl.pallas_call(
        _make_bn_relu_unseam_kernel(w),
        out_shape=jax.ShapeDtypeStruct((n, h, w, c_out), jnp.float32),
        grid=(n, n_hblk),
        in_specs=[
            pl.BlockSpec((None, hb, wp, c_out), lambda i, j: (i, j, 0, 0)),
            pl.BlockSpec((2, c_out), lambda i, j: (0, 0)),
        ],
        out_specs=pl.BlockSpec((None, hb, w, c_out), lambda i, j: (i, j, 0, 0)),
        compiler_params=pltpu.CompilerParams(
            dimension_semantics=("parallel", "parallel")),
    )(y2_4d, ss2)

    # Small, unpadded NHWC -> NCHW transpose (16 KiB at these shapes).
    return jnp.transpose(out_nhwc, (0, 3, 1, 2))


# ---------------------------------------------------------------------------
# Deterministic parameter init (shapes from the module's __init__).  Biases
# are kept for fidelity; the fused kernel drops them because train-mode BN
# cancels any per-channel pre-BN constant exactly.
# ---------------------------------------------------------------------------
def init_params(key, in_channels, out_channels, k=3):
    k1, k2, k3, k4 = jax.random.split(key, 4)
    bound1 = 1.0 / math.sqrt(in_channels * k * k)
    bound2 = 1.0 / math.sqrt(out_channels * k * k)
    return {
        "w1": jax.random.uniform(k1, (k, k, in_channels, out_channels),
                                 jnp.float32, -bound1, bound1),      # HWIO
        "b1": jax.random.uniform(k2, (out_channels,), jnp.float32, -bound1, bound1),
        "g1": jnp.ones((out_channels,), jnp.float32),
        "bt1": jnp.zeros((out_channels,), jnp.float32),
        "w2": jax.random.uniform(k3, (k, k, out_channels, out_channels),
                                 jnp.float32, -bound2, bound2),
        "b2": jax.random.uniform(k4, (out_channels,), jnp.float32, -bound2, bound2),
        "g2": jnp.ones((out_channels,), jnp.float32),
        "bt2": jnp.zeros((out_channels,), jnp.float32),
    }


# ---------------------------------------------------------------------------
# Pure-JAX f32 reference (with the conv bias) for correctness checking.
# ---------------------------------------------------------------------------
def _ref_forward(x_nchw, params):
    x = jnp.transpose(x_nchw, (0, 2, 3, 1))

    def block(x, w, b, g, bt):
        y = jax.lax.conv_general_dilated(
            x, w, window_strides=(1, 1), padding="SAME",
            dimension_numbers=("NHWC", "HWIO", "NHWC"))
        y = y + b       # bias kept here; the kernel relies on BN cancelling it
        mean = jnp.mean(y, axis=(0, 1, 2), keepdims=True)
        var = jnp.mean((y - mean) ** 2, axis=(0, 1, 2), keepdims=True)
        y = (y - mean) * jax.lax.rsqrt(var + EPS) * g + bt
        return jnp.maximum(y, 0.0)

    y = block(x, params["w1"], params["b1"], params["g1"], params["bt1"])
    y = block(y, params["w2"], params["b2"], params["g2"], params["bt2"])
    return jnp.transpose(y, (0, 3, 1, 2))


if __name__ == "__main__":
    key = jax.random.PRNGKey(0)
    kx, kparams = jax.random.split(key)

    # Small shapes consistent with the module: batch=2, in_ch=4, out_ch=8, 16x16.
    x = jax.random.normal(kx, (2, 4, 16, 16), jnp.float32)   # NCHW (PyTorch)
    params = init_params(kparams, in_channels=4, out_channels=8)

    fwd = jax.jit(double_conv2d_bn_forward)
    out = jax.block_until_ready(fwd(x, params))
    assert out.shape == (2, 8, 16, 16), out.shape

    ref = jax.block_until_ready(_ref_forward(x, params))
    # bf16 MXU inputs and bf16 conv intermediates (f32 accumulation / BN math)
    # => relaxed tolerance versus the pure-f32 reference.
    np.testing.assert_allclose(np.asarray(out), np.asarray(ref),
                               atol=5e-2, rtol=5e-2)

    print("KERNEL_OK")
</pallas_src>

<mosaic_0001>
module attributes {stable_mosaic.version = 11 : i64} {
  func.func @kernel(%arg0: i32, %arg1: memref<1x326x4xbf16, #tpu.memory_space<vmem>>, %arg2: memref<128x128xbf16, #tpu.memory_space<vmem>>, %arg3: memref<1x288x8xbf16, #tpu.memory_space<vmem>>, %arg4: memref<1x2x8xf32, #tpu.memory_space<vmem>>) attributes {dimension_semantics = [#tpu.dimension_semantics<parallel>], iteration_bounds = array<i64: 2>, scalar_prefetch = 0 : i64, scratch_operands = 0 : i64, tpu.core_type = #tpu.core_type<tc>, window_params = [{transform_indices = @transform_0, window_bounds = array<i64: 1, 326, 4>}, {pipeline_mode = #tpu.pipeline_mode<synchronous>, transform_indices = @transform_1, window_bounds = array<i64: 128, 128>}, {transform_indices = @transform_2, window_bounds = array<i64: 1, 288, 8>}, {transform_indices = @transform_3, window_bounds = array<i64: 1, 2, 8>}]} {
    %c0 = arith.constant 0 : index
    %c0_0 = arith.constant 0 : index
    %c0_1 = arith.constant 0 : index
    %0 = vector.load %arg1[%c0, %c0_0, %c0_1] : memref<1x326x4xbf16, #tpu.memory_space<vmem>>, vector<1x288x4xbf16>
    %1 = vector.shape_cast %0 : vector<1x288x4xbf16> to vector<288x4xbf16>
    %c0_2 = arith.constant 0 : index
    %c1 = arith.constant 1 : index
    %c0_3 = arith.constant 0 : index
    %2 = vector.load %arg1[%c0_2, %c1, %c0_3] : memref<1x326x4xbf16, #tpu.memory_space<vmem>>, vector<1x288x4xbf16>
    %3 = vector.shape_cast %2 : vector<1x288x4xbf16> to vector<288x4xbf16>
    %c0_4 = arith.constant 0 : index
    %c2 = arith.constant 2 : index
    %c0_5 = arith.constant 0 : index
    %4 = vector.load %arg1[%c0_4, %c2, %c0_5] : memref<1x326x4xbf16, #tpu.memory_space<vmem>>, vector<1x288x4xbf16>
    %5 = vector.shape_cast %4 : vector<1x288x4xbf16> to vector<288x4xbf16>
    %c0_6 = arith.constant 0 : index
    %c18 = arith.constant 18 : index
    %c0_7 = arith.constant 0 : index
    %6 = vector.load %arg1[%c0_6, %c18, %c0_7] : memref<1x326x4xbf16, #tpu.memory_space<vmem>>, vector<1x288x4xbf16>
    %7 = vector.shape_cast %6 : vector<1x288x4xbf16> to vector<288x4xbf16>
    %c0_8 = arith.constant 0 : index
    %c19 = arith.constant 19 : index
    %c0_9 = arith.constant 0 : index
    %8 = vector.load %arg1[%c0_8, %c19, %c0_9] : memref<1x326x4xbf16, #tpu.memory_space<vmem>>, vector<1x288x4xbf16>
    %9 = vector.shape_cast %8 : vector<1x288x4xbf16> to vector<288x4xbf16>
    %c0_10 = arith.constant 0 : index
    %c20 = arith.constant 20 : index
    %c0_11 = arith.constant 0 : index
    %10 = vector.load %arg1[%c0_10, %c20, %c0_11] : memref<1x326x4xbf16, #tpu.memory_space<vmem>>, vector<1x288x4xbf16>
    %11 = vector.shape_cast %10 : vector<1x288x4xbf16> to vector<288x4xbf16>
    %c0_12 = arith.constant 0 : index
    %c36 = arith.constant 36 : index
    %c0_13 = arith.constant 0 : index
    %12 = vector.load %arg1[%c0_12, %c36, %c0_13] : memref<1x326x4xbf16, #tpu.memory_space<vmem>>, vector<1x288x4xbf16>
    %13 = vector.shape_cast %12 : vector<1x288x4xbf16> to vector<288x4xbf16>
    %c0_14 = arith.constant 0 : index
    %c37 = arith.constant 37 : index
    %c0_15 = arith.constant 0 : index
    %14 = vector.load %arg1[%c0_14, %c37, %c0_15] : memref<1x326x4xbf16, #tpu.memory_space<vmem>>, vector<1x288x4xbf16>
    %15 = vector.shape_cast %14 : vector<1x288x4xbf16> to vector<288x4xbf16>
    %c0_16 = arith.constant 0 : index
    %c38 = arith.constant 38 : index
    %c0_17 = arith.constant 0 : index
    %16 = vector.load %arg1[%c0_16, %c38, %c0_17] : memref<1x326x4xbf16, #tpu.memory_space<vmem>>, vector<1x288x4xbf16>
    %17 = vector.shape_cast %16 : vector<1x288x4xbf16> to vector<288x4xbf16>
    %cst = arith.constant 0.000000e+00 : bf16
    %18 = vector.broadcast %cst : bf16 to vector<288x92xbf16>
    %19 = tpu.concatenate %1, %3, %5, %7, %9, %11, %13, %15, %17, %18 in 1 : vector<288x4xbf16>, vector<288x4xbf16>, vector<288x4xbf16>, vector<288x4xbf16>, vector<288x4xbf16>, vector<288x4xbf16>, vector<288x4xbf16>, vector<288x4xbf16>, vector<288x4xbf16>, vector<288x92xbf16> -> vector<288x128xbf16>
    %c0_18 = arith.constant 0 : index
    %c0_19 = arith.constant 0 : index
    %20 = vector.load %arg2[%c0_18, %c0_19] : memref<128x128xbf16, #tpu.memory_space<vmem>>, vector<128x128xbf16>
    %cst_20 = arith.constant dense<0.000000e+00> : vector<288x128xf32>
    %21 = tpu.matmul %19, %20, %cst_20 {dimension_numbers = #tpu.dot_dimension_numbers<[1], [0], [0], [1], [0, 0, 1, 1], [], []>} : vector<288x128xbf16>, vector<128x128xbf16>, vector<288x128xf32> -> vector<288x128xf32>
    %22 = vector.extract_strided_slice %21 {offsets = [0, 0], sizes = [288, 8], strides = [1, 1]} : vector<288x128xf32> to vector<288x8xf32>
    %23 = tpu.iota {dimensions = array<i32: 0>} : vector<288x1xi32>
    %c18_i32 = arith.constant 18 : i32
    %c0_i32 = arith.constant 0 : i32
    %24 = arith.cmpi eq, %c18_i32, %c0_i32 : i32
    %c1_i32 = arith.constant 1 : i32
    %25 = arith.select %24, %c1_i32, %c18_i32 : i32
    %26 = vector.broadcast %25 : i32 to vector<288x1xi32>
    %27 = arith.remsi %23, %26 : vector<288x1xi32>
    %c0_i32_21 = arith.constant 0 : i32
    %28 = vector.broadcast %c0_i32_21 : i32 to vector<288x1xi32>
    %29 = arith.cmpi ne, %27, %28 : vector<288x1xi32>
    %c0_i32_22 = arith.constant 0 : i32
    %30 = vector.broadcast %c0_i32_22 : i32 to vector<288x1xi32>
    %31 = arith.cmpi slt, %27, %30 : vector<288x1xi32>
    %c0_i32_23 = arith.constant 0 : i32
    %32 = arith.cmpi slt, %25, %c0_i32_23 : i32
    %33 = vector.broadcast %32 : i1 to vector<288x1xi1>
    %34 = vector.broadcast %33 : vector<288x1xi1> to vector<288x1xi1>
    %35 = arith.xori %31, %34 : vector<288x1xi1>
    %36 = arith.andi %35, %29 : vector<288x1xi1>
    %37 = vector.broadcast %25 : i32 to vector<288x1xi32>
    %38 = arith.addi %27, %37 : vector<288x1xi32>
    %39 = arith.select %36, %38, %27 : vector<288x1xi1>, vector<288x1xi32>
    %c16_i32 = arith.constant 16 : i32
    %40 = vector.broadcast %c16_i32 : i32 to vector<288x1xi32>
    %41 = arith.cmpi slt, %39, %40 : vector<288x1xi32>
    %42 = arith.extui %41 : vector<288x1xi1> to vector<288x1xi32>
    %43 = arith.sitofp %42 : vector<288x1xi32> to vector<288x1xf32>
    %44 = arith.truncf %22 : vector<288x8xf32> to vector<288x8xbf16>
    %c0_24 = arith.constant 0 : index
    %c0_25 = arith.constant 0 : index
    %c0_26 = arith.constant 0 : index
    %45 = vector.load %arg3[%c0_24, %c0_25, %c0_26] : memref<1x288x8xbf16, #tpu.memory_space<vmem>>, vector<1x288x8xbf16>
    %46 = vector.shape_cast %45 : vector<1x288x8xbf16> to vector<288x8xbf16>
    %47 = vector.shape_cast %44 : vector<288x8xbf16> to vector<1x288x8xbf16>
    tpu.vector_store %arg3[%c0_24, %c0_25, %c0_26], %47 {strides = array<i32>} : memref<1x288x8xbf16, #tpu.memory_space<vmem>>, vector<1x288x8xbf16>,
    %48 = vector.broadcast %43 : vector<288x1xf32> to vector<288x8xf32>
    %49 = arith.mulf %22, %48 : vector<288x8xf32>
    %cst_27 = arith.constant dense<0.000000e+00> : vector<8xf32>
    %50 = vector.multi_reduction <add>, %49, %cst_27 [0] : vector<288x8xf32> to vector<8xf32>
    %51 = vector.shape_cast %50 : vector<8xf32> to vector<1x8xf32>
    %52 = arith.mulf %22, %22 : vector<288x8xf32>
    %53 = vector.broadcast %43 : vector<288x1xf32> to vector<288x8xf32>
    %54 = arith.mulf %52, %53 : vector<288x8xf32>
    %cst_28 = arith.constant dense<0.000000e+00> : vector<8xf32>
    %55 = vector.multi_reduction <add>, %54, %cst_28 [0] : vector<288x8xf32> to vector<8xf32>
    %56 = vector.shape_cast %55 : vector<8xf32> to vector<1x8xf32>
    %57 = tpu.concatenate %51, %56 in 0 : vector<1x8xf32>, vector<1x8xf32> -> vector<2x8xf32>
    %c0_29 = arith.constant 0 : index
    %c0_30 = arith.constant 0 : index
    %c0_31 = arith.constant 0 : index
    %58 = vector.load %arg4[%c0_29, %c0_30, %c0_31] : memref<1x2x8xf32, #tpu.memory_space<vmem>>, vector<1x2x8xf32>
    %59 = vector.shape_cast %58 : vector<1x2x8xf32> to vector<2x8xf32>
    %60 = vector.shape_cast %57 : vector<2x8xf32> to vector<1x2x8xf32>
    tpu.vector_store %arg4[%c0_29, %c0_30, %c0_31], %60 {strides = array<i32>} : memref<1x2x8xf32, #tpu.memory_space<vmem>>, vector<1x2x8xf32>,
    return
  }
  func.func @transform_0(%arg0: i32) -> (i32, i32, i32) {
    %c0_i32 = arith.constant 0 : i32
    %c0_i32_0 = arith.constant 0 : i32
    %c0_i32_1 = arith.constant 0 : i32
    return %arg0, %c0_i32, %c0_i32_0 : i32, i32, i32
  }
  func.func @transform_1(%arg0: i32) -> (i32, i32) {
    %c0_i32 = arith.constant 0 : i32
    %c0_i32_0 = arith.constant 0 : i32
    %c0_i32_1 = arith.constant 0 : i32
    return %c0_i32, %c0_i32_0 : i32, i32
  }
  func.func @transform_2(%arg0: i32) -> (i32, i32, i32) {
    %c0_i32 = arith.constant 0 : i32
    %c0_i32_0 = arith.constant 0 : i32
    %c0_i32_1 = arith.constant 0 : i32
    return %arg0, %c0_i32, %c0_i32_0 : i32, i32, i32
  }
  func.func @transform_3(%arg0: i32) -> (i32, i32, i32) {
    %c0_i32 = arith.constant 0 : i32
    %c0_i32_0 = arith.constant 0 : i32
    %c0_i32_1 = arith.constant 0 : i32
    return %arg0, %c0_i32, %c0_i32_0 : i32, i32, i32
  }
}

module attributes {stable_mosaic.version = 11 : i64} {
  func.func @kernel(%arg0: i32, %arg1: memref<1x288x8xbf16, #tpu.memory_space<vmem>>, %arg2: memref<2x8xf32, #tpu.memory_space<vmem>>, %arg3: memref<128x128xbf16, #tpu.memory_space<vmem>>, %arg4: memref<1x288x8xbf16, #tpu.memory_space<vmem>>, %arg5: memref<1x2x8xf32, #tpu.memory_space<vmem>>, %arg6: memref<326x8xbf16, #tpu.memory_space<vmem>>) attributes {dimension_semantics = [#tpu.dimension_semantics<parallel>], iteration_bounds = array<i64: 2>, scalar_prefetch = 0 : i64, scratch_operands = 1 : i64, tpu.core_type = #tpu.core_type<tc>, window_params = [{transform_indices = @transform_0, window_bounds = array<i64: 1, 288, 8>}, {pipeline_mode = #tpu.pipeline_mode<synchronous>, transform_indices = @transform_1, window_bounds = array<i64: 2, 8>}, {pipeline_mode = #tpu.pipeline_mode<synchronous>, transform_indices = @transform_2, window_bounds = array<i64: 128, 128>}, {transform_indices = @transform_3, window_bounds = array<i64: 1, 288, 8>}, {transform_indices = @transform_4, window_bounds = array<i64: 1, 2, 8>}]} {
    %0 = tpu.iota {dimensions = array<i32: 0>} : vector<288x1xi32>
    %c18_i32 = arith.constant 18 : i32
    %c0_i32 = arith.constant 0 : i32
    %1 = arith.cmpi eq, %c18_i32, %c0_i32 : i32
    %c1_i32 = arith.constant 1 : i32
    %2 = arith.select %1, %c1_i32, %c18_i32 : i32
    %3 = vector.broadcast %2 : i32 to vector<288x1xi32>
    %4 = arith.remsi %0, %3 : vector<288x1xi32>
    %c0_i32_0 = arith.constant 0 : i32
    %5 = vector.broadcast %c0_i32_0 : i32 to vector<288x1xi32>
    %6 = arith.cmpi ne, %4, %5 : vector<288x1xi32>
    %c0_i32_1 = arith.constant 0 : i32
    %7 = vector.broadcast %c0_i32_1 : i32 to vector<288x1xi32>
    %8 = arith.cmpi slt, %4, %7 : vector<288x1xi32>
    %c0_i32_2 = arith.constant 0 : i32
    %9 = arith.cmpi slt, %2, %c0_i32_2 : i32
    %10 = vector.broadcast %9 : i1 to vector<288x1xi1>
    %11 = vector.broadcast %10 : vector<288x1xi1> to vector<288x1xi1>
    %12 = arith.xori %8, %11 : vector<288x1xi1>
    %13 = arith.andi %12, %6 : vector<288x1xi1>
    %14 = vector.broadcast %2 : i32 to vector<288x1xi32>
    %15 = arith.addi %4, %14 : vector<288x1xi32>
    %16 = arith.select %13, %15, %4 : vector<288x1xi1>, vector<288x1xi32>
    %c16_i32 = arith.constant 16 : i32
    %17 = vector.broadcast %c16_i32 : i32 to vector<288x1xi32>
    %18 = arith.cmpi slt, %16, %17 : vector<288x1xi32>
    %19 = arith.extui %18 : vector<288x1xi1> to vector<288x1xi32>
    %20 = arith.sitofp %19 : vector<288x1xi32> to vector<288x1xf32>
    %c0 = arith.constant 0 : index
    %c0_3 = arith.constant 0 : index
    %c0_4 = arith.constant 0 : index
    %21 = vector.load %arg1[%c0, %c0_3, %c0_4] : memref<1x288x8xbf16, #tpu.memory_space<vmem>>, vector<1x288x8xbf16>
    %22 = vector.shape_cast %21 : vector<1x288x8xbf16> to vector<288x8xbf16>
    %23 = arith.extf %22 : vector<288x8xbf16> to vector<288x8xf32>
    %c0_5 = arith.constant 0 : index
    %c0_6 = arith.constant 0 : index
    %24 = vector.load %arg2[%c0_5, %c0_6] : memref<2x8xf32, #tpu.memory_space<vmem>>, vector<1x8xf32>
    %25 = vector.broadcast %24 : vector<1x8xf32> to vector<288x8xf32>
    %26 = arith.mulf %23, %25 : vector<288x8xf32>
    %c1 = arith.constant 1 : index
    %c0_7 = arith.constant 0 : index
    %27 = vector.load %arg2[%c1, %c0_7] : memref<2x8xf32, #tpu.memory_space<vmem>>, vector<1x8xf32>
    %28 = vector.broadcast %27 : vector<1x8xf32> to vector<288x8xf32>
    %29 = arith.addf %26, %28 : vector<288x8xf32>
    %cst = arith.constant 0.000000e+00 : f32
    %30 = vector.broadcast %cst : f32 to vector<288x8xf32>
    %31 = arith.maximumf %29, %30 : vector<288x8xf32>
    %32 = vector.broadcast %20 : vector<288x1xf32> to vector<288x8xf32>
    %33 = arith.mulf %31, %32 : vector<288x8xf32>
    %cst_8 = arith.constant 0.000000e+00 : bf16
    %34 = vector.broadcast %cst_8 : bf16 to vector<326x8xbf16>
    %c0_9 = arith.constant 0 : index
    %c0_10 = arith.constant 0 : index
    %35 = vector.load %arg6[%c0_9, %c0_10] : memref<326x8xbf16, #tpu.memory_space<vmem>>, vector<326x8xbf16>
    tpu.vector_store %arg6[%c0_9, %c0_10], %34 {strides = array<i32>} : memref<326x8xbf16, #tpu.memory_space<vmem>>, vector<326x8xbf16>,
    %36 = arith.truncf %33 : vector<288x8xf32> to vector<288x8xbf16>
    %c19 = arith.constant 19 : index
    %c0_11 = arith.constant 0 : index
    %37 = vector.load %arg6[%c19, %c0_11] : memref<326x8xbf16, #tpu.memory_space<vmem>>, vector<288x8xbf16>
    tpu.vector_store %arg6[%c19, %c0_11], %36 {strides = array<i32>} : memref<326x8xbf16, #tpu.memory_space<vmem>>, vector<288x8xbf16>,
    %c0_12 = arith.constant 0 : index
    %c0_13 = arith.constant 0 : index
    %38 = vector.load %arg6[%c0_12, %c0_13] : memref<326x8xbf16, #tpu.memory_space<vmem>>, vector<288x8xbf16>
    %c1_14 = arith.constant 1 : index
    %c0_15 = arith.constant 0 : index
    %39 = vector.load %arg6[%c1_14, %c0_15] : memref<326x8xbf16, #tpu.memory_space<vmem>>, vector<288x8xbf16>
    %c2 = arith.constant 2 : index
    %c0_16 = arith.constant 0 : index
    %40 = vector.load %arg6[%c2, %c0_16] : memref<326x8xbf16, #tpu.memory_space<vmem>>, vector<288x8xbf16>
    %c18 = arith.constant 18 : index
    %c0_17 = arith.constant 0 : index
    %41 = vector.load %arg6[%c18, %c0_17] : memref<326x8xbf16, #tpu.memory_space<vmem>>, vector<288x8xbf16>
    %c19_18 = arith.constant 19 : index
    %c0_19 = arith.constant 0 : index
    %42 = vector.load %arg6[%c19_18, %c0_19] : memref<326x8xbf16, #tpu.memory_space<vmem>>, vector<288x8xbf16>
    %c20 = arith.constant 20 : index
    %c0_20 = arith.constant 0 : index
    %43 = vector.load %arg6[%c20, %c0_20] : memref<326x8xbf16, #tpu.memory_space<vmem>>, vector<288x8xbf16>
    %c36 = arith.constant 36 : index
    %c0_21 = arith.constant 0 : index
    %44 = vector.load %arg6[%c36, %c0_21] : memref<326x8xbf16, #tpu.memory_space<vmem>>, vector<288x8xbf16>
    %c37 = arith.constant 37 : index
    %c0_22 = arith.constant 0 : index
    %45 = vector.load %arg6[%c37, %c0_22] : memref<326x8xbf16, #tpu.memory_space<vmem>>, vector<288x8xbf16>
    %c38 = arith.constant 38 : index
    %c0_23 = arith.constant 0 : index
    %46 = vector.load %arg6[%c38, %c0_23] : memref<326x8xbf16, #tpu.memory_space<vmem>>, vector<288x8xbf16>
    %cst_24 = arith.constant 0.000000e+00 : bf16
    %47 = vector.broadcast %cst_24 : bf16 to vector<288x56xbf16>
    %48 = tpu.concatenate %38, %39, %40, %41, %42, %43, %44, %45, %46, %47 in 1 : vector<288x8xbf16>, vector<288x8xbf16>, vector<288x8xbf16>, vector<288x8xbf16>, vector<288x8xbf16>, vector<288x8xbf16>, vector<288x8xbf16>, vector<288x8xbf16>, vector<288x8xbf16>, vector<288x56xbf16> -> vector<288x128xbf16>
    %c0_25 = arith.constant 0 : index
    %c0_26 = arith.constant 0 : index
    %49 = vector.load %arg3[%c0_25, %c0_26] : memref<128x128xbf16, #tpu.memory_space<vmem>>, vector<128x128xbf16>
    %cst_27 = arith.constant dense<0.000000e+00> : vector<288x128xf32>
    %50 = tpu.matmul %48, %49, %cst_27 {dimension_numbers = #tpu.dot_dimension_numbers<[1], [0], [0], [1], [0, 0, 1, 1], [], []>} : vector<288x128xbf16>, vector<128x128xbf16>, vector<288x128xf32> -> vector<288x128xf32>
    %51 = vector.extract_strided_slice %50 {offsets = [0, 0], sizes = [288, 8], strides = [1, 1]} : vector<288x128xf32> to vector<288x8xf32>
    %52 = arith.truncf %51 : vector<288x8xf32> to vector<288x8xbf16>
    %c0_28 = arith.constant 0 : index
    %c0_29 = arith.constant 0 : index
    %c0_30 = arith.constant 0 : index
    %53 = vector.load %arg4[%c0_28, %c0_29, %c0_30] : memref<1x288x8xbf16, #tpu.memory_space<vmem>>, vector<1x288x8xbf16>
    %54 = vector.shape_cast %53 : vector<1x288x8xbf16> to vector<288x8xbf16>
    %55 = vector.shape_cast %52 : vector<288x8xbf16> to vector<1x288x8xbf16>
    tpu.vector_store %arg4[%c0_28, %c0_29, %c0_30], %55 {strides = array<i32>} : memref<1x288x8xbf16, #tpu.memory_space<vmem>>, vector<1x288x8xbf16>,
    %56 = vector.broadcast %20 : vector<288x1xf32> to vector<288x8xf32>
    %57 = arith.mulf %51, %56 : vector<288x8xf32>
    %cst_31 = arith.constant dense<0.000000e+00> : vector<8xf32>
    %58 = vector.multi_reduction <add>, %57, %cst_31 [0] : vector<288x8xf32> to vector<8xf32>
    %59 = vector.shape_cast %58 : vector<8xf32> to vector<1x8xf32>
    %60 = arith.mulf %51, %51 : vector<288x8xf32>
    %61 = vector.broadcast %20 : vector<288x1xf32> to vector<288x8xf32>
    %62 = arith.mulf %60, %61 : vector<288x8xf32>
    %cst_32 = arith.constant dense<0.000000e+00> : vector<8xf32>
    %63 = vector.multi_reduction <add>, %62, %cst_32 [0] : vector<288x8xf32> to vector<8xf32>
    %64 = vector.shape_cast %63 : vector<8xf32> to vector<1x8xf32>
    %65 = tpu.concatenate %59, %64 in 0 : vector<1x8xf32>, vector<1x8xf32> -> vector<2x8xf32>
    %c0_33 = arith.constant 0 : index
    %c0_34 = arith.constant 0 : index
    %c0_35 = arith.constant 0 : index
    %66 = vector.load %arg5[%c0_33, %c0_34, %c0_35] : memref<1x2x8xf32, #tpu.memory_space<vmem>>, vector<1x2x8xf32>
    %67 = vector.shape_cast %66 : vector<1x2x8xf32> to vector<2x8xf32>
    %68 = vector.shape_cast %65 : vector<2x8xf32> to vector<1x2x8xf32>
    tpu.vector_store %arg5[%c0_33, %c0_34, %c0_35], %68 {strides = array<i32>} : memref<1x2x8xf32, #tpu.memory_space<vmem>>, vector<1x2x8xf32>,
    return
  }
  func.func @transform_0(%arg0: i32) -> (i32, i32, i32) {
    %c0_i32 = arith.constant 0 : i32
    %c0_i32_0 = arith.constant 0 : i32
    %c0_i32_1 = arith.constant 0 : i32
    return %arg0, %c0_i32, %c0_i32_0 : i32, i32, i32
  }
  func.func @transform_1(%arg0: i32) -> (i32, i32) {
    %c0_i32 = arith.constant 0 : i32
    %c0_i32_0 = arith.constant 0 : i32
    %c0_i32_1 = arith.constant 0 : i32
    return %c0_i32, %c0_i32_0 : i32, i32
  }
  func.func @transform_2(%arg0: i32) -> (i32, i32) {
    %c0_i32 = arith.constant 0 : i32
    %c0_i32_0 = arith.constant 0 : i32
    %c0_i32_1 = arith.constant 0 : i32
    return %c0_i32, %c0_i32_0 : i32, i32
  }
  func.func @transform_3(%arg0: i32) -> (i32, i32, i32) {
    %c0_i32 = arith.constant 0 : i32
    %c0_i32_0 = arith.constant 0 : i32
    %c0_i32_1 = arith.constant 0 : i32
    return %arg0, %c0_i32, %c0_i32_0 : i32, i32, i32
  }
  func.func @transform_4(%arg0: i32) -> (i32, i32, i32) {
    %c0_i32 = arith.constant 0 : i32
    %c0_i32_0 = arith.constant 0 : i32
    %c0_i32_1 = arith.constant 0 : i32
    return %arg0, %c0_i32, %c0_i32_0 : i32, i32, i32
  }
}

module attributes {stable_mosaic.version = 11 : i64} {
  func.func @kernel(%arg0: i32, %arg1: i32, %arg2: memref<1x8x18x8xbf16, #tpu.memory_space<vmem>>, %arg3: memref<2x8xf32, #tpu.memory_space<vmem>>, %arg4: memref<1x8x16x8xf32, #tpu.memory_space<vmem>>) attributes {dimension_semantics = [#tpu.dimension_semantics<parallel>, #tpu.dimension_semantics<parallel>], iteration_bounds = array<i64: 2, 2>, scalar_prefetch = 0 : i64, scratch_operands = 0 : i64, tpu.core_type = #tpu.core_type<tc>, window_params = [{transform_indices = @transform_0, window_bounds = array<i64: 1, 8, 18, 8>}, {pipeline_mode = #tpu.pipeline_mode<synchronous>, transform_indices = @transform_1, window_bounds = array<i64: 2, 8>}, {transform_indices = @transform_2, window_bounds = array<i64: 1, 8, 16, 8>}]} {
    %c0 = arith.constant 0 : index
    %c0_0 = arith.constant 0 : index
    %0 = vector.load %arg3[%c0, %c0_0] : memref<2x8xf32, #tpu.memory_space<vmem>>, vector<2x8xf32>
    %1 = vector.extract_strided_slice %0 {offsets = [0, 0], sizes = [1, 8], strides = [1, 1]} : vector<2x8xf32> to vector<1x8xf32>
    %2 = vector.shape_cast %1 : vector<1x8xf32> to vector<1x1x8xf32>
    %3 = vector.extract_strided_slice %0 {offsets = [1, 0], sizes = [1, 8], strides = [1, 1]} : vector<2x8xf32> to vector<1x8xf32>
    %4 = vector.shape_cast %3 : vector<1x8xf32> to vector<1x1x8xf32>
    %c0_1 = arith.constant 0 : index
    %c0_2 = arith.constant 0 : index
    %c0_3 = arith.constant 0 : index
    %c0_4 = arith.constant 0 : index
    %5 = vector.load %arg2[%c0_1, %c0_2, %c0_3, %c0_4] : memref<1x8x18x8xbf16, #tpu.memory_space<vmem>>, vector<1x8x18x8xbf16>
    %6 = vector.shape_cast %5 : vector<1x8x18x8xbf16> to vector<8x18x8xbf16>
    %7 = arith.extf %6 : vector<8x18x8xbf16> to vector<8x18x8xf32>
    %8 = vector.broadcast %2 : vector<1x1x8xf32> to vector<8x18x8xf32>
    %9 = arith.mulf %7, %8 : vector<8x18x8xf32>
    %10 = vector.broadcast %4 : vector<1x1x8xf32> to vector<8x18x8xf32>
    %11 = arith.addf %9, %10 : vector<8x18x8xf32>
    %cst = arith.constant 0.000000e+00 : f32
    %12 = vector.broadcast %cst : f32 to vector<8x18x8xf32>
    %13 = arith.maximumf %11, %12 : vector<8x18x8xf32>
    %14 = vector.extract_strided_slice %13 {offsets = [0, 0, 0], sizes = [8, 16, 8], strides = [1, 1, 1]} : vector<8x18x8xf32> to vector<8x16x8xf32>
    %c0_5 = arith.constant 0 : index
    %c0_6 = arith.constant 0 : index
    %c0_7 = arith.constant 0 : index
    %c0_8 = arith.constant 0 : index
    %15 = vector.load %arg4[%c0_5, %c0_6, %c0_7, %c0_8] : memref<1x8x16x8xf32, #tpu.memory_space<vmem>>, vector<1x8x16x8xf32>
    %16 = vector.shape_cast %15 : vector<1x8x16x8xf32> to vector<8x16x8xf32>
    %17 = vector.shape_cast %14 : vector<8x16x8xf32> to vector<1x8x16x8xf32>
    tpu.vector_store %arg4[%c0_5, %c0_6, %c0_7, %c0_8], %17 {strides = array<i32>} : memref<1x8x16x8xf32, #tpu.memory_space<vmem>>, vector<1x8x16x8xf32>,
    return
  }
  func.func @transform_0(%arg0: i32, %arg1: i32) -> (i32, i32, i32, i32) {
    %c0_i32 = arith.constant 0 : i32
    %c0_i32_0 = arith.constant 0 : i32
    %c0_i32_1 = arith.constant 0 : i32
    return %arg0, %arg1, %c0_i32, %c0_i32_0 : i32, i32, i32, i32
  }
  func.func @transform_1(%arg0: i32, %arg1: i32) -> (i32, i32) {
    %c0_i32 = arith.constant 0 : i32
    %c0_i32_0 = arith.constant 0 : i32
    %c0_i32_1 = arith.constant 0 : i32
    return %c0_i32, %c0_i32_0 : i32, i32
  }
  func.func @transform_2(%arg0: i32, %arg1: i32) -> (i32, i32, i32, i32) {
    %c0_i32 = arith.constant 0 : i32
    %c0_i32_0 = arith.constant 0 : i32
    %c0_i32_1 = arith.constant 0 : i32
    return %arg0, %arg1, %c0_i32, %c0_i32_0 : i32, i32, i32, i32
  }
}

</mosaic_0001>

<llo_original>
// kernel: double_conv2d_bn_forward.5
$region0: #{double_conv2d_bn_forward.5}
  #allocation0 [shape = 'u32[]', space=smem, size = 0x4, offset = 0x4, fixed_abs, tag = 'smem constant byte address 0x4 - core index']
  #allocation1 [shape = 'u32[144,128]{1,0:T(1,128)}', space=vmem, size = 0x12000, scoped, tag = 'internal scratch']
  %s0 = inlined_call_operand.vmem [shape: bf16[2,16,18,8], index: 0, kind: input, shape index: {}]
  %s1 = inlined_call_operand.vmem [shape: f32[2,8], index: 1, kind: input, shape index: {}]
  %s2 = inlined_call_operand.vmem [shape: f32[2,16,16,8], index: 2, kind: output, shape index: {}]
  %s3 = sld [smem:[#allocation0]]
  $region41: #{double_conv2d_bn_forward.5} parent=0
    _
  %s5 = ssub.s32 1, %s3
  %s6 = scalar_select 0, %s5, %s3
  loop: start=0, step=1, limit=6
  $region2: #{double_conv2d_bn_forward.5} parent=0 // loop_pre_header
    _
  $region3: #{double_conv2d_bn_forward.5} parent=0 // loop_header
    %s8 = sphi 0, %s12
    %p9 = scmp.ge.s32.totalorder %s8, 6
    %s15 = sphi 0, %s27
    %s16 = sphi 0, %s23
    %s17 = sphi 0, %s15
    %s18 = sphi 0, %s16
    %s19 = sphi 0, %s17
    %s20 = sphi 0, %s18
    %s32 = sphi 0, %s34
    %s35 = sphi 0, %s32
    %s36 = sphi 0, %s35
    %s52 = sphi 0, %s36
    %s56 = sphi 0, %s56
    %s58 = sphi 0, %s56
    %s59 = sphi 0, %s58
    %s73 = sphi 0, %s59
    %s81 = sphi 0, %s83
    %s84 = sphi 0, %s81
    %s85 = sphi 0, %s84
    %s101 = sphi 0, %s85
  $region4: #{double_conv2d_bn_forward.5} parent=0 // loop_header_branch
    %11 = sbr.rel (%p9) target = $region8
  $region5: #{double_conv2d_bn_forward.5} parent=0 // loop_body
    %s13 = ssub.s32 %s8, 1
    %s14 = ssub.s32 %s8, 2
    %s21 = sadd.s32 1, %s16
    %p22 = scmp.ge.s32.totalorder %s21, 2
    %s23 = scalar_select %p22, 0, %s21
    %s24 = sadd.s32 1, %s15
    %s25 = scalar_select %p22, %s24, %s15
    %p26 = scmp.ge.s32.totalorder %s25, 2
    %s27 = scalar_select %p26, 0, %s25
    %s28 = ssub.s32 %s15, %s27
    %s29 = ssub.s32 %s16, %s23
    %s30 = sor.u32 %s28, %s29
    %p31 = scmp.eq.s32.totalorder %s30, 0
    %s33 = sadd.s32 %s32, 1
    %s34 = scalar_select %p31, %s32, %s33
    %p37 = pneg %p31
    %p38 = scmp.eq.s32.totalorder %s8, 3
    %p39 = por %p37, %p38
    %p40 = scmp.ne.s32.totalorder %s32, %s35
    %p41 = scmp.eq.s32.totalorder %s8, 0
    %p42 = por %p40, %p41
    %p43 = scmp.ne.s32.totalorder %s32, %s35
    %p44 = scmp.eq.s32.totalorder %s13, 3
    %p45 = por %p43, %p44
    %p46 = scmp.ne.s32.totalorder %s35, %s36
    %p47 = scmp.eq.s32.totalorder %s13, 0
    %p48 = por %p46, %p47
    %p49 = scmp.ne.s32.totalorder %s35, %s36
    %p50 = scmp.eq.s32.totalorder %s14, 3
    %p51 = por %p49, %p50
    %p53 = scmp.ne.s32.totalorder %s36, %s52
    %p54 = scmp.eq.s32.totalorder %s14, 0
    %p55 = por %p53, %p54
    %s57 = sadd.s32 %s56, 1
    %p60 = scmp.eq.s32.totalorder %s8, 3
    %p61 = scmp.ne.s32.totalorder %s56, %s58
    %p62 = scmp.eq.s32.totalorder %s8, 0
    %p63 = por %p61, %p62
    %p64 = scmp.ne.s32.totalorder %s56, %s58
    %p65 = scmp.eq.s32.totalorder %s13, 3
    %p66 = por %p64, %p65
    %p67 = scmp.ne.s32.totalorder %s58, %s59
    %p68 = scmp.eq.s32.totalorder %s13, 0
    %p69 = por %p67, %p68
    %p70 = scmp.ne.s32.totalorder %s58, %s59
    %p71 = scmp.eq.s32.totalorder %s14, 3
    %p72 = por %p70, %p71
    %p74 = scmp.ne.s32.totalorder %s59, %s73
    %p75 = scmp.eq.s32.totalorder %s14, 0
    %p76 = por %p74, %p75
    %s77 = ssub.s32 %s15, %s27
    %s78 = ssub.s32 %s16, %s23
    %s79 = sor.u32 %s77, %s78
    %p80 = scmp.eq.s32.totalorder %s79, 0
    %s82 = sadd.s32 %s81, 1
    %s83 = scalar_select %p80, %s81, %s82
    %p86 = pneg %p80
    %p87 = scmp.eq.s32.totalorder %s8, 3
    %p88 = por %p86, %p87
    %p89 = scmp.ne.s32.totalorder %s81, %s84
    %p90 = scmp.eq.s32.totalorder %s8, 0
    %p91 = por %p89, %p90
    %p92 = scmp.ne.s32.totalorder %s81, %s84
    %p93 = scmp.eq.s32.totalorder %s13, 3
    %p94 = por %p92, %p93
    %p95 = scmp.ne.s32.totalorder %s84, %s85
    %p96 = scmp.eq.s32.totalorder %s13, 0
    %p97 = por %p95, %p96
    %p98 = scmp.ne.s32.totalorder %s84, %s85
    %p99 = scmp.eq.s32.totalorder %s14, 3
    %p100 = por %p98, %p99
    %p102 = scmp.ne.s32.totalorder %s85, %s101
    %p103 = scmp.eq.s32.totalorder %s14, 0
    %p104 = por %p102, %p103
    %p105 = scmp.le.s32.totalorder 1, %s8
    %p106 = scmp.lt.s32.totalorder %s8, 5
    %p107 = pnand %p105, %p106
    %p108 = pneg %p107
    // Predicated region
    $region9: #{double_conv2d_bn_forward.5} parent=5 // pred_check
      _
    $region10: #{double_conv2d_bn_forward.5} parent=5 // pred_check_branch
      %110 = sbr.rel (%p107) target = $region12
    $region11: #{double_conv2d_bn_forward.5} parent=5 // pred_region
      %s111 = ssub.s32 %s8, 1
      // Predicated region
      $region13: #{double_conv2d_bn_forward.5} parent=11 // pred_check
        %p112 = pneg %p69
      $region14: #{double_conv2d_bn_forward.5} parent=11 // pred_check_branch
        %114 = sbr.rel (%p112) target = $region16
      $region15: #{double_conv2d_bn_forward.5} parent=11 // pred_region
        _
      $region16: #{double_conv2d_bn_forward.5} parent=11 // pred_fallthru
        _
    $region12: #{double_conv2d_bn_forward.5} parent=5 // pred_fallthru
      _
    %p115 = scmp.lt.s32.totalorder %s8, 4
    // Predicated region
    $region17: #{double_conv2d_bn_forward.5} parent=5 // pred_check
      %p116 = pneg %p115
    $region18: #{double_conv2d_bn_forward.5} parent=5 // pred_check_branch
      %118 = sbr.rel (%p116) target = $region20
    $region19: #{double_conv2d_bn_forward.5} parent=5 // pred_region
      // Predicated region
      $region21: #{double_conv2d_bn_forward.5} parent=19 // pred_check
        %p119 = pneg %p42
      $region22: #{double_conv2d_bn_forward.5} parent=19 // pred_check_branch
        %121 = sbr.rel (%p119) target = $region24
      $region23: #{double_conv2d_bn_forward.5} parent=19 // pred_region
        %s122 = smul.u32 8, %s16
        %p123 = scmp.lt.s32.totalorder %s15, 1
        %s124 = scalar_select %p123, %s15, 1
        %p125 = scmp.lt.s32.totalorder %s122, 15
        %s126 = scalar_select %p125, %s122, 15
        %s127 = smul.addr %s126, 3
        %s128 = smul.addr %s124, 48
        %s129 = sadd.s32 %s127, %s128
        %s130 = smul.addr %s129, 4
        %s131 = scalar_lea.vmem %s0, %s130
        %s132 = smul.u32 8, %s16
      $region24: #{double_conv2d_bn_forward.5} parent=19 // pred_fallthru
        _
    $region20: #{double_conv2d_bn_forward.5} parent=5 // pred_fallthru
      _
    %p133 = scmp.le.s32.totalorder 1, %s8
    %p134 = scmp.lt.s32.totalorder %s8, 5
    %p135 = pnand %p133, %p134
    %p136 = pneg %p135
    // Predicated region
    $region25: #{double_conv2d_bn_forward.5} parent=5 // pred_check
      _
    $region26: #{double_conv2d_bn_forward.5} parent=5 // pred_check_branch
      %138 = sbr.rel (%p135) target = $region28
    $region27: #{double_conv2d_bn_forward.5} parent=5 // pred_region
      %s139 = ssub.s32 %s8, 1
      %s140 = smul.u32 8, %s18
      %p141 = scmp.lt.s32.totalorder %s17, 1
      %s142 = scalar_select %p141, %s17, 1
      %p143 = scmp.lt.s32.totalorder %s140, 15
      %s144 = scalar_select %p143, %s140, 15
      %s145 = smul.addr %s144, 3
      %s146 = smul.addr %s142, 48
      %s147 = sadd.s32 %s145, %s146
      %s148 = smul.addr %s147, 4
      %s149 = scalar_lea.vmem %s0, %s148
      %p150 = pneg %p48
      %p151 = pneg %p45
      %p152 = pneg %p69
      %p153 = pneg %p66
      %p154 = pneg %p97
      %p155 = pneg %p94
      %s156 = smul.u32 8, %s18
      %p157 = scmp.lt.s32.totalorder %s17, 1
      %s158 = scalar_select %p157, %s17, 1
      %p159 = scmp.lt.s32.totalorder %s156, 15
      %s160 = scalar_select %p159, %s156, 15
      %s161 = smul.addr %s160, 2
      %s162 = smul.addr %s158, 32
      %s163 = sadd.s32 %s161, %s162
      %s164 = smul.addr %s163, 8
      %s165 = scalar_lea.vmem %s2, %s164
      %s166 = smul.u32 8, %s18
      %p167 = scmp.lt.s32.totalorder %s17, 1
      %s168 = scalar_select %p167, %s17, 1
      %p169 = scmp.lt.s32.totalorder %s166, 15
      %s170 = scalar_select %p169, %s166, 15
      %s171 = smul.addr %s170, 3
      %s172 = smul.addr %s168, 48
      %s173 = sadd.s32 %s171, %s172
      %s174 = smul.addr %s173, 4
      %s175 = scalar_lea.vmem %s0, %s174
      %s176 = smul.u32 8, %s18
      %s177 = smul.u32 8, %s18
      %p178 = scmp.lt.s32.totalorder %s17, 1
      %s179 = scalar_select %p178, %s17, 1
      %p180 = scmp.lt.s32.totalorder %s177, 15
      %s181 = scalar_select %p180, %s177, 15
      %s182 = smul.addr %s181, 2
      %s183 = smul.addr %s179, 32
      %s184 = sadd.s32 %s182, %s183
      %s185 = smul.addr %s184, 8
      %s186 = scalar_lea.vmem %s2, %s185
      %s187 = smul.u32 8, %s18
      %v188 = vld [vmem:[%s1] sm:$0x3]
      %v189 = vld [vmem:[%s175] sm:$0xf]
      %v190 = vld [vmem:[%s175 + $0x4] sm:$0xf]
      %v191 = vld [vmem:[%s175 + $0xc] sm:$0xf]
      %v192 = vld [vmem:[%s175 + $0x10] sm:$0xf]
      %v193 = vld [vmem:[%s175 + $0x18] sm:$0xf]
      %v194 = vld [vmem:[%s175 + $0x1c] sm:$0xf]
      %v195 = vld [vmem:[%s175 + $0x24] sm:$0xf]
      %v196 = vld [vmem:[%s175 + $0x28] sm:$0xf]
      %v197 = vld [vmem:[%s175 + $0x30] sm:$0xf]
      %v198 = vld [vmem:[%s175 + $0x34] sm:$0xf]
      %v199 = vld [vmem:[%s175 + $0x3c] sm:$0xf]
      %v200 = vld [vmem:[%s175 + $0x40] sm:$0xf]
      %v201 = vld [vmem:[%s175 + $0x48] sm:$0xf]
      %v202 = vld [vmem:[%s175 + $0x4c] sm:$0xf]
      %v203 = vld [vmem:[%s175 + $0x54] sm:$0xf]
      %v204 = vld [vmem:[%s175 + $0x58] sm:$0xf]
      %v205 = vunpack.c.l.bf16 %v189
      %v206 = vunpack.c.l.bf16 %v190
      %v207 = vunpack.c.l.bf16 %v191
      %v208 = vunpack.c.l.bf16 %v192
      %v209 = vunpack.c.l.bf16 %v193
      %v210 = vunpack.c.l.bf16 %v194
      %v211 = vunpack.c.l.bf16 %v195
      %v212 = vunpack.c.l.bf16 %v196
      %v213 = vunpack.c.l.bf16 %v197
      %v214 = vunpack.c.l.bf16 %v198
      %v215 = vunpack.c.l.bf16 %v199
      %v216 = vunpack.c.l.bf16 %v200
      %v217 = vunpack.c.l.bf16 %v201
      %v218 = vunpack.c.l.bf16 %v202
      %v219 = vunpack.c.l.bf16 %v203
      %v220 = vunpack.c.l.bf16 %v204
      %v221 = vlaneseq
      %v222 = vshrl.u32 %v221, 7
      %v223 = vsub.s32 0, %v222
      %v224 = vrot.slane %v188, %v223
      %v225 = vmul.f32 %v205, %v224
      %v226 = vmul.f32 %v206, %v224
      %v227 = vmul.f32 %v207, %v224
      %v228 = vmul.f32 %v208, %v224
      %v229 = vmul.f32 %v209, %v224
      %v230 = vmul.f32 %v210, %v224
      %v231 = vmul.f32 %v211, %v224
      %v232 = vmul.f32 %v212, %v224
      %v233 = vmul.f32 %v213, %v224
      %v234 = vmul.f32 %v214, %v224
      %v235 = vmul.f32 %v215, %v224
      %v236 = vmul.f32 %v216, %v224
      %v237 = vmul.f32 %v217, %v224
      %v238 = vmul.f32 %v218, %v224
      %v239 = vmul.f32 %v219, %v224
      %v240 = vmul.f32 %v220, %v224
      %v241 = vlaneseq
      %v242 = vshrl.u32 %v241, 7
      %v243 = vsub.s32 1, %v242
      %v244 = vrot.slane %v188, %v243
      %v245 = vadd.f32 %v225, %v244
      %v246 = vadd.f32 %v226, %v244
      %v247 = vadd.f32 %v227, %v244
      %v248 = vadd.f32 %v228, %v244
      %v249 = vadd.f32 %v229, %v244
      %v250 = vadd.f32 %v230, %v244
      %v251 = vadd.f32 %v231, %v244
      %v252 = vadd.f32 %v232, %v244
      %v253 = vadd.f32 %v233, %v244
      %v254 = vadd.f32 %v234, %v244
      %v255 = vadd.f32 %v235, %v244
      %v256 = vadd.f32 %v236, %v244
      %v257 = vadd.f32 %v237, %v244
      %v258 = vadd.f32 %v238, %v244
      %v259 = vadd.f32 %v239, %v244
      %v260 = vadd.f32 %v240, %v244
      %v261 = vmax.f32 %v245, 0.0
      %v262 = vmax.f32 %v246, 0.0
      %v263 = vmax.f32 %v247, 0.0
      %v264 = vmax.f32 %v248, 0.0
      %v265 = vmax.f32 %v249, 0.0
      %v266 = vmax.f32 %v250, 0.0
      %v267 = vmax.f32 %v251, 0.0
      %v268 = vmax.f32 %v252, 0.0
      %v269 = vmax.f32 %v253, 0.0
      %v270 = vmax.f32 %v254, 0.0
      %v271 = vmax.f32 %v255, 0.0
      %v272 = vmax.f32 %v256, 0.0
      %v273 = vmax.f32 %v257, 0.0
      %v274 = vmax.f32 %v258, 0.0
      %v275 = vmax.f32 %v259, 0.0
      %v276 = vmax.f32 %v260, 0.0
      %vm277 = vcmask 64512
      %278 = vst.msk [vmem:[%s186] sm:$0xff] %vm277, %v261
      %279 = vst.msk [vmem:[%s186 + $0x8] sm:$0xff] %vm277, %v262
      %280 = vst.msk [vmem:[%s186 + $0x10] sm:$0xff] %vm277, %v263
      %281 = vst.msk [vmem:[%s186 + $0x18] sm:$0xff] %vm277, %v264
      %282 = vst.msk [vmem:[%s186 + $0x20] sm:$0xff] %vm277, %v265
      %283 = vst.msk [vmem:[%s186 + $0x28] sm:$0xff] %vm277, %v266
      %284 = vst.msk [vmem:[%s186 + $0x30] sm:$0xff] %vm277, %v267
      %285 = vst.msk [vmem:[%s186 + $0x38] sm:$0xff] %vm277, %v268
      %286 = vst.msk [vmem:[%s186 + $0x40] sm:$0xff] %vm277, %v269
      %287 = vst.msk [vmem:[%s186 + $0x48] sm:$0xff] %vm277, %v270
      %288 = vst.msk [vmem:[%s186 + $0x50] sm:$0xff] %vm277, %v271
      %289 = vst.msk [vmem:[%s186 + $0x58] sm:$0xff] %vm277, %v272
      %290 = vst.msk [vmem:[%s186 + $0x60] sm:$0xff] %vm277, %v273
      %291 = vst.msk [vmem:[%s186 + $0x68] sm:$0xff] %vm277, %v274
      %292 = vst.msk [vmem:[%s186 + $0x70] sm:$0xff] %vm277, %v275
      %293 = vst.msk [vmem:[%s186 + $0x78] sm:$0xff] %vm277, %v276
      %s294 = smul.u32 8, %s18
      %p295 = scmp.lt.s32.totalorder %s17, 1
      %s296 = scalar_select %p295, %s17, 1
      %p297 = scmp.lt.s32.totalorder %s294, 15
      %s298 = scalar_select %p297, %s294, 15
      %s299 = smul.addr %s298, 2
      %s300 = smul.addr %s296, 32
      %s301 = sadd.s32 %s299, %s300
      %s302 = smul.addr %s301, 8
      %s303 = scalar_lea.vmem %s2, %s302
      // Predicated region
      $region29: #{double_conv2d_bn_forward.5} parent=27 // pred_check
        %p304 = pneg %p94
      $region30: #{double_conv2d_bn_forward.5} parent=27 // pred_check_branch
        %306 = sbr.rel (%p304) target = $region32
      $region31: #{double_conv2d_bn_forward.5} parent=27 // pred_region
        %s307 = smul.u32 8, %s18
      $region32: #{double_conv2d_bn_forward.5} parent=27 // pred_fallthru
        _
    $region28: #{double_conv2d_bn_forward.5} parent=5 // pred_fallthru
      _
    %p308 = scmp.le.s32.totalorder 2, %s8
    // Predicated region
    $region33: #{double_conv2d_bn_forward.5} parent=5 // pred_check
      %p309 = pneg %p308
    $region34: #{double_conv2d_bn_forward.5} parent=5 // pred_check_branch
      %311 = sbr.rel (%p309) target = $region36
    $region35: #{double_conv2d_bn_forward.5} parent=5 // pred_region
      %s312 = ssub.s32 %s8, 2
      // Predicated region
      $region37: #{double_conv2d_bn_forward.5} parent=35 // pred_check
        %p313 = pneg %p100
      $region38: #{double_conv2d_bn_forward.5} parent=35 // pred_check_branch
        %315 = sbr.rel (%p313) target = $region40
      $region39: #{double_conv2d_bn_forward.5} parent=35 // pred_region
        %s316 = smul.u32 8, %s20
        %p317 = scmp.lt.s32.totalorder %s19, 1
        %s318 = scalar_select %p317, %s19, 1
        %p319 = scmp.lt.s32.totalorder %s316, 15
        %s320 = scalar_select %p319, %s316, 15
        %s321 = smul.addr %s320, 2
        %s322 = smul.addr %s318, 32
        %s323 = sadd.s32 %s321, %s322
        %s324 = smul.addr %s323, 8
        %s325 = scalar_lea.vmem %s2, %s324
      $region40: #{double_conv2d_bn_forward.5} parent=35 // pred_fallthru
        _
    $region36: #{double_conv2d_bn_forward.5} parent=5 // pred_fallthru
      _
  $region6: #{double_conv2d_bn_forward.5} parent=0 // loop_footer
    %s12 = sadd.s32 1, %s8
  $region7: #{double_conv2d_bn_forward.5} parent=0 // loop_footer_branch
    %7 = sbr.rel target = $region3
  $region8: #{double_conv2d_bn_forward.5} parent=0 // loop_exit
    _

// kernel: double_conv2d_bn_forward.3
$region0: #{double_conv2d_bn_forward.3}
  #allocation0 [shape = 'u32[]', space=smem, size = 0x4, offset = 0x4, fixed_abs, tag = 'smem constant byte address 0x4 - core index']
  #allocation1 [shape = 'u32[144,128]{1,0:T(1,128)}', space=vmem, size = 0x12000, scoped, tag = 'internal scratch']
  %s0 = inlined_call_operand.vmem [shape: bf16[2,326,4], index: 0, kind: input, shape index: {}]
  %s1 = inlined_call_operand.vmem [shape: bf16[128,128], index: 1, kind: input, shape index: {}]
  %s2 = inlined_call_operand.vmem [shape: bf16[2,288,8], index: 2, kind: output, shape index: {0}]
  %s3 = inlined_call_operand.vmem [shape: f32[2,2,8], index: 3, kind: output, shape index: {1}]
  %4 = xla_tuple %s2, %s3
  %s5 = sld [smem:[#allocation0]]
  $region49: #{double_conv2d_bn_forward.3} parent=0
    _
  %s7 = ssub.s32 1, %s5
  %s8 = scalar_select 0, %s7, %s5
  loop: start=0, step=1, limit=4
  $region2: #{double_conv2d_bn_forward.3} parent=0 // loop_pre_header
    _
  $region3: #{double_conv2d_bn_forward.3} parent=0 // loop_header
    %s10 = sphi 0, %s14
    %p11 = scmp.ge.s32.totalorder %s10, 4
    %s20 = sphi 0, %s22
    %s23 = sphi 0, %s20
    %s24 = sphi 0, %s23
    %s40 = sphi 0, %s24
    %s44 = sphi 0, %s44
    %s46 = sphi 0, %s44
    %s47 = sphi 0, %s46
    %s61 = sphi 0, %s47
    %s67 = sphi 0, %s69
    %s70 = sphi 0, %s67
    %s71 = sphi 0, %s70
    %s87 = sphi 0, %s71
    %s93 = sphi 0, %s95
    %s96 = sphi 0, %s93
    %s97 = sphi 0, %s96
    %s113 = sphi 0, %s97
  $region4: #{double_conv2d_bn_forward.3} parent=0 // loop_header_branch
    %13 = sbr.rel (%p11) target = $region8
  $region5: #{double_conv2d_bn_forward.3} parent=0 // loop_body
    %s15 = ssub.s32 %s10, 1
    %s16 = ssub.s32 %s10, 2
    %s17 = sadd.s32 %s10, 1
    %s18 = ssub.s32 %s10, %s17
    %p19 = scmp.eq.s32.totalorder %s18, 0
    %s21 = sadd.s32 %s20, 1
    %s22 = scalar_select %p19, %s20, %s21
    %p25 = pneg %p19
    %p26 = scmp.eq.s32.totalorder %s10, 1
    %p27 = por %p25, %p26
    %p28 = scmp.ne.s32.totalorder %s20, %s23
    %p29 = scmp.eq.s32.totalorder %s10, 0
    %p30 = por %p28, %p29
    %p31 = scmp.ne.s32.totalorder %s20, %s23
    %p32 = scmp.eq.s32.totalorder %s15, 1
    %p33 = por %p31, %p32
    %p34 = scmp.ne.s32.totalorder %s23, %s24
    %p35 = scmp.eq.s32.totalorder %s15, 0
    %p36 = por %p34, %p35
    %p37 = scmp.ne.s32.totalorder %s23, %s24
    %p38 = scmp.eq.s32.totalorder %s16, 1
    %p39 = por %p37, %p38
    %p41 = scmp.ne.s32.totalorder %s24, %s40
    %p42 = scmp.eq.s32.totalorder %s16, 0
    %p43 = por %p41, %p42
    %s45 = sadd.s32 %s44, 1
    %p48 = scmp.eq.s32.totalorder %s10, 1
    %p49 = scmp.ne.s32.totalorder %s44, %s46
    %p50 = scmp.eq.s32.totalorder %s10, 0
    %p51 = por %p49, %p50
    %p52 = scmp.ne.s32.totalorder %s44, %s46
    %p53 = scmp.eq.s32.totalorder %s15, 1
    %p54 = por %p52, %p53
    %p55 = scmp.ne.s32.totalorder %s46, %s47
    %p56 = scmp.eq.s32.totalorder %s15, 0
    %p57 = por %p55, %p56
    %p58 = scmp.ne.s32.totalorder %s46, %s47
    %p59 = scmp.eq.s32.totalorder %s16, 1
    %p60 = por %p58, %p59
    %p62 = scmp.ne.s32.totalorder %s47, %s61
    %p63 = scmp.eq.s32.totalorder %s16, 0
    %p64 = por %p62, %p63
    %s65 = ssub.s32 %s10, %s17
    %p66 = scmp.eq.s32.totalorder %s65, 0
    %s68 = sadd.s32 %s67, 1
    %s69 = scalar_select %p66, %s67, %s68
    %p72 = pneg %p66
    %p73 = scmp.eq.s32.totalorder %s10, 1
    %p74 = por %p72, %p73
    %p75 = scmp.ne.s32.totalorder %s67, %s70
    %p76 = scmp.eq.s32.totalorder %s10, 0
    %p77 = por %p75, %p76
    %p78 = scmp.ne.s32.totalorder %s67, %s70
    %p79 = scmp.eq.s32.totalorder %s15, 1
    %p80 = por %p78, %p79
    %p81 = scmp.ne.s32.totalorder %s70, %s71
    %p82 = scmp.eq.s32.totalorder %s15, 0
    %p83 = por %p81, %p82
    %p84 = scmp.ne.s32.totalorder %s70, %s71
    %p85 = scmp.eq.s32.totalorder %s16, 1
    %p86 = por %p84, %p85
    %p88 = scmp.ne.s32.totalorder %s71, %s87
    %p89 = scmp.eq.s32.totalorder %s16, 0
    %p90 = por %p88, %p89
    %s91 = ssub.s32 %s10, %s17
    %p92 = scmp.eq.s32.totalorder %s91, 0
    %s94 = sadd.s32 %s93, 1
    %s95 = scalar_select %p92, %s93, %s94
    %p98 = pneg %p92
    %p99 = scmp.eq.s32.totalorder %s10, 1
    %p100 = por %p98, %p99
    %p101 = scmp.ne.s32.totalorder %s93, %s96
    %p102 = scmp.eq.s32.totalorder %s10, 0
    %p103 = por %p101, %p102
    %p104 = scmp.ne.s32.totalorder %s93, %s96
    %p105 = scmp.eq.s32.totalorder %s15, 1
    %p106 = por %p104, %p105
    %p107 = scmp.ne.s32.totalorder %s96, %s97
    %p108 = scmp.eq.s32.totalorder %s15, 0
    %p109 = por %p107, %p108
    %p110 = scmp.ne.s32.totalorder %s96, %s97
    %p111 = scmp.eq.s32.totalorder %s16, 1
    %p112 = por %p110, %p111
    %p114 = scmp.ne.s32.totalorder %s97, %s113
    %p115 = scmp.eq.s32.totalorder %s16, 0
    %p116 = por %p114, %p115
    %p117 = scmp.le.s32.totalorder 1, %s10
    %p118 = scmp.lt.s32.totalorder %s10, 3
    %p119 = pnand %p117, %p118
    %p120 = pneg %p119
    // Predicated region
    $region9: #{double_conv2d_bn_forward.3} parent=5 // pred_check
      _
    $region10: #{double_conv2d_bn_forward.3} parent=5 // pred_check_branch
      %122 = sbr.rel (%p119) target = $region12
    $region11: #{double_conv2d_bn_forward.3} parent=5 // pred_region
      %s123 = ssub.s32 %s10, 1
      // Predicated region
      $region13: #{double_conv2d_bn_forward.3} parent=11 // pred_check
        %p124 = pneg %p57
      $region14: #{double_conv2d_bn_forward.3} parent=11 // pred_check_branch
        %126 = sbr.rel (%p124) target = $region16
      $region15: #{double_conv2d_bn_forward.3} parent=11 // pred_region
        _
      $region16: #{double_conv2d_bn_forward.3} parent=11 // pred_fallthru
        _
    $region12: #{double_conv2d_bn_forward.3} parent=5 // pred_fallthru
      _
    %p127 = scmp.lt.s32.totalorder %s10, 2
    // Predicated region
    $region17: #{double_conv2d_bn_forward.3} parent=5 // pred_check
      %p128 = pneg %p127
    $region18: #{double_conv2d_bn_forward.3} parent=5 // pred_check_branch
      %130 = sbr.rel (%p128) target = $region20
    $region19: #{double_conv2d_bn_forward.3} parent=5 // pred_region
      // Predicated region
      $region21: #{double_conv2d_bn_forward.3} parent=19 // pred_check
        %p131 = pneg %p30
      $region22: #{double_conv2d_bn_forward.3} parent=19 // pred_check_branch
        %133 = sbr.rel (%p131) target = $region24
      $region23: #{double_conv2d_bn_forward.3} parent=19 // pred_region
        %p134 = scmp.lt.s32.totalorder %s10, 1
        %s135 = scalar_select %p134, %s10, 1
        %s136 = smul.addr %s135, 41
        %s137 = smul.addr %s136, 4
        %s138 = scalar_lea.vmem %s0, %s137
      $region24: #{double_conv2d_bn_forward.3} parent=19 // pred_fallthru
        _
    $region20: #{double_conv2d_bn_forward.3} parent=5 // pred_fallthru
      _
    %p139 = scmp.le.s32.totalorder 1, %s10
    %p140 = scmp.lt.s32.totalorder %s10, 3
    %p141 = pnand %p139, %p140
    %p142 = pneg %p141
    // Predicated region
    $region25: #{double_conv2d_bn_forward.3} parent=5 // pred_check
      _
    $region26: #{double_conv2d_bn_forward.3} parent=5 // pred_check_branch
      %144 = sbr.rel (%p141) target = $region28
    $region27: #{double_conv2d_bn_forward.3} parent=5 // pred_region
      %s145 = ssub.s32 %s10, 1
      %p146 = scmp.lt.s32.totalorder %s15, 1
      %s147 = scalar_select %p146, %s15, 1
      %s148 = smul.addr %s147, 41
      %s149 = smul.addr %s148, 4
      %s150 = scalar_lea.vmem %s0, %s149
      %p151 = pneg %p36
      %p152 = pneg %p33
      %p153 = pneg %p57
      %p154 = pneg %p54
      %p155 = pneg %p83
      %p156 = pneg %p80
      %p157 = scmp.lt.s32.totalorder %s15, 1
      %s158 = scalar_select %p157, %s15, 1
      %s159 = smul.addr %s158, 36
      %s160 = smul.addr %s159, 4
      %s161 = scalar_lea.vmem %s2, %s160
      %p162 = pneg %p109
      %p163 = pneg %p106
      %p164 = scmp.lt.s32.totalorder %s15, 1
      %s165 = scalar_select %p164, %s15, 1
      %s166 = smul.addr %s165, 2
      %s167 = scalar_lea.vmem %s3, %s166
      %p168 = scmp.lt.s32.totalorder %s15, 1
      %s169 = scalar_select %p168, %s15, 1
      %s170 = smul.addr %s169, 41
      %s171 = smul.addr %s170, 4
      %s172 = scalar_lea.vmem %s0, %s171
      %p173 = scmp.lt.s32.totalorder %s15, 1
      %s174 = scalar_select %p173, %s15, 1
      %s175 = smul.addr %s174, 36
      %s176 = smul.addr %s175, 4
      %s177 = scalar_lea.vmem %s2, %s176
      %p178 = scmp.lt.s32.totalorder %s15, 1
      %s179 = scalar_select %p178, %s15, 1
      %s180 = smul.addr %s179, 2
      %s181 = scalar_lea.vmem %s3, %s180
      %v183 = vld [vmem:[%s172] sm:$0xf]
      %v184 = vld [vmem:[%s172 + $0x4] sm:$0xf]
      %v185 = vld [vmem:[%s172 + $0x8] sm:$0xf]
      %v186 = vld [vmem:[%s172 + $0xc] sm:$0xf]
      %v187 = vld [vmem:[%s172 + $0x10] sm:$0xf]
      %v188 = vld [vmem:[%s172 + $0x14] sm:$0xf]
      %v189 = vld [vmem:[%s172 + $0x18] sm:$0xf]
      %v190 = vld [vmem:[%s172 + $0x1c] sm:$0xf]
      %v191 = vld [vmem:[%s172 + $0x20] sm:$0xf]
      %v192 = vld [vmem:[%s172 + $0x24] sm:$0xf]
      %v193 = vld [vmem:[%s172 + $0x28] sm:$0xf]
      %v194 = vld [vmem:[%s172 + $0x2c] sm:$0xf]
      %v195 = vld [vmem:[%s172 + $0x30] sm:$0xf]
      %v196 = vld [vmem:[%s172 + $0x34] sm:$0xf]
      %v197 = vld [vmem:[%s172 + $0x38] sm:$0xf]
      %v198 = vld [vmem:[%s172 + $0x3c] sm:$0xf]
      %v199 = vld [vmem:[%s172 + $0x40] sm:$0xf]
      %v200 = vld [vmem:[%s172 + $0x44] sm:$0xf]
      %v201 = vld [vmem:[%s172 + $0x48] sm:$0xf]
      %v202 = vld [vmem:[%s172 + $0x4c] sm:$0xf]
      %v203 = vld [vmem:[%s172 + $0x50] sm:$0xf]
      %v204 = vld [vmem:[%s172 + $0x54] sm:$0xf]
      %v205 = vld [vmem:[%s172 + $0x58] sm:$0xf]
      %v206 = vld [vmem:[%s172 + $0x5c] sm:$0xf]
      %v207 = vld [vmem:[%s172 + $0x60] sm:$0xf]
      %v208 = vld [vmem:[%s172 + $0x64] sm:$0xf]
      %v209 = vld [vmem:[%s172 + $0x68] sm:$0xf]
      %v210 = vld [vmem:[%s172 + $0x6c] sm:$0xf]
      %v211 = vld [vmem:[%s172 + $0x70] sm:$0xf]
      %v212 = vld [vmem:[%s172 + $0x74] sm:$0xf]
      %v213 = vld [vmem:[%s172 + $0x78] sm:$0xf]
      %v214 = vld [vmem:[%s172 + $0x7c] sm:$0xf]
      %v215 = vld [vmem:[%s172 + $0x80] sm:$0xf]
      %v216 = vld [vmem:[%s172 + $0x84] sm:$0xf]
      %v217 = vld [vmem:[%s172 + $0x88] sm:$0xf]
      %v218 = vld [vmem:[%s172 + $0x8c] sm:$0xf]
      %v219 = vld [vmem:[%s172 + $0x90] sm:$0x1]
      %v220 = vld [vmem:[%s172] sm:$0xe]
      %v221 = vld [vmem:[%s172 + $0x8] sm:$0xe]
      %v222 = vld [vmem:[%s172 + $0x90] sm:$0xf]
      %v223 = vld [vmem:[%s172 + $0x94] sm:$0xf]
      %v224 = vld [vmem:[%s172 + $0x98] sm:$0x1]
      %v225 = vld [vmem:[%s172 + $0x98] sm:$0x3]
      %v226 = vld [vmem:[%s172 + $0x8] sm:$0xc]
      %v227 = vld [vmem:[%s172 + $0x10] sm:$0xc]
      %v228 = vld [vmem:[%s172 + $0x98] sm:$0xf]
      %v229 = vld [vmem:[%s172 + $0x9c] sm:$0xf]
      %v230 = vld [vmem:[%s172 + $0xa0] sm:$0x3]
      %v231 = vld [vmem:[%s172 + $0xa0] sm:$0x7]
      %v232 = vld [vmem:[%s172 + $0x10] sm:$0x8]
      %v269 = vunpack.c.l.b16 %v183
      %v270 = vunpack.c.l.b16 %v184
      %v271 = vunpack.c.l.b16 %v185
      %v272 = vunpack.c.l.b16 %v186
      %v273 = vunpack.c.l.b16 %v187
      %v274 = vunpack.c.l.b16 %v188
      %v275 = vunpack.c.l.b16 %v189
      %v276 = vunpack.c.l.b16 %v190
      %v277 = vunpack.c.l.b16 %v191
      %v278 = vunpack.c.l.b16 %v192
      %v279 = vunpack.c.l.b16 %v193
      %v280 = vunpack.c.l.b16 %v194
      %v281 = vunpack.c.l.b16 %v195
      %v282 = vunpack.c.l.b16 %v196
      %v283 = vunpack.c.l.b16 %v197
      %v284 = vunpack.c.l.b16 %v198
      %v285 = vunpack.c.l.b16 %v199
      %v286 = vunpack.c.l.b16 %v200
      %v287 = vunpack.c.l.b16 %v201
      %v288 = vunpack.c.l.b16 %v202
      %v289 = vunpack.c.l.b16 %v203
      %v290 = vunpack.c.l.b16 %v204
      %v291 = vunpack.c.l.b16 %v205
      %v292 = vunpack.c.l.b16 %v206
      %v293 = vunpack.c.l.b16 %v207
      %v294 = vunpack.c.l.b16 %v208
      %v295 = vunpack.c.l.b16 %v209
      %v296 = vunpack.c.l.b16 %v210
      %v297 = vunpack.c.l.b16 %v211
      %v298 = vunpack.c.l.b16 %v212
      %v299 = vunpack.c.l.b16 %v213
      %v300 = vunpack.c.l.b16 %v214
      %v301 = vunpack.c.l.b16 %v215
      %v302 = vunpack.c.l.b16 %v216
      %v303 = vunpack.c.l.b16 %v217
      %v304 = vunpack.c.l.b16 %v218
      %v305 = vpack.c.b16 %v270, %v269
      %v306 = vpack.c.b16 %v272, %v271
      %v307 = vpack.c.b16 %v274, %v273
      %v308 = vpack.c.b16 %v276, %v275
      %v309 = vpack.c.b16 %v278, %v277
      %v310 = vpack.c.b16 %v280, %v279
      %v311 = vpack.c.b16 %v282, %v281
      %v312 = vpack.c.b16 %v284, %v283
      %v313 = vpack.c.b16 %v286, %v285
      %v314 = vpack.c.b16 %v288, %v287
      %v315 = vpack.c.b16 %v290, %v289
      %v316 = vpack.c.b16 %v292, %v291
      %v317 = vpack.c.b16 %v294, %v293
      %v318 = vpack.c.b16 %v296, %v295
      %v319 = vpack.c.b16 %v298, %v297
      %v320 = vpack.c.b16 %v300, %v299
      %v321 = vpack.c.b16 %v302, %v301
      %v322 = vpack.c.b16 %v304, %v303
      %v324 = vunpack.c.l.b16 %v219
      %v325 = vpack.c.b16 %v324, %v324
      %vm326 = vsmask.f32 7424
      %v328 = vshrl.u32 %v305, 16
      %v330 = vshll.u32 %v305, 16
      %v332 = vrot.slane %v330, 1
      %v333 = vor.u32 %v328, %v332
      %v335 = vshll.u32 %v306, 16
      %v337 = vrot.slane %v335, 1
      %v338 = vsel %vm326, %v333, %v337
      %v339 = vshrl.u32 %v306, 16
      %v341 = vor.u32 %v339, %v337
      %v343 = vshll.u32 %v307, 16
      %v345 = vrot.slane %v343, 1
      %v346 = vsel %vm326, %v341, %v345
      %v347 = vshrl.u32 %v307, 16
      %v349 = vor.u32 %v347, %v345
      %v351 = vshll.u32 %v308, 16
      %v353 = vrot.slane %v351, 1
      %v354 = vsel %vm326, %v349, %v353
      %v355 = vshrl.u32 %v308, 16
      %v357 = vor.u32 %v355, %v353
      %v359 = vshll.u32 %v309, 16
      %v361 = vrot.slane %v359, 1
      %v362 = vsel %vm326, %v357, %v361
      %v363 = vshrl.u32 %v309, 16
      %v365 = vor.u32 %v363, %v361
      %v367 = vshll.u32 %v310, 16
      %v369 = vrot.slane %v367, 1
      %v370 = vsel %vm326, %v365, %v369
      %v371 = vshrl.u32 %v310, 16
      %v373 = vor.u32 %v371, %v369
      %v375 = vshll.u32 %v311, 16
      %v377 = vrot.slane %v375, 1
      %v378 = vsel %vm326, %v373, %v377
      %v379 = vshrl.u32 %v311, 16
      %v381 = vor.u32 %v379, %v377
      %v383 = vshll.u32 %v312, 16
      %v385 = vrot.slane %v383, 1
      %v386 = vsel %vm326, %v381, %v385
      %v387 = vshrl.u32 %v312, 16
      %v389 = vor.u32 %v387, %v385
      %v391 = vshll.u32 %v313, 16
      %v393 = vrot.slane %v391, 1
      %v394 = vsel %vm326, %v389, %v393
      %v395 = vshrl.u32 %v313, 16
      %v397 = vor.u32 %v395, %v393
      %v399 = vshll.u32 %v314, 16
      %v401 = vrot.slane %v399, 1
      %v402 = vsel %vm326, %v397, %v401
      %v403 = vshrl.u32 %v314, 16
      %v405 = vor.u32 %v403, %v401
      %v407 = vshll.u32 %v315, 16
      %v409 = vrot.slane %v407, 1
      %v410 = vsel %vm326, %v405, %v409
      %v411 = vshrl.u32 %v315, 16
      %v413 = vor.u32 %v411, %v409
      %v415 = vshll.u32 %v316, 16
      %v417 = vrot.slane %v415, 1
      %v418 = vsel %vm326, %v413, %v417
      %v419 = vshrl.u32 %v316, 16
      %v421 = vor.u32 %v419, %v417
      %v423 = vshll.u32 %v317, 16
      %v425 = vrot.slane %v423, 1
      %v426 = vsel %vm326, %v421, %v425
      %v427 = vshrl.u32 %v317, 16
      %v429 = vor.u32 %v427, %v425
      %v431 = vshll.u32 %v318, 16
      %v433 = vrot.slane %v431, 1
      %v434 = vsel %vm326, %v429, %v433
      %v435 = vshrl.u32 %v318, 16
      %v437 = vor.u32 %v435, %v433
      %v439 = vshll.u32 %v319, 16
      %v441 = vrot.slane %v439, 1
      %v442 = vsel %vm326, %v437, %v441
      %v443 = vshrl.u32 %v319, 16
      %v445 = vor.u32 %v443, %v441
      %v447 = vshll.u32 %v320, 16
      %v449 = vrot.slane %v447, 1
      %v450 = vsel %vm326, %v445, %v449
      %v451 = vshrl.u32 %v320, 16
      %v453 = vor.u32 %v451, %v449
      %v455 = vshll.u32 %v321, 16
      %v457 = vrot.slane %v455, 1
      %v458 = vsel %vm326, %v453, %v457
      %v459 = vshrl.u32 %v321, 16
      %v461 = vor.u32 %v459, %v457
      %v463 = vshll.u32 %v322, 16
      %v465 = vrot.slane %v463, 1
      %v466 = vsel %vm326, %v461, %v465
      %v467 = vshrl.u32 %v322, 16
      %v469 = vor.u32 %v467, %v465
      %v471 = vshll.u32 %v325, 16
      %v473 = vrot.slane %v471, 1
      %v474 = vsel %vm326, %v469, %v473
      %475 = vrot.lane.b32.xlu0 %v338, 4
      %v476 = vpop.permute.xlu0 %475
      %477 = vrot.lane.b32.xlu0 %v346, 4
      %v478 = vpop.permute.xlu0 %477
      %479 = vrot.lane.b32.xlu0 %v354, 4
      %v480 = vpop.permute.xlu0 %479
      %481 = vrot.lane.b32.xlu0 %v362, 4
      %v482 = vpop.permute.xlu0 %481
      %483 = vrot.lane.b32.xlu0 %v370, 4
      %v484 = vpop.permute.xlu0 %483
      %485 = vrot.lane.b32.xlu0 %v378, 4
      %v486 = vpop.permute.xlu0 %485
      %487 = vrot.lane.b32.xlu0 %v386, 4
      %v488 = vpop.permute.xlu0 %487
      %489 = vrot.lane.b32.xlu0 %v394, 4
      %v490 = vpop.permute.xlu0 %489
      %491 = vrot.lane.b32.xlu0 %v402, 4
      %v492 = vpop.permute.xlu0 %491
      %493 = vrot.lane.b32.xlu0 %v410, 4
      %v494 = vpop.permute.xlu0 %493
      %495 = vrot.lane.b32.xlu0 %v418, 4
      %v496 = vpop.permute.xlu0 %495
      %497 = vrot.lane.b32.xlu0 %v426, 4
      %v498 = vpop.permute.xlu0 %497
      %499 = vrot.lane.b32.xlu0 %v434, 4
      %v500 = vpop.permute.xlu0 %499
      %501 = vrot.lane.b32.xlu0 %v442, 4
      %v502 = vpop.permute.xlu0 %501
      %503 = vrot.lane.b32.xlu0 %v450, 4
      %v504 = vpop.permute.xlu0 %503
      %505 = vrot.lane.b32.xlu0 %v458, 4
      %v506 = vpop.permute.xlu0 %505
      %507 = vrot.lane.b32.xlu0 %v466, 4
      %v508 = vpop.permute.xlu0 %507
      %509 = vrot.lane.b32.xlu0 %v474, 4
      %v510 = vpop.permute.xlu0 %509
      %v512 = vunpack.c.l.b16 %v220
      %v513 = vpack.c.b16 %v270, %v512
      %vm514 = vcmask 1046528
      %v515 = vrot.slane %v513, 1
      %v516 = vrot.slane %v306, 1
      %v517 = vsel %vm514, %v515, %v516
      %v518 = vrot.slane %v307, 1
      %v519 = vsel %vm514, %v516, %v518
      %v520 = vrot.slane %v308, 1
      %v521 = vsel %vm514, %v518, %v520
      %v522 = vrot.slane %v309, 1
      %v523 = vsel %vm514, %v520, %v522
      %v524 = vrot.slane %v310, 1
      %v525 = vsel %vm514, %v522, %v524
      %v526 = vrot.slane %v311, 1
      %v527 = vsel %vm514, %v524, %v526
      %v528 = vrot.slane %v312, 1
      %v529 = vsel %vm514, %v526, %v528
      %v530 = vrot.slane %v313, 1
      %v531 = vsel %vm514, %v528, %v530
      %v532 = vrot.slane %v314, 1
      %v533 = vsel %vm514, %v530, %v532
      %v534 = vrot.slane %v315, 1
      %v535 = vsel %vm514, %v532, %v534
      %v536 = vrot.slane %v316, 1
      %v537 = vsel %vm514, %v534, %v536
      %v538 = vrot.slane %v317, 1
      %v539 = vsel %vm514, %v536, %v538
      %v540 = vrot.slane %v318, 1
      %v541 = vsel %vm514, %v538, %v540
      %v542 = vrot.slane %v319, 1
      %v543 = vsel %vm514, %v540, %v542
      %v544 = vrot.slane %v320, 1
      %v545 = vsel %vm514, %v542, %v544
      %v546 = vrot.slane %v321, 1
      %v547 = vsel %vm514, %v544, %v546
      %v548 = vrot.slane %v322, 1
      %v549 = vsel %vm514, %v546, %v548
      %v550 = vrot.slane %v325, 1
      %v551 = vsel %vm514, %v548, %v550
      %552 = vrot.lane.b32.xlu0 %v517, 8
      %v553 = vpop.permute.xlu0 %552
      %554 = vrot.lane.b32.xlu0 %v519, 8
      %v555 = vpop.permute.xlu0 %554
      %556 = vrot.lane.b32.xlu0 %v521, 8
      %v557 = vpop.permute.xlu0 %556
      %558 = vrot.lane.b32.xlu0 %v523, 8
      %v559 = vpop.permute.xlu0 %558
      %560 = vrot.lane.b32.xlu0 %v525, 8
      %v561 = vpop.permute.xlu0 %560
      %562 = vrot.lane.b32.xlu0 %v527, 8
      %v563 = vpop.permute.xlu0 %562
      %564 = vrot.lane.b32.xlu0 %v529, 8
      %v565 = vpop.permute.xlu0 %564
      %566 = vrot.lane.b32.xlu0 %v531, 8
      %v567 = vpop.permute.xlu0 %566
      %568 = vrot.lane.b32.xlu0 %v533, 8
      %v569 = vpop.permute.xlu0 %568
      %570 = vrot.lane.b32.xlu0 %v535, 8
      %v571 = vpop.permute.xlu0 %570
      %572 = vrot.lane.b32.xlu0 %v537, 8
      %v573 = vpop.permute.xlu0 %572
      %574 = vrot.lane.b32.xlu0 %v539, 8
      %v575 = vpop.permute.xlu0 %574
      %576 = vrot.lane.b32.xlu0 %v541, 8
      %v577 = vpop.permute.xlu0 %576
      %578 = vrot.lane.b32.xlu0 %v543, 8
      %v579 = vpop.permute.xlu0 %578
      %580 = vrot.lane.b32.xlu0 %v545, 8
      %v581 = vpop.permute.xlu0 %580
      %582 = vrot.lane.b32.xlu0 %v547, 8
      %v583 = vpop.permute.xlu0 %582
      %584 = vrot.lane.b32.xlu0 %v549, 8
      %v585 = vpop.permute.xlu0 %584
      %586 = vrot.lane.b32.xlu0 %v551, 8
      %v587 = vpop.permute.xlu0 %586
      %v592 = vunpack.c.l.b16 %v221
      %v593 = vunpack.c.l.b16 %v222
      %v594 = vunpack.c.l.b16 %v223
      %v595 = vunpack.c.l.b16 %v224
      %v596 = vpack.c.b16 %v272, %v592
      %v597 = vpack.c.b16 %v594, %v593
      %v598 = vpack.c.b16 %v595, %v595
      %v599 = vrot.slane %v596, 1
      %v600 = vsel %vm514, %v599, %v518
      %v601 = vrot.slane %v597, 1
      %v602 = vsel %vm514, %v548, %v601
      %v603 = vrot.slane %v598, 1
      %v604 = vsel %vm514, %v601, %v603
      %605 = vrot.lane.b32.xlu0 %v600, 12
      %v606 = vpop.permute.xlu0 %605
      %607 = vrot.lane.b32.xlu0 %v521, 12
      %v608 = vpop.permute.xlu0 %607
      %609 = vrot.lane.b32.xlu0 %v523, 12
      %v610 = vpop.permute.xlu0 %609
      %611 = vrot.lane.b32.xlu0 %v525, 12
      %v612 = vpop.permute.xlu0 %611
      %613 = vrot.lane.b32.xlu0 %v527, 12
      %v614 = vpop.permute.xlu0 %613
      %615 = vrot.lane.b32.xlu0 %v529, 12
      %v616 = vpop.permute.xlu0 %615
      %617 = vrot.lane.b32.xlu0 %v531, 12
      %v618 = vpop.permute.xlu0 %617
      %619 = vrot.lane.b32.xlu0 %v533, 12
      %v620 = vpop.permute.xlu0 %619
      %621 = vrot.lane.b32.xlu0 %v535, 12
      %v622 = vpop.permute.xlu0 %621
      %623 = vrot.lane.b32.xlu0 %v537, 12
      %v624 = vpop.permute.xlu0 %623
      %625 = vrot.lane.b32.xlu0 %v539, 12
      %v626 = vpop.permute.xlu0 %625
      %627 = vrot.lane.b32.xlu0 %v541, 12
      %v628 = vpop.permute.xlu0 %627
      %629 = vrot.lane.b32.xlu0 %v543, 12
      %v630 = vpop.permute.xlu0 %629
      %631 = vrot.lane.b32.xlu0 %v545, 12
      %v632 = vpop.permute.xlu0 %631
      %633 = vrot.lane.b32.xlu0 %v547, 12
      %v634 = vpop.permute.xlu0 %633
      %635 = vrot.lane.b32.xlu0 %v549, 12
      %v636 = vpop.permute.xlu0 %635
      %637 = vrot.lane.b32.xlu0 %v602, 12
      %v638 = vpop.permute.xlu0 %637
      %639 = vrot.lane.b32.xlu0 %v604, 12
      %v640 = vpop.permute.xlu0 %639
      %v642 = vunpack.c.l.b16 %v225
      %v643 = vpack.c.b16 %v642, %v642
      %vm644 = vsmask.f32 6400
      %v646 = vshrl.u32 %v596, 16
      %v648 = vrot.slane %v646, 1
      %v649 = vshll.u32 %v596, 16
      %v651 = vrot.slane %v649, 2
      %v652 = vor.u32 %v648, %v651
      %v653 = vrot.slane %v347, 1
      %v654 = vrot.slane %v343, 2
      %v655 = vor.u32 %v653, %v654
      %v656 = vsel %vm644, %v652, %v655
      %v657 = vrot.slane %v355, 1
      %v658 = vrot.slane %v351, 2
      %v659 = vor.u32 %v657, %v658
      %v660 = vsel %vm644, %v655, %v659
      %v661 = vrot.slane %v363, 1
      %v662 = vrot.slane %v359, 2
      %v663 = vor.u32 %v661, %v662
      %v664 = vsel %vm644, %v659, %v663
      %v665 = vrot.slane %v371, 1
      %v666 = vrot.slane %v367, 2
      %v667 = vor.u32 %v665, %v666
      %v668 = vsel %vm644, %v663, %v667
      %v669 = vrot.slane %v379, 1
      %v670 = vrot.slane %v375, 2
      %v671 = vor.u32 %v669, %v670
      %v672 = vsel %vm644, %v667, %v671
      %v673 = vrot.slane %v387, 1
      %v674 = vrot.slane %v383, 2
      %v675 = vor.u32 %v673, %v674
      %v676 = vsel %vm644, %v671, %v675
      %v677 = vrot.slane %v395, 1
      %v678 = vrot.slane %v391, 2
      %v679 = vor.u32 %v677, %v678
      %v680 = vsel %vm644, %v675, %v679
      %v681 = vrot.slane %v403, 1
      %v682 = vrot.slane %v399, 2
      %v683 = vor.u32 %v681, %v682
      %v684 = vsel %vm644, %v679, %v683
      %v685 = vrot.slane %v411, 1
      %v686 = vrot.slane %v407, 2
      %v687 = vor.u32 %v685, %v686
      %v688 = vsel %vm644, %v683, %v687
      %v689 = vrot.slane %v419, 1
      %v690 = vrot.slane %v415, 2
      %v691 = vor.u32 %v689, %v690
      %v692 = vsel %vm644, %v687, %v691
      %v693 = vrot.slane %v427, 1
      %v694 = vrot.slane %v423, 2
      %v695 = vor.u32 %v693, %v694
      %v696 = vsel %vm644, %v691, %v695
      %v697 = vrot.slane %v435, 1
      %v698 = vrot.slane %v431, 2
      %v699 = vor.u32 %v697, %v698
      %v700 = vsel %vm644, %v695, %v699
      %v701 = vrot.slane %v443, 1
      %v702 = vrot.slane %v439, 2
      %v703 = vor.u32 %v701, %v702
      %v704 = vsel %vm644, %v699, %v703
      %v705 = vrot.slane %v451, 1
      %v706 = vrot.slane %v447, 2
      %v707 = vor.u32 %v705, %v706
      %v708 = vsel %vm644, %v703, %v707
      %v709 = vrot.slane %v459, 1
      %v710 = vrot.slane %v455, 2
      %v711 = vor.u32 %v709, %v710
      %v712 = vsel %vm644, %v707, %v711
      %v713 = vrot.slane %v467, 1
      %v714 = vrot.slane %v463, 2
      %v715 = vor.u32 %v713, %v714
      %v716 = vsel %vm644, %v711, %v715
      %v718 = vshrl.u32 %v597, 16
      %v720 = vrot.slane %v718, 1
      %v721 = vshll.u32 %v597, 16
      %v723 = vrot.slane %v721, 2
      %v724 = vor.u32 %v720, %v723
      %v725 = vsel %vm644, %v715, %v724
      %v727 = vshrl.u32 %v643, 16
      %v729 = vrot.slane %v727, 1
      %v730 = vshll.u32 %v643, 16
      %v732 = vrot.slane %v730, 2
      %v733 = vor.u32 %v729, %v732
      %v734 = vsel %vm644, %v724, %v733
      %735 = vrot.lane.b32.xlu0 %v656, 16
      %v736 = vpop.permute.xlu0 %735
      %737 = vrot.lane.b32.xlu0 %v660, 16
      %v738 = vpop.permute.xlu0 %737
      %739 = vrot.lane.b32.xlu0 %v664, 16
      %v740 = vpop.permute.xlu0 %739
      %741 = vrot.lane.b32.xlu0 %v668, 16
      %v742 = vpop.permute.xlu0 %741
      %743 = vrot.lane.b32.xlu0 %v672, 16
      %v744 = vpop.permute.xlu0 %743
      %745 = vrot.lane.b32.xlu0 %v676, 16
      %v746 = vpop.permute.xlu0 %745
      %747 = vrot.lane.b32.xlu0 %v680, 16
      %v748 = vpop.permute.xlu0 %747
      %749 = vrot.lane.b32.xlu0 %v684, 16
      %v750 = vpop.permute.xlu0 %749
      %751 = vrot.lane.b32.xlu0 %v688, 16
      %v752 = vpop.permute.xlu0 %751
      %753 = vrot.lane.b32.xlu0 %v692, 16
      %v754 = vpop.permute.xlu0 %753
      %755 = vrot.lane.b32.xlu0 %v696, 16
      %v756 = vpop.permute.xlu0 %755
      %757 = vrot.lane.b32.xlu0 %v700, 16
      %v758 = vpop.permute.xlu0 %757
      %759 = vrot.lane.b32.xlu0 %v704, 16
      %v760 = vpop.permute.xlu0 %759
      %761 = vrot.lane.b32.xlu0 %v708, 16
      %v762 = vpop.permute.xlu0 %761
      %763 = vrot.lane.b32.xlu0 %v712, 16
      %v764 = vpop.permute.xlu0 %763
      %765 = vrot.lane.b32.xlu0 %v716, 16
      %v766 = vpop.permute.xlu0 %765
      %767 = vrot.lane.b32.xlu0 %v725, 16
      %v768 = vpop.permute.xlu0 %767
      %769 = vrot.lane.b32.xlu0 %v734, 16
      %v770 = vpop.permute.xlu0 %769
      %v772 = vunpack.c.l.b16 %v226
      %v773 = vpack.c.b16 %v272, %v772
      %vm774 = vcmask 1045504
      %v775 = vrot.slane %v773, 2
      %v776 = vrot.slane %v307, 2
      %v777 = vsel %vm774, %v775, %v776
      %v778 = vrot.slane %v308, 2
      %v779 = vsel %vm774, %v776, %v778
      %v780 = vrot.slane %v309, 2
      %v781 = vsel %vm774, %v778, %v780
      %v782 = vrot.slane %v310, 2
      %v783 = vsel %vm774, %v780, %v782
      %v784 = vrot.slane %v311, 2
      %v785 = vsel %vm774, %v782, %v784
      %v786 = vrot.slane %v312, 2
      %v787 = vsel %vm774, %v784, %v786
      %v788 = vrot.slane %v313, 2
      %v789 = vsel %vm774, %v786, %v788
      %v790 = vrot.slane %v314, 2
      %v791 = vsel %vm774, %v788, %v790
      %v792 = vrot.slane %v315, 2
      %v793 = vsel %vm774, %v790, %v792
      %v794 = vrot.slane %v316, 2
      %v795 = vsel %vm774, %v792, %v794
      %v796 = vrot.slane %v317, 2
      %v797 = vsel %vm774, %v794, %v796
      %v798 = vrot.slane %v318, 2
      %v799 = vsel %vm774, %v796, %v798
      %v800 = vrot.slane %v319, 2
      %v801 = vsel %vm774, %v798, %v800
      %v802 = vrot.slane %v320, 2
      %v803 = vsel %vm774, %v800, %v802
      %v804 = vrot.slane %v321, 2
      %v805 = vsel %vm774, %v802, %v804
      %v806 = vrot.slane %v322, 2
      %v807 = vsel %vm774, %v804, %v806
      %v808 = vrot.slane %v597, 2
      %v809 = vsel %vm774, %v806, %v808
      %v810 = vrot.slane %v643, 2
      %v811 = vsel %vm774, %v808, %v810
      %812 = vrot.lane.b32.xlu0 %v777, 20
      %v813 = vpop.permute.xlu0 %812
      %814 = vrot.lane.b32.xlu0 %v779, 20
      %v815 = vpop.permute.xlu0 %814
      %816 = vrot.lane.b32.xlu0 %v781, 20
      %v817 = vpop.permute.xlu0 %816
      %818 = vrot.lane.b32.xlu0 %v783, 20
      %v819 = vpop.permute.xlu0 %818
      %820 = vrot.lane.b32.xlu0 %v785, 20
      %v821 = vpop.permute.xlu0 %820
      %822 = vrot.lane.b32.xlu0 %v787, 20
      %v823 = vpop.permute.xlu0 %822
      %824 = vrot.lane.b32.xlu0 %v789, 20
      %v825 = vpop.permute.xlu0 %824
      %826 = vrot.lane.b32.xlu0 %v791, 20
      %v827 = vpop.permute.xlu0 %826
      %828 = vrot.lane.b32.xlu0 %v793, 20
      %v829 = vpop.permute.xlu0 %828
      %830 = vrot.lane.b32.xlu0 %v795, 20
      %v831 = vpop.permute.xlu0 %830
      %832 = vrot.lane.b32.xlu0 %v797, 20
      %v833 = vpop.permute.xlu0 %832
      %834 = vrot.lane.b32.xlu0 %v799, 20
      %v835 = vpop.permute.xlu0 %834
      %836 = vrot.lane.b32.xlu0 %v801, 20
      %v837 = vpop.permute.xlu0 %836
      %838 = vrot.lane.b32.xlu0 %v803, 20
      %v839 = vpop.permute.xlu0 %838
      %840 = vrot.lane.b32.xlu0 %v805, 20
      %v841 = vpop.permute.xlu0 %840
      %842 = vrot.lane.b32.xlu0 %v807, 20
      %v843 = vpop.permute.xlu0 %842
      %844 = vrot.lane.b32.xlu0 %v809, 20
      %v845 = vpop.permute.xlu0 %844
      %846 = vrot.lane.b32.xlu0 %v811, 20
      %v847 = vpop.permute.xlu0 %846
      %v852 = vunpack.c.l.b16 %v227
      %v853 = vunpack.c.l.b16 %v228
      %v854 = vunpack.c.l.b16 %v229
      %v855 = vunpack.c.l.b16 %v230
      %v856 = vpack.c.b16 %v274, %v852
      %v857 = vpack.c.b16 %v854, %v853
      %v858 = vpack.c.b16 %v855, %v855
      %v859 = vrot.slane %v856, 2
      %v860 = vsel %vm774, %v859, %v778
      %v861 = vrot.slane %v857, 2
      %v862 = vsel %vm774, %v808, %v861
      %v863 = vrot.slane %v858, 2
      %v864 = vsel %vm774, %v861, %v863
      %865 = vrot.lane.b32.xlu0 %v860, 24
      %v866 = vpop.permute.xlu0 %865
      %867 = vrot.lane.b32.xlu0 %v781, 24
      %v868 = vpop.permute.xlu0 %867
      %869 = vrot.lane.b32.xlu0 %v783, 24
      %v870 = vpop.permute.xlu0 %869
      %871 = vrot.lane.b32.xlu0 %v785, 24
      %v872 = vpop.permute.xlu0 %871
      %873 = vrot.lane.b32.xlu0 %v787, 24
      %v874 = vpop.permute.xlu0 %873
      %875 = vrot.lane.b32.xlu0 %v789, 24
      %v876 = vpop.permute.xlu0 %875
      %877 = vrot.lane.b32.xlu0 %v791, 24
      %v878 = vpop.permute.xlu0 %877
      %879 = vrot.lane.b32.xlu0 %v793, 24
      %v880 = vpop.permute.xlu0 %879
      %881 = vrot.lane.b32.xlu0 %v795, 24
      %v882 = vpop.permute.xlu0 %881
      %883 = vrot.lane.b32.xlu0 %v797, 24
      %v884 = vpop.permute.xlu0 %883
      %885 = vrot.lane.b32.xlu0 %v799, 24
      %v886 = vpop.permute.xlu0 %885
      %887 = vrot.lane.b32.xlu0 %v801, 24
      %v888 = vpop.permute.xlu0 %887
      %889 = vrot.lane.b32.xlu0 %v803, 24
      %v890 = vpop.permute.xlu0 %889
      %891 = vrot.lane.b32.xlu0 %v805, 24
      %v892 = vpop.permute.xlu0 %891
      %893 = vrot.lane.b32.xlu0 %v807, 24
      %v894 = vpop.permute.xlu0 %893
      %895 = vrot.lane.b32.xlu0 %v809, 24
      %v896 = vpop.permute.xlu0 %895
      %897 = vrot.lane.b32.xlu0 %v862, 24
      %v898 = vpop.permute.xlu0 %897
      %899 = vrot.lane.b32.xlu0 %v864, 24
      %v900 = vpop.permute.xlu0 %899
      %v902 = vunpack.c.l.b16 %v231
      %v903 = vpack.c.b16 %v902, %v902
      %vm904 = vsmask.f32 5376
      %v906 = vshrl.u32 %v856, 16
      %v908 = vrot.slane %v906, 2
      %v909 = vshll.u32 %v856, 16
      %v911 = vrot.slane %v909, 3
      %v912 = vor.u32 %v908, %v911
      %v913 = vrot.slane %v355, 2
      %v914 = vrot.slane %v351, 3
      %v915 = vor.u32 %v913, %v914
      %v916 = vsel %vm904, %v912, %v915
      %v917 = vrot.slane %v363, 2
      %v918 = vrot.slane %v359, 3
      %v919 = vor.u32 %v917, %v918
      %v920 = vsel %vm904, %v915, %v919
      %v921 = vrot.slane %v371, 2
      %v922 = vrot.slane %v367, 3
      %v923 = vor.u32 %v921, %v922
      %v924 = vsel %vm904, %v919, %v923
      %v925 = vrot.slane %v379, 2
      %v926 = vrot.slane %v375, 3
      %v927 = vor.u32 %v925, %v926
      %v928 = vsel %vm904, %v923, %v927
      %v929 = vrot.slane %v387, 2
      %v930 = vrot.slane %v383, 3
      %v931 = vor.u32 %v929, %v930
      %v932 = vsel %vm904, %v927, %v931
      %v933 = vrot.slane %v395, 2
      %v934 = vrot.slane %v391, 3
      %v935 = vor.u32 %v933, %v934
      %v936 = vsel %vm904, %v931, %v935
      %v937 = vrot.slane %v403, 2
      %v938 = vrot.slane %v399, 3
      %v939 = vor.u32 %v937, %v938
      %v940 = vsel %vm904, %v935, %v939
      %v941 = vrot.slane %v411, 2
      %v942 = vrot.slane %v407, 3
      %v943 = vor.u32 %v941, %v942
      %v944 = vsel %vm904, %v939, %v943
      %v945 = vrot.slane %v419, 2
      %v946 = vrot.slane %v415, 3
      %v947 = vor.u32 %v945, %v946
      %v948 = vsel %vm904, %v943, %v947
      %v949 = vrot.slane %v427, 2
      %v950 = vrot.slane %v423, 3
      %v951 = vor.u32 %v949, %v950
      %v952 = vsel %vm904, %v947, %v951
      %v953 = vrot.slane %v435, 2
      %v954 = vrot.slane %v431, 3
      %v955 = vor.u32 %v953, %v954
      %v956 = vsel %vm904, %v951, %v955
      %v957 = vrot.slane %v443, 2
      %v958 = vrot.slane %v439, 3
      %v959 = vor.u32 %v957, %v958
      %v960 = vsel %vm904, %v955, %v959
      %v961 = vrot.slane %v451, 2
      %v962 = vrot.slane %v447, 3
      %v963 = vor.u32 %v961, %v962
      %v964 = vsel %vm904, %v959, %v963
      %v965 = vrot.slane %v459, 2
      %v966 = vrot.slane %v455, 3
      %v967 = vor.u32 %v965, %v966
      %v968 = vsel %vm904, %v963, %v967
      %v969 = vrot.slane %v467, 2
      %v970 = vrot.slane %v463, 3
      %v971 = vor.u32 %v969, %v970
      %v972 = vsel %vm904, %v967, %v971
      %v973 = vrot.slane %v718, 2
      %v974 = vrot.slane %v721, 3
      %v975 = vor.u32 %v973, %v974
      %v976 = vsel %vm904, %v971, %v975
      %v978 = vshrl.u32 %v857, 16
      %v980 = vrot.slane %v978, 2
      %v981 = vshll.u32 %v857, 16
      %v983 = vrot.slane %v981, 3
      %v984 = vor.u32 %v980, %v983
      %v985 = vsel %vm904, %v975, %v984
      %v987 = vshrl.u32 %v903, 16
      %v989 = vrot.slane %v987, 2
      %v990 = vshll.u32 %v903, 16
      %v992 = vrot.slane %v990, 3
      %v993 = vor.u32 %v989, %v992
      %v994 = vsel %vm904, %v984, %v993
      %995 = vrot.lane.b32.xlu0 %v916, 28
      %v996 = vpop.permute.xlu0 %995
      %997 = vrot.lane.b32.xlu0 %v920, 28
      %v998 = vpop.permute.xlu0 %997
      %999 = vrot.lane.b32.xlu0 %v924, 28
      %v1000 = vpop.permute.xlu0 %999
      %1001 = vrot.lane.b32.xlu0 %v928, 28
      %v1002 = vpop.permute.xlu0 %1001
      %1003 = vrot.lane.b32.xlu0 %v932, 28
      %v1004 = vpop.permute.xlu0 %1003
      %1005 = vrot.lane.b32.xlu0 %v936, 28
      %v1006 = vpop.permute.xlu0 %1005
      %1007 = vrot.lane.b32.xlu0 %v940, 28
      %v1008 = vpop.permute.xlu0 %1007
      %1009 = vrot.lane.b32.xlu0 %v944, 28
      %v1010 = vpop.permute.xlu0 %1009
      %1011 = vrot.lane.b32.xlu0 %v948, 28
      %v1012 = vpop.permute.xlu0 %1011
      %1013 = vrot.lane.b32.xlu0 %v952, 28
      %v1014 = vpop.permute.xlu0 %1013
      %1015 = vrot.lane.b32.xlu0 %v956, 28
      %v1016 = vpop.permute.xlu0 %1015
      %1017 = vrot.lane.b32.xlu0 %v960, 28
      %v1018 = vpop.permute.xlu0 %1017
      %1019 = vrot.lane.b32.xlu0 %v964, 28
      %v1020 = vpop.permute.xlu0 %1019
      %1021 = vrot.lane.b32.xlu0 %v968, 28
      %v1022 = vpop.permute.xlu0 %1021
      %1023 = vrot.lane.b32.xlu0 %v972, 28
      %v1024 = vpop.permute.xlu0 %1023
      %1025 = vrot.lane.b32.xlu0 %v976, 28
      %v1026 = vpop.permute.xlu0 %1025
      %1027 = vrot.lane.b32.xlu0 %v985, 28
      %v1028 = vpop.permute.xlu0 %1027
      %1029 = vrot.lane.b32.xlu0 %v994, 28
      %v1030 = vpop.permute.xlu0 %1029
      %v1032 = vunpack.c.l.b16 %v232
      %v1033 = vpack.c.b16 %v274, %v1032
      %vm1034 = vcmask 1044480
      %v1035 = vrot.slane %v1033, 3
      %v1036 = vrot.slane %v308, 3
      %v1037 = vsel %vm1034, %v1035, %v1036
      %v1038 = vrot.slane %v309, 3
      %v1039 = vsel %vm1034, %v1036, %v1038
      %v1040 = vrot.slane %v310, 3
      %v1041 = vsel %vm1034, %v1038, %v1040
      %v1042 = vrot.slane %v311, 3
      %v1043 = vsel %vm1034, %v1040, %v1042
      %v1044 = vrot.slane %v312, 3
      %v1045 = vsel %vm1034, %v1042, %v1044
      %v1046 = vrot.slane %v313, 3
      %v1047 = vsel %vm1034, %v1044, %v1046
      %v1048 = vrot.slane %v314, 3
      %v1049 = vsel %vm1034, %v1046, %v1048
      %v1050 = vrot.slane %v315, 3
      %v1051 = vsel %vm1034, %v1048, %v1050
      %v1052 = vrot.slane %v316, 3
      %v1053 = vsel %vm1034, %v1050, %v1052
      %v1054 = vrot.slane %v317, 3
      %v1055 = vsel %vm1034, %v1052, %v1054
      %v1056 = vrot.slane %v318, 3
      %v1057 = vsel %vm1034, %v1054, %v1056
      %v1058 = vrot.slane %v319, 3
      %v1059 = vsel %vm1034, %v1056, %v1058
      %v1060 = vrot.slane %v320, 3
      %v1061 = vsel %vm1034, %v1058, %v1060
      %v1062 = vrot.slane %v321, 3
      %v1063 = vsel %vm1034, %v1060, %v1062
      %v1064 = vrot.slane %v322, 3
      %v1065 = vsel %vm1034, %v1062, %v1064
      %v1066 = vrot.slane %v597, 3
      %v1067 = vsel %vm1034, %v1064, %v1066
      %v1068 = vrot.slane %v857, 3
      %v1069 = vsel %vm1034, %v1066, %v1068
      %v1070 = vrot.slane %v903, 3
      %v1071 = vsel %vm1034, %v1068, %v1070
      %1072 = vrot.lane.b32.xlu0 %v1037, 32
      %v1073 = vpop.permute.xlu0 %1072
      %1074 = vrot.lane.b32.xlu0 %v1039, 32
      %v1075 = vpop.permute.xlu0 %1074
      %1076 = vrot.lane.b32.xlu0 %v1041, 32
      %v1077 = vpop.permute.xlu0 %1076
      %1078 = vrot.lane.b32.xlu0 %v1043, 32
      %v1079 = vpop.permute.xlu0 %1078
      %1080 = vrot.lane.b32.xlu0 %v1045, 32
      %v1081 = vpop.permute.xlu0 %1080
      %1082 = vrot.lane.b32.xlu0 %v1047, 32
      %v1083 = vpop.permute.xlu0 %1082
      %1084 = vrot.lane.b32.xlu0 %v1049, 32
      %v1085 = vpop.permute.xlu0 %1084
      %1086 = vrot.lane.b32.xlu0 %v1051, 32
      %v1087 = vpop.permute.xlu0 %1086
      %1088 = vrot.lane.b32.xlu0 %v1053, 32
      %v1089 = vpop.permute.xlu0 %1088
      %1090 = vrot.lane.b32.xlu0 %v1055, 32
      %v1091 = vpop.permute.xlu0 %1090
      %1092 = vrot.lane.b32.xlu0 %v1057, 32
      %v1093 = vpop.permute.xlu0 %1092
      %1094 = vrot.lane.b32.xlu0 %v1059, 32
      %v1095 = vpop.permute.xlu0 %1094
      %1096 = vrot.lane.b32.xlu0 %v1061, 32
      %v1097 = vpop.permute.xlu0 %1096
      %1098 = vrot.lane.b32.xlu0 %v1063, 32
      %v1099 = vpop.permute.xlu0 %1098
      %1100 = vrot.lane.b32.xlu0 %v1065, 32
      %v1101 = vpop.permute.xlu0 %1100
      %1102 = vrot.lane.b32.xlu0 %v1067, 32
      %v1103 = vpop.permute.xlu0 %1102
      %1104 = vrot.lane.b32.xlu0 %v1069, 32
      %v1105 = vpop.permute.xlu0 %1104
      %1106 = vrot.lane.b32.xlu0 %v1071, 32
      %v1107 = vpop.permute.xlu0 %1106
      %vm1108 = vcmask 31744
      %v1110 = vsel %vm1108, %v305, %v476
      %v1112 = vsel %vm1108, %v306, %v478
      %v1114 = vsel %vm1108, %v307, %v480
      %v1116 = vsel %vm1108, %v308, %v482
      %v1118 = vsel %vm1108, %v309, %v484
      %v1120 = vsel %vm1108, %v310, %v486
      %v1122 = vsel %vm1108, %v311, %v488
      %v1124 = vsel %vm1108, %v312, %v490
      %v1126 = vsel %vm1108, %v313, %v492
      %v1128 = vsel %vm1108, %v314, %v494
      %v1130 = vsel %vm1108, %v315, %v496
      %v1132 = vsel %vm1108, %v316, %v498
      %v1134 = vsel %vm1108, %v317, %v500
      %v1136 = vsel %vm1108, %v318, %v502
      %v1138 = vsel %vm1108, %v319, %v504
      %v1140 = vsel %vm1108, %v320, %v506
      %v1142 = vsel %vm1108, %v321, %v508
      %v1144 = vsel %vm1108, %v322, %v510
      %vm1145 = vcmask 64512
      %v1147 = vsel %vm1145, %v1110, %v553
      %v1149 = vsel %vm1145, %v1112, %v555
      %v1151 = vsel %vm1145, %v1114, %v557
      %v1153 = vsel %vm1145, %v1116, %v559
      %v1155 = vsel %vm1145, %v1118, %v561
      %v1157 = vsel %vm1145, %v1120, %v563
      %v1159 = vsel %vm1145, %v1122, %v565
      %v1161 = vsel %vm1145, %v1124, %v567
      %v1163 = vsel %vm1145, %v1126, %v569
      %v1165 = vsel %vm1145, %v1128, %v571
      %v1167 = vsel %vm1145, %v1130, %v573
      %v1169 = vsel %vm1145, %v1132, %v575
      %v1171 = vsel %vm1145, %v1134, %v577
      %v1173 = vsel %vm1145, %v1136, %v579
      %v1175 = vsel %vm1145, %v1138, %v581
      %v1177 = vsel %vm1145, %v1140, %v583
      %v1179 = vsel %vm1145, %v1142, %v585
      %v1181 = vsel %vm1145, %v1144, %v587
      %vm1182 = vcmask 97280
      %v1184 = vsel %vm1182, %v1147, %v606
      %v1186 = vsel %vm1182, %v1149, %v608
      %v1188 = vsel %vm1182, %v1151, %v610
      %v1190 = vsel %vm1182, %v1153, %v612
      %v1192 = vsel %vm1182, %v1155, %v614
      %v1194 = vsel %vm1182, %v1157, %v616
      %v1196 = vsel %vm1182, %v1159, %v618
      %v1198 = vsel %vm1182, %v1161, %v620
      %v1200 = vsel %vm1182, %v1163, %v622
      %v1202 = vsel %vm1182, %v1165, %v624
      %v1204 = vsel %vm1182, %v1167, %v626
      %v1206 = vsel %vm1182, %v1169, %v628
      %v1208 = vsel %vm1182, %v1171, %v630
      %v1210 = vsel %vm1182, %v1173, %v632
      %v1212 = vsel %vm1182, %v1175, %v634
      %v1214 = vsel %vm1182, %v1177, %v636
      %v1216 = vsel %vm1182, %v1179, %v638
      %v1218 = vsel %vm1182, %v1181, %v640
      %vm1219 = vcmask 130048
      %v1221 = vsel %vm1219, %v1184, %v736
      %v1223 = vsel %vm1219, %v1186, %v738
      %v1225 = vsel %vm1219, %v1188, %v740
      %v1227 = vsel %vm1219, %v1190, %v742
      %v1229 = vsel %vm1219, %v1192, %v744
      %v1231 = vsel %vm1219, %v1194, %v746
      %v1233 = vsel %vm1219, %v1196, %v748
      %v1235 = vsel %vm1219, %v1198, %v750
      %v1237 = vsel %vm1219, %v1200, %v752
      %v1239 = vsel %vm1219, %v1202, %v754
      %v1241 = vsel %vm1219, %v1204, %v756
      %v1243 = vsel %vm1219, %v1206, %v758
      %v1245 = vsel %vm1219, %v1208, %v760
      %v1247 = vsel %vm1219, %v1210, %v762
      %v1249 = vsel %vm1219, %v1212, %v764
      %v1251 = vsel %vm1219, %v1214, %v766
      %v1253 = vsel %vm1219, %v1216, %v768
      %v1255 = vsel %vm1219, %v1218, %v770
      %vm1256 = vcmask 162816
      %v1258 = vsel %vm1256, %v1221, %v813
      %v1260 = vsel %vm1256, %v1223, %v815
      %v1262 = vsel %vm1256, %v1225, %v817
      %v1264 = vsel %vm1256, %v1227, %v819
      %v1266 = vsel %vm1256, %v1229, %v821
      %v1268 = vsel %vm1256, %v1231, %v823
      %v1270 = vsel %vm1256, %v1233, %v825
      %v1272 = vsel %vm1256, %v1235, %v827
      %v1274 = vsel %vm1256, %v1237, %v829
      %v1276 = vsel %vm1256, %v1239, %v831
      %v1278 = vsel %vm1256, %v1241, %v833
      %v1280 = vsel %vm1256, %v1243, %v835
      %v1282 = vsel %vm1256, %v1245, %v837
      %v1284 = vsel %vm1256, %v1247, %v839
      %v1286 = vsel %vm1256, %v1249, %v841
      %v1288 = vsel %vm1256, %v1251, %v843
      %v1290 = vsel %vm1256, %v1253, %v845
      %v1292 = vsel %vm1256, %v1255, %v847
      %vm1293 = vcmask 195584
      %v1295 = vsel %vm1293, %v1258, %v866
      %v1297 = vsel %vm1293, %v1260, %v868
      %v1299 = vsel %vm1293, %v1262, %v870
      %v1301 = vsel %vm1293, %v1264, %v872
      %v1303 = vsel %vm1293, %v1266, %v874
      %v1305 = vsel %vm1293, %v1268, %v876
      %v1307 = vsel %vm1293, %v1270, %v878
      %v1309 = vsel %vm1293, %v1272, %v880
      %v1311 = vsel %vm1293, %v1274, %v882
      %v1313 = vsel %vm1293, %v1276, %v884
      %v1315 = vsel %vm1293, %v1278, %v886
      %v1317 = vsel %vm1293, %v1280, %v888
      %v1319 = vsel %vm1293, %v1282, %v890
      %v1321 = vsel %vm1293, %v1284, %v892
      %v1323 = vsel %vm1293, %v1286, %v894
      %v1325 = vsel %vm1293, %v1288, %v896
      %v1327 = vsel %vm1293, %v1290, %v898
      %v1329 = vsel %vm1293, %v1292, %v900
      %vm1330 = vcmask 228352
      %v1332 = vsel %vm1330, %v1295, %v996
      %v1334 = vsel %vm1330, %v1297, %v998
      %v1336 = vsel %vm1330, %v1299, %v1000
      %v1338 = vsel %vm1330, %v1301, %v1002
      %v1340 = vsel %vm1330, %v1303, %v1004
      %v1342 = vsel %vm1330, %v1305, %v1006
      %v1344 = vsel %vm1330, %v1307, %v1008
      %v1346 = vsel %vm1330, %v1309, %v1010
      %v1348 = vsel %vm1330, %v1311, %v1012
      %v1350 = vsel %vm1330, %v1313, %v1014
      %v1352 = vsel %vm1330, %v1315, %v1016
      %v1354 = vsel %vm1330, %v1317, %v1018
      %v1356 = vsel %vm1330, %v1319, %v1020
      %v1358 = vsel %vm1330, %v1321, %v1022
      %v1360 = vsel %vm1330, %v1323, %v1024
      %v1362 = vsel %vm1330, %v1325, %v1026
      %v1364 = vsel %vm1330, %v1327, %v1028
      %v1366 = vsel %vm1330, %v1329, %v1030
      %vm1367 = vcmask 261120
      %v1369 = vsel %vm1367, %v1332, %v1073
      %v1371 = vsel %vm1367, %v1334, %v1075
      %v1373 = vsel %vm1367, %v1336, %v1077
      %v1375 = vsel %vm1367, %v1338, %v1079
      %v1377 = vsel %vm1367, %v1340, %v1081
      %v1379 = vsel %vm1367, %v1342, %v1083
      %v1381 = vsel %vm1367, %v1344, %v1085
      %v1383 = vsel %vm1367, %v1346, %v1087
      %v1385 = vsel %vm1367, %v1348, %v1089
      %v1387 = vsel %vm1367, %v1350, %v1091
      %v1389 = vsel %vm1367, %v1352, %v1093
      %v1391 = vsel %vm1367, %v1354, %v1095
      %v1393 = vsel %vm1367, %v1356, %v1097
      %v1395 = vsel %vm1367, %v1358, %v1099
      %v1397 = vsel %vm1367, %v1360, %v1101
      %v1399 = vsel %vm1367, %v1362, %v1103
      %v1401 = vsel %vm1367, %v1364, %v1105
      %v1403 = vsel %vm1367, %v1366, %v1107
      %vm1404 = vcmask 293888
      %v1406 = vsel %vm1404, %v1369, 0
      %v1408 = vsel %vm1404, %v1371, 0
      %v1410 = vsel %vm1404, %v1373, 0
      %v1412 = vsel %vm1404, %v1375, 0
      %v1414 = vsel %vm1404, %v1377, 0
      %v1416 = vsel %vm1404, %v1379, 0
      %v1418 = vsel %vm1404, %v1381, 0
      %v1420 = vsel %vm1404, %v1383, 0
      %v1422 = vsel %vm1404, %v1385, 0
      %v1424 = vsel %vm1404, %v1387, 0
      %v1426 = vsel %vm1404, %v1389, 0
      %v1428 = vsel %vm1404, %v1391, 0
      %v1430 = vsel %vm1404, %v1393, 0
      %v1432 = vsel %vm1404, %v1395, 0
      %v1434 = vsel %vm1404, %v1397, 0
      %v1436 = vsel %vm1404, %v1399, 0
      %v1438 = vsel %vm1404, %v1401, 0
      %v1440 = vsel %vm1404, %v1403, 0
      %v1442 = vld [vmem:[%s1] sm:$0xf]
      %v1443 = vld [vmem:[%s1 + $0x4] sm:$0xf]
      %v1444 = vld [vmem:[%s1 + $0x8] sm:$0xf]
      %v1445 = vld [vmem:[%s1 + $0xc] sm:$0xf]
      %v1446 = vld [vmem:[%s1 + $0x10] sm:$0xf]
      %v1447 = vld [vmem:[%s1 + $0x14] sm:$0xf]
      %v1448 = vld [vmem:[%s1 + $0x18] sm:$0xf]
      %v1449 = vld [vmem:[%s1 + $0x1c] sm:$0xf]
      %v1450 = vld [vmem:[%s1 + $0x20] sm:$0xf]
      %v1451 = vld [vmem:[%s1 + $0x24] sm:$0xf]
      %v1452 = vld [vmem:[%s1 + $0x28] sm:$0xf]
      %v1453 = vld [vmem:[%s1 + $0x2c] sm:$0xf]
      %v1454 = vld [vmem:[%s1 + $0x30] sm:$0xf]
      %v1455 = vld [vmem:[%s1 + $0x34] sm:$0xf]
      %v1456 = vld [vmem:[%s1 + $0x38] sm:$0xf]
      %v1457 = vld [vmem:[%s1 + $0x3c] sm:$0xf]
      %v1474 = vunpack.c.l.b16 %v1442
      %v1475 = vunpack.c.l.b16 %v1443
      %v1476 = vunpack.c.l.b16 %v1444
      %v1477 = vunpack.c.l.b16 %v1445
      %v1478 = vunpack.c.l.b16 %v1446
      %v1479 = vunpack.c.l.b16 %v1447
      %v1480 = vunpack.c.l.b16 %v1448
      %v1481 = vunpack.c.l.b16 %v1449
      %v1482 = vunpack.c.l.b16 %v1450
      %v1483 = vunpack.c.l.b16 %v1451
      %v1484 = vunpack.c.l.b16 %v1452
      %v1485 = vunpack.c.l.b16 %v1453
      %v1486 = vunpack.c.l.b16 %v1454
      %v1487 = vunpack.c.l.b16 %v1455
      %v1488 = vunpack.c.l.b16 %v1456
      %v1489 = vunpack.c.l.b16 %v1457
      %v1490 = vpack.c.b16 %v1475, %v1474
      %v1491 = vpack.c.b16 %v1477, %v1476
      %v1492 = vpack.c.b16 %v1479, %v1478
      %v1493 = vpack.c.b16 %v1481, %v1480
      %v1494 = vpack.c.b16 %v1483, %v1482
      %v1495 = vpack.c.b16 %v1485, %v1484
      %v1496 = vpack.c.b16 %v1487, %v1486
      %v1497 = vpack.c.b16 %v1489, %v1488
      %1506 = vmatprep.subr.bf16.mxu0 0
      %1507 = vmatpush1.bf16.msra.mxu0 %v1497
      %1508 = vmatprep.subr.bf16.mxu0 0
      %1509 = vmatpush1.bf16.msra.mxu0 %v1496
      %1510 = vmatprep.subr.bf16.mxu0 0
      %1511 = vmatpush1.bf16.msra.mxu0 %v1495
      %1512 = vmatprep.subr.bf16.mxu0 0
      %1513 = vmatpush1.bf16.msra.mxu0 %v1494
      %1514 = vmatprep.subr.bf16.mxu0 0
      %1515 = vmatpush1.bf16.msra.mxu0 %v1493
      %1516 = vmatprep.subr.bf16.mxu0 0
      %1517 = vmatpush1.bf16.msra.mxu0 %v1492
      %1518 = vmatprep.subr.bf16.mxu0 0
      %1519 = vmatpush1.bf16.msra.mxu0 %v1491
      %1520 = vmatprep.subr.bf16.mxu0 0
      %1521 = vmatpush1.bf16.msra.mxu0 %v1490
      %1522 = vmatprep.subr.bf16.mxu0 0
      %1523 = vmatpush2.bf16.msra.mxu0 0
      %1524 = vmatprep.subr.bf16.mxu0 0
      %1525 = vmatpush2.bf16.msra.mxu0 0
      %1526 = vmatprep.subr.bf16.mxu0 0
      %1527 = vmatpush2.bf16.msra.mxu0 0
      %1528 = vmatprep.subr.bf16.mxu0 0
      %1529 = vmatpush2.bf16.msra.mxu0 0
      %1530 = vmatprep.subr.bf16.mxu0 0
      %1531 = vmatpush2.bf16.msra.mxu0 0
      %1532 = vmatprep.subr.bf16.mxu0 0
      %1533 = vmatpush2.bf16.msra.mxu0 0
      %1534 = vmatprep.subr.bf16.mxu0 0
      %1535 = vmatpush2.bf16.msra.mxu0 0
      %1536 = vmatprep.subr.bf16.mxu0 0
      %1537 = vmatpush2.bf16.msra.mxu0 0
      %1538 = vmatprep.mubr.bf16.mxu0 0
      %1539 = vmatmul.mubr.bf16.gmra.mxu0 %v1406
      %v1540 = vpop.f32.mrf.mxu0
      %v1541 = vadd.f32 0.0, %v1540
      %v1542 = vpop.f32.mrf.mxu0
      %v1543 = vpop.f32.mrf.mxu0
      %v1544 = vadd.f32 0.0, %v1543
      %v1545 = vpop.f32.mrf.mxu0
      %1546 = vmatprep.mubr.bf16.mxu0 0
      %1547 = vmatmul.mubr.bf16.gmra.mxu0 %v1408
      %v1548 = vpop.f32.mrf.mxu0
      %v1549 = vadd.f32 0.0, %v1548
      %v1550 = vpop.f32.mrf.mxu0
      %v1551 = vpop.f32.mrf.mxu0
      %v1552 = vadd.f32 0.0, %v1551
      %v1553 = vpop.f32.mrf.mxu0
      %1554 = vmatprep.mubr.bf16.mxu0 0
      %1555 = vmatmul.mubr.bf16.gmra.mxu0 %v1410
      %v1556 = vpop.f32.mrf.mxu0
      %v1557 = vadd.f32 0.0, %v1556
      %v1558 = vpop.f32.mrf.mxu0
      %v1559 = vpop.f32.mrf.mxu0
      %v1560 = vadd.f32 0.0, %v1559
      %v1561 = vpop.f32.mrf.mxu0
      %1562 = vmatprep.mubr.bf16.mxu0 0
      %1563 = vmatmul.mubr.bf16.gmra.mxu0 %v1412
      %v1564 = vpop.f32.mrf.mxu0
      %v1565 = vadd.f32 0.0, %v1564
      %v1566 = vpop.f32.mrf.mxu0
      %v1567 = vpop.f32.mrf.mxu0
      %v1568 = vadd.f32 0.0, %v1567
      %v1569 = vpop.f32.mrf.mxu0
      %1570 = vmatprep.mubr.bf16.mxu0 0
      %1571 = vmatmul.mubr.bf16.gmra.mxu0 %v1414
      %v1572 = vpop.f32.mrf.mxu0
      %v1573 = vadd.f32 0.0, %v1572
      %v1574 = vpop.f32.mrf.mxu0
      %v1575 = vpop.f32.mrf.mxu0
      %v1576 = vadd.f32 0.0, %v1575
      %v1577 = vpop.f32.mrf.mxu0
      %1578 = vmatprep.mubr.bf16.mxu0 0
      %1579 = vmatmul.mubr.bf16.gmra.mxu0 %v1416
      %v1580 = vpop.f32.mrf.mxu0
      %v1581 = vadd.f32 0.0, %v1580
      %v1582 = vpop.f32.mrf.mxu0
      %v1583 = vpop.f32.mrf.mxu0
      %v1584 = vadd.f32 0.0, %v1583
      %v1585 = vpop.f32.mrf.mxu0
      %1586 = vmatprep.mubr.bf16.mxu0 0
      %1587 = vmatmul.mubr.bf16.gmra.mxu0 %v1418
      %v1588 = vpop.f32.mrf.mxu0
      %v1589 = vadd.f32 0.0, %v1588
      %v1590 = vpop.f32.mrf.mxu0
      %v1591 = vpop.f32.mrf.mxu0
      %v1592 = vadd.f32 0.0, %v1591
      %v1593 = vpop.f32.mrf.mxu0
      %1594 = vmatprep.mubr.bf16.mxu0 0
      %1595 = vmatmul.mubr.bf16.gmra.mxu0 %v1420
      %v1596 = vpop.f32.mrf.mxu0
      %v1597 = vadd.f32 0.0, %v1596
      %v1598 = vpop.f32.mrf.mxu0
      %v1599 = vpop.f32.mrf.mxu0
      %v1600 = vadd.f32 0.0, %v1599
      %v1601 = vpop.f32.mrf.mxu0
      %1602 = vmatprep.mubr.bf16.mxu0 0
      %1603 = vmatmul.mubr.bf16.gmra.mxu0 %v1422
      %v1604 = vpop.f32.mrf.mxu0
      %v1605 = vadd.f32 0.0, %v1604
      %v1606 = vpop.f32.mrf.mxu0
      %v1607 = vpop.f32.mrf.mxu0
      %v1608 = vadd.f32 0.0, %v1607
      %v1609 = vpop.f32.mrf.mxu0
      %1610 = vmatprep.mubr.bf16.mxu0 0
      %1611 = vmatmul.mubr.bf16.gmra.mxu0 %v1424
      %v1612 = vpop.f32.mrf.mxu0
      %v1613 = vadd.f32 0.0, %v1612
      %v1614 = vpop.f32.mrf.mxu0
      %v1615 = vpop.f32.mrf.mxu0
      %v1616 = vadd.f32 0.0, %v1615
      %v1617 = vpop.f32.mrf.mxu0
      %1618 = vmatprep.mubr.bf16.mxu0 0
      %1619 = vmatmul.mubr.bf16.gmra.mxu0 %v1426
      %v1620 = vpop.f32.mrf.mxu0
      %v1621 = vadd.f32 0.0, %v1620
      %v1622 = vpop.f32.mrf.mxu0
      %v1623 = vpop.f32.mrf.mxu0
      %v1624 = vadd.f32 0.0, %v1623
      %v1625 = vpop.f32.mrf.mxu0
      %1626 = vmatprep.mubr.bf16.mxu0 0
      %1627 = vmatmul.mubr.bf16.gmra.mxu0 %v1428
      %v1628 = vpop.f32.mrf.mxu0
      %v1629 = vadd.f32 0.0, %v1628
      %v1630 = vpop.f32.mrf.mxu0
      %v1631 = vpop.f32.mrf.mxu0
      %v1632 = vadd.f32 0.0, %v1631
      %v1633 = vpop.f32.mrf.mxu0
      %1634 = vmatprep.mubr.bf16.mxu0 0
      %1635 = vmatmul.mubr.bf16.gmra.mxu0 %v1430
      %v1636 = vpop.f32.mrf.mxu0
      %v1637 = vadd.f32 0.0, %v1636
      %v1638 = vpop.f32.mrf.mxu0
      %v1639 = vpop.f32.mrf.mxu0
      %v1640 = vadd.f32 0.0, %v1639
      %v1641 = vpop.f32.mrf.mxu0
      %1642 = vmatprep.mubr.bf16.mxu0 0
      %1643 = vmatmul.mubr.bf16.gmra.mxu0 %v1432
      %v1644 = vpop.f32.mrf.mxu0
      %v1645 = vadd.f32 0.0, %v1644
      %v1646 = vpop.f32.mrf.mxu0
      %v1647 = vpop.f32.mrf.mxu0
      %v1648 = vadd.f32 0.0, %v1647
      %v1649 = vpop.f32.mrf.mxu0
      %1650 = vmatprep.mubr.bf16.mxu0 0
      %1651 = vmatmul.mubr.bf16.gmra.mxu0 %v1434
      %v1652 = vpop.f32.mrf.mxu0
      %v1653 = vadd.f32 0.0, %v1652
      %v1654 = vpop.f32.mrf.mxu0
      %v1655 = vpop.f32.mrf.mxu0
      %v1656 = vadd.f32 0.0, %v1655
      %v1657 = vpop.f32.mrf.mxu0
      %1658 = vmatprep.mubr.bf16.mxu0 0
      %1659 = vmatmul.mubr.bf16.gmra.mxu0 %v1436
      %v1660 = vpop.f32.mrf.mxu0
      %v1661 = vadd.f32 0.0, %v1660
      %v1662 = vpop.f32.mrf.mxu0
      %v1663 = vpop.f32.mrf.mxu0
      %v1664 = vadd.f32 0.0, %v1663
      %v1665 = vpop.f32.mrf.mxu0
      %1666 = vmatprep.mubr.bf16.mxu0 0
      %1667 = vmatmul.mubr.bf16.gmra.mxu0 %v1438
      %v1668 = vpop.f32.mrf.mxu0
      %v1669 = vadd.f32 0.0, %v1668
      %v1670 = vpop.f32.mrf.mxu0
      %v1671 = vpop.f32.mrf.mxu0
      %v1672 = vadd.f32 0.0, %v1671
      %v1673 = vpop.f32.mrf.mxu0
      %1674 = vmatprep.mubr.bf16.mxu0 0
      %1675 = vmatmul.mubr.bf16.gmra.mxu0 %v1440
      %v1676 = vpop.f32.mrf.mxu0
      %v1677 = vadd.f32 0.0, %v1676
      %v1678 = vpop.f32.mrf.mxu0
      %v1679 = vpop.f32.mrf.mxu0
      %v1680 = vadd.f32 0.0, %v1679
      %v1681 = vpop.f32.mrf.mxu0
      %1682 = vdwg.mxu0
      %v1683 = vlaneseq
      %v1684 = vshrl.u32 %v1683, 7
      %v1685 = vadd.s32 %v1684, 8
      %v1686 = vadd.s32 %v1684, 16
      %v1687 = vadd.s32 %v1684, 24
      %v1688 = vadd.s32 %v1684, 32
      %v1689 = vadd.s32 %v1684, 40
      %v1690 = vadd.s32 %v1684, 48
      %v1691 = vadd.s32 %v1684, 56
      %v1692 = vadd.s32 %v1684, 64
      %v1693 = vadd.s32 %v1684, 72
      %v1694 = vadd.s32 %v1684, 80
      %v1695 = vadd.s32 %v1684, 88
      %v1696 = vadd.s32 %v1684, 96
      %v1697 = vadd.s32 %v1684, 104
      %v1698 = vadd.s32 %v1684, 112
      %v1699 = vadd.s32 %v1684, 120
      %v1700 = vadd.s32 %v1684, 128
      %v1701 = vadd.s32 %v1684, 136
      %v1702 = vadd.s32 %v1684, 144
      %v1703 = vadd.s32 %v1684, 152
      %v1704 = vadd.s32 %v1684, 160
      %v1705 = vadd.s32 %v1684, 168
      %v1706 = vadd.s32 %v1684, 176
      %v1707 = vadd.s32 %v1684, 184
      %v1708 = vadd.s32 %v1684, 192
      %v1709 = vadd.s32 %v1684, 200
      %v1710 = vadd.s32 %v1684, 208
      %v1711 = vadd.s32 %v1684, 216
      %v1712 = vadd.s32 %v1684, 224
      %v1713 = vadd.s32 %v1684, 232
      %v1714 = vadd.s32 %v1684, 240
      %v1715 = vadd.s32 %v1684, 248
      %v1716 = vadd.s32 %v1684, 256
      %v1717 = vadd.s32 %v1684, 264
      %v1718 = vadd.s32 %v1684, 272
      %v1719 = vadd.s32 %v1684, 280
      %vm1720 = vcmp.lt.s32.totalorder %v1684, 0
      %v1721 = vsub.s32 0, %v1684
      %v1722 = vsel %vm1720, %v1721, %v1684
      %v1723 = vmul.u32.u64.compose %v1722, 3817748708
      %v1724 = vextract.low.u32 %v1723
      %v1725 = vextract.high.u32 %v1723
      %v1726 = vshrl.u32 %v1725, 4
      %v1727 = vmul.u32 %v1726, 18
      %v1728 = vsub.s32 %v1722, %v1727
      %v1729 = vsub.s32 0, %v1728
      %v1730 = vsel %vm1720, %v1729, %v1728
      %vm1731 = vcmp.lt.s32.totalorder %v1685, 0
      %v1732 = vsub.s32 0, %v1685
      %v1733 = vsel %vm1731, %v1732, %v1685
      %v1734 = vmul.u32.u64.compose %v1733, 3817748708
      %v1735 = vextract.low.u32 %v1734
      %v1736 = vextract.high.u32 %v1734
      %v1737 = vshrl.u32 %v1736, 4
      %v1738 = vmul.u32 %v1737, 18
      %v1739 = vsub.s32 %v1733, %v1738
      %v1740 = vsub.s32 0, %v1739
      %v1741 = vsel %vm1731, %v1740, %v1739
      %vm1742 = vcmp.lt.s32.totalorder %v1686, 0
      %v1743 = vsub.s32 0, %v1686
      %v1744 = vsel %vm1742, %v1743, %v1686
      %v1745 = vmul.u32.u64.compose %v1744, 3817748708
      %v1746 = vextract.low.u32 %v1745
      %v1747 = vextract.high.u32 %v1745
      %v1748 = vshrl.u32 %v1747, 4
      %v1749 = vmul.u32 %v1748, 18
      %v1750 = vsub.s32 %v1744, %v1749
      %v1751 = vsub.s32 0, %v1750
      %v1752 = vsel %vm1742, %v1751, %v1750
      %vm1753 = vcmp.lt.s32.totalorder %v1687, 0
      %v1754 = vsub.s32 0, %v1687
      %v1755 = vsel %vm1753, %v1754, %v1687
      %v1756 = vmul.u32.u64.compose %v1755, 3817748708
      %v1757 = vextract.low.u32 %v1756
      %v1758 = vextract.high.u32 %v1756
      %v1759 = vshrl.u32 %v1758, 4
      %v1760 = vmul.u32 %v1759, 18
      %v1761 = vsub.s32 %v1755, %v1760
      %v1762 = vsub.s32 0, %v1761
      %v1763 = vsel %vm1753, %v1762, %v1761
      %vm1764 = vcmp.lt.s32.totalorder %v1688, 0
      %v1765 = vsub.s32 0, %v1688
      %v1766 = vsel %vm1764, %v1765, %v1688
      %v1767 = vmul.u32.u64.compose %v1766, 3817748708
      %v1768 = vextract.low.u32 %v1767
      %v1769 = vextract.high.u32 %v1767
      %v1770 = vshrl.u32 %v1769, 4
      %v1771 = vmul.u32 %v1770, 18
      %v1772 = vsub.s32 %v1766, %v1771
      %v1773 = vsub.s32 0, %v1772
      %v1774 = vsel %vm1764, %v1773, %v1772
      %vm1775 = vcmp.lt.s32.totalorder %v1689, 0
      %v1776 = vsub.s32 0, %v1689
      %v1777 = vsel %vm1775, %v1776, %v1689
      %v1778 = vmul.u32.u64.compose %v1777, 3817748708
      %v1779 = vextract.low.u32 %v1778
      %v1780 = vextract.high.u32 %v1778
      %v1781 = vshrl.u32 %v1780, 4
      %v1782 = vmul.u32 %v1781, 18
      %v1783 = vsub.s32 %v1777, %v1782
      %v1784 = vsub.s32 0, %v1783
      %v1785 = vsel %vm1775, %v1784, %v1783
      %vm1786 = vcmp.lt.s32.totalorder %v1690, 0
      %v1787 = vsub.s32 0, %v1690
      %v1788 = vsel %vm1786, %v1787, %v1690
      %v1789 = vmul.u32.u64.compose %v1788, 3817748708
      %v1790 = vextract.low.u32 %v1789
      %v1791 = vextract.high.u32 %v1789
      %v1792 = vshrl.u32 %v1791, 4
      %v1793 = vmul.u32 %v1792, 18
      %v1794 = vsub.s32 %v1788, %v1793
      %v1795 = vsub.s32 0, %v1794
      %v1796 = vsel %vm1786, %v1795, %v1794
      %vm1797 = vcmp.lt.s32.totalorder %v1691, 0
      %v1798 = vsub.s32 0, %v1691
      %v1799 = vsel %vm1797, %v1798, %v1691
      %v1800 = vmul.u32.u64.compose %v1799, 3817748708
      %v1801 = vextract.low.u32 %v1800
      %v1802 = vextract.high.u32 %v1800
      %v1803 = vshrl.u32 %v1802, 4
      %v1804 = vmul.u32 %v1803, 18
      %v1805 = vsub.s32 %v1799, %v1804
      %v1806 = vsub.s32 0, %v1805
      %v1807 = vsel %vm1797, %v1806, %v1805
      %vm1808 = vcmp.lt.s32.totalorder %v1692, 0
      %v1809 = vsub.s32 0, %v1692
      %v1810 = vsel %vm1808, %v1809, %v1692
      %v1811 = vmul.u32.u64.compose %v1810, 3817748708
      %v1812 = vextract.low.u32 %v1811
      %v1813 = vextract.high.u32 %v1811
      %v1814 = vshrl.u32 %v1813, 4
      %v1815 = vmul.u32 %v1814, 18
      %v1816 = vsub.s32 %v1810, %v1815
      %v1817 = vsub.s32 0, %v1816
      %v1818 = vsel %vm1808, %v1817, %v1816
      %vm1819 = vcmp.lt.s32.totalorder %v1693, 0
      %v1820 = vsub.s32 0, %v1693
      %v1821 = vsel %vm1819, %v1820, %v1693
      %v1822 = vmul.u32.u64.compose %v1821, 3817748708
      %v1823 = vextract.low.u32 %v1822
      %v1824 = vextract.high.u32 %v1822
      %v1825 = vshrl.u32 %v1824, 4
      %v1826 = vmul.u32 %v1825, 18
      %v1827 = vsub.s32 %v1821, %v1826
      %v1828 = vsub.s32 0, %v1827
      %v1829 = vsel %vm1819, %v1828, %v1827
      %vm1830 = vcmp.lt.s32.totalorder %v1694, 0
      %v1831 = vsub.s32 0, %v1694
      %v1832 = vsel %vm1830, %v1831, %v1694
      %v1833 = vmul.u32.u64.compose %v1832, 3817748708
      %v1834 = vextract.low.u32 %v1833
      %v1835 = vextract.high.u32 %v1833
      %v1836 = vshrl.u32 %v1835, 4
      %v1837 = vmul.u32 %v1836, 18
      %v1838 = vsub.s32 %v1832, %v1837
      %v1839 = vsub.s32 0, %v1838
      %v1840 = vsel %vm1830, %v1839, %v1838
      %vm1841 = vcmp.lt.s32.totalorder %v1695, 0
      %v1842 = vsub.s32 0, %v1695
      %v1843 = vsel %vm1841, %v1842, %v1695
      %v1844 = vmul.u32.u64.compose %v1843, 3817748708
      %v1845 = vextract.low.u32 %v1844
      %v1846 = vextract.high.u32 %v1844
      %v1847 = vshrl.u32 %v1846, 4
      %v1848 = vmul.u32 %v1847, 18
      %v1849 = vsub.s32 %v1843, %v1848
      %v1850 = vsub.s32 0, %v1849
      %v1851 = vsel %vm1841, %v1850, %v1849
      %vm1852 = vcmp.lt.s32.totalorder %v1696, 0
      %v1853 = vsub.s32 0, %v1696
      %v1854 = vsel %vm1852, %v1853, %v1696
      %v1855 = vmul.u32.u64.compose %v1854, 3817748708
      %v1856 = vextract.low.u32 %v1855
      %v1857 = vextract.high.u32 %v1855
      %v1858 = vshrl.u32 %v1857, 4
      %v1859 = vmul.u32 %v1858, 18
      %v1860 = vsub.s32 %v1854, %v1859
      %v1861 = vsub.s32 0, %v1860
      %v1862 = vsel %vm1852, %v1861, %v1860
      %vm1863 = vcmp.lt.s32.totalorder %v1697, 0
      %v1864 = vsub.s32 0, %v1697
      %v1865 = vsel %vm1863, %v1864, %v1697
      %v1866 = vmul.u32.u64.compose %v1865, 3817748708
      %v1867 = vextract.low.u32 %v1866
      %v1868 = vextract.high.u32 %v1866
      %v1869 = vshrl.u32 %v1868, 4
      %v1870 = vmul.u32 %v1869, 18
      %v1871 = vsub.s32 %v1865, %v1870
      %v1872 = vsub.s32 0, %v1871
      %v1873 = vsel %vm1863, %v1872, %v1871
      %vm1874 = vcmp.lt.s32.totalorder %v1698, 0
      %v1875 = vsub.s32 0, %v1698
      %v1876 = vsel %vm1874, %v1875, %v1698
      %v1877 = vmul.u32.u64.compose %v1876, 3817748708
      %v1878 = vextract.low.u32 %v1877
      %v1879 = vextract.high.u32 %v1877
      %v1880 = vshrl.u32 %v1879, 4
      %v1881 = vmul.u32 %v1880, 18
      %v1882 = vsub.s32 %v1876, %v1881
      %v1883 = vsub.s32 0, %v1882
      %v1884 = vsel %vm1874, %v1883, %v1882
      %vm1885 = vcmp.lt.s32.totalorder %v1699, 0
      %v1886 = vsub.s32 0, %v1699
      %v1887 = vsel %vm1885, %v1886, %v1699
      %v1888 = vmul.u32.u64.compose %v1887, 3817748708
      %v1889 = vextract.low.u32 %v1888
      %v1890 = vextract.high.u32 %v1888
      %v1891 = vshrl.u32 %v1890, 4
      %v1892 = vmul.u32 %v1891, 18
      %v1893 = vsub.s32 %v1887, %v1892
      %v1894 = vsub.s32 0, %v1893
      %v1895 = vsel %vm1885, %v1894, %v1893
      %vm1896 = vcmp.lt.s32.totalorder %v1700, 0
      %v1897 = vsub.s32 0, %v1700
      %v1898 = vsel %vm1896, %v1897, %v1700
      %v1899 = vmul.u32.u64.compose %v1898, 3817748708
      %v1900 = vextract.low.u32 %v1899
      %v1901 = vextract.high.u32 %v1899
      %v1902 = vshrl.u32 %v1901, 4
      %v1903 = vmul.u32 %v1902, 18
      %v1904 = vsub.s32 %v1898, %v1903
      %v1905 = vsub.s32 0, %v1904
      %v1906 = vsel %vm1896, %v1905, %v1904
      %vm1907 = vcmp.lt.s32.totalorder %v1701, 0
      %v1908 = vsub.s32 0, %v1701
      %v1909 = vsel %vm1907, %v1908, %v1701
      %v1910 = vmul.u32.u64.compose %v1909, 3817748708
      %v1911 = vextract.low.u32 %v1910
      %v1912 = vextract.high.u32 %v1910
      %v1913 = vshrl.u32 %v1912, 4
      %v1914 = vmul.u32 %v1913, 18
      %v1915 = vsub.s32 %v1909, %v1914
      %v1916 = vsub.s32 0, %v1915
      %v1917 = vsel %vm1907, %v1916, %v1915
      %vm1918 = vcmp.lt.s32.totalorder %v1702, 0
      %v1919 = vsub.s32 0, %v1702
      %v1920 = vsel %vm1918, %v1919, %v1702
      %v1921 = vmul.u32.u64.compose %v1920, 3817748708
      %v1922 = vextract.low.u32 %v1921
      %v1923 = vextract.high.u32 %v1921
      %v1924 = vshrl.u32 %v1923, 4
      %v1925 = vmul.u32 %v1924, 18
      %v1926 = vsub.s32 %v1920, %v1925
      %v1927 = vsub.s32 0, %v1926
      %v1928 = vsel %vm1918, %v1927, %v1926
      %vm1929 = vcmp.lt.s32.totalorder %v1703, 0
      %v1930 = vsub.s32 0, %v1703
      %v1931 = vsel %vm1929, %v1930, %v1703
      %v1932 = vmul.u32.u64.compose %v1931, 3817748708
      %v1933 = vextract.low.u32 %v1932
      %v1934 = vextract.high.u32 %v1932
      %v1935 = vshrl.u32 %v1934, 4
      %v1936 = vmul.u32 %v1935, 18
      %v1937 = vsub.s32 %v1931, %v1936
      %v1938 = vsub.s32 0, %v1937
      %v1939 = vsel %vm1929, %v1938, %v1937
      %vm1940 = vcmp.lt.s32.totalorder %v1704, 0
      %v1941 = vsub.s32 0, %v1704
      %v1942 = vsel %vm1940, %v1941, %v1704
      %v1943 = vmul.u32.u64.compose %v1942, 3817748708
      %v1944 = vextract.low.u32 %v1943
      %v1945 = vextract.high.u32 %v1943
      %v1946 = vshrl.u32 %v1945, 4
      %v1947 = vmul.u32 %v1946, 18
      %v1948 = vsub.s32 %v1942, %v1947
      %v1949 = vsub.s32 0, %v1948
      %v1950 = vsel %vm1940, %v1949, %v1948
      %vm1951 = vcmp.lt.s32.totalorder %v1705, 0
      %v1952 = vsub.s32 0, %v1705
      %v1953 = vsel %vm1951, %v1952, %v1705
      %v1954 = vmul.u32.u64.compose %v1953, 3817748708
      %v1955 = vextract.low.u32 %v1954
      %v1956 = vextract.high.u32 %v1954
      %v1957 = vshrl.u32 %v1956, 4
      %v1958 = vmul.u32 %v1957, 18
      %v1959 = vsub.s32 %v1953, %v1958
      %v1960 = vsub.s32 0, %v1959
      %v1961 = vsel %vm1951, %v1960, %v1959
      %vm1962 = vcmp.lt.s32.totalorder %v1706, 0
      %v1963 = vsub.s32 0, %v1706
      %v1964 = vsel %vm1962, %v1963, %v1706
      %v1965 = vmul.u32.u64.compose %v1964, 3817748708
      %v1966 = vextract.low.u32 %v1965
      %v1967 = vextract.high.u32 %v1965
      %v1968 = vshrl.u32 %v1967, 4
      %v1969 = vmul.u32 %v1968, 18
      %v1970 = vsub.s32 %v1964, %v1969
      %v1971 = vsub.s32 0, %v1970
      %v1972 = vsel %vm1962, %v1971, %v1970
      %vm1973 = vcmp.lt.s32.totalorder %v1707, 0
      %v1974 = vsub.s32 0, %v1707
      %v1975 = vsel %vm1973, %v1974, %v1707
      %v1976 = vmul.u32.u64.compose %v1975, 3817748708
      %v1977 = vextract.low.u32 %v1976
      %v1978 = vextract.high.u32 %v1976
      %v1979 = vshrl.u32 %v1978, 4
      %v1980 = vmul.u32 %v1979, 18
      %v1981 = vsub.s32 %v1975, %v1980
      %v1982 = vsub.s32 0, %v1981
      %v1983 = vsel %vm1973, %v1982, %v1981
      %vm1984 = vcmp.lt.s32.totalorder %v1708, 0
      %v1985 = vsub.s32 0, %v1708
      %v1986 = vsel %vm1984, %v1985, %v1708
      %v1987 = vmul.u32.u64.compose %v1986, 3817748708
      %v1988 = vextract.low.u32 %v1987
      %v1989 = vextract.high.u32 %v1987
      %v1990 = vshrl.u32 %v1989, 4
      %v1991 = vmul.u32 %v1990, 18
      %v1992 = vsub.s32 %v1986, %v1991
      %v1993 = vsub.s32 0, %v1992
      %v1994 = vsel %vm1984, %v1993, %v1992
      %vm1995 = vcmp.lt.s32.totalorder %v1709, 0
      %v1996 = vsub.s32 0, %v1709
      %v1997 = vsel %vm1995, %v1996, %v1709
      %v1998 = vmul.u32.u64.compose %v1997, 3817748708
      %v1999 = vextract.low.u32 %v1998
      %v2000 = vextract.high.u32 %v1998
      %v2001 = vshrl.u32 %v2000, 4
      %v2002 = vmul.u32 %v2001, 18
      %v2003 = vsub.s32 %v1997, %v2002
      %v2004 = vsub.s32 0, %v2003
      %v2005 = vsel %vm1995, %v2004, %v2003
      %vm2006 = vcmp.lt.s32.totalorder %v1710, 0
      %v2007 = vsub.s32 0, %v1710
      %v2008 = vsel %vm2006, %v2007, %v1710
      %v2009 = vmul.u32.u64.compose %v2008, 3817748708
      %v2010 = vextract.low.u32 %v2009
      %v2011 = vextract.high.u32 %v2009
      %v2012 = vshrl.u32 %v2011, 4
      %v2013 = vmul.u32 %v2012, 18
      %v2014 = vsub.s32 %v2008, %v2013
      %v2015 = vsub.s32 0, %v2014
      %v2016 = vsel %vm2006, %v2015, %v2014
      %vm2017 = vcmp.lt.s32.totalorder %v1711, 0
      %v2018 = vsub.s32 0, %v1711
      %v2019 = vsel %vm2017, %v2018, %v1711
      %v2020 = vmul.u32.u64.compose %v2019, 3817748708
      %v2021 = vextract.low.u32 %v2020
      %v2022 = vextract.high.u32 %v2020
      %v2023 = vshrl.u32 %v2022, 4
      %v2024 = vmul.u32 %v2023, 18
      %v2025 = vsub.s32 %v2019, %v2024
      %v2026 = vsub.s32 0, %v2025
      %v2027 = vsel %vm2017, %v2026, %v2025
      %vm2028 = vcmp.lt.s32.totalorder %v1712, 0
      %v2029 = vsub.s32 0, %v1712
      %v2030 = vsel %vm2028, %v2029, %v1712
      %v2031 = vmul.u32.u64.compose %v2030, 3817748708
      %v2032 = vextract.low.u32 %v2031
      %v2033 = vextract.high.u32 %v2031
      %v2034 = vshrl.u32 %v2033, 4
      %v2035 = vmul.u32 %v2034, 18
      %v2036 = vsub.s32 %v2030, %v2035
      %v2037 = vsub.s32 0, %v2036
      %v2038 = vsel %vm2028, %v2037, %v2036
      %vm2039 = vcmp.lt.s32.totalorder %v1713, 0
      %v2040 = vsub.s32 0, %v1713
      %v2041 = vsel %vm2039, %v2040, %v1713
      %v2042 = vmul.u32.u64.compose %v2041, 3817748708
      %v2043 = vextract.low.u32 %v2042
      %v2044 = vextract.high.u32 %v2042
      %v2045 = vshrl.u32 %v2044, 4
      %v2046 = vmul.u32 %v2045, 18
      %v2047 = vsub.s32 %v2041, %v2046
      %v2048 = vsub.s32 0, %v2047
      %v2049 = vsel %vm2039, %v2048, %v2047
      %vm2050 = vcmp.lt.s32.totalorder %v1714, 0
      %v2051 = vsub.s32 0, %v1714
      %v2052 = vsel %vm2050, %v2051, %v1714
      %v2053 = vmul.u32.u64.compose %v2052, 3817748708
      %v2054 = vextract.low.u32 %v2053
      %v2055 = vextract.high.u32 %v2053
      %v2056 = vshrl.u32 %v2055, 4
      %v2057 = vmul.u32 %v2056, 18
      %v2058 = vsub.s32 %v2052, %v2057
      %v2059 = vsub.s32 0, %v2058
      %v2060 = vsel %vm2050, %v2059, %v2058
      %vm2061 = vcmp.lt.s32.totalorder %v1715, 0
      %v2062 = vsub.s32 0, %v1715
      %v2063 = vsel %vm2061, %v2062, %v1715
      %v2064 = vmul.u32.u64.compose %v2063, 3817748708
      %v2065 = vextract.low.u32 %v2064
      %v2066 = vextract.high.u32 %v2064
      %v2067 = vshrl.u32 %v2066, 4
      %v2068 = vmul.u32 %v2067, 18
      %v2069 = vsub.s32 %v2063, %v2068
      %v2070 = vsub.s32 0, %v2069
      %v2071 = vsel %vm2061, %v2070, %v2069
      %vm2072 = vcmp.lt.s32.totalorder %v1716, 0
      %v2073 = vsub.s32 0, %v1716
      %v2074 = vsel %vm2072, %v2073, %v1716
      %v2075 = vmul.u32.u64.compose %v2074, 3817748708
      %v2076 = vextract.low.u32 %v2075
      %v2077 = vextract.high.u32 %v2075
      %v2078 = vshrl.u32 %v2077, 4
      %v2079 = vmul.u32 %v2078, 18
      %v2080 = vsub.s32 %v2074, %v2079
      %v2081 = vsub.s32 0, %v2080
      %v2082 = vsel %vm2072, %v2081, %v2080
      %vm2083 = vcmp.lt.s32.totalorder %v1717, 0
      %v2084 = vsub.s32 0, %v1717
      %v2085 = vsel %vm2083, %v2084, %v1717
      %v2086 = vmul.u32.u64.compose %v2085, 3817748708
      %v2087 = vextract.low.u32 %v2086
      %v2088 = vextract.high.u32 %v2086
      %v2089 = vshrl.u32 %v2088, 4
      %v2090 = vmul.u32 %v2089, 18
      %v2091 = vsub.s32 %v2085, %v2090
      %v2092 = vsub.s32 0, %v2091
      %v2093 = vsel %vm2083, %v2092, %v2091
      %vm2094 = vcmp.lt.s32.totalorder %v1718, 0
      %v2095 = vsub.s32 0, %v1718
      %v2096 = vsel %vm2094, %v2095, %v1718
      %v2097 = vmul.u32.u64.compose %v2096, 3817748708
      %v2098 = vextract.low.u32 %v2097
      %v2099 = vextract.high.u32 %v2097
      %v2100 = vshrl.u32 %v2099, 4
      %v2101 = vmul.u32 %v2100, 18
      %v2102 = vsub.s32 %v2096, %v2101
      %v2103 = vsub.s32 0, %v2102
      %v2104 = vsel %vm2094, %v2103, %v2102
      %vm2105 = vcmp.lt.s32.totalorder %v1719, 0
      %v2106 = vsub.s32 0, %v1719
      %v2107 = vsel %vm2105, %v2106, %v1719
      %v2108 = vmul.u32.u64.compose %v2107, 3817748708
      %v2109 = vextract.low.u32 %v2108
      %v2110 = vextract.high.u32 %v2108
      %v2111 = vshrl.u32 %v2110, 4
      %v2112 = vmul.u32 %v2111, 18
      %v2113 = vsub.s32 %v2107, %v2112
      %v2114 = vsub.s32 0, %v2113
      %v2115 = vsel %vm2105, %v2114, %v2113
      %vm2116 = vcmp.ne.s32.totalorder %v1730, 0
      %vm2117 = vcmp.ne.s32.totalorder %v1741, 0
      %vm2118 = vcmp.ne.s32.totalorder %v1752, 0
      %vm2119 = vcmp.ne.s32.totalorder %v1763, 0
      %vm2120 = vcmp.ne.s32.totalorder %v1774, 0
      %vm2121 = vcmp.ne.s32.totalorder %v1785, 0
      %vm2122 = vcmp.ne.s32.totalorder %v1796, 0
      %vm2123 = vcmp.ne.s32.totalorder %v1807, 0
      %vm2124 = vcmp.ne.s32.totalorder %v1818, 0
      %vm2125 = vcmp.ne.s32.totalorder %v1829, 0
      %vm2126 = vcmp.ne.s32.totalorder %v1840, 0
      %vm2127 = vcmp.ne.s32.totalorder %v1851, 0
      %vm2128 = vcmp.ne.s32.totalorder %v1862, 0
      %vm2129 = vcmp.ne.s32.totalorder %v1873, 0
      %vm2130 = vcmp.ne.s32.totalorder %v1884, 0
      %vm2131 = vcmp.ne.s32.totalorder %v1895, 0
      %vm2132 = vcmp.ne.s32.totalorder %v1906, 0
      %vm2133 = vcmp.ne.s32.totalorder %v1917, 0
      %vm2134 = vcmp.ne.s32.totalorder %v1928, 0
      %vm2135 = vcmp.ne.s32.totalorder %v1939, 0
      %vm2136 = vcmp.ne.s32.totalorder %v1950, 0
      %vm2137 = vcmp.ne.s32.totalorder %v1961, 0
      %vm2138 = vcmp.ne.s32.totalorder %v1972, 0
      %vm2139 = vcmp.ne.s32.totalorder %v1983, 0
      %vm2140 = vcmp.ne.s32.totalorder %v1994, 0
      %vm2141 = vcmp.ne.s32.totalorder %v2005, 0
      %vm2142 = vcmp.ne.s32.totalorder %v2016, 0
      %vm2143 = vcmp.ne.s32.totalorder %v2027, 0
      %vm2144 = vcmp.ne.s32.totalorder %v2038, 0
      %vm2145 = vcmp.ne.s32.totalorder %v2049, 0
      %vm2146 = vcmp.ne.s32.totalorder %v2060, 0
      %vm2147 = vcmp.ne.s32.totalorder %v2071, 0
      %vm2148 = vcmp.ne.s32.totalorder %v2082, 0
      %vm2149 = vcmp.ne.s32.totalorder %v2093, 0
      %vm2150 = vcmp.ne.s32.totalorder %v2104, 0
      %vm2151 = vcmp.ne.s32.totalorder %v2115, 0
      %vm2152 = vcmp.lt.s32.totalorder %v1730, 0
      %vm2153 = vcmp.lt.s32.totalorder %v1741, 0
      %vm2154 = vcmp.lt.s32.totalorder %v1752, 0
      %vm2155 = vcmp.lt.s32.totalorder %v1763, 0
      %vm2156 = vcmp.lt.s32.totalorder %v1774, 0
      %vm2157 = vcmp.lt.s32.totalorder %v1785, 0
      %vm2158 = vcmp.lt.s32.totalorder %v1796, 0
      %vm2159 = vcmp.lt.s32.totalorder %v1807, 0
      %vm2160 = vcmp.lt.s32.totalorder %v1818, 0
      %vm2161 = vcmp.lt.s32.totalorder %v1829, 0
      %vm2162 = vcmp.lt.s32.totalorder %v1840, 0
      %vm2163 = vcmp.lt.s32.totalorder %v1851, 0
      %vm2164 = vcmp.lt.s32.totalorder %v1862, 0
      %vm2165 = vcmp.lt.s32.totalorder %v1873, 0
      %vm2166 = vcmp.lt.s32.totalorder %v1884, 0
      %vm2167 = vcmp.lt.s32.totalorder %v1895, 0
      %vm2168 = vcmp.lt.s32.totalorder %v1906, 0
      %vm2169 = vcmp.lt.s32.totalorder %v1917, 0
      %vm2170 = vcmp.lt.s32.totalorder %v1928, 0
      %vm2171 = vcmp.lt.s32.totalorder %v1939, 0
      %vm2172 = vcmp.lt.s32.totalorder %v1950, 0
      %vm2173 = vcmp.lt.s32.totalorder %v1961, 0
      %vm2174 = vcmp.lt.s32.totalorder %v1972, 0
      %vm2175 = vcmp.lt.s32.totalorder %v1983, 0
      %vm2176 = vcmp.lt.s32.totalorder %v1994, 0
      %vm2177 = vcmp.lt.s32.totalorder %v2005, 0
      %vm2178 = vcmp.lt.s32.totalorder %v2016, 0
      %vm2179 = vcmp.lt.s32.totalorder %v2027, 0
      %vm2180 = vcmp.lt.s32.totalorder %v2038, 0
      %vm2181 = vcmp.lt.s32.totalorder %v2049, 0
      %vm2182 = vcmp.lt.s32.totalorder %v2060, 0
      %vm2183 = vcmp.lt.s32.totalorder %v2071, 0
      %vm2184 = vcmp.lt.s32.totalorder %v2082, 0
      %vm2185 = vcmp.lt.s32.totalorder %v2093, 0
      %vm2186 = vcmp.lt.s32.totalorder %v2104, 0
      %vm2187 = vcmp.lt.s32.totalorder %v2115, 0
      %vm2188 = vmand %vm2152, %vm2116
      %vm2189 = vmand %vm2153, %vm2117
      %vm2190 = vmand %vm2154, %vm2118
      %vm2191 = vmand %vm2155, %vm2119
      %vm2192 = vmand %vm2156, %vm2120
      %vm2193 = vmand %vm2157, %vm2121
      %vm2194 = vmand %vm2158, %vm2122
      %vm2195 = vmand %vm2159, %vm2123
      %vm2196 = vmand %vm2160, %vm2124
      %vm2197 = vmand %vm2161, %vm2125
      %vm2198 = vmand %vm2162, %vm2126
      %vm2199 = vmand %vm2163, %vm2127
      %vm2200 = vmand %vm2164, %vm2128
      %vm2201 = vmand %vm2165, %vm2129
      %vm2202 = vmand %vm2166, %vm2130
      %vm2203 = vmand %vm2167, %vm2131
      %vm2204 = vmand %vm2168, %vm2132
      %vm2205 = vmand %vm2169, %vm2133
      %vm2206 = vmand %vm2170, %vm2134
      %vm2207 = vmand %vm2171, %vm2135
      %vm2208 = vmand %vm2172, %vm2136
      %vm2209 = vmand %vm2173, %vm2137
      %vm2210 = vmand %vm2174, %vm2138
      %vm2211 = vmand %vm2175, %vm2139
      %vm2212 = vmand %vm2176, %vm2140
      %vm2213 = vmand %vm2177, %vm2141
      %vm2214 = vmand %vm2178, %vm2142
      %vm2215 = vmand %vm2179, %vm2143
      %vm2216 = vmand %vm2180, %vm2144
      %vm2217 = vmand %vm2181, %vm2145
      %vm2218 = vmand %vm2182, %vm2146
      %vm2219 = vmand %vm2183, %vm2147
      %vm2220 = vmand %vm2184, %vm2148
      %vm2221 = vmand %vm2185, %vm2149
      %vm2222 = vmand %vm2186, %vm2150
      %vm2223 = vmand %vm2187, %vm2151
      %v2224 = vadd.s32 %v1730, 18
      %v2225 = vadd.s32 %v1741, 18
      %v2226 = vadd.s32 %v1752, 18
      %v2227 = vadd.s32 %v1763, 18
      %v2228 = vadd.s32 %v1774, 18
      %v2229 = vadd.s32 %v1785, 18
      %v2230 = vadd.s32 %v1796, 18
      %v2231 = vadd.s32 %v1807, 18
      %v2232 = vadd.s32 %v1818, 18
      %v2233 = vadd.s32 %v1829, 18
      %v2234 = vadd.s32 %v1840, 18
      %v2235 = vadd.s32 %v1851, 18
      %v2236 = vadd.s32 %v1862, 18
      %v2237 = vadd.s32 %v1873, 18
      %v2238 = vadd.s32 %v1884, 18
      %v2239 = vadd.s32 %v1895, 18
      %v2240 = vadd.s32 %v1906, 18
      %v2241 = vadd.s32 %v1917, 18
      %v2242 = vadd.s32 %v1928, 18
      %v2243 = vadd.s32 %v1939, 18
      %v2244 = vadd.s32 %v1950, 18
      %v2245 = vadd.s32 %v1961, 18
      %v2246 = vadd.s32 %v1972, 18
      %v2247 = vadd.s32 %v1983, 18
      %v2248 = vadd.s32 %v1994, 18
      %v2249 = vadd.s32 %v2005, 18
      %v2250 = vadd.s32 %v2016, 18
      %v2251 = vadd.s32 %v2027, 18
      %v2252 = vadd.s32 %v2038, 18
      %v2253 = vadd.s32 %v2049, 18
      %v2254 = vadd.s32 %v2060, 18
      %v2255 = vadd.s32 %v2071, 18
      %v2256 = vadd.s32 %v2082, 18
      %v2257 = vadd.s32 %v2093, 18
      %v2258 = vadd.s32 %v2104, 18
      %v2259 = vadd.s32 %v2115, 18
      %v2260 = vsel %vm2188, %v2224, %v1730
      %v2261 = vsel %vm2189, %v2225, %v1741
      %v2262 = vsel %vm2190, %v2226, %v1752
      %v2263 = vsel %vm2191, %v2227, %v1763
      %v2264 = vsel %vm2192, %v2228, %v1774
      %v2265 = vsel %vm2193, %v2229, %v1785
      %v2266 = vsel %vm2194, %v2230, %v1796
      %v2267 = vsel %vm2195, %v2231, %v1807
      %v2268 = vsel %vm2196, %v2232, %v1818
      %v2269 = vsel %vm2197, %v2233, %v1829
      %v2270 = vsel %vm2198, %v2234, %v1840
      %v2271 = vsel %vm2199, %v2235, %v1851
      %v2272 = vsel %vm2200, %v2236, %v1862
      %v2273 = vsel %vm2201, %v2237, %v1873
      %v2274 = vsel %vm2202, %v2238, %v1884
      %v2275 = vsel %vm2203, %v2239, %v1895
      %v2276 = vsel %vm2204, %v2240, %v1906
      %v2277 = vsel %vm2205, %v2241, %v1917
      %v2278 = vsel %vm2206, %v2242, %v1928
      %v2279 = vsel %vm2207, %v2243, %v1939
      %v2280 = vsel %vm2208, %v2244, %v1950
      %v2281 = vsel %vm2209, %v2245, %v1961
      %v2282 = vsel %vm2210, %v2246, %v1972
      %v2283 = vsel %vm2211, %v2247, %v1983
      %v2284 = vsel %vm2212, %v2248, %v1994
      %v2285 = vsel %vm2213, %v2249, %v2005
      %v2286 = vsel %vm2214, %v2250, %v2016
      %v2287 = vsel %vm2215, %v2251, %v2027
      %v2288 = vsel %vm2216, %v2252, %v2038
      %v2289 = vsel %vm2217, %v2253, %v2049
      %v2290 = vsel %vm2218, %v2254, %v2060
      %v2291 = vsel %vm2219, %v2255, %v2071
      %v2292 = vsel %vm2220, %v2256, %v2082
      %v2293 = vsel %vm2221, %v2257, %v2093
      %v2294 = vsel %vm2222, %v2258, %v2104
      %v2295 = vsel %vm2223, %v2259, %v2115
      %vm2296 = vcmp.lt.s32.totalorder %v2260, 16
      %vm2297 = vcmp.lt.s32.totalorder %v2261, 16
      %vm2298 = vcmp.lt.s32.totalorder %v2262, 16
      %vm2299 = vcmp.lt.s32.totalorder %v2263, 16
      %vm2300 = vcmp.lt.s32.totalorder %v2264, 16
      %vm2301 = vcmp.lt.s32.totalorder %v2265, 16
      %vm2302 = vcmp.lt.s32.totalorder %v2266, 16
      %vm2303 = vcmp.lt.s32.totalorder %v2267, 16
      %vm2304 = vcmp.lt.s32.totalorder %v2268, 16
      %vm2305 = vcmp.lt.s32.totalorder %v2269, 16
      %vm2306 = vcmp.lt.s32.totalorder %v2270, 16
      %vm2307 = vcmp.lt.s32.totalorder %v2271, 16
      %vm2308 = vcmp.lt.s32.totalorder %v2272, 16
      %vm2309 = vcmp.lt.s32.totalorder %v2273, 16
      %vm2310 = vcmp.lt.s32.totalorder %v2274, 16
      %vm2311 = vcmp.lt.s32.totalorder %v2275, 16
      %vm2312 = vcmp.lt.s32.totalorder %v2276, 16
      %vm2313 = vcmp.lt.s32.totalorder %v2277, 16
      %vm2314 = vcmp.lt.s32.totalorder %v2278, 16
      %vm2315 = vcmp.lt.s32.totalorder %v2279, 16
      %vm2316 = vcmp.lt.s32.totalorder %v2280, 16
      %vm2317 = vcmp.lt.s32.totalorder %v2281, 16
      %vm2318 = vcmp.lt.s32.totalorder %v2282, 16
      %vm2319 = vcmp.lt.s32.totalorder %v2283, 16
      %vm2320 = vcmp.lt.s32.totalorder %v2284, 16
      %vm2321 = vcmp.lt.s32.totalorder %v2285, 16
      %vm2322 = vcmp.lt.s32.totalorder %v2286, 16
      %vm2323 = vcmp.lt.s32.totalorder %v2287, 16
      %vm2324 = vcmp.lt.s32.totalorder %v2288, 16
      %vm2325 = vcmp.lt.s32.totalorder %v2289, 16
      %vm2326 = vcmp.lt.s32.totalorder %v2290, 16
      %vm2327 = vcmp.lt.s32.totalorder %v2291, 16
      %vm2328 = vcmp.lt.s32.totalorder %v2292, 16
      %vm2329 = vcmp.lt.s32.totalorder %v2293, 16
      %vm2330 = vcmp.lt.s32.totalorder %v2294, 16
      %vm2331 = vcmp.lt.s32.totalorder %v2295, 16
      %v2332 = vsel %vm2296, 1, 0
      %v2333 = vsel %vm2297, 1, 0
      %v2334 = vsel %vm2298, 1, 0
      %v2335 = vsel %vm2299, 1, 0
      %v2336 = vsel %vm2300, 1, 0
      %v2337 = vsel %vm2301, 1, 0
      %v2338 = vsel %vm2302, 1, 0
      %v2339 = vsel %vm2303, 1, 0
      %v2340 = vsel %vm2304, 1, 0
      %v2341 = vsel %vm2305, 1, 0
      %v2342 = vsel %vm2306, 1, 0
      %v2343 = vsel %vm2307, 1, 0
      %v2344 = vsel %vm2308, 1, 0
      %v2345 = vsel %vm2309, 1, 0
      %v2346 = vsel %vm2310, 1, 0
      %v2347 = vsel %vm2311, 1, 0
      %v2348 = vsel %vm2312, 1, 0
      %v2349 = vsel %vm2313, 1, 0
      %v2350 = vsel %vm2314, 1, 0
      %v2351 = vsel %vm2315, 1, 0
      %v2352 = vsel %vm2316, 1, 0
      %v2353 = vsel %vm2317, 1, 0
      %v2354 = vsel %vm2318, 1, 0
      %v2355 = vsel %vm2319, 1, 0
      %v2356 = vsel %vm2320, 1, 0
      %v2357 = vsel %vm2321, 1, 0
      %v2358 = vsel %vm2322, 1, 0
      %v2359 = vsel %vm2323, 1, 0
      %v2360 = vsel %vm2324, 1, 0
      %v2361 = vsel %vm2325, 1, 0
      %v2362 = vsel %vm2326, 1, 0
      %v2363 = vsel %vm2327, 1, 0
      %v2364 = vsel %vm2328, 1, 0
      %v2365 = vsel %vm2329, 1, 0
      %v2366 = vsel %vm2330, 1, 0
      %v2367 = vsel %vm2331, 1, 0
      %v2368 = vcvt.s32.f32 %v2332
      %v2369 = vcvt.s32.f32 %v2333
      %v2370 = vcvt.s32.f32 %v2334
      %v2371 = vcvt.s32.f32 %v2335
      %v2372 = vcvt.s32.f32 %v2336
      %v2373 = vcvt.s32.f32 %v2337
      %v2374 = vcvt.s32.f32 %v2338
      %v2375 = vcvt.s32.f32 %v2339
      %v2376 = vcvt.s32.f32 %v2340
      %v2377 = vcvt.s32.f32 %v2341
      %v2378 = vcvt.s32.f32 %v2342
      %v2379 = vcvt.s32.f32 %v2343
      %v2380 = vcvt.s32.f32 %v2344
      %v2381 = vcvt.s32.f32 %v2345
      %v2382 = vcvt.s32.f32 %v2346
      %v2383 = vcvt.s32.f32 %v2347
      %v2384 = vcvt.s32.f32 %v2348
      %v2385 = vcvt.s32.f32 %v2349
      %v2386 = vcvt.s32.f32 %v2350
      %v2387 = vcvt.s32.f32 %v2351
      %v2388 = vcvt.s32.f32 %v2352
      %v2389 = vcvt.s32.f32 %v2353
      %v2390 = vcvt.s32.f32 %v2354
      %v2391 = vcvt.s32.f32 %v2355
      %v2392 = vcvt.s32.f32 %v2356
      %v2393 = vcvt.s32.f32 %v2357
      %v2394 = vcvt.s32.f32 %v2358
      %v2395 = vcvt.s32.f32 %v2359
      %v2396 = vcvt.s32.f32 %v2360
      %v2397 = vcvt.s32.f32 %v2361
      %v2398 = vcvt.s32.f32 %v2362
      %v2399 = vcvt.s32.f32 %v2363
      %v2400 = vcvt.s32.f32 %v2364
      %v2401 = vcvt.s32.f32 %v2365
      %v2402 = vcvt.s32.f32 %v2366
      %v2403 = vcvt.s32.f32 %v2367
      %v2404 = vpack.c.bf16 %v1544, %v1541
      %v2405 = vpack.c.bf16 %v1552, %v1549
      %v2406 = vpack.c.bf16 %v1560, %v1557
      %v2407 = vpack.c.bf16 %v1568, %v1565
      %v2408 = vpack.c.bf16 %v1576, %v1573
      %v2409 = vpack.c.bf16 %v1584, %v1581
      %v2410 = vpack.c.bf16 %v1592, %v1589
      %v2411 = vpack.c.bf16 %v1600, %v1597
      %v2412 = vpack.c.bf16 %v1608, %v1605
      %v2413 = vpack.c.bf16 %v1616, %v1613
      %v2414 = vpack.c.bf16 %v1624, %v1621
      %v2415 = vpack.c.bf16 %v1632, %v1629
      %v2416 = vpack.c.bf16 %v1640, %v1637
      %v2417 = vpack.c.bf16 %v1648, %v1645
      %v2418 = vpack.c.bf16 %v1656, %v1653
      %v2419 = vpack.c.bf16 %v1664, %v1661
      %v2420 = vpack.c.bf16 %v1672, %v1669
      %v2421 = vpack.c.bf16 %v1680, %v1677
      %v2440 = vunpack.c.l.b16 %v2404
      %v2441 = vunpack.c.h.b16 %v2404
      %v2442 = vunpack.c.l.b16 %v2405
      %v2443 = vunpack.c.h.b16 %v2405
      %v2444 = vunpack.c.l.b16 %v2406
      %v2445 = vunpack.c.h.b16 %v2406
      %v2446 = vunpack.c.l.b16 %v2407
      %v2447 = vunpack.c.h.b16 %v2407
      %v2448 = vunpack.c.l.b16 %v2408
      %v2449 = vunpack.c.h.b16 %v2408
      %v2450 = vunpack.c.l.b16 %v2409
      %v2451 = vunpack.c.h.b16 %v2409
      %v2452 = vunpack.c.l.b16 %v2410
      %v2453 = vunpack.c.h.b16 %v2410
      %v2454 = vunpack.c.l.b16 %v2411
      %v2455 = vunpack.c.h.b16 %v2411
      %v2456 = vunpack.c.l.b16 %v2412
      %v2457 = vunpack.c.h.b16 %v2412
      %v2458 = vunpack.c.l.b16 %v2413
      %v2459 = vunpack.c.h.b16 %v2413
      %v2460 = vunpack.c.l.b16 %v2414
      %v2461 = vunpack.c.h.b16 %v2414
      %v2462 = vunpack.c.l.b16 %v2415
      %v2463 = vunpack.c.h.b16 %v2415
      %v2464 = vunpack.c.l.b16 %v2416
      %v2465 = vunpack.c.h.b16 %v2416
      %v2466 = vunpack.c.l.b16 %v2417
      %v2467 = vunpack.c.h.b16 %v2417
      %v2468 = vunpack.c.l.b16 %v2418
      %v2469 = vunpack.c.h.b16 %v2418
      %v2470 = vunpack.c.l.b16 %v2419
      %v2471 = vunpack.c.h.b16 %v2419
      %v2472 = vunpack.c.l.b16 %v2420
      %v2473 = vunpack.c.h.b16 %v2420
      %v2474 = vunpack.c.l.b16 %v2421
      %v2475 = vunpack.c.h.b16 %v2421
      %v2476 = vpack.c.b16 %v2440, %v2440
      %v2477 = vpack.c.b16 %v2441, %v2441
      %v2478 = vpack.c.b16 %v2442, %v2442
      %v2479 = vpack.c.b16 %v2443, %v2443
      %v2480 = vpack.c.b16 %v2444, %v2444
      %v2481 = vpack.c.b16 %v2445, %v2445
      %v2482 = vpack.c.b16 %v2446, %v2446
      %v2483 = vpack.c.b16 %v2447, %v2447
      %v2484 = vpack.c.b16 %v2448, %v2448
      %v2485 = vpack.c.b16 %v2449, %v2449
      %v2486 = vpack.c.b16 %v2450, %v2450
      %v2487 = vpack.c.b16 %v2451, %v2451
      %v2488 = vpack.c.b16 %v2452, %v2452
      %v2489 = vpack.c.b16 %v2453, %v2453
      %v2490 = vpack.c.b16 %v2454, %v2454
      %v2491 = vpack.c.b16 %v2455, %v2455
      %v2492 = vpack.c.b16 %v2456, %v2456
      %v2493 = vpack.c.b16 %v2457, %v2457
      %v2494 = vpack.c.b16 %v2458, %v2458
      %v2495 = vpack.c.b16 %v2459, %v2459
      %v2496 = vpack.c.b16 %v2460, %v2460
      %v2497 = vpack.c.b16 %v2461, %v2461
      %v2498 = vpack.c.b16 %v2462, %v2462
      %v2499 = vpack.c.b16 %v2463, %v2463
      %v2500 = vpack.c.b16 %v2464, %v2464
      %v2501 = vpack.c.b16 %v2465, %v2465
      %v2502 = vpack.c.b16 %v2466, %v2466
      %v2503 = vpack.c.b16 %v2467, %v2467
      %v2504 = vpack.c.b16 %v2468, %v2468
      %v2505 = vpack.c.b16 %v2469, %v2469
      %v2506 = vpack.c.b16 %v2470, %v2470
      %v2507 = vpack.c.b16 %v2471, %v2471
      %v2508 = vpack.c.b16 %v2472, %v2472
      %v2509 = vpack.c.b16 %v2473, %v2473
      %v2510 = vpack.c.b16 %v2474, %v2474
      %v2511 = vpack.c.b16 %v2475, %v2475
      %vm2548 = vcmask 60416
      %2549 = vst.msk [vmem:[%s177] sm:$0xf] %vm2548, %v2476
      %2550 = vst.msk [vmem:[%s177 + $0x4] sm:$0xf] %vm2548, %v2477
      %2551 = vst.msk [vmem:[%s177 + $0x8] sm:$0xf] %vm2548, %v2478
      %2552 = vst.msk [vmem:[%s177 + $0xc] sm:$0xf] %vm2548, %v2479
      %2553 = vst.msk [vmem:[%s177 + $0x10] sm:$0xf] %vm2548, %v2480
      %2554 = vst.msk [vmem:[%s177 + $0x14] sm:$0xf] %vm2548, %v2481
      %2555 = vst.msk [vmem:[%s177 + $0x18] sm:$0xf] %vm2548, %v2482
      %2556 = vst.msk [vmem:[%s177 + $0x1c] sm:$0xf] %vm2548, %v2483
      %2557 = vst.msk [vmem:[%s177 + $0x20] sm:$0xf] %vm2548, %v2484
      %2558 = vst.msk [vmem:[%s177 + $0x24] sm:$0xf] %vm2548, %v2485
      %2559 = vst.msk [vmem:[%s177 + $0x28] sm:$0xf] %vm2548, %v2486
      %2560 = vst.msk [vmem:[%s177 + $0x2c] sm:$0xf] %vm2548, %v2487
      %2561 = vst.msk [vmem:[%s177 + $0x30] sm:$0xf] %vm2548, %v2488
      %2562 = vst.msk [vmem:[%s177 + $0x34] sm:$0xf] %vm2548, %v2489
      %2563 = vst.msk [vmem:[%s177 + $0x38] sm:$0xf] %vm2548, %v2490
      %2564 = vst.msk [vmem:[%s177 + $0x3c] sm:$0xf] %vm2548, %v2491
      %2565 = vst.msk [vmem:[%s177 + $0x40] sm:$0xf] %vm2548, %v2492
      %2566 = vst.msk [vmem:[%s177 + $0x44] sm:$0xf] %vm2548, %v2493
      %2567 = vst.msk [vmem:[%s177 + $0x48] sm:$0xf] %vm2548, %v2494
      %2568 = vst.msk [vmem:[%s177 + $0x4c] sm:$0xf] %vm2548, %v2495
      %2569 = vst.msk [vmem:[%s177 + $0x50] sm:$0xf] %vm2548, %v2496
      %2570 = vst.msk [vmem:[%s177 + $0x54] sm:$0xf] %vm2548, %v2497
      %2571 = vst.msk [vmem:[%s177 + $0x58] sm:$0xf] %vm2548, %v2498
      %2572 = vst.msk [vmem:[%s177 + $0x5c] sm:$0xf] %vm2548, %v2499
      %2573 = vst.msk [vmem:[%s177 + $0x60] sm:$0xf] %vm2548, %v2500
      %2574 = vst.msk [vmem:[%s177 + $0x64] sm:$0xf] %vm2548, %v2501
      %2575 = vst.msk [vmem:[%s177 + $0x68] sm:$0xf] %vm2548, %v2502
      %2576 = vst.msk [vmem:[%s177 + $0x6c] sm:$0xf] %vm2548, %v2503
      %2577 = vst.msk [vmem:[%s177 + $0x70] sm:$0xf] %vm2548, %v2504
      %2578 = vst.msk [vmem:[%s177 + $0x74] sm:$0xf] %vm2548, %v2505
      %2579 = vst.msk [vmem:[%s177 + $0x78] sm:$0xf] %vm2548, %v2506
      %2580 = vst.msk [vmem:[%s177 + $0x7c] sm:$0xf] %vm2548, %v2507
      %2581 = vst.msk [vmem:[%s177 + $0x80] sm:$0xf] %vm2548, %v2508
      %2582 = vst.msk [vmem:[%s177 + $0x84] sm:$0xf] %vm2548, %v2509
      %2583 = vst.msk [vmem:[%s177 + $0x88] sm:$0xf] %vm2548, %v2510
      %2584 = vst.msk [vmem:[%s177 + $0x8c] sm:$0xf] %vm2548, %v2511
      %v2585 = vmul.f32 %v1541, %v2368
      %v2586 = vmul.f32 %v1544, %v2369
      %v2587 = vmul.f32 %v1549, %v2370
      %v2588 = vmul.f32 %v1552, %v2371
      %v2589 = vmul.f32 %v1557, %v2372
      %v2590 = vmul.f32 %v1560, %v2373
      %v2591 = vmul.f32 %v1565, %v2374
      %v2592 = vmul.f32 %v1568, %v2375
      %v2593 = vmul.f32 %v1573, %v2376
      %v2594 = vmul.f32 %v1576, %v2377
      %v2595 = vmul.f32 %v1581, %v2378
      %v2596 = vmul.f32 %v1584, %v2379
      %v2597 = vmul.f32 %v1589, %v2380
      %v2598 = vmul.f32 %v1592, %v2381
      %v2599 = vmul.f32 %v1597, %v2382
      %v2600 = vmul.f32 %v1600, %v2383
      %v2601 = vmul.f32 %v1605, %v2384
      %v2602 = vmul.f32 %v1608, %v2385
      %v2603 = vmul.f32 %v1613, %v2386
      %v2604 = vmul.f32 %v1616, %v2387
      %v2605 = vmul.f32 %v1621, %v2388
      %v2606 = vmul.f32 %v1624, %v2389
      %v2607 = vmul.f32 %v1629, %v2390
      %v2608 = vmul.f32 %v1632, %v2391
      %v2609 = vmul.f32 %v1637, %v2392
      %v2610 = vmul.f32 %v1640, %v2393
      %v2611 = vmul.f32 %v1645, %v2394
      %v2612 = vmul.f32 %v1648, %v2395
      %v2613 = vmul.f32 %v1653, %v2396
      %v2614 = vmul.f32 %v1656, %v2397
      %v2615 = vmul.f32 %v1661, %v2398
      %v2616 = vmul.f32 %v1664, %v2399
      %v2617 = vmul.f32 %v1669, %v2400
      %v2618 = vmul.f32 %v1672, %v2401
      %v2619 = vmul.f32 %v1677, %v2402
      %v2620 = vmul.f32 %v1680, %v2403
      %v2621 = vsel %vm1145, %v2585, 0.0
      %v2622 = vsel %vm1145, %v2586, 0.0
      %v2623 = vadd.f32 %v2621, %v2622
      %v2624 = vsel %vm1145, %v2587, 0.0
      %v2625 = vadd.f32 %v2623, %v2624
      %v2626 = vsel %vm1145, %v2588, 0.0
      %v2627 = vadd.f32 %v2625, %v2626
      %v2628 = vsel %vm1145, %v2589, 0.0
      %v2629 = vadd.f32 %v2627, %v2628
      %v2630 = vsel %vm1145, %v2590, 0.0
      %v2631 = vadd.f32 %v2629, %v2630
      %v2632 = vsel %vm1145, %v2591, 0.0
      %v2633 = vadd.f32 %v2631, %v2632
      %v2634 = vsel %vm1145, %v2592, 0.0
      %v2635 = vadd.f32 %v2633, %v2634
      %v2636 = vsel %vm1145, %v2593, 0.0
      %v2637 = vadd.f32 %v2635, %v2636
      %v2638 = vsel %vm1145, %v2594, 0.0
      %v2639 = vadd.f32 %v2637, %v2638
      %v2640 = vsel %vm1145, %v2595, 0.0
      %v2641 = vadd.f32 %v2639, %v2640
      %v2642 = vsel %vm1145, %v2596, 0.0
      %v2643 = vadd.f32 %v2641, %v2642
      %v2644 = vsel %vm1145, %v2597, 0.0
      %v2645 = vadd.f32 %v2643, %v2644
      %v2646 = vsel %vm1145, %v2598, 0.0
      %v2647 = vadd.f32 %v2645, %v2646
      %v2648 = vsel %vm1145, %v2599, 0.0
      %v2649 = vadd.f32 %v2647, %v2648
      %v2650 = vsel %vm1145, %v2600, 0.0
      %v2651 = vadd.f32 %v2649, %v2650
      %v2652 = vsel %vm1145, %v2601, 0.0
      %v2653 = vadd.f32 %v2651, %v2652
      %v2654 = vsel %vm1145, %v2602, 0.0
      %v2655 = vadd.f32 %v2653, %v2654
      %v2656 = vsel %vm1145, %v2603, 0.0
      %v2657 = vadd.f32 %v2655, %v2656
      %v2658 = vsel %vm1145, %v2604, 0.0
      %v2659 = vadd.f32 %v2657, %v2658
      %v2660 = vsel %vm1145, %v2605, 0.0
      %v2661 = vadd.f32 %v2659, %v2660
      %v2662 = vsel %vm1145, %v2606, 0.0
      %v2663 = vadd.f32 %v2661, %v2662
      %v2664 = vsel %vm1145, %v2607, 0.0
      %v2665 = vadd.f32 %v2663, %v2664
      %v2666 = vsel %vm1145, %v2608, 0.0
      %v2667 = vadd.f32 %v2665, %v2666
      %v2668 = vsel %vm1145, %v2609, 0.0
      %v2669 = vadd.f32 %v2667, %v2668
      %v2670 = vsel %vm1145, %v2610, 0.0
      %v2671 = vadd.f32 %v2669, %v2670
      %v2672 = vsel %vm1145, %v2611, 0.0
      %v2673 = vadd.f32 %v2671, %v2672
      %v2674 = vsel %vm1145, %v2612, 0.0
      %v2675 = vadd.f32 %v2673, %v2674
      %v2676 = vsel %vm1145, %v2613, 0.0
      %v2677 = vadd.f32 %v2675, %v2676
      %v2678 = vsel %vm1145, %v2614, 0.0
      %v2679 = vadd.f32 %v2677, %v2678
      %v2680 = vsel %vm1145, %v2615, 0.0
      %v2681 = vadd.f32 %v2679, %v2680
      %v2682 = vsel %vm1145, %v2616, 0.0
      %v2683 = vadd.f32 %v2681, %v2682
      %v2684 = vsel %vm1145, %v2617, 0.0
      %v2685 = vadd.f32 %v2683, %v2684
      %v2686 = vsel %vm1145, %v2618, 0.0
      %v2687 = vadd.f32 %v2685, %v2686
      %v2688 = vsel %vm1145, %v2619, 0.0
      %v2689 = vadd.f32 %v2687, %v2688
      %v2690 = vsel %vm1145, %v2620, 0.0
      %v2691 = vadd.f32 %v2689, %v2690
      %v2692 = vrot.slane %v2691, 4
      %v2693 = vadd.f32 %v2691, %v2692
      %v2694 = vrot.slane %v2693, 2
      %v2695 = vadd.f32 %v2693, %v2694
      %v2696 = vrot.slane %v2695, 1
      %v2697 = vadd.f32 %v2695, %v2696
      %v2698 = vmul.f32 %v1541, %v1541
      %v2699 = vmul.f32 %v1544, %v1544
      %v2700 = vmul.f32 %v1549, %v1549
      %v2701 = vmul.f32 %v1552, %v1552
      %v2702 = vmul.f32 %v1557, %v1557
      %v2703 = vmul.f32 %v1560, %v1560
      %v2704 = vmul.f32 %v1565, %v1565
      %v2705 = vmul.f32 %v1568, %v1568
      %v2706 = vmul.f32 %v1573, %v1573
      %v2707 = vmul.f32 %v1576, %v1576
      %v2708 = vmul.f32 %v1581, %v1581
      %v2709 = vmul.f32 %v1584, %v1584
      %v2710 = vmul.f32 %v1589, %v1589
      %v2711 = vmul.f32 %v1592, %v1592
      %v2712 = vmul.f32 %v1597, %v1597
      %v2713 = vmul.f32 %v1600, %v1600
      %v2714 = vmul.f32 %v1605, %v1605
      %v2715 = vmul.f32 %v1608, %v1608
      %v2716 = vmul.f32 %v1613, %v1613
      %v2717 = vmul.f32 %v1616, %v1616
      %v2718 = vmul.f32 %v1621, %v1621
      %v2719 = vmul.f32 %v1624, %v1624
      %v2720 = vmul.f32 %v1629, %v1629
      %v2721 = vmul.f32 %v1632, %v1632
      %v2722 = vmul.f32 %v1637, %v1637
      %v2723 = vmul.f32 %v1640, %v1640
      %v2724 = vmul.f32 %v1645, %v1645
      %v2725 = vmul.f32 %v1648, %v1648
      %v2726 = vmul.f32 %v1653, %v1653
      %v2727 = vmul.f32 %v1656, %v1656
      %v2728 = vmul.f32 %v1661, %v1661
      %v2729 = vmul.f32 %v1664, %v1664
      %v2730 = vmul.f32 %v1669, %v1669
      %v2731 = vmul.f32 %v1672, %v1672
      %v2732 = vmul.f32 %v1677, %v1677
      %v2733 = vmul.f32 %v1680, %v1680
      %v2734 = vmul.f32 %v2698, %v2368
      %v2735 = vmul.f32 %v2699, %v2369
      %v2736 = vmul.f32 %v2700, %v2370
      %v2737 = vmul.f32 %v2701, %v2371
      %v2738 = vmul.f32 %v2702, %v2372
      %v2739 = vmul.f32 %v2703, %v2373
      %v2740 = vmul.f32 %v2704, %v2374
      %v2741 = vmul.f32 %v2705, %v2375
      %v2742 = vmul.f32 %v2706, %v2376
      %v2743 = vmul.f32 %v2707, %v2377
      %v2744 = vmul.f32 %v2708, %v2378
      %v2745 = vmul.f32 %v2709, %v2379
      %v2746 = vmul.f32 %v2710, %v2380
      %v2747 = vmul.f32 %v2711, %v2381
      %v2748 = vmul.f32 %v2712, %v2382
      %v2749 = vmul.f32 %v2713, %v2383
      %v2750 = vmul.f32 %v2714, %v2384
      %v2751 = vmul.f32 %v2715, %v2385
      %v2752 = vmul.f32 %v2716, %v2386
      %v2753 = vmul.f32 %v2717, %v2387
      %v2754 = vmul.f32 %v2718, %v2388
      %v2755 = vmul.f32 %v2719, %v2389
      %v2756 = vmul.f32 %v2720, %v2390
      %v2757 = vmul.f32 %v2721, %v2391
      %v2758 = vmul.f32 %v2722, %v2392
      %v2759 = vmul.f32 %v2723, %v2393
      %v2760 = vmul.f32 %v2724, %v2394
      %v2761 = vmul.f32 %v2725, %v2395
      %v2762 = vmul.f32 %v2726, %v2396
      %v2763 = vmul.f32 %v2727, %v2397
      %v2764 = vmul.f32 %v2728, %v2398
      %v2765 = vmul.f32 %v2729, %v2399
      %v2766 = vmul.f32 %v2730, %v2400
      %v2767 = vmul.f32 %v2731, %v2401
      %v2768 = vmul.f32 %v2732, %v2402
      %v2769 = vmul.f32 %v2733, %v2403
      %v2770 = vsel %vm1145, %v2734, 0.0
      %v2771 = vsel %vm1145, %v2735, 0.0
      %v2772 = vadd.f32 %v2770, %v2771
      %v2773 = vsel %vm1145, %v2736, 0.0
      %v2774 = vadd.f32 %v2772, %v2773
      %v2775 = vsel %vm1145, %v2737, 0.0
      %v2776 = vadd.f32 %v2774, %v2775
      %v2777 = vsel %vm1145, %v2738, 0.0
      %v2778 = vadd.f32 %v2776, %v2777
      %v2779 = vsel %vm1145, %v2739, 0.0
      %v2780 = vadd.f32 %v2778, %v2779
      %v2781 = vsel %vm1145, %v2740, 0.0
      %v2782 = vadd.f32 %v2780, %v2781
      %v2783 = vsel %vm1145, %v2741, 0.0
      %v2784 = vadd.f32 %v2782, %v2783
      %v2785 = vsel %vm1145, %v2742, 0.0
      %v2786 = vadd.f32 %v2784, %v2785
      %v2787 = vsel %vm1145, %v2743, 0.0
      %v2788 = vadd.f32 %v2786, %v2787
      %v2789 = vsel %vm1145, %v2744, 0.0
      %v2790 = vadd.f32 %v2788, %v2789
      %v2791 = vsel %vm1145, %v2745, 0.0
      %v2792 = vadd.f32 %v2790, %v2791
      %v2793 = vsel %vm1145, %v2746, 0.0
      %v2794 = vadd.f32 %v2792, %v2793
      %v2795 = vsel %vm1145, %v2747, 0.0
      %v2796 = vadd.f32 %v2794, %v2795
      %v2797 = vsel %vm1145, %v2748, 0.0
      %v2798 = vadd.f32 %v2796, %v2797
      %v2799 = vsel %vm1145, %v2749, 0.0
      %v2800 = vadd.f32 %v2798, %v2799
      %v2801 = vsel %vm1145, %v2750, 0.0
      %v2802 = vadd.f32 %v2800, %v2801
      %v2803 = vsel %vm1145, %v2751, 0.0
      %v2804 = vadd.f32 %v2802, %v2803
      %v2805 = vsel %vm1145, %v2752, 0.0
      %v2806 = vadd.f32 %v2804, %v2805
      %v2807 = vsel %vm1145, %v2753, 0.0
      %v2808 = vadd.f32 %v2806, %v2807
      %v2809 = vsel %vm1145, %v2754, 0.0
      %v2810 = vadd.f32 %v2808, %v2809
      %v2811 = vsel %vm1145, %v2755, 0.0
      %v2812 = vadd.f32 %v2810, %v2811
      %v2813 = vsel %vm1145, %v2756, 0.0
      %v2814 = vadd.f32 %v2812, %v2813
      %v2815 = vsel %vm1145, %v2757, 0.0
      %v2816 = vadd.f32 %v2814, %v2815
      %v2817 = vsel %vm1145, %v2758, 0.0
      %v2818 = vadd.f32 %v2816, %v2817
      %v2819 = vsel %vm1145, %v2759, 0.0
      %v2820 = vadd.f32 %v2818, %v2819
      %v2821 = vsel %vm1145, %v2760, 0.0
      %v2822 = vadd.f32 %v2820, %v2821
      %v2823 = vsel %vm1145, %v2761, 0.0
      %v2824 = vadd.f32 %v2822, %v2823
      %v2825 = vsel %vm1145, %v2762, 0.0
      %v2826 = vadd.f32 %v2824, %v2825
      %v2827 = vsel %vm1145, %v2763, 0.0
      %v2828 = vadd.f32 %v2826, %v2827
      %v2829 = vsel %vm1145, %v2764, 0.0
      %v2830 = vadd.f32 %v2828, %v2829
      %v2831 = vsel %vm1145, %v2765, 0.0
      %v2832 = vadd.f32 %v2830, %v2831
      %v2833 = vsel %vm1145, %v2766, 0.0
      %v2834 = vadd.f32 %v2832, %v2833
      %v2835 = vsel %vm1145, %v2767, 0.0
      %v2836 = vadd.f32 %v2834, %v2835
      %v2837 = vsel %vm1145, %v2768, 0.0
      %v2838 = vadd.f32 %v2836, %v2837
      %v2839 = vsel %vm1145, %v2769, 0.0
      %v2840 = vadd.f32 %v2838, %v2839
      %v2841 = vrot.slane %v2840, 4
      %v2842 = vadd.f32 %v2840, %v2841
      %v2843 = vrot.slane %v2842, 2
      %v2844 = vadd.f32 %v2842, %v2843
      %v2845 = vrot.slane %v2844, 1
      %v2846 = vadd.f32 %v2844, %v2845
      %vm2847 = vcmask 1040384
      %v2848 = vsel %vm2847, %v2697, %v2846
      %vm2849 = vcmask 58368
      %2850 = vst.msk [vmem:[%s181] sm:$0x3] %vm2849, %v2848
      %p2851 = scmp.lt.s32.totalorder %s15, 1
      %s2852 = scalar_select %p2851, %s15, 1
      %s2853 = smul.addr %s2852, 36
      %s2854 = smul.addr %s2853, 4
      %s2855 = scalar_lea.vmem %s2, %s2854
      %p2856 = scmp.lt.s32.totalorder %s15, 1
      %s2857 = scalar_select %p2856, %s15, 1
      %s2858 = smul.addr %s2857, 2
      %s2859 = scalar_lea.vmem %s3, %s2858
      // Predicated region
      $region29: #{double_conv2d_bn_forward.3} parent=27 // pred_check
        %p2860 = pneg %p80
      $region30: #{double_conv2d_bn_forward.3} parent=27 // pred_check_branch
        %2862 = sbr.rel (%p2860) target = $region32
      $region31: #{double_conv2d_bn_forward.3} parent=27 // pred_region
        _
      $region32: #{double_conv2d_bn_forward.3} parent=27 // pred_fallthru
        _
      // Predicated region
      $region33: #{double_conv2d_bn_forward.3} parent=27 // pred_check
        %p2863 = pneg %p106
      $region34: #{double_conv2d_bn_forward.3} parent=27 // pred_check_branch
        %2865 = sbr.rel (%p2863) target = $region36
      $region35: #{double_conv2d_bn_forward.3} parent=27 // pred_region
        _
      $region36: #{double_conv2d_bn_forward.3} parent=27 // pred_fallthru
        _
    $region28: #{double_conv2d_bn_forward.3} parent=5 // pred_fallthru
      _
    %p2866 = scmp.le.s32.totalorder 2, %s10
    // Predicated region
    $region37: #{double_conv2d_bn_forward.3} parent=5 // pred_check
      %p2867 = pneg %p2866
    $region38: #{double_conv2d_bn_forward.3} parent=5 // pred_check_branch
      %2869 = sbr.rel (%p2867) target = $region40
    $region39: #{double_conv2d_bn_forward.3} parent=5 // pred_region
      %s2870 = ssub.s32 %s10, 2
      // Predicated region
      $region41: #{double_conv2d_bn_forward.3} parent=39 // pred_check
        %p2871 = pneg %p86
      $region42: #{double_conv2d_bn_forward.3} parent=39 // pred_check_branch
        %2873 = sbr.rel (%p2871) target = $region44
      $region43: #{double_conv2d_bn_forward.3} parent=39 // pred_region
        %p2874 = scmp.lt.s32.totalorder %s16, 1
        %s2875 = scalar_select %p2874, %s16, 1
        %s2876 = smul.addr %s2875, 36
        %s2877 = smul.addr %s2876, 4
        %s2878 = scalar_lea.vmem %s2, %s2877
      $region44: #{double_conv2d_bn_forward.3} parent=39 // pred_fallthru
        _
      // Predicated region
      $region45: #{double_conv2d_bn_forward.3} parent=39 // pred_check
        %p2879 = pneg %p112
      $region46: #{double_conv2d_bn_forward.3} parent=39 // pred_check_branch
        %2881 = sbr.rel (%p2879) target = $region48
      $region47: #{double_conv2d_bn_forward.3} parent=39 // pred_region
        %p2882 = scmp.lt.s32.totalorder %s16, 1
        %s2883 = scalar_select %p2882, %s16, 1
        %s2884 = smul.addr %s2883, 2
        %s2885 = scalar_lea.vmem %s3, %s2884
      $region48: #{double_conv2d_bn_forward.3} parent=39 // pred_fallthru
        _
    $region40: #{double_conv2d_bn_forward.3} parent=5 // pred_fallthru
      _
  $region6: #{double_conv2d_bn_forward.3} parent=0 // loop_footer
    %s14 = sadd.s32 1, %s10
  $region7: #{double_conv2d_bn_forward.3} parent=0 // loop_footer_branch
    %9 = sbr.rel target = $region3
  $region8: #{double_conv2d_bn_forward.3} parent=0 // loop_exit
    _

// kernel: double_conv2d_bn_forward.4
$region0: #{double_conv2d_bn_forward.4}
  #allocation0 [shape = 'u32[]', space=smem, size = 0x4, offset = 0x4, fixed_abs, tag = 'smem constant byte address 0x4 - core index']
  #allocation1 [shape = 'u32[144,128]{1,0:T(1,128)}', space=vmem, size = 0x12000, scoped, tag = 'internal scratch']
  #allocation2 [shape = 'bf16[326,8]{1,0:T(8,128)(2,1)}', space=vmem, size = 0x14800, scoped, tag = 'scratch operand']
  %s0 = inlined_call_operand.vmem [shape: bf16[2,288,8], index: 0, kind: input, shape index: {}]
  %s1 = inlined_call_operand.vmem [shape: f32[2,8], index: 1, kind: input, shape index: {}]
  %s2 = inlined_call_operand.vmem [shape: bf16[128,128], index: 2, kind: input, shape index: {}]
  %s3 = inlined_call_operand.vmem [shape: bf16[2,288,8], index: 3, kind: output, shape index: {0}]
  %s4 = inlined_call_operand.vmem [shape: f32[2,2,8], index: 4, kind: output, shape index: {1}]
  %5 = xla_tuple %s3, %s4
  %s6 = sld [smem:[#allocation0]]
  $region53: #{double_conv2d_bn_forward.4} parent=0
    _
  %s8 = ssub.s32 1, %s6
  %s9 = scalar_select 0, %s8, %s6
  loop: start=0, step=1, limit=4
  $region2: #{double_conv2d_bn_forward.4} parent=0 // loop_pre_header
    _
  $region3: #{double_conv2d_bn_forward.4} parent=0 // loop_header
    %s11 = sphi 0, %s15
    %p12 = scmp.ge.s32.totalorder %s11, 4
    %s21 = sphi 0, %s23
    %s24 = sphi 0, %s21
    %s25 = sphi 0, %s24
    %s41 = sphi 0, %s25
    %s45 = sphi 0, %s45
    %s47 = sphi 0, %s45
    %s48 = sphi 0, %s47
    %s62 = sphi 0, %s48
    %s66 = sphi 0, %s66
    %s68 = sphi 0, %s66
    %s69 = sphi 0, %s68
    %s83 = sphi 0, %s69
    %s89 = sphi 0, %s91
    %s92 = sphi 0, %s89
    %s93 = sphi 0, %s92
    %s109 = sphi 0, %s93
    %s115 = sphi 0, %s117
    %s118 = sphi 0, %s115
    %s119 = sphi 0, %s118
    %s135 = sphi 0, %s119
  $region4: #{double_conv2d_bn_forward.4} parent=0 // loop_header_branch
    %14 = sbr.rel (%p12) target = $region8
  $region5: #{double_conv2d_bn_forward.4} parent=0 // loop_body
    %s16 = ssub.s32 %s11, 1
    %s17 = ssub.s32 %s11, 2
    %s18 = sadd.s32 %s11, 1
    %s19 = ssub.s32 %s11, %s18
    %p20 = scmp.eq.s32.totalorder %s19, 0
    %s22 = sadd.s32 %s21, 1
    %s23 = scalar_select %p20, %s21, %s22
    %p26 = pneg %p20
    %p27 = scmp.eq.s32.totalorder %s11, 1
    %p28 = por %p26, %p27
    %p29 = scmp.ne.s32.totalorder %s21, %s24
    %p30 = scmp.eq.s32.totalorder %s11, 0
    %p31 = por %p29, %p30
    %p32 = scmp.ne.s32.totalorder %s21, %s24
    %p33 = scmp.eq.s32.totalorder %s16, 1
    %p34 = por %p32, %p33
    %p35 = scmp.ne.s32.totalorder %s24, %s25
    %p36 = scmp.eq.s32.totalorder %s16, 0
    %p37 = por %p35, %p36
    %p38 = scmp.ne.s32.totalorder %s24, %s25
    %p39 = scmp.eq.s32.totalorder %s17, 1
    %p40 = por %p38, %p39
    %p42 = scmp.ne.s32.totalorder %s25, %s41
    %p43 = scmp.eq.s32.totalorder %s17, 0
    %p44 = por %p42, %p43
    %s46 = sadd.s32 %s45, 1
    %p49 = scmp.eq.s32.totalorder %s11, 1
    %p50 = scmp.ne.s32.totalorder %s45, %s47
    %p51 = scmp.eq.s32.totalorder %s11, 0
    %p52 = por %p50, %p51
    %p53 = scmp.ne.s32.totalorder %s45, %s47
    %p54 = scmp.eq.s32.totalorder %s16, 1
    %p55 = por %p53, %p54
    %p56 = scmp.ne.s32.totalorder %s47, %s48
    %p57 = scmp.eq.s32.totalorder %s16, 0
    %p58 = por %p56, %p57
    %p59 = scmp.ne.s32.totalorder %s47, %s48
    %p60 = scmp.eq.s32.totalorder %s17, 1
    %p61 = por %p59, %p60
    %p63 = scmp.ne.s32.totalorder %s48, %s62
    %p64 = scmp.eq.s32.totalorder %s17, 0
    %p65 = por %p63, %p64
    %s67 = sadd.s32 %s66, 1
    %p70 = scmp.eq.s32.totalorder %s11, 1
    %p71 = scmp.ne.s32.totalorder %s66, %s68
    %p72 = scmp.eq.s32.totalorder %s11, 0
    %p73 = por %p71, %p72
    %p74 = scmp.ne.s32.totalorder %s66, %s68
    %p75 = scmp.eq.s32.totalorder %s16, 1
    %p76 = por %p74, %p75
    %p77 = scmp.ne.s32.totalorder %s68, %s69
    %p78 = scmp.eq.s32.totalorder %s16, 0
    %p79 = por %p77, %p78
    %p80 = scmp.ne.s32.totalorder %s68, %s69
    %p81 = scmp.eq.s32.totalorder %s17, 1
    %p82 = por %p80, %p81
    %p84 = scmp.ne.s32.totalorder %s69, %s83
    %p85 = scmp.eq.s32.totalorder %s17, 0
    %p86 = por %p84, %p85
    %s87 = ssub.s32 %s11, %s18
    %p88 = scmp.eq.s32.totalorder %s87, 0
    %s90 = sadd.s32 %s89, 1
    %s91 = scalar_select %p88, %s89, %s90
    %p94 = pneg %p88
    %p95 = scmp.eq.s32.totalorder %s11, 1
    %p96 = por %p94, %p95
    %p97 = scmp.ne.s32.totalorder %s89, %s92
    %p98 = scmp.eq.s32.totalorder %s11, 0
    %p99 = por %p97, %p98
    %p100 = scmp.ne.s32.totalorder %s89, %s92
    %p101 = scmp.eq.s32.totalorder %s16, 1
    %p102 = por %p100, %p101
    %p103 = scmp.ne.s32.totalorder %s92, %s93
    %p104 = scmp.eq.s32.totalorder %s16, 0
    %p105 = por %p103, %p104
    %p106 = scmp.ne.s32.totalorder %s92, %s93
    %p107 = scmp.eq.s32.totalorder %s17, 1
    %p108 = por %p106, %p107
    %p110 = scmp.ne.s32.totalorder %s93, %s109
    %p111 = scmp.eq.s32.totalorder %s17, 0
    %p112 = por %p110, %p111
    %s113 = ssub.s32 %s11, %s18
    %p114 = scmp.eq.s32.totalorder %s113, 0
    %s116 = sadd.s32 %s115, 1
    %s117 = scalar_select %p114, %s115, %s116
    %p120 = pneg %p114
    %p121 = scmp.eq.s32.totalorder %s11, 1
    %p122 = por %p120, %p121
    %p123 = scmp.ne.s32.totalorder %s115, %s118
    %p124 = scmp.eq.s32.totalorder %s11, 0
    %p125 = por %p123, %p124
    %p126 = scmp.ne.s32.totalorder %s115, %s118
    %p127 = scmp.eq.s32.totalorder %s16, 1
    %p128 = por %p126, %p127
    %p129 = scmp.ne.s32.totalorder %s118, %s119
    %p130 = scmp.eq.s32.totalorder %s16, 0
    %p131 = por %p129, %p130
    %p132 = scmp.ne.s32.totalorder %s118, %s119
    %p133 = scmp.eq.s32.totalorder %s17, 1
    %p134 = por %p132, %p133
    %p136 = scmp.ne.s32.totalorder %s119, %s135
    %p137 = scmp.eq.s32.totalorder %s17, 0
    %p138 = por %p136, %p137
    %p139 = scmp.le.s32.totalorder 1, %s11
    %p140 = scmp.lt.s32.totalorder %s11, 3
    %p141 = pnand %p139, %p140
    %p142 = pneg %p141
    // Predicated region
    $region9: #{double_conv2d_bn_forward.4} parent=5 // pred_check
      _
    $region10: #{double_conv2d_bn_forward.4} parent=5 // pred_check_branch
      %144 = sbr.rel (%p141) target = $region12
    $region11: #{double_conv2d_bn_forward.4} parent=5 // pred_region
      %s145 = ssub.s32 %s11, 1
      // Predicated region
      $region13: #{double_conv2d_bn_forward.4} parent=11 // pred_check
        %p146 = pneg %p58
      $region14: #{double_conv2d_bn_forward.4} parent=11 // pred_check_branch
        %148 = sbr.rel (%p146) target = $region16
      $region15: #{double_conv2d_bn_forward.4} parent=11 // pred_region
        _
      $region16: #{double_conv2d_bn_forward.4} parent=11 // pred_fallthru
        _
      // Predicated region
      $region17: #{double_conv2d_bn_forward.4} parent=11 // pred_check
        %p149 = pneg %p79
      $region18: #{double_conv2d_bn_forward.4} parent=11 // pred_check_branch
        %151 = sbr.rel (%p149) target = $region20
      $region19: #{double_conv2d_bn_forward.4} parent=11 // pred_region
        _
      $region20: #{double_conv2d_bn_forward.4} parent=11 // pred_fallthru
        _
    $region12: #{double_conv2d_bn_forward.4} parent=5 // pred_fallthru
      _
    %p152 = scmp.lt.s32.totalorder %s11, 2
    // Predicated region
    $region21: #{double_conv2d_bn_forward.4} parent=5 // pred_check
      %p153 = pneg %p152
    $region22: #{double_conv2d_bn_forward.4} parent=5 // pred_check_branch
      %155 = sbr.rel (%p153) target = $region24
    $region23: #{double_conv2d_bn_forward.4} parent=5 // pred_region
      // Predicated region
      $region25: #{double_conv2d_bn_forward.4} parent=23 // pred_check
        %p156 = pneg %p31
      $region26: #{double_conv2d_bn_forward.4} parent=23 // pred_check_branch
        %158 = sbr.rel (%p156) target = $region28
      $region27: #{double_conv2d_bn_forward.4} parent=23 // pred_region
        %p159 = scmp.lt.s32.totalorder %s11, 1
        %s160 = scalar_select %p159, %s11, 1
        %s161 = smul.addr %s160, 36
        %s162 = smul.addr %s161, 4
        %s163 = scalar_lea.vmem %s0, %s162
      $region28: #{double_conv2d_bn_forward.4} parent=23 // pred_fallthru
        _
    $region24: #{double_conv2d_bn_forward.4} parent=5 // pred_fallthru
      _
    %p164 = scmp.le.s32.totalorder 1, %s11
    %p165 = scmp.lt.s32.totalorder %s11, 3
    %p166 = pnand %p164, %p165
    %p167 = pneg %p166
    // Predicated region
    $region29: #{double_conv2d_bn_forward.4} parent=5 // pred_check
      _
    $region30: #{double_conv2d_bn_forward.4} parent=5 // pred_check_branch
      %169 = sbr.rel (%p166) target = $region32
    $region31: #{double_conv2d_bn_forward.4} parent=5 // pred_region
      %s170 = ssub.s32 %s11, 1
      %p171 = scmp.lt.s32.totalorder %s16, 1
      %s172 = scalar_select %p171, %s16, 1
      %s173 = smul.addr %s172, 36
      %s174 = smul.addr %s173, 4
      %s175 = scalar_lea.vmem %s0, %s174
      %p176 = pneg %p37
      %p177 = pneg %p34
      %p178 = pneg %p58
      %p179 = pneg %p55
      %p180 = pneg %p79
      %p181 = pneg %p76
      %p182 = pneg %p105
      %p183 = pneg %p102
      %p184 = scmp.lt.s32.totalorder %s16, 1
      %s185 = scalar_select %p184, %s16, 1
      %s186 = smul.addr %s185, 36
      %s187 = smul.addr %s186, 4
      %s188 = scalar_lea.vmem %s3, %s187
      %p189 = pneg %p131
      %p190 = pneg %p128
      %p191 = scmp.lt.s32.totalorder %s16, 1
      %s192 = scalar_select %p191, %s16, 1
      %s193 = smul.addr %s192, 2
      %s194 = scalar_lea.vmem %s4, %s193
      %p195 = scmp.lt.s32.totalorder %s16, 1
      %s196 = scalar_select %p195, %s16, 1
      %s197 = smul.addr %s196, 36
      %s198 = smul.addr %s197, 4
      %s199 = scalar_lea.vmem %s0, %s198
      %p200 = scmp.lt.s32.totalorder %s16, 1
      %s201 = scalar_select %p200, %s16, 1
      %s202 = smul.addr %s201, 36
      %s203 = smul.addr %s202, 4
      %s204 = scalar_lea.vmem %s3, %s203
      %p205 = scmp.lt.s32.totalorder %s16, 1
      %s206 = scalar_select %p205, %s16, 1
      %s207 = smul.addr %s206, 2
      %s208 = scalar_lea.vmem %s4, %s207
      %v210 = vlaneseq
      %v211 = vshrl.u32 %v210, 7
      %v212 = vadd.s32 %v211, 8
      %v213 = vadd.s32 %v211, 16
      %v214 = vadd.s32 %v211, 24
      %v215 = vadd.s32 %v211, 32
      %v216 = vadd.s32 %v211, 40
      %v217 = vadd.s32 %v211, 48
      %v218 = vadd.s32 %v211, 56
      %v219 = vadd.s32 %v211, 64
      %v220 = vadd.s32 %v211, 72
      %v221 = vadd.s32 %v211, 80
      %v222 = vadd.s32 %v211, 88
      %v223 = vadd.s32 %v211, 96
      %v224 = vadd.s32 %v211, 104
      %v225 = vadd.s32 %v211, 112
      %v226 = vadd.s32 %v211, 120
      %v227 = vadd.s32 %v211, 128
      %v228 = vadd.s32 %v211, 136
      %v229 = vadd.s32 %v211, 144
      %v230 = vadd.s32 %v211, 152
      %v231 = vadd.s32 %v211, 160
      %v232 = vadd.s32 %v211, 168
      %v233 = vadd.s32 %v211, 176
      %v234 = vadd.s32 %v211, 184
      %v235 = vadd.s32 %v211, 192
      %v236 = vadd.s32 %v211, 200
      %v237 = vadd.s32 %v211, 208
      %v238 = vadd.s32 %v211, 216
      %v239 = vadd.s32 %v211, 224
      %v240 = vadd.s32 %v211, 232
      %v241 = vadd.s32 %v211, 240
      %v242 = vadd.s32 %v211, 248
      %v243 = vadd.s32 %v211, 256
      %v244 = vadd.s32 %v211, 264
      %v245 = vadd.s32 %v211, 272
      %v246 = vadd.s32 %v211, 280
      %vm247 = vcmp.lt.s32.totalorder %v211, 0
      %v248 = vsub.s32 0, %v211
      %v249 = vsel %vm247, %v248, %v211
      %v250 = vmul.u32.u64.compose %v249, 3817748708
      %v251 = vextract.low.u32 %v250
      %v252 = vextract.high.u32 %v250
      %v253 = vshrl.u32 %v252, 4
      %v254 = vmul.u32 %v253, 18
      %v255 = vsub.s32 %v249, %v254
      %v256 = vsub.s32 0, %v255
      %v257 = vsel %vm247, %v256, %v255
      %vm258 = vcmp.lt.s32.totalorder %v212, 0
      %v259 = vsub.s32 0, %v212
      %v260 = vsel %vm258, %v259, %v212
      %v261 = vmul.u32.u64.compose %v260, 3817748708
      %v262 = vextract.low.u32 %v261
      %v263 = vextract.high.u32 %v261
      %v264 = vshrl.u32 %v263, 4
      %v265 = vmul.u32 %v264, 18
      %v266 = vsub.s32 %v260, %v265
      %v267 = vsub.s32 0, %v266
      %v268 = vsel %vm258, %v267, %v266
      %vm269 = vcmp.lt.s32.totalorder %v213, 0
      %v270 = vsub.s32 0, %v213
      %v271 = vsel %vm269, %v270, %v213
      %v272 = vmul.u32.u64.compose %v271, 3817748708
      %v273 = vextract.low.u32 %v272
      %v274 = vextract.high.u32 %v272
      %v275 = vshrl.u32 %v274, 4
      %v276 = vmul.u32 %v275, 18
      %v277 = vsub.s32 %v271, %v276
      %v278 = vsub.s32 0, %v277
      %v279 = vsel %vm269, %v278, %v277
      %vm280 = vcmp.lt.s32.totalorder %v214, 0
      %v281 = vsub.s32 0, %v214
      %v282 = vsel %vm280, %v281, %v214
      %v283 = vmul.u32.u64.compose %v282, 3817748708
      %v284 = vextract.low.u32 %v283
      %v285 = vextract.high.u32 %v283
      %v286 = vshrl.u32 %v285, 4
      %v287 = vmul.u32 %v286, 18
      %v288 = vsub.s32 %v282, %v287
      %v289 = vsub.s32 0, %v288
      %v290 = vsel %vm280, %v289, %v288
      %vm291 = vcmp.lt.s32.totalorder %v215, 0
      %v292 = vsub.s32 0, %v215
      %v293 = vsel %vm291, %v292, %v215
      %v294 = vmul.u32.u64.compose %v293, 3817748708
      %v295 = vextract.low.u32 %v294
      %v296 = vextract.high.u32 %v294
      %v297 = vshrl.u32 %v296, 4
      %v298 = vmul.u32 %v297, 18
      %v299 = vsub.s32 %v293, %v298
      %v300 = vsub.s32 0, %v299
      %v301 = vsel %vm291, %v300, %v299
      %vm302 = vcmp.lt.s32.totalorder %v216, 0
      %v303 = vsub.s32 0, %v216
      %v304 = vsel %vm302, %v303, %v216
      %v305 = vmul.u32.u64.compose %v304, 3817748708
      %v306 = vextract.low.u32 %v305
      %v307 = vextract.high.u32 %v305
      %v308 = vshrl.u32 %v307, 4
      %v309 = vmul.u32 %v308, 18
      %v310 = vsub.s32 %v304, %v309
      %v311 = vsub.s32 0, %v310
      %v312 = vsel %vm302, %v311, %v310
      %vm313 = vcmp.lt.s32.totalorder %v217, 0
      %v314 = vsub.s32 0, %v217
      %v315 = vsel %vm313, %v314, %v217
      %v316 = vmul.u32.u64.compose %v315, 3817748708
      %v317 = vextract.low.u32 %v316
      %v318 = vextract.high.u32 %v316
      %v319 = vshrl.u32 %v318, 4
      %v320 = vmul.u32 %v319, 18
      %v321 = vsub.s32 %v315, %v320
      %v322 = vsub.s32 0, %v321
      %v323 = vsel %vm313, %v322, %v321
      %vm324 = vcmp.lt.s32.totalorder %v218, 0
      %v325 = vsub.s32 0, %v218
      %v326 = vsel %vm324, %v325, %v218
      %v327 = vmul.u32.u64.compose %v326, 3817748708
      %v328 = vextract.low.u32 %v327
      %v329 = vextract.high.u32 %v327
      %v330 = vshrl.u32 %v329, 4
      %v331 = vmul.u32 %v330, 18
      %v332 = vsub.s32 %v326, %v331
      %v333 = vsub.s32 0, %v332
      %v334 = vsel %vm324, %v333, %v332
      %vm335 = vcmp.lt.s32.totalorder %v219, 0
      %v336 = vsub.s32 0, %v219
      %v337 = vsel %vm335, %v336, %v219
      %v338 = vmul.u32.u64.compose %v337, 3817748708
      %v339 = vextract.low.u32 %v338
      %v340 = vextract.high.u32 %v338
      %v341 = vshrl.u32 %v340, 4
      %v342 = vmul.u32 %v341, 18
      %v343 = vsub.s32 %v337, %v342
      %v344 = vsub.s32 0, %v343
      %v345 = vsel %vm335, %v344, %v343
      %vm346 = vcmp.lt.s32.totalorder %v220, 0
      %v347 = vsub.s32 0, %v220
      %v348 = vsel %vm346, %v347, %v220
      %v349 = vmul.u32.u64.compose %v348, 3817748708
      %v350 = vextract.low.u32 %v349
      %v351 = vextract.high.u32 %v349
      %v352 = vshrl.u32 %v351, 4
      %v353 = vmul.u32 %v352, 18
      %v354 = vsub.s32 %v348, %v353
      %v355 = vsub.s32 0, %v354
      %v356 = vsel %vm346, %v355, %v354
      %vm357 = vcmp.lt.s32.totalorder %v221, 0
      %v358 = vsub.s32 0, %v221
      %v359 = vsel %vm357, %v358, %v221
      %v360 = vmul.u32.u64.compose %v359, 3817748708
      %v361 = vextract.low.u32 %v360
      %v362 = vextract.high.u32 %v360
      %v363 = vshrl.u32 %v362, 4
      %v364 = vmul.u32 %v363, 18
      %v365 = vsub.s32 %v359, %v364
      %v366 = vsub.s32 0, %v365
      %v367 = vsel %vm357, %v366, %v365
      %vm368 = vcmp.lt.s32.totalorder %v222, 0
      %v369 = vsub.s32 0, %v222
      %v370 = vsel %vm368, %v369, %v222
      %v371 = vmul.u32.u64.compose %v370, 3817748708
      %v372 = vextract.low.u32 %v371
      %v373 = vextract.high.u32 %v371
      %v374 = vshrl.u32 %v373, 4
      %v375 = vmul.u32 %v374, 18
      %v376 = vsub.s32 %v370, %v375
      %v377 = vsub.s32 0, %v376
      %v378 = vsel %vm368, %v377, %v376
      %vm379 = vcmp.lt.s32.totalorder %v223, 0
      %v380 = vsub.s32 0, %v223
      %v381 = vsel %vm379, %v380, %v223
      %v382 = vmul.u32.u64.compose %v381, 3817748708
      %v383 = vextract.low.u32 %v382
      %v384 = vextract.high.u32 %v382
      %v385 = vshrl.u32 %v384, 4
      %v386 = vmul.u32 %v385, 18
      %v387 = vsub.s32 %v381, %v386
      %v388 = vsub.s32 0, %v387
      %v389 = vsel %vm379, %v388, %v387
      %vm390 = vcmp.lt.s32.totalorder %v224, 0
      %v391 = vsub.s32 0, %v224
      %v392 = vsel %vm390, %v391, %v224
      %v393 = vmul.u32.u64.compose %v392, 3817748708
      %v394 = vextract.low.u32 %v393
      %v395 = vextract.high.u32 %v393
      %v396 = vshrl.u32 %v395, 4
      %v397 = vmul.u32 %v396, 18
      %v398 = vsub.s32 %v392, %v397
      %v399 = vsub.s32 0, %v398
      %v400 = vsel %vm390, %v399, %v398
      %vm401 = vcmp.lt.s32.totalorder %v225, 0
      %v402 = vsub.s32 0, %v225
      %v403 = vsel %vm401, %v402, %v225
      %v404 = vmul.u32.u64.compose %v403, 3817748708
      %v405 = vextract.low.u32 %v404
      %v406 = vextract.high.u32 %v404
      %v407 = vshrl.u32 %v406, 4
      %v408 = vmul.u32 %v407, 18
      %v409 = vsub.s32 %v403, %v408
      %v410 = vsub.s32 0, %v409
      %v411 = vsel %vm401, %v410, %v409
      %vm412 = vcmp.lt.s32.totalorder %v226, 0
      %v413 = vsub.s32 0, %v226
      %v414 = vsel %vm412, %v413, %v226
      %v415 = vmul.u32.u64.compose %v414, 3817748708
      %v416 = vextract.low.u32 %v415
      %v417 = vextract.high.u32 %v415
      %v418 = vshrl.u32 %v417, 4
      %v419 = vmul.u32 %v418, 18
      %v420 = vsub.s32 %v414, %v419
      %v421 = vsub.s32 0, %v420
      %v422 = vsel %vm412, %v421, %v420
      %vm423 = vcmp.lt.s32.totalorder %v227, 0
      %v424 = vsub.s32 0, %v227
      %v425 = vsel %vm423, %v424, %v227
      %v426 = vmul.u32.u64.compose %v425, 3817748708
      %v427 = vextract.low.u32 %v426
      %v428 = vextract.high.u32 %v426
      %v429 = vshrl.u32 %v428, 4
      %v430 = vmul.u32 %v429, 18
      %v431 = vsub.s32 %v425, %v430
      %v432 = vsub.s32 0, %v431
      %v433 = vsel %vm423, %v432, %v431
      %vm434 = vcmp.lt.s32.totalorder %v228, 0
      %v435 = vsub.s32 0, %v228
      %v436 = vsel %vm434, %v435, %v228
      %v437 = vmul.u32.u64.compose %v436, 3817748708
      %v438 = vextract.low.u32 %v437
      %v439 = vextract.high.u32 %v437
      %v440 = vshrl.u32 %v439, 4
      %v441 = vmul.u32 %v440, 18
      %v442 = vsub.s32 %v436, %v441
      %v443 = vsub.s32 0, %v442
      %v444 = vsel %vm434, %v443, %v442
      %vm445 = vcmp.lt.s32.totalorder %v229, 0
      %v446 = vsub.s32 0, %v229
      %v447 = vsel %vm445, %v446, %v229
      %v448 = vmul.u32.u64.compose %v447, 3817748708
      %v449 = vextract.low.u32 %v448
      %v450 = vextract.high.u32 %v448
      %v451 = vshrl.u32 %v450, 4
      %v452 = vmul.u32 %v451, 18
      %v453 = vsub.s32 %v447, %v452
      %v454 = vsub.s32 0, %v453
      %v455 = vsel %vm445, %v454, %v453
      %vm456 = vcmp.lt.s32.totalorder %v230, 0
      %v457 = vsub.s32 0, %v230
      %v458 = vsel %vm456, %v457, %v230
      %v459 = vmul.u32.u64.compose %v458, 3817748708
      %v460 = vextract.low.u32 %v459
      %v461 = vextract.high.u32 %v459
      %v462 = vshrl.u32 %v461, 4
      %v463 = vmul.u32 %v462, 18
      %v464 = vsub.s32 %v458, %v463
      %v465 = vsub.s32 0, %v464
      %v466 = vsel %vm456, %v465, %v464
      %vm467 = vcmp.lt.s32.totalorder %v231, 0
      %v468 = vsub.s32 0, %v231
      %v469 = vsel %vm467, %v468, %v231
      %v470 = vmul.u32.u64.compose %v469, 3817748708
      %v471 = vextract.low.u32 %v470
      %v472 = vextract.high.u32 %v470
      %v473 = vshrl.u32 %v472, 4
      %v474 = vmul.u32 %v473, 18
      %v475 = vsub.s32 %v469, %v474
      %v476 = vsub.s32 0, %v475
      %v477 = vsel %vm467, %v476, %v475
      %vm478 = vcmp.lt.s32.totalorder %v232, 0
      %v479 = vsub.s32 0, %v232
      %v480 = vsel %vm478, %v479, %v232
      %v481 = vmul.u32.u64.compose %v480, 3817748708
      %v482 = vextract.low.u32 %v481
      %v483 = vextract.high.u32 %v481
      %v484 = vshrl.u32 %v483, 4
      %v485 = vmul.u32 %v484, 18
      %v486 = vsub.s32 %v480, %v485
      %v487 = vsub.s32 0, %v486
      %v488 = vsel %vm478, %v487, %v486
      %vm489 = vcmp.lt.s32.totalorder %v233, 0
      %v490 = vsub.s32 0, %v233
      %v491 = vsel %vm489, %v490, %v233
      %v492 = vmul.u32.u64.compose %v491, 3817748708
      %v493 = vextract.low.u32 %v492
      %v494 = vextract.high.u32 %v492
      %v495 = vshrl.u32 %v494, 4
      %v496 = vmul.u32 %v495, 18
      %v497 = vsub.s32 %v491, %v496
      %v498 = vsub.s32 0, %v497
      %v499 = vsel %vm489, %v498, %v497
      %vm500 = vcmp.lt.s32.totalorder %v234, 0
      %v501 = vsub.s32 0, %v234
      %v502 = vsel %vm500, %v501, %v234
      %v503 = vmul.u32.u64.compose %v502, 3817748708
      %v504 = vextract.low.u32 %v503
      %v505 = vextract.high.u32 %v503
      %v506 = vshrl.u32 %v505, 4
      %v507 = vmul.u32 %v506, 18
      %v508 = vsub.s32 %v502, %v507
      %v509 = vsub.s32 0, %v508
      %v510 = vsel %vm500, %v509, %v508
      %vm511 = vcmp.lt.s32.totalorder %v235, 0
      %v512 = vsub.s32 0, %v235
      %v513 = vsel %vm511, %v512, %v235
      %v514 = vmul.u32.u64.compose %v513, 3817748708
      %v515 = vextract.low.u32 %v514
      %v516 = vextract.high.u32 %v514
      %v517 = vshrl.u32 %v516, 4
      %v518 = vmul.u32 %v517, 18
      %v519 = vsub.s32 %v513, %v518
      %v520 = vsub.s32 0, %v519
      %v521 = vsel %vm511, %v520, %v519
      %vm522 = vcmp.lt.s32.totalorder %v236, 0
      %v523 = vsub.s32 0, %v236
      %v524 = vsel %vm522, %v523, %v236
      %v525 = vmul.u32.u64.compose %v524, 3817748708
      %v526 = vextract.low.u32 %v525
      %v527 = vextract.high.u32 %v525
      %v528 = vshrl.u32 %v527, 4
      %v529 = vmul.u32 %v528, 18
      %v530 = vsub.s32 %v524, %v529
      %v531 = vsub.s32 0, %v530
      %v532 = vsel %vm522, %v531, %v530
      %vm533 = vcmp.lt.s32.totalorder %v237, 0
      %v534 = vsub.s32 0, %v237
      %v535 = vsel %vm533, %v534, %v237
      %v536 = vmul.u32.u64.compose %v535, 3817748708
      %v537 = vextract.low.u32 %v536
      %v538 = vextract.high.u32 %v536
      %v539 = vshrl.u32 %v538, 4
      %v540 = vmul.u32 %v539, 18
      %v541 = vsub.s32 %v535, %v540
      %v542 = vsub.s32 0, %v541
      %v543 = vsel %vm533, %v542, %v541
      %vm544 = vcmp.lt.s32.totalorder %v238, 0
      %v545 = vsub.s32 0, %v238
      %v546 = vsel %vm544, %v545, %v238
      %v547 = vmul.u32.u64.compose %v546, 3817748708
      %v548 = vextract.low.u32 %v547
      %v549 = vextract.high.u32 %v547
      %v550 = vshrl.u32 %v549, 4
      %v551 = vmul.u32 %v550, 18
      %v552 = vsub.s32 %v546, %v551
      %v553 = vsub.s32 0, %v552
      %v554 = vsel %vm544, %v553, %v552
      %vm555 = vcmp.lt.s32.totalorder %v239, 0
      %v556 = vsub.s32 0, %v239
      %v557 = vsel %vm555, %v556, %v239
      %v558 = vmul.u32.u64.compose %v557, 3817748708
      %v559 = vextract.low.u32 %v558
      %v560 = vextract.high.u32 %v558
      %v561 = vshrl.u32 %v560, 4
      %v562 = vmul.u32 %v561, 18
      %v563 = vsub.s32 %v557, %v562
      %v564 = vsub.s32 0, %v563
      %v565 = vsel %vm555, %v564, %v563
      %vm566 = vcmp.lt.s32.totalorder %v240, 0
      %v567 = vsub.s32 0, %v240
      %v568 = vsel %vm566, %v567, %v240
      %v569 = vmul.u32.u64.compose %v568, 3817748708
      %v570 = vextract.low.u32 %v569
      %v571 = vextract.high.u32 %v569
      %v572 = vshrl.u32 %v571, 4
      %v573 = vmul.u32 %v572, 18
      %v574 = vsub.s32 %v568, %v573
      %v575 = vsub.s32 0, %v574
      %v576 = vsel %vm566, %v575, %v574
      %vm577 = vcmp.lt.s32.totalorder %v241, 0
      %v578 = vsub.s32 0, %v241
      %v579 = vsel %vm577, %v578, %v241
      %v580 = vmul.u32.u64.compose %v579, 3817748708
      %v581 = vextract.low.u32 %v580
      %v582 = vextract.high.u32 %v580
      %v583 = vshrl.u32 %v582, 4
      %v584 = vmul.u32 %v583, 18
      %v585 = vsub.s32 %v579, %v584
      %v586 = vsub.s32 0, %v585
      %v587 = vsel %vm577, %v586, %v585
      %vm588 = vcmp.lt.s32.totalorder %v242, 0
      %v589 = vsub.s32 0, %v242
      %v590 = vsel %vm588, %v589, %v242
      %v591 = vmul.u32.u64.compose %v590, 3817748708
      %v592 = vextract.low.u32 %v591
      %v593 = vextract.high.u32 %v591
      %v594 = vshrl.u32 %v593, 4
      %v595 = vmul.u32 %v594, 18
      %v596 = vsub.s32 %v590, %v595
      %v597 = vsub.s32 0, %v596
      %v598 = vsel %vm588, %v597, %v596
      %vm599 = vcmp.lt.s32.totalorder %v243, 0
      %v600 = vsub.s32 0, %v243
      %v601 = vsel %vm599, %v600, %v243
      %v602 = vmul.u32.u64.compose %v601, 3817748708
      %v603 = vextract.low.u32 %v602
      %v604 = vextract.high.u32 %v602
      %v605 = vshrl.u32 %v604, 4
      %v606 = vmul.u32 %v605, 18
      %v607 = vsub.s32 %v601, %v606
      %v608 = vsub.s32 0, %v607
      %v609 = vsel %vm599, %v608, %v607
      %vm610 = vcmp.lt.s32.totalorder %v244, 0
      %v611 = vsub.s32 0, %v244
      %v612 = vsel %vm610, %v611, %v244
      %v613 = vmul.u32.u64.compose %v612, 3817748708
      %v614 = vextract.low.u32 %v613
      %v615 = vextract.high.u32 %v613
      %v616 = vshrl.u32 %v615, 4
      %v617 = vmul.u32 %v616, 18
      %v618 = vsub.s32 %v612, %v617
      %v619 = vsub.s32 0, %v618
      %v620 = vsel %vm610, %v619, %v618
      %vm621 = vcmp.lt.s32.totalorder %v245, 0
      %v622 = vsub.s32 0, %v245
      %v623 = vsel %vm621, %v622, %v245
      %v624 = vmul.u32.u64.compose %v623, 3817748708
      %v625 = vextract.low.u32 %v624
      %v626 = vextract.high.u32 %v624
      %v627 = vshrl.u32 %v626, 4
      %v628 = vmul.u32 %v627, 18
      %v629 = vsub.s32 %v623, %v628
      %v630 = vsub.s32 0, %v629
      %v631 = vsel %vm621, %v630, %v629
      %vm632 = vcmp.lt.s32.totalorder %v246, 0
      %v633 = vsub.s32 0, %v246
      %v634 = vsel %vm632, %v633, %v246
      %v635 = vmul.u32.u64.compose %v634, 3817748708
      %v636 = vextract.low.u32 %v635
      %v637 = vextract.high.u32 %v635
      %v638 = vshrl.u32 %v637, 4
      %v639 = vmul.u32 %v638, 18
      %v640 = vsub.s32 %v634, %v639
      %v641 = vsub.s32 0, %v640
      %v642 = vsel %vm632, %v641, %v640
      %vm643 = vcmp.ne.s32.totalorder %v257, 0
      %vm644 = vcmp.ne.s32.totalorder %v268, 0
      %vm645 = vcmp.ne.s32.totalorder %v279, 0
      %vm646 = vcmp.ne.s32.totalorder %v290, 0
      %vm647 = vcmp.ne.s32.totalorder %v301, 0
      %vm648 = vcmp.ne.s32.totalorder %v312, 0
      %vm649 = vcmp.ne.s32.totalorder %v323, 0
      %vm650 = vcmp.ne.s32.totalorder %v334, 0
      %vm651 = vcmp.ne.s32.totalorder %v345, 0
      %vm652 = vcmp.ne.s32.totalorder %v356, 0
      %vm653 = vcmp.ne.s32.totalorder %v367, 0
      %vm654 = vcmp.ne.s32.totalorder %v378, 0
      %vm655 = vcmp.ne.s32.totalorder %v389, 0
      %vm656 = vcmp.ne.s32.totalorder %v400, 0
      %vm657 = vcmp.ne.s32.totalorder %v411, 0
      %vm658 = vcmp.ne.s32.totalorder %v422, 0
      %vm659 = vcmp.ne.s32.totalorder %v433, 0
      %vm660 = vcmp.ne.s32.totalorder %v444, 0
      %vm661 = vcmp.ne.s32.totalorder %v455, 0
      %vm662 = vcmp.ne.s32.totalorder %v466, 0
      %vm663 = vcmp.ne.s32.totalorder %v477, 0
      %vm664 = vcmp.ne.s32.totalorder %v488, 0
      %vm665 = vcmp.ne.s32.totalorder %v499, 0
      %vm666 = vcmp.ne.s32.totalorder %v510, 0
      %vm667 = vcmp.ne.s32.totalorder %v521, 0
      %vm668 = vcmp.ne.s32.totalorder %v532, 0
      %vm669 = vcmp.ne.s32.totalorder %v543, 0
      %vm670 = vcmp.ne.s32.totalorder %v554, 0
      %vm671 = vcmp.ne.s32.totalorder %v565, 0
      %vm672 = vcmp.ne.s32.totalorder %v576, 0
      %vm673 = vcmp.ne.s32.totalorder %v587, 0
      %vm674 = vcmp.ne.s32.totalorder %v598, 0
      %vm675 = vcmp.ne.s32.totalorder %v609, 0
      %vm676 = vcmp.ne.s32.totalorder %v620, 0
      %vm677 = vcmp.ne.s32.totalorder %v631, 0
      %vm678 = vcmp.ne.s32.totalorder %v642, 0
      %vm679 = vcmp.lt.s32.totalorder %v257, 0
      %vm680 = vcmp.lt.s32.totalorder %v268, 0
      %vm681 = vcmp.lt.s32.totalorder %v279, 0
      %vm682 = vcmp.lt.s32.totalorder %v290, 0
      %vm683 = vcmp.lt.s32.totalorder %v301, 0
      %vm684 = vcmp.lt.s32.totalorder %v312, 0
      %vm685 = vcmp.lt.s32.totalorder %v323, 0
      %vm686 = vcmp.lt.s32.totalorder %v334, 0
      %vm687 = vcmp.lt.s32.totalorder %v345, 0
      %vm688 = vcmp.lt.s32.totalorder %v356, 0
      %vm689 = vcmp.lt.s32.totalorder %v367, 0
      %vm690 = vcmp.lt.s32.totalorder %v378, 0
      %vm691 = vcmp.lt.s32.totalorder %v389, 0
      %vm692 = vcmp.lt.s32.totalorder %v400, 0
      %vm693 = vcmp.lt.s32.totalorder %v411, 0
      %vm694 = vcmp.lt.s32.totalorder %v422, 0
      %vm695 = vcmp.lt.s32.totalorder %v433, 0
      %vm696 = vcmp.lt.s32.totalorder %v444, 0
      %vm697 = vcmp.lt.s32.totalorder %v455, 0
      %vm698 = vcmp.lt.s32.totalorder %v466, 0
      %vm699 = vcmp.lt.s32.totalorder %v477, 0
      %vm700 = vcmp.lt.s32.totalorder %v488, 0
      %vm701 = vcmp.lt.s32.totalorder %v499, 0
      %vm702 = vcmp.lt.s32.totalorder %v510, 0
      %vm703 = vcmp.lt.s32.totalorder %v521, 0
      %vm704 = vcmp.lt.s32.totalorder %v532, 0
      %vm705 = vcmp.lt.s32.totalorder %v543, 0
      %vm706 = vcmp.lt.s32.totalorder %v554, 0
      %vm707 = vcmp.lt.s32.totalorder %v565, 0
      %vm708 = vcmp.lt.s32.totalorder %v576, 0
      %vm709 = vcmp.lt.s32.totalorder %v587, 0
      %vm710 = vcmp.lt.s32.totalorder %v598, 0
      %vm711 = vcmp.lt.s32.totalorder %v609, 0
      %vm712 = vcmp.lt.s32.totalorder %v620, 0
      %vm713 = vcmp.lt.s32.totalorder %v631, 0
      %vm714 = vcmp.lt.s32.totalorder %v642, 0
      %vm715 = vmand %vm679, %vm643
      %vm716 = vmand %vm680, %vm644
      %vm717 = vmand %vm681, %vm645
      %vm718 = vmand %vm682, %vm646
      %vm719 = vmand %vm683, %vm647
      %vm720 = vmand %vm684, %vm648
      %vm721 = vmand %vm685, %vm649
      %vm722 = vmand %vm686, %vm650
      %vm723 = vmand %vm687, %vm651
      %vm724 = vmand %vm688, %vm652
      %vm725 = vmand %vm689, %vm653
      %vm726 = vmand %vm690, %vm654
      %vm727 = vmand %vm691, %vm655
      %vm728 = vmand %vm692, %vm656
      %vm729 = vmand %vm693, %vm657
      %vm730 = vmand %vm694, %vm658
      %vm731 = vmand %vm695, %vm659
      %vm732 = vmand %vm696, %vm660
      %vm733 = vmand %vm697, %vm661
      %vm734 = vmand %vm698, %vm662
      %vm735 = vmand %vm699, %vm663
      %vm736 = vmand %vm700, %vm664
      %vm737 = vmand %vm701, %vm665
      %vm738 = vmand %vm702, %vm666
      %vm739 = vmand %vm703, %vm667
      %vm740 = vmand %vm704, %vm668
      %vm741 = vmand %vm705, %vm669
      %vm742 = vmand %vm706, %vm670
      %vm743 = vmand %vm707, %vm671
      %vm744 = vmand %vm708, %vm672
      %vm745 = vmand %vm709, %vm673
      %vm746 = vmand %vm710, %vm674
      %vm747 = vmand %vm711, %vm675
      %vm748 = vmand %vm712, %vm676
      %vm749 = vmand %vm713, %vm677
      %vm750 = vmand %vm714, %vm678
      %v751 = vadd.s32 %v257, 18
      %v752 = vadd.s32 %v268, 18
      %v753 = vadd.s32 %v279, 18
      %v754 = vadd.s32 %v290, 18
      %v755 = vadd.s32 %v301, 18
      %v756 = vadd.s32 %v312, 18
      %v757 = vadd.s32 %v323, 18
      %v758 = vadd.s32 %v334, 18
      %v759 = vadd.s32 %v345, 18
      %v760 = vadd.s32 %v356, 18
      %v761 = vadd.s32 %v367, 18
      %v762 = vadd.s32 %v378, 18
      %v763 = vadd.s32 %v389, 18
      %v764 = vadd.s32 %v400, 18
      %v765 = vadd.s32 %v411, 18
      %v766 = vadd.s32 %v422, 18
      %v767 = vadd.s32 %v433, 18
      %v768 = vadd.s32 %v444, 18
      %v769 = vadd.s32 %v455, 18
      %v770 = vadd.s32 %v466, 18
      %v771 = vadd.s32 %v477, 18
      %v772 = vadd.s32 %v488, 18
      %v773 = vadd.s32 %v499, 18
      %v774 = vadd.s32 %v510, 18
      %v775 = vadd.s32 %v521, 18
      %v776 = vadd.s32 %v532, 18
      %v777 = vadd.s32 %v543, 18
      %v778 = vadd.s32 %v554, 18
      %v779 = vadd.s32 %v565, 18
      %v780 = vadd.s32 %v576, 18
      %v781 = vadd.s32 %v587, 18
      %v782 = vadd.s32 %v598, 18
      %v783 = vadd.s32 %v609, 18
      %v784 = vadd.s32 %v620, 18
      %v785 = vadd.s32 %v631, 18
      %v786 = vadd.s32 %v642, 18
      %v787 = vsel %vm715, %v751, %v257
      %v788 = vsel %vm716, %v752, %v268
      %v789 = vsel %vm717, %v753, %v279
      %v790 = vsel %vm718, %v754, %v290
      %v791 = vsel %vm719, %v755, %v301
      %v792 = vsel %vm720, %v756, %v312
      %v793 = vsel %vm721, %v757, %v323
      %v794 = vsel %vm722, %v758, %v334
      %v795 = vsel %vm723, %v759, %v345
      %v796 = vsel %vm724, %v760, %v356
      %v797 = vsel %vm725, %v761, %v367
      %v798 = vsel %vm726, %v762, %v378
      %v799 = vsel %vm727, %v763, %v389
      %v800 = vsel %vm728, %v764, %v400
      %v801 = vsel %vm729, %v765, %v411
      %v802 = vsel %vm730, %v766, %v422
      %v803 = vsel %vm731, %v767, %v433
      %v804 = vsel %vm732, %v768, %v444
      %v805 = vsel %vm733, %v769, %v455
      %v806 = vsel %vm734, %v770, %v466
      %v807 = vsel %vm735, %v771, %v477
      %v808 = vsel %vm736, %v772, %v488
      %v809 = vsel %vm737, %v773, %v499
      %v810 = vsel %vm738, %v774, %v510
      %v811 = vsel %vm739, %v775, %v521
      %v812 = vsel %vm740, %v776, %v532
      %v813 = vsel %vm741, %v777, %v543
      %v814 = vsel %vm742, %v778, %v554
      %v815 = vsel %vm743, %v779, %v565
      %v816 = vsel %vm744, %v780, %v576
      %v817 = vsel %vm745, %v781, %v587
      %v818 = vsel %vm746, %v782, %v598
      %v819 = vsel %vm747, %v783, %v609
      %v820 = vsel %vm748, %v784, %v620
      %v821 = vsel %vm749, %v785, %v631
      %v822 = vsel %vm750, %v786, %v642
      %vm823 = vcmp.lt.s32.totalorder %v787, 16
      %vm824 = vcmp.lt.s32.totalorder %v788, 16
      %vm825 = vcmp.lt.s32.totalorder %v789, 16
      %vm826 = vcmp.lt.s32.totalorder %v790, 16
      %vm827 = vcmp.lt.s32.totalorder %v791, 16
      %vm828 = vcmp.lt.s32.totalorder %v792, 16
      %vm829 = vcmp.lt.s32.totalorder %v793, 16
      %vm830 = vcmp.lt.s32.totalorder %v794, 16
      %vm831 = vcmp.lt.s32.totalorder %v795, 16
      %vm832 = vcmp.lt.s32.totalorder %v796, 16
      %vm833 = vcmp.lt.s32.totalorder %v797, 16
      %vm834 = vcmp.lt.s32.totalorder %v798, 16
      %vm835 = vcmp.lt.s32.totalorder %v799, 16
      %vm836 = vcmp.lt.s32.totalorder %v800, 16
      %vm837 = vcmp.lt.s32.totalorder %v801, 16
      %vm838 = vcmp.lt.s32.totalorder %v802, 16
      %vm839 = vcmp.lt.s32.totalorder %v803, 16
      %vm840 = vcmp.lt.s32.totalorder %v804, 16
      %vm841 = vcmp.lt.s32.totalorder %v805, 16
      %vm842 = vcmp.lt.s32.totalorder %v806, 16
      %vm843 = vcmp.lt.s32.totalorder %v807, 16
      %vm844 = vcmp.lt.s32.totalorder %v808, 16
      %vm845 = vcmp.lt.s32.totalorder %v809, 16
      %vm846 = vcmp.lt.s32.totalorder %v810, 16
      %vm847 = vcmp.lt.s32.totalorder %v811, 16
      %vm848 = vcmp.lt.s32.totalorder %v812, 16
      %vm849 = vcmp.lt.s32.totalorder %v813, 16
      %vm850 = vcmp.lt.s32.totalorder %v814, 16
      %vm851 = vcmp.lt.s32.totalorder %v815, 16
      %vm852 = vcmp.lt.s32.totalorder %v816, 16
      %vm853 = vcmp.lt.s32.totalorder %v817, 16
      %vm854 = vcmp.lt.s32.totalorder %v818, 16
      %vm855 = vcmp.lt.s32.totalorder %v819, 16
      %vm856 = vcmp.lt.s32.totalorder %v820, 16
      %vm857 = vcmp.lt.s32.totalorder %v821, 16
      %vm858 = vcmp.lt.s32.totalorder %v822, 16
      %v859 = vsel %vm823, 1, 0
      %v860 = vsel %vm824, 1, 0
      %v861 = vsel %vm825, 1, 0
      %v862 = vsel %vm826, 1, 0
      %v863 = vsel %vm827, 1, 0
      %v864 = vsel %vm828, 1, 0
      %v865 = vsel %vm829, 1, 0
      %v866 = vsel %vm830, 1, 0
      %v867 = vsel %vm831, 1, 0
      %v868 = vsel %vm832, 1, 0
      %v869 = vsel %vm833, 1, 0
      %v870 = vsel %vm834, 1, 0
      %v871 = vsel %vm835, 1, 0
      %v872 = vsel %vm836, 1, 0
      %v873 = vsel %vm837, 1, 0
      %v874 = vsel %vm838, 1, 0
      %v875 = vsel %vm839, 1, 0
      %v876 = vsel %vm840, 1, 0
      %v877 = vsel %vm841, 1, 0
      %v878 = vsel %vm842, 1, 0
      %v879 = vsel %vm843, 1, 0
      %v880 = vsel %vm844, 1, 0
      %v881 = vsel %vm845, 1, 0
      %v882 = vsel %vm846, 1, 0
      %v883 = vsel %vm847, 1, 0
      %v884 = vsel %vm848, 1, 0
      %v885 = vsel %vm849, 1, 0
      %v886 = vsel %vm850, 1, 0
      %v887 = vsel %vm851, 1, 0
      %v888 = vsel %vm852, 1, 0
      %v889 = vsel %vm853, 1, 0
      %v890 = vsel %vm854, 1, 0
      %v891 = vsel %vm855, 1, 0
      %v892 = vsel %vm856, 1, 0
      %v893 = vsel %vm857, 1, 0
      %v894 = vsel %vm858, 1, 0
      %v895 = vcvt.s32.f32 %v859
      %v896 = vcvt.s32.f32 %v860
      %v897 = vcvt.s32.f32 %v861
      %v898 = vcvt.s32.f32 %v862
      %v899 = vcvt.s32.f32 %v863
      %v900 = vcvt.s32.f32 %v864
      %v901 = vcvt.s32.f32 %v865
      %v902 = vcvt.s32.f32 %v866
      %v903 = vcvt.s32.f32 %v867
      %v904 = vcvt.s32.f32 %v868
      %v905 = vcvt.s32.f32 %v869
      %v906 = vcvt.s32.f32 %v870
      %v907 = vcvt.s32.f32 %v871
      %v908 = vcvt.s32.f32 %v872
      %v909 = vcvt.s32.f32 %v873
      %v910 = vcvt.s32.f32 %v874
      %v911 = vcvt.s32.f32 %v875
      %v912 = vcvt.s32.f32 %v876
      %v913 = vcvt.s32.f32 %v877
      %v914 = vcvt.s32.f32 %v878
      %v915 = vcvt.s32.f32 %v879
      %v916 = vcvt.s32.f32 %v880
      %v917 = vcvt.s32.f32 %v881
      %v918 = vcvt.s32.f32 %v882
      %v919 = vcvt.s32.f32 %v883
      %v920 = vcvt.s32.f32 %v884
      %v921 = vcvt.s32.f32 %v885
      %v922 = vcvt.s32.f32 %v886
      %v923 = vcvt.s32.f32 %v887
      %v924 = vcvt.s32.f32 %v888
      %v925 = vcvt.s32.f32 %v889
      %v926 = vcvt.s32.f32 %v890
      %v927 = vcvt.s32.f32 %v891
      %v928 = vcvt.s32.f32 %v892
      %v929 = vcvt.s32.f32 %v893
      %v930 = vcvt.s32.f32 %v894
      %v931 = vld [vmem:[%s199] sm:$0xf]
      %v932 = vld [vmem:[%s199 + $0x4] sm:$0xf]
      %v933 = vld [vmem:[%s199 + $0x8] sm:$0xf]
      %v934 = vld [vmem:[%s199 + $0xc] sm:$0xf]
      %v935 = vld [vmem:[%s199 + $0x10] sm:$0xf]
      %v936 = vld [vmem:[%s199 + $0x14] sm:$0xf]
      %v937 = vld [vmem:[%s199 + $0x18] sm:$0xf]
      %v938 = vld [vmem:[%s199 + $0x1c] sm:$0xf]
      %v939 = vld [vmem:[%s199 + $0x20] sm:$0xf]
      %v940 = vld [vmem:[%s199 + $0x24] sm:$0xf]
      %v941 = vld [vmem:[%s199 + $0x28] sm:$0xf]
      %v942 = vld [vmem:[%s199 + $0x2c] sm:$0xf]
      %v943 = vld [vmem:[%s199 + $0x30] sm:$0xf]
      %v944 = vld [vmem:[%s199 + $0x34] sm:$0xf]
      %v945 = vld [vmem:[%s199 + $0x38] sm:$0xf]
      %v946 = vld [vmem:[%s199 + $0x3c] sm:$0xf]
      %v947 = vld [vmem:[%s199 + $0x40] sm:$0xf]
      %v948 = vld [vmem:[%s199 + $0x44] sm:$0xf]
      %v949 = vld [vmem:[%s199 + $0x48] sm:$0xf]
      %v950 = vld [vmem:[%s199 + $0x4c] sm:$0xf]
      %v951 = vld [vmem:[%s199 + $0x50] sm:$0xf]
      %v952 = vld [vmem:[%s199 + $0x54] sm:$0xf]
      %v953 = vld [vmem:[%s199 + $0x58] sm:$0xf]
      %v954 = vld [vmem:[%s199 + $0x5c] sm:$0xf]
      %v955 = vld [vmem:[%s199 + $0x60] sm:$0xf]
      %v956 = vld [vmem:[%s199 + $0x64] sm:$0xf]
      %v957 = vld [vmem:[%s199 + $0x68] sm:$0xf]
      %v958 = vld [vmem:[%s199 + $0x6c] sm:$0xf]
      %v959 = vld [vmem:[%s199 + $0x70] sm:$0xf]
      %v960 = vld [vmem:[%s199 + $0x74] sm:$0xf]
      %v961 = vld [vmem:[%s199 + $0x78] sm:$0xf]
      %v962 = vld [vmem:[%s199 + $0x7c] sm:$0xf]
      %v963 = vld [vmem:[%s199 + $0x80] sm:$0xf]
      %v964 = vld [vmem:[%s199 + $0x84] sm:$0xf]
      %v965 = vld [vmem:[%s199 + $0x88] sm:$0xf]
      %v966 = vld [vmem:[%s199 + $0x8c] sm:$0xf]
      %v967 = vunpack.c.l.bf16 %v931
      %v968 = vunpack.c.l.bf16 %v932
      %v969 = vunpack.c.l.bf16 %v933
      %v970 = vunpack.c.l.bf16 %v934
      %v971 = vunpack.c.l.bf16 %v935
      %v972 = vunpack.c.l.bf16 %v936
      %v973 = vunpack.c.l.bf16 %v937
      %v974 = vunpack.c.l.bf16 %v938
      %v975 = vunpack.c.l.bf16 %v939
      %v976 = vunpack.c.l.bf16 %v940
      %v977 = vunpack.c.l.bf16 %v941
      %v978 = vunpack.c.l.bf16 %v942
      %v979 = vunpack.c.l.bf16 %v943
      %v980 = vunpack.c.l.bf16 %v944
      %v981 = vunpack.c.l.bf16 %v945
      %v982 = vunpack.c.l.bf16 %v946
      %v983 = vunpack.c.l.bf16 %v947
      %v984 = vunpack.c.l.bf16 %v948
      %v985 = vunpack.c.l.bf16 %v949
      %v986 = vunpack.c.l.bf16 %v950
      %v987 = vunpack.c.l.bf16 %v951
      %v988 = vunpack.c.l.bf16 %v952
      %v989 = vunpack.c.l.bf16 %v953
      %v990 = vunpack.c.l.bf16 %v954
      %v991 = vunpack.c.l.bf16 %v955
      %v992 = vunpack.c.l.bf16 %v956
      %v993 = vunpack.c.l.bf16 %v957
      %v994 = vunpack.c.l.bf16 %v958
      %v995 = vunpack.c.l.bf16 %v959
      %v996 = vunpack.c.l.bf16 %v960
      %v997 = vunpack.c.l.bf16 %v961
      %v998 = vunpack.c.l.bf16 %v962
      %v999 = vunpack.c.l.bf16 %v963
      %v1000 = vunpack.c.l.bf16 %v964
      %v1001 = vunpack.c.l.bf16 %v965
      %v1002 = vunpack.c.l.bf16 %v966
      %v1003 = vld [vmem:[%s1] sm:$0x1]
      %v1004 = vlaneseq
      %v1005 = vshrl.u32 %v1004, 7
      %v1006 = vsub.s32 0, %v1005
      %v1007 = vrot.slane %v1003, %v1006
      %v1008 = vmul.f32 %v967, %v1007
      %v1009 = vmul.f32 %v968, %v1007
      %v1010 = vmul.f32 %v969, %v1007
      %v1011 = vmul.f32 %v970, %v1007
      %v1012 = vmul.f32 %v971, %v1007
      %v1013 = vmul.f32 %v972, %v1007
      %v1014 = vmul.f32 %v973, %v1007
      %v1015 = vmul.f32 %v974, %v1007
      %v1016 = vmul.f32 %v975, %v1007
      %v1017 = vmul.f32 %v976, %v1007
      %v1018 = vmul.f32 %v977, %v1007
      %v1019 = vmul.f32 %v978, %v1007
      %v1020 = vmul.f32 %v979, %v1007
      %v1021 = vmul.f32 %v980, %v1007
      %v1022 = vmul.f32 %v981, %v1007
      %v1023 = vmul.f32 %v982, %v1007
      %v1024 = vmul.f32 %v983, %v1007
      %v1025 = vmul.f32 %v984, %v1007
      %v1026 = vmul.f32 %v985, %v1007
      %v1027 = vmul.f32 %v986, %v1007
      %v1028 = vmul.f32 %v987, %v1007
      %v1029 = vmul.f32 %v988, %v1007
      %v1030 = vmul.f32 %v989, %v1007
      %v1031 = vmul.f32 %v990, %v1007
      %v1032 = vmul.f32 %v991, %v1007
      %v1033 = vmul.f32 %v992, %v1007
      %v1034 = vmul.f32 %v993, %v1007
      %v1035 = vmul.f32 %v994, %v1007
      %v1036 = vmul.f32 %v995, %v1007
      %v1037 = vmul.f32 %v996, %v1007
      %v1038 = vmul.f32 %v997, %v1007
      %v1039 = vmul.f32 %v998, %v1007
      %v1040 = vmul.f32 %v999, %v1007
      %v1041 = vmul.f32 %v1000, %v1007
      %v1042 = vmul.f32 %v1001, %v1007
      %v1043 = vmul.f32 %v1002, %v1007
      %v1044 = vld [vmem:[%s1 + $0x1] sm:$0x1]
      %v1045 = vlaneseq
      %v1046 = vshrl.u32 %v1045, 7
      %v1047 = vsub.s32 0, %v1046
      %v1048 = vrot.slane %v1044, %v1047
      %v1049 = vadd.f32 %v1008, %v1048
      %v1050 = vadd.f32 %v1009, %v1048
      %v1051 = vadd.f32 %v1010, %v1048
      %v1052 = vadd.f32 %v1011, %v1048
      %v1053 = vadd.f32 %v1012, %v1048
      %v1054 = vadd.f32 %v1013, %v1048
      %v1055 = vadd.f32 %v1014, %v1048
      %v1056 = vadd.f32 %v1015, %v1048
      %v1057 = vadd.f32 %v1016, %v1048
      %v1058 = vadd.f32 %v1017, %v1048
      %v1059 = vadd.f32 %v1018, %v1048
      %v1060 = vadd.f32 %v1019, %v1048
      %v1061 = vadd.f32 %v1020, %v1048
      %v1062 = vadd.f32 %v1021, %v1048
      %v1063 = vadd.f32 %v1022, %v1048
      %v1064 = vadd.f32 %v1023, %v1048
      %v1065 = vadd.f32 %v1024, %v1048
      %v1066 = vadd.f32 %v1025, %v1048
      %v1067 = vadd.f32 %v1026, %v1048
      %v1068 = vadd.f32 %v1027, %v1048
      %v1069 = vadd.f32 %v1028, %v1048
      %v1070 = vadd.f32 %v1029, %v1048
      %v1071 = vadd.f32 %v1030, %v1048
      %v1072 = vadd.f32 %v1031, %v1048
      %v1073 = vadd.f32 %v1032, %v1048
      %v1074 = vadd.f32 %v1033, %v1048
      %v1075 = vadd.f32 %v1034, %v1048
      %v1076 = vadd.f32 %v1035, %v1048
      %v1077 = vadd.f32 %v1036, %v1048
      %v1078 = vadd.f32 %v1037, %v1048
      %v1079 = vadd.f32 %v1038, %v1048
      %v1080 = vadd.f32 %v1039, %v1048
      %v1081 = vadd.f32 %v1040, %v1048
      %v1082 = vadd.f32 %v1041, %v1048
      %v1083 = vadd.f32 %v1042, %v1048
      %v1084 = vadd.f32 %v1043, %v1048
      %v1085 = vmax.f32 %v1049, 0.0
      %v1086 = vmax.f32 %v1050, 0.0
      %v1087 = vmax.f32 %v1051, 0.0
      %v1088 = vmax.f32 %v1052, 0.0
      %v1089 = vmax.f32 %v1053, 0.0
      %v1090 = vmax.f32 %v1054, 0.0
      %v1091 = vmax.f32 %v1055, 0.0
      %v1092 = vmax.f32 %v1056, 0.0
      %v1093 = vmax.f32 %v1057, 0.0
      %v1094 = vmax.f32 %v1058, 0.0
      %v1095 = vmax.f32 %v1059, 0.0
      %v1096 = vmax.f32 %v1060, 0.0
      %v1097 = vmax.f32 %v1061, 0.0
      %v1098 = vmax.f32 %v1062, 0.0
      %v1099 = vmax.f32 %v1063, 0.0
      %v1100 = vmax.f32 %v1064, 0.0
      %v1101 = vmax.f32 %v1065, 0.0
      %v1102 = vmax.f32 %v1066, 0.0
      %v1103 = vmax.f32 %v1067, 0.0
      %v1104 = vmax.f32 %v1068, 0.0
      %v1105 = vmax.f32 %v1069, 0.0
      %v1106 = vmax.f32 %v1070, 0.0
      %v1107 = vmax.f32 %v1071, 0.0
      %v1108 = vmax.f32 %v1072, 0.0
      %v1109 = vmax.f32 %v1073, 0.0
      %v1110 = vmax.f32 %v1074, 0.0
      %v1111 = vmax.f32 %v1075, 0.0
      %v1112 = vmax.f32 %v1076, 0.0
      %v1113 = vmax.f32 %v1077, 0.0
      %v1114 = vmax.f32 %v1078, 0.0
      %v1115 = vmax.f32 %v1079, 0.0
      %v1116 = vmax.f32 %v1080, 0.0
      %v1117 = vmax.f32 %v1081, 0.0
      %v1118 = vmax.f32 %v1082, 0.0
      %v1119 = vmax.f32 %v1083, 0.0
      %v1120 = vmax.f32 %v1084, 0.0
      %v1121 = vmul.f32 %v1085, %v895
      %v1122 = vmul.f32 %v1086, %v896
      %v1123 = vmul.f32 %v1087, %v897
      %v1124 = vmul.f32 %v1088, %v898
      %v1125 = vmul.f32 %v1089, %v899
      %v1126 = vmul.f32 %v1090, %v900
      %v1127 = vmul.f32 %v1091, %v901
      %v1128 = vmul.f32 %v1092, %v902
      %v1129 = vmul.f32 %v1093, %v903
      %v1130 = vmul.f32 %v1094, %v904
      %v1131 = vmul.f32 %v1095, %v905
      %v1132 = vmul.f32 %v1096, %v906
      %v1133 = vmul.f32 %v1097, %v907
      %v1134 = vmul.f32 %v1098, %v908
      %v1135 = vmul.f32 %v1099, %v909
      %v1136 = vmul.f32 %v1100, %v910
      %v1137 = vmul.f32 %v1101, %v911
      %v1138 = vmul.f32 %v1102, %v912
      %v1139 = vmul.f32 %v1103, %v913
      %v1140 = vmul.f32 %v1104, %v914
      %v1141 = vmul.f32 %v1105, %v915
      %v1142 = vmul.f32 %v1106, %v916
      %v1143 = vmul.f32 %v1107, %v917
      %v1144 = vmul.f32 %v1108, %v918
      %v1145 = vmul.f32 %v1109, %v919
      %v1146 = vmul.f32 %v1110, %v920
      %v1147 = vmul.f32 %v1111, %v921
      %v1148 = vmul.f32 %v1112, %v922
      %v1149 = vmul.f32 %v1113, %v923
      %v1150 = vmul.f32 %v1114, %v924
      %v1151 = vmul.f32 %v1115, %v925
      %v1152 = vmul.f32 %v1116, %v926
      %v1153 = vmul.f32 %v1117, %v927
      %v1154 = vmul.f32 %v1118, %v928
      %v1155 = vmul.f32 %v1119, %v929
      %v1156 = vmul.f32 %v1120, %v930
      %vm1157 = vcmask 60416
      %1158 = vst.msk [vmem:[#allocation2] sm:$0xf] %vm1157, 0
      %1159 = vst.msk [vmem:[#allocation2 + $0x4] sm:$0xf] %vm1157, 0
      %1160 = vst.msk [vmem:[#allocation2 + $0x8] sm:$0xf] %vm1157, 0
      %1161 = vst.msk [vmem:[#allocation2 + $0xc] sm:$0xf] %vm1157, 0
      %1162 = vst.msk [vmem:[#allocation2 + $0x10] sm:$0xf] %vm1157, 0
      %1163 = vst.msk [vmem:[#allocation2 + $0x14] sm:$0xf] %vm1157, 0
      %1164 = vst.msk [vmem:[#allocation2 + $0x18] sm:$0xf] %vm1157, 0
      %1165 = vst.msk [vmem:[#allocation2 + $0x1c] sm:$0xf] %vm1157, 0
      %1166 = vst.msk [vmem:[#allocation2 + $0x20] sm:$0xf] %vm1157, 0
      %1167 = vst.msk [vmem:[#allocation2 + $0x24] sm:$0xf] %vm1157, 0
      %1168 = vst.msk [vmem:[#allocation2 + $0x28] sm:$0xf] %vm1157, 0
      %1169 = vst.msk [vmem:[#allocation2 + $0x2c] sm:$0xf] %vm1157, 0
      %1170 = vst.msk [vmem:[#allocation2 + $0x30] sm:$0xf] %vm1157, 0
      %1171 = vst.msk [vmem:[#allocation2 + $0x34] sm:$0xf] %vm1157, 0
      %1172 = vst.msk [vmem:[#allocation2 + $0x38] sm:$0xf] %vm1157, 0
      %1173 = vst.msk [vmem:[#allocation2 + $0x3c] sm:$0xf] %vm1157, 0
      %1174 = vst.msk [vmem:[#allocation2 + $0x40] sm:$0xf] %vm1157, 0
      %1175 = vst.msk [vmem:[#allocation2 + $0x44] sm:$0xf] %vm1157, 0
      %1176 = vst.msk [vmem:[#allocation2 + $0x48] sm:$0xf] %vm1157, 0
      %1177 = vst.msk [vmem:[#allocation2 + $0x4c] sm:$0xf] %vm1157, 0
      %1178 = vst.msk [vmem:[#allocation2 + $0x50] sm:$0xf] %vm1157, 0
      %1179 = vst.msk [vmem:[#allocation2 + $0x54] sm:$0xf] %vm1157, 0
      %1180 = vst.msk [vmem:[#allocation2 + $0x58] sm:$0xf] %vm1157, 0
      %1181 = vst.msk [vmem:[#allocation2 + $0x5c] sm:$0xf] %vm1157, 0
      %1182 = vst.msk [vmem:[#allocation2 + $0x60] sm:$0xf] %vm1157, 0
      %1183 = vst.msk [vmem:[#allocation2 + $0x64] sm:$0xf] %vm1157, 0
      %1184 = vst.msk [vmem:[#allocation2 + $0x68] sm:$0xf] %vm1157, 0
      %1185 = vst.msk [vmem:[#allocation2 + $0x6c] sm:$0xf] %vm1157, 0
      %1186 = vst.msk [vmem:[#allocation2 + $0x70] sm:$0xf] %vm1157, 0
      %1187 = vst.msk [vmem:[#allocation2 + $0x74] sm:$0xf] %vm1157, 0
      %1188 = vst.msk [vmem:[#allocation2 + $0x78] sm:$0xf] %vm1157, 0
      %1189 = vst.msk [vmem:[#allocation2 + $0x7c] sm:$0xf] %vm1157, 0
      %1190 = vst.msk [vmem:[#allocation2 + $0x80] sm:$0xf] %vm1157, 0
      %1191 = vst.msk [vmem:[#allocation2 + $0x84] sm:$0xf] %vm1157, 0
      %1192 = vst.msk [vmem:[#allocation2 + $0x88] sm:$0xf] %vm1157, 0
      %1193 = vst.msk [vmem:[#allocation2 + $0x8c] sm:$0xf] %vm1157, 0
      %1194 = vst.msk [vmem:[#allocation2 + $0x90] sm:$0xf] %vm1157, 0
      %1195 = vst.msk [vmem:[#allocation2 + $0x94] sm:$0xf] %vm1157, 0
      %1196 = vst.msk [vmem:[#allocation2 + $0x98] sm:$0xf] %vm1157, 0
      %1197 = vst.msk [vmem:[#allocation2 + $0x9c] sm:$0xf] %vm1157, 0
      %vm1198 = vcmask 59392
      %1199 = vst.msk [vmem:[#allocation2 + $0xa0] sm:$0x7] %vm1198, 0
      %v1200 = vpack.c.bf16 %v1122, %v1121
      %v1201 = vpack.c.bf16 %v1124, %v1123
      %v1202 = vpack.c.bf16 %v1126, %v1125
      %v1203 = vpack.c.bf16 %v1128, %v1127
      %v1204 = vpack.c.bf16 %v1130, %v1129
      %v1205 = vpack.c.bf16 %v1132, %v1131
      %v1206 = vpack.c.bf16 %v1134, %v1133
      %v1207 = vpack.c.bf16 %v1136, %v1135
      %v1208 = vpack.c.bf16 %v1138, %v1137
      %v1209 = vpack.c.bf16 %v1140, %v1139
      %v1210 = vpack.c.bf16 %v1142, %v1141
      %v1211 = vpack.c.bf16 %v1144, %v1143
      %v1212 = vpack.c.bf16 %v1146, %v1145
      %v1213 = vpack.c.bf16 %v1148, %v1147
      %v1214 = vpack.c.bf16 %v1150, %v1149
      %v1215 = vpack.c.bf16 %v1152, %v1151
      %v1216 = vpack.c.bf16 %v1154, %v1153
      %v1217 = vpack.c.bf16 %v1156, %v1155
      %v1236 = vunpack.c.l.b16 %v1200
      %v1237 = vunpack.c.h.b16 %v1200
      %v1238 = vunpack.c.l.b16 %v1201
      %v1239 = vunpack.c.h.b16 %v1201
      %v1240 = vunpack.c.l.b16 %v1202
      %v1241 = vunpack.c.h.b16 %v1202
      %v1242 = vunpack.c.l.b16 %v1203
      %v1243 = vunpack.c.h.b16 %v1203
      %v1244 = vunpack.c.l.b16 %v1204
      %v1245 = vunpack.c.h.b16 %v1204
      %v1246 = vunpack.c.l.b16 %v1205
      %v1247 = vunpack.c.h.b16 %v1205
      %v1248 = vunpack.c.l.b16 %v1206
      %v1249 = vunpack.c.h.b16 %v1206
      %v1250 = vunpack.c.l.b16 %v1207
      %v1251 = vunpack.c.h.b16 %v1207
      %v1252 = vunpack.c.l.b16 %v1208
      %v1253 = vunpack.c.h.b16 %v1208
      %v1254 = vunpack.c.l.b16 %v1209
      %v1255 = vunpack.c.h.b16 %v1209
      %v1256 = vunpack.c.l.b16 %v1210
      %v1257 = vunpack.c.h.b16 %v1210
      %v1258 = vunpack.c.l.b16 %v1211
      %v1259 = vunpack.c.h.b16 %v1211
      %v1260 = vunpack.c.l.b16 %v1212
      %v1261 = vunpack.c.h.b16 %v1212
      %v1262 = vunpack.c.l.b16 %v1213
      %v1263 = vunpack.c.h.b16 %v1213
      %v1264 = vunpack.c.l.b16 %v1214
      %v1265 = vunpack.c.h.b16 %v1214
      %v1266 = vunpack.c.l.b16 %v1215
      %v1267 = vunpack.c.h.b16 %v1215
      %v1268 = vunpack.c.l.b16 %v1216
      %v1269 = vunpack.c.h.b16 %v1216
      %v1270 = vunpack.c.l.b16 %v1217
      %v1271 = vunpack.c.h.b16 %v1217
      %v1272 = vpack.c.b16 %v1236, %v1236
      %v1273 = vpack.c.b16 %v1237, %v1237
      %v1274 = vpack.c.b16 %v1238, %v1238
      %v1275 = vpack.c.b16 %v1239, %v1239
      %v1276 = vpack.c.b16 %v1240, %v1240
      %v1277 = vpack.c.b16 %v1241, %v1241
      %v1278 = vpack.c.b16 %v1242, %v1242
      %v1279 = vpack.c.b16 %v1243, %v1243
      %v1280 = vpack.c.b16 %v1244, %v1244
      %v1281 = vpack.c.b16 %v1245, %v1245
      %v1282 = vpack.c.b16 %v1246, %v1246
      %v1283 = vpack.c.b16 %v1247, %v1247
      %v1284 = vpack.c.b16 %v1248, %v1248
      %v1285 = vpack.c.b16 %v1249, %v1249
      %v1286 = vpack.c.b16 %v1250, %v1250
      %v1287 = vpack.c.b16 %v1251, %v1251
      %v1288 = vpack.c.b16 %v1252, %v1252
      %v1289 = vpack.c.b16 %v1253, %v1253
      %v1290 = vpack.c.b16 %v1254, %v1254
      %v1291 = vpack.c.b16 %v1255, %v1255
      %v1292 = vpack.c.b16 %v1256, %v1256
      %v1293 = vpack.c.b16 %v1257, %v1257
      %v1294 = vpack.c.b16 %v1258, %v1258
      %v1295 = vpack.c.b16 %v1259, %v1259
      %v1296 = vpack.c.b16 %v1260, %v1260
      %v1297 = vpack.c.b16 %v1261, %v1261
      %v1298 = vpack.c.b16 %v1262, %v1262
      %v1299 = vpack.c.b16 %v1263, %v1263
      %v1300 = vpack.c.b16 %v1264, %v1264
      %v1301 = vpack.c.b16 %v1265, %v1265
      %v1302 = vpack.c.b16 %v1266, %v1266
      %v1303 = vpack.c.b16 %v1267, %v1267
      %v1304 = vpack.c.b16 %v1268, %v1268
      %v1305 = vpack.c.b16 %v1269, %v1269
      %v1306 = vpack.c.b16 %v1270, %v1270
      %v1307 = vpack.c.b16 %v1271, %v1271
      %vm1308 = vsmask.f32 1280
      %vm1309 = vsmask.f32 5392
      %vm1310 = vmor %vm1308, %vm1309
      %v1312 = vshrl.u32 %v1272, 16
      %v1314 = vrot.slane %v1312, 6
      %v1315 = vshll.u32 %v1272, 16
      %v1317 = vrot.slane %v1315, 7
      %v1318 = vor.u32 %v1314, %v1317
      %v1319 = vrot.slane %v1318, 4
      %v1321 = vshrl.u32 %v1273, 16
      %v1323 = vrot.slane %v1321, 6
      %v1324 = vshll.u32 %v1273, 16
      %v1326 = vrot.slane %v1324, 7
      %v1327 = vor.u32 %v1323, %v1326
      %v1328 = vsel %vm1310, %v1319, %v1327
      %v1329 = vrot.slane %v1327, 4
      %v1331 = vshrl.u32 %v1274, 16
      %v1333 = vrot.slane %v1331, 6
      %v1334 = vshll.u32 %v1274, 16
      %v1336 = vrot.slane %v1334, 7
      %v1337 = vor.u32 %v1333, %v1336
      %v1338 = vsel %vm1310, %v1329, %v1337
      %v1339 = vrot.slane %v1337, 4
      %v1341 = vshrl.u32 %v1275, 16
      %v1343 = vrot.slane %v1341, 6
      %v1344 = vshll.u32 %v1275, 16
      %v1346 = vrot.slane %v1344, 7
      %v1347 = vor.u32 %v1343, %v1346
      %v1348 = vsel %vm1310, %v1339, %v1347
      %v1349 = vrot.slane %v1347, 4
      %v1351 = vshrl.u32 %v1276, 16
      %v1353 = vrot.slane %v1351, 6
      %v1354 = vshll.u32 %v1276, 16
      %v1356 = vrot.slane %v1354, 7
      %v1357 = vor.u32 %v1353, %v1356
      %v1358 = vsel %vm1310, %v1349, %v1357
      %v1359 = vrot.slane %v1357, 4
      %v1361 = vshrl.u32 %v1277, 16
      %v1363 = vrot.slane %v1361, 6
      %v1364 = vshll.u32 %v1277, 16
      %v1366 = vrot.slane %v1364, 7
      %v1367 = vor.u32 %v1363, %v1366
      %v1368 = vsel %vm1310, %v1359, %v1367
      %v1369 = vrot.slane %v1367, 4
      %v1371 = vshrl.u32 %v1278, 16
      %v1373 = vrot.slane %v1371, 6
      %v1374 = vshll.u32 %v1278, 16
      %v1376 = vrot.slane %v1374, 7
      %v1377 = vor.u32 %v1373, %v1376
      %v1378 = vsel %vm1310, %v1369, %v1377
      %v1379 = vrot.slane %v1377, 4
      %v1381 = vshrl.u32 %v1279, 16
      %v1383 = vrot.slane %v1381, 6
      %v1384 = vshll.u32 %v1279, 16
      %v1386 = vrot.slane %v1384, 7
      %v1387 = vor.u32 %v1383, %v1386
      %v1388 = vsel %vm1310, %v1379, %v1387
      %v1389 = vrot.slane %v1387, 4
      %v1391 = vshrl.u32 %v1280, 16
      %v1393 = vrot.slane %v1391, 6
      %v1394 = vshll.u32 %v1280, 16
      %v1396 = vrot.slane %v1394, 7
      %v1397 = vor.u32 %v1393, %v1396
      %v1398 = vsel %vm1310, %v1389, %v1397
      %v1399 = vrot.slane %v1397, 4
      %v1401 = vshrl.u32 %v1281, 16
      %v1403 = vrot.slane %v1401, 6
      %v1404 = vshll.u32 %v1281, 16
      %v1406 = vrot.slane %v1404, 7
      %v1407 = vor.u32 %v1403, %v1406
      %v1408 = vsel %vm1310, %v1399, %v1407
      %v1409 = vrot.slane %v1407, 4
      %v1411 = vshrl.u32 %v1282, 16
      %v1413 = vrot.slane %v1411, 6
      %v1414 = vshll.u32 %v1282, 16
      %v1416 = vrot.slane %v1414, 7
      %v1417 = vor.u32 %v1413, %v1416
      %v1418 = vsel %vm1310, %v1409, %v1417
      %v1419 = vrot.slane %v1417, 4
      %v1421 = vshrl.u32 %v1283, 16
      %v1423 = vrot.slane %v1421, 6
      %v1424 = vshll.u32 %v1283, 16
      %v1426 = vrot.slane %v1424, 7
      %v1427 = vor.u32 %v1423, %v1426
      %v1428 = vsel %vm1310, %v1419, %v1427
      %v1429 = vrot.slane %v1427, 4
      %v1431 = vshrl.u32 %v1284, 16
      %v1433 = vrot.slane %v1431, 6
      %v1434 = vshll.u32 %v1284, 16
      %v1436 = vrot.slane %v1434, 7
      %v1437 = vor.u32 %v1433, %v1436
      %v1438 = vsel %vm1310, %v1429, %v1437
      %v1439 = vrot.slane %v1437, 4
      %v1441 = vshrl.u32 %v1285, 16
      %v1443 = vrot.slane %v1441, 6
      %v1444 = vshll.u32 %v1285, 16
      %v1446 = vrot.slane %v1444, 7
      %v1447 = vor.u32 %v1443, %v1446
      %v1448 = vsel %vm1310, %v1439, %v1447
      %v1449 = vrot.slane %v1447, 4
      %v1451 = vshrl.u32 %v1286, 16
      %v1453 = vrot.slane %v1451, 6
      %v1454 = vshll.u32 %v1286, 16
      %v1456 = vrot.slane %v1454, 7
      %v1457 = vor.u32 %v1453, %v1456
      %v1458 = vsel %vm1310, %v1449, %v1457
      %v1459 = vrot.slane %v1457, 4
      %v1461 = vshrl.u32 %v1287, 16
      %v1463 = vrot.slane %v1461, 6
      %v1464 = vshll.u32 %v1287, 16
      %v1466 = vrot.slane %v1464, 7
      %v1467 = vor.u32 %v1463, %v1466
      %v1468 = vsel %vm1310, %v1459, %v1467
      %v1469 = vrot.slane %v1467, 4
      %v1471 = vshrl.u32 %v1288, 16
      %v1473 = vrot.slane %v1471, 6
      %v1474 = vshll.u32 %v1288, 16
      %v1476 = vrot.slane %v1474, 7
      %v1477 = vor.u32 %v1473, %v1476
      %v1478 = vsel %vm1310, %v1469, %v1477
      %v1479 = vrot.slane %v1477, 4
      %v1481 = vshrl.u32 %v1289, 16
      %v1483 = vrot.slane %v1481, 6
      %v1484 = vshll.u32 %v1289, 16
      %v1486 = vrot.slane %v1484, 7
      %v1487 = vor.u32 %v1483, %v1486
      %v1488 = vsel %vm1310, %v1479, %v1487
      %v1489 = vrot.slane %v1487, 4
      %v1491 = vshrl.u32 %v1290, 16
      %v1493 = vrot.slane %v1491, 6
      %v1494 = vshll.u32 %v1290, 16
      %v1496 = vrot.slane %v1494, 7
      %v1497 = vor.u32 %v1493, %v1496
      %v1498 = vsel %vm1310, %v1489, %v1497
      %v1499 = vrot.slane %v1497, 4
      %v1501 = vshrl.u32 %v1291, 16
      %v1503 = vrot.slane %v1501, 6
      %v1504 = vshll.u32 %v1291, 16
      %v1506 = vrot.slane %v1504, 7
      %v1507 = vor.u32 %v1503, %v1506
      %v1508 = vsel %vm1310, %v1499, %v1507
      %v1509 = vrot.slane %v1507, 4
      %v1511 = vshrl.u32 %v1292, 16
      %v1513 = vrot.slane %v1511, 6
      %v1514 = vshll.u32 %v1292, 16
      %v1516 = vrot.slane %v1514, 7
      %v1517 = vor.u32 %v1513, %v1516
      %v1518 = vsel %vm1310, %v1509, %v1517
      %v1519 = vrot.slane %v1517, 4
      %v1521 = vshrl.u32 %v1293, 16
      %v1523 = vrot.slane %v1521, 6
      %v1524 = vshll.u32 %v1293, 16
      %v1526 = vrot.slane %v1524, 7
      %v1527 = vor.u32 %v1523, %v1526
      %v1528 = vsel %vm1310, %v1519, %v1527
      %v1529 = vrot.slane %v1527, 4
      %v1531 = vshrl.u32 %v1294, 16
      %v1533 = vrot.slane %v1531, 6
      %v1534 = vshll.u32 %v1294, 16
      %v1536 = vrot.slane %v1534, 7
      %v1537 = vor.u32 %v1533, %v1536
      %v1538 = vsel %vm1310, %v1529, %v1537
      %v1539 = vrot.slane %v1537, 4
      %v1541 = vshrl.u32 %v1295, 16
      %v1543 = vrot.slane %v1541, 6
      %v1544 = vshll.u32 %v1295, 16
      %v1546 = vrot.slane %v1544, 7
      %v1547 = vor.u32 %v1543, %v1546
      %v1548 = vsel %vm1310, %v1539, %v1547
      %v1549 = vrot.slane %v1547, 4
      %v1551 = vshrl.u32 %v1296, 16
      %v1553 = vrot.slane %v1551, 6
      %v1554 = vshll.u32 %v1296, 16
      %v1556 = vrot.slane %v1554, 7
      %v1557 = vor.u32 %v1553, %v1556
      %v1558 = vsel %vm1310, %v1549, %v1557
      %v1559 = vrot.slane %v1557, 4
      %v1561 = vshrl.u32 %v1297, 16
      %v1563 = vrot.slane %v1561, 6
      %v1564 = vshll.u32 %v1297, 16
      %v1566 = vrot.slane %v1564, 7
      %v1567 = vor.u32 %v1563, %v1566
      %v1568 = vsel %vm1310, %v1559, %v1567
      %v1569 = vrot.slane %v1567, 4
      %v1571 = vshrl.u32 %v1298, 16
      %v1573 = vrot.slane %v1571, 6
      %v1574 = vshll.u32 %v1298, 16
      %v1576 = vrot.slane %v1574, 7
      %v1577 = vor.u32 %v1573, %v1576
      %v1578 = vsel %vm1310, %v1569, %v1577
      %v1579 = vrot.slane %v1577, 4
      %v1581 = vshrl.u32 %v1299, 16
      %v1583 = vrot.slane %v1581, 6
      %v1584 = vshll.u32 %v1299, 16
      %v1586 = vrot.slane %v1584, 7
      %v1587 = vor.u32 %v1583, %v1586
      %v1588 = vsel %vm1310, %v1579, %v1587
      %v1589 = vrot.slane %v1587, 4
      %v1591 = vshrl.u32 %v1300, 16
      %v1593 = vrot.slane %v1591, 6
      %v1594 = vshll.u32 %v1300, 16
      %v1596 = vrot.slane %v1594, 7
      %v1597 = vor.u32 %v1593, %v1596
      %v1598 = vsel %vm1310, %v1589, %v1597
      %v1599 = vrot.slane %v1597, 4
      %v1601 = vshrl.u32 %v1301, 16
      %v1603 = vrot.slane %v1601, 6
      %v1604 = vshll.u32 %v1301, 16
      %v1606 = vrot.slane %v1604, 7
      %v1607 = vor.u32 %v1603, %v1606
      %v1608 = vsel %vm1310, %v1599, %v1607
      %v1609 = vrot.slane %v1607, 4
      %v1611 = vshrl.u32 %v1302, 16
      %v1613 = vrot.slane %v1611, 6
      %v1614 = vshll.u32 %v1302, 16
      %v1616 = vrot.slane %v1614, 7
      %v1617 = vor.u32 %v1613, %v1616
      %v1618 = vsel %vm1310, %v1609, %v1617
      %v1619 = vrot.slane %v1617, 4
      %v1621 = vshrl.u32 %v1303, 16
      %v1623 = vrot.slane %v1621, 6
      %v1624 = vshll.u32 %v1303, 16
      %v1626 = vrot.slane %v1624, 7
      %v1627 = vor.u32 %v1623, %v1626
      %v1628 = vsel %vm1310, %v1619, %v1627
      %v1629 = vrot.slane %v1627, 4
      %v1631 = vshrl.u32 %v1304, 16
      %v1633 = vrot.slane %v1631, 6
      %v1634 = vshll.u32 %v1304, 16
      %v1636 = vrot.slane %v1634, 7
      %v1637 = vor.u32 %v1633, %v1636
      %v1638 = vsel %vm1310, %v1629, %v1637
      %v1639 = vrot.slane %v1637, 4
      %v1641 = vshrl.u32 %v1305, 16
      %v1643 = vrot.slane %v1641, 6
      %v1644 = vshll.u32 %v1305, 16
      %v1646 = vrot.slane %v1644, 7
      %v1647 = vor.u32 %v1643, %v1646
      %v1648 = vsel %vm1310, %v1639, %v1647
      %v1649 = vrot.slane %v1647, 4
      %v1651 = vshrl.u32 %v1306, 16
      %v1653 = vrot.slane %v1651, 6
      %v1654 = vshll.u32 %v1306, 16
      %v1656 = vrot.slane %v1654, 7
      %v1657 = vor.u32 %v1653, %v1656
      %v1658 = vsel %vm1310, %v1649, %v1657
      %v1659 = vrot.slane %v1657, 4
      %v1661 = vshrl.u32 %v1307, 16
      %v1663 = vrot.slane %v1661, 6
      %v1664 = vshll.u32 %v1307, 16
      %v1666 = vrot.slane %v1664, 7
      %v1667 = vor.u32 %v1663, %v1666
      %v1668 = vsel %vm1310, %v1659, %v1667
      %v1669 = vrot.slane %v1667, 4
      %vm1707 = vcmask 60417
      %vm1708 = vsmask.f32 7942
      %vm1709 = vmand %vm1707, %vm1708
      %v1710 = vld [vmem:[#allocation2 + $0x8] sm:$0xe]
      %v1711 = vsel %vm1709, %v1318, %v1710
      %1712 = vst [vmem:[#allocation2 + $0x8] sm:$0xe] %v1711
      %1713 = vst.msk [vmem:[#allocation2 + $0xc] sm:$0xf] %vm1157, %v1328
      %1714 = vst.msk [vmem:[#allocation2 + $0x10] sm:$0xf] %vm1157, %v1338
      %1715 = vst.msk [vmem:[#allocation2 + $0x14] sm:$0xf] %vm1157, %v1348
      %1716 = vst.msk [vmem:[#allocation2 + $0x18] sm:$0xf] %vm1157, %v1358
      %1717 = vst.msk [vmem:[#allocation2 + $0x1c] sm:$0xf] %vm1157, %v1368
      %1718 = vst.msk [vmem:[#allocation2 + $0x20] sm:$0xf] %vm1157, %v1378
      %1719 = vst.msk [vmem:[#allocation2 + $0x24] sm:$0xf] %vm1157, %v1388
      %1720 = vst.msk [vmem:[#allocation2 + $0x28] sm:$0xf] %vm1157, %v1398
      %1721 = vst.msk [vmem:[#allocation2 + $0x2c] sm:$0xf] %vm1157, %v1408
      %1722 = vst.msk [vmem:[#allocation2 + $0x30] sm:$0xf] %vm1157, %v1418
      %1723 = vst.msk [vmem:[#allocation2 + $0x34] sm:$0xf] %vm1157, %v1428
      %1724 = vst.msk [vmem:[#allocation2 + $0x38] sm:$0xf] %vm1157, %v1438
      %1725 = vst.msk [vmem:[#allocation2 + $0x3c] sm:$0xf] %vm1157, %v1448
      %1726 = vst.msk [vmem:[#allocation2 + $0x40] sm:$0xf] %vm1157, %v1458
      %1727 = vst.msk [vmem:[#allocation2 + $0x44] sm:$0xf] %vm1157, %v1468
      %1728 = vst.msk [vmem:[#allocation2 + $0x48] sm:$0xf] %vm1157, %v1478
      %1729 = vst.msk [vmem:[#allocation2 + $0x4c] sm:$0xf] %vm1157, %v1488
      %1730 = vst.msk [vmem:[#allocation2 + $0x50] sm:$0xf] %vm1157, %v1498
      %1731 = vst.msk [vmem:[#allocation2 + $0x54] sm:$0xf] %vm1157, %v1508
      %1732 = vst.msk [vmem:[#allocation2 + $0x58] sm:$0xf] %vm1157, %v1518
      %1733 = vst.msk [vmem:[#allocation2 + $0x5c] sm:$0xf] %vm1157, %v1528
      %1734 = vst.msk [vmem:[#allocation2 + $0x60] sm:$0xf] %vm1157, %v1538
      %1735 = vst.msk [vmem:[#allocation2 + $0x64] sm:$0xf] %vm1157, %v1548
      %1736 = vst.msk [vmem:[#allocation2 + $0x68] sm:$0xf] %vm1157, %v1558
      %1737 = vst.msk [vmem:[#allocation2 + $0x6c] sm:$0xf] %vm1157, %v1568
      %1738 = vst.msk [vmem:[#allocation2 + $0x70] sm:$0xf] %vm1157, %v1578
      %1739 = vst.msk [vmem:[#allocation2 + $0x74] sm:$0xf] %vm1157, %v1588
      %1740 = vst.msk [vmem:[#allocation2 + $0x78] sm:$0xf] %vm1157, %v1598
      %1741 = vst.msk [vmem:[#allocation2 + $0x7c] sm:$0xf] %vm1157, %v1608
      %1742 = vst.msk [vmem:[#allocation2 + $0x80] sm:$0xf] %vm1157, %v1618
      %1743 = vst.msk [vmem:[#allocation2 + $0x84] sm:$0xf] %vm1157, %v1628
      %1744 = vst.msk [vmem:[#allocation2 + $0x88] sm:$0xf] %vm1157, %v1638
      %1745 = vst.msk [vmem:[#allocation2 + $0x8c] sm:$0xf] %vm1157, %v1648
      %1746 = vst.msk [vmem:[#allocation2 + $0x90] sm:$0xf] %vm1157, %v1658
      %1747 = vst.msk [vmem:[#allocation2 + $0x94] sm:$0xf] %vm1157, %v1668
      %vm1748 = vcmask 58368
      %vm1749 = vmand %vm1748, %vm1308
      %v1750 = vld [vmem:[#allocation2 + $0x98] sm:$0x3]
      %v1751 = vsel %vm1749, %v1669, %v1750
      %1752 = vst [vmem:[#allocation2 + $0x98] sm:$0x3] %v1751
      %v1753 = vld [vmem:[#allocation2] sm:$0xf]
      %v1754 = vld [vmem:[#allocation2 + $0x4] sm:$0xf]
      %v1755 = vld [vmem:[#allocation2 + $0x8] sm:$0xf]
      %v1756 = vld [vmem:[#allocation2 + $0xc] sm:$0xf]
      %v1757 = vld [vmem:[#allocation2 + $0x10] sm:$0xf]
      %v1758 = vld [vmem:[#allocation2 + $0x14] sm:$0xf]
      %v1759 = vld [vmem:[#allocation2 + $0x18] sm:$0xf]
      %v1760 = vld [vmem:[#allocation2 + $0x1c] sm:$0xf]
      %v1761 = vld [vmem:[#allocation2 + $0x20] sm:$0xf]
      %v1762 = vld [vmem:[#allocation2 + $0x24] sm:$0xf]
      %v1763 = vld [vmem:[#allocation2 + $0x28] sm:$0xf]
      %v1764 = vld [vmem:[#allocation2 + $0x2c] sm:$0xf]
      %v1765 = vld [vmem:[#allocation2 + $0x30] sm:$0xf]
      %v1766 = vld [vmem:[#allocation2 + $0x34] sm:$0xf]
      %v1767 = vld [vmem:[#allocation2 + $0x38] sm:$0xf]
      %v1768 = vld [vmem:[#allocation2 + $0x3c] sm:$0xf]
      %v1769 = vld [vmem:[#allocation2 + $0x40] sm:$0xf]
      %v1770 = vld [vmem:[#allocation2 + $0x44] sm:$0xf]
      %v1771 = vld [vmem:[#allocation2 + $0x48] sm:$0xf]
      %v1772 = vld [vmem:[#allocation2 + $0x4c] sm:$0xf]
      %v1773 = vld [vmem:[#allocation2 + $0x50] sm:$0xf]
      %v1774 = vld [vmem:[#allocation2 + $0x54] sm:$0xf]
      %v1775 = vld [vmem:[#allocation2 + $0x58] sm:$0xf]
      %v1776 = vld [vmem:[#allocation2 + $0x5c] sm:$0xf]
      %v1777 = vld [vmem:[#allocation2 + $0x60] sm:$0xf]
      %v1778 = vld [vmem:[#allocation2 + $0x64] sm:$0xf]
      %v1779 = vld [vmem:[#allocation2 + $0x68] sm:$0xf]
      %v1780 = vld [vmem:[#allocation2 + $0x6c] sm:$0xf]
      %v1781 = vld [vmem:[#allocation2 + $0x70] sm:$0xf]
      %v1782 = vld [vmem:[#allocation2 + $0x74] sm:$0xf]
      %v1783 = vld [vmem:[#allocation2 + $0x78] sm:$0xf]
      %v1784 = vld [vmem:[#allocation2 + $0x7c] sm:$0xf]
      %v1785 = vld [vmem:[#allocation2 + $0x80] sm:$0xf]
      %v1786 = vld [vmem:[#allocation2 + $0x84] sm:$0xf]
      %v1787 = vld [vmem:[#allocation2 + $0x88] sm:$0xf]
      %v1788 = vld [vmem:[#allocation2 + $0x8c] sm:$0xf]
      %v1789 = vld [vmem:[#allocation2 + $0x90] sm:$0x1]
      %v1790 = vld [vmem:[#allocation2] sm:$0xe]
      %v1791 = vld [vmem:[#allocation2 + $0x8] sm:$0xe]
      %v1792 = vld [vmem:[#allocation2 + $0x90] sm:$0xf]
      %v1793 = vld [vmem:[#allocation2 + $0x94] sm:$0xf]
      %v1794 = vld [vmem:[#allocation2 + $0x98] sm:$0x1]
      %v1795 = vld [vmem:[#allocation2 + $0x98] sm:$0x3]
      %v1796 = vld [vmem:[#allocation2 + $0x8] sm:$0xc]
      %v1797 = vld [vmem:[#allocation2 + $0x10] sm:$0xc]
      %v1798 = vld [vmem:[#allocation2 + $0x98] sm:$0xf]
      %v1799 = vld [vmem:[#allocation2 + $0x9c] sm:$0xf]
      %v1800 = vld [vmem:[#allocation2 + $0xa0] sm:$0x3]
      %v1801 = vld [vmem:[#allocation2 + $0xa0] sm:$0x7]
      %v1802 = vld [vmem:[#allocation2 + $0x10] sm:$0x8]
      %v1839 = vunpack.c.l.b16 %v1753
      %v1840 = vunpack.c.l.b16 %v1754
      %v1841 = vunpack.c.l.b16 %v1755
      %v1842 = vunpack.c.l.b16 %v1756
      %v1843 = vunpack.c.l.b16 %v1757
      %v1844 = vunpack.c.l.b16 %v1758
      %v1845 = vunpack.c.l.b16 %v1759
      %v1846 = vunpack.c.l.b16 %v1760
      %v1847 = vunpack.c.l.b16 %v1761
      %v1848 = vunpack.c.l.b16 %v1762
      %v1849 = vunpack.c.l.b16 %v1763
      %v1850 = vunpack.c.l.b16 %v1764
      %v1851 = vunpack.c.l.b16 %v1765
      %v1852 = vunpack.c.l.b16 %v1766
      %v1853 = vunpack.c.l.b16 %v1767
      %v1854 = vunpack.c.l.b16 %v1768
      %v1855 = vunpack.c.l.b16 %v1769
      %v1856 = vunpack.c.l.b16 %v1770
      %v1857 = vunpack.c.l.b16 %v1771
      %v1858 = vunpack.c.l.b16 %v1772
      %v1859 = vunpack.c.l.b16 %v1773
      %v1860 = vunpack.c.l.b16 %v1774
      %v1861 = vunpack.c.l.b16 %v1775
      %v1862 = vunpack.c.l.b16 %v1776
      %v1863 = vunpack.c.l.b16 %v1777
      %v1864 = vunpack.c.l.b16 %v1778
      %v1865 = vunpack.c.l.b16 %v1779
      %v1866 = vunpack.c.l.b16 %v1780
      %v1867 = vunpack.c.l.b16 %v1781
      %v1868 = vunpack.c.l.b16 %v1782
      %v1869 = vunpack.c.l.b16 %v1783
      %v1870 = vunpack.c.l.b16 %v1784
      %v1871 = vunpack.c.l.b16 %v1785
      %v1872 = vunpack.c.l.b16 %v1786
      %v1873 = vunpack.c.l.b16 %v1787
      %v1874 = vunpack.c.l.b16 %v1788
      %v1875 = vpack.c.b16 %v1840, %v1839
      %v1876 = vpack.c.b16 %v1842, %v1841
      %v1877 = vpack.c.b16 %v1844, %v1843
      %v1878 = vpack.c.b16 %v1846, %v1845
      %v1879 = vpack.c.b16 %v1848, %v1847
      %v1880 = vpack.c.b16 %v1850, %v1849
      %v1881 = vpack.c.b16 %v1852, %v1851
      %v1882 = vpack.c.b16 %v1854, %v1853
      %v1883 = vpack.c.b16 %v1856, %v1855
      %v1884 = vpack.c.b16 %v1858, %v1857
      %v1885 = vpack.c.b16 %v1860, %v1859
      %v1886 = vpack.c.b16 %v1862, %v1861
      %v1887 = vpack.c.b16 %v1864, %v1863
      %v1888 = vpack.c.b16 %v1866, %v1865
      %v1889 = vpack.c.b16 %v1868, %v1867
      %v1890 = vpack.c.b16 %v1870, %v1869
      %v1891 = vpack.c.b16 %v1872, %v1871
      %v1892 = vpack.c.b16 %v1874, %v1873
      %v1894 = vunpack.c.l.b16 %v1789
      %v1895 = vpack.c.b16 %v1894, %v1894
      %vm1896 = vsmask.f32 7424
      %v1898 = vshrl.u32 %v1875, 16
      %v1900 = vshll.u32 %v1875, 16
      %v1902 = vrot.slane %v1900, 1
      %v1903 = vor.u32 %v1898, %v1902
      %v1905 = vshll.u32 %v1876, 16
      %v1907 = vrot.slane %v1905, 1
      %v1908 = vsel %vm1896, %v1903, %v1907
      %v1909 = vshrl.u32 %v1876, 16
      %v1911 = vor.u32 %v1909, %v1907
      %v1913 = vshll.u32 %v1877, 16
      %v1915 = vrot.slane %v1913, 1
      %v1916 = vsel %vm1896, %v1911, %v1915
      %v1917 = vshrl.u32 %v1877, 16
      %v1919 = vor.u32 %v1917, %v1915
      %v1921 = vshll.u32 %v1878, 16
      %v1923 = vrot.slane %v1921, 1
      %v1924 = vsel %vm1896, %v1919, %v1923
      %v1925 = vshrl.u32 %v1878, 16
      %v1927 = vor.u32 %v1925, %v1923
      %v1929 = vshll.u32 %v1879, 16
      %v1931 = vrot.slane %v1929, 1
      %v1932 = vsel %vm1896, %v1927, %v1931
      %v1933 = vshrl.u32 %v1879, 16
      %v1935 = vor.u32 %v1933, %v1931
      %v1937 = vshll.u32 %v1880, 16
      %v1939 = vrot.slane %v1937, 1
      %v1940 = vsel %vm1896, %v1935, %v1939
      %v1941 = vshrl.u32 %v1880, 16
      %v1943 = vor.u32 %v1941, %v1939
      %v1945 = vshll.u32 %v1881, 16
      %v1947 = vrot.slane %v1945, 1
      %v1948 = vsel %vm1896, %v1943, %v1947
      %v1949 = vshrl.u32 %v1881, 16
      %v1951 = vor.u32 %v1949, %v1947
      %v1953 = vshll.u32 %v1882, 16
      %v1955 = vrot.slane %v1953, 1
      %v1956 = vsel %vm1896, %v1951, %v1955
      %v1957 = vshrl.u32 %v1882, 16
      %v1959 = vor.u32 %v1957, %v1955
      %v1961 = vshll.u32 %v1883, 16
      %v1963 = vrot.slane %v1961, 1
      %v1964 = vsel %vm1896, %v1959, %v1963
      %v1965 = vshrl.u32 %v1883, 16
      %v1967 = vor.u32 %v1965, %v1963
      %v1969 = vshll.u32 %v1884, 16
      %v1971 = vrot.slane %v1969, 1
      %v1972 = vsel %vm1896, %v1967, %v1971
      %v1973 = vshrl.u32 %v1884, 16
      %v1975 = vor.u32 %v1973, %v1971
      %v1977 = vshll.u32 %v1885, 16
      %v1979 = vrot.slane %v1977, 1
      %v1980 = vsel %vm1896, %v1975, %v1979
      %v1981 = vshrl.u32 %v1885, 16
      %v1983 = vor.u32 %v1981, %v1979
      %v1985 = vshll.u32 %v1886, 16
      %v1987 = vrot.slane %v1985, 1
      %v1988 = vsel %vm1896, %v1983, %v1987
      %v1989 = vshrl.u32 %v1886, 16
      %v1991 = vor.u32 %v1989, %v1987
      %v1993 = vshll.u32 %v1887, 16
      %v1995 = vrot.slane %v1993, 1
      %v1996 = vsel %vm1896, %v1991, %v1995
      %v1997 = vshrl.u32 %v1887, 16
      %v1999 = vor.u32 %v1997, %v1995
      %v2001 = vshll.u32 %v1888, 16
      %v2003 = vrot.slane %v2001, 1
      %v2004 = vsel %vm1896, %v1999, %v2003
      %v2005 = vshrl.u32 %v1888, 16
      %v2007 = vor.u32 %v2005, %v2003
      %v2009 = vshll.u32 %v1889, 16
      %v2011 = vrot.slane %v2009, 1
      %v2012 = vsel %vm1896, %v2007, %v2011
      %v2013 = vshrl.u32 %v1889, 16
      %v2015 = vor.u32 %v2013, %v2011
      %v2017 = vshll.u32 %v1890, 16
      %v2019 = vrot.slane %v2017, 1
      %v2020 = vsel %vm1896, %v2015, %v2019
      %v2021 = vshrl.u32 %v1890, 16
      %v2023 = vor.u32 %v2021, %v2019
      %v2025 = vshll.u32 %v1891, 16
      %v2027 = vrot.slane %v2025, 1
      %v2028 = vsel %vm1896, %v2023, %v2027
      %v2029 = vshrl.u32 %v1891, 16
      %v2031 = vor.u32 %v2029, %v2027
      %v2033 = vshll.u32 %v1892, 16
      %v2035 = vrot.slane %v2033, 1
      %v2036 = vsel %vm1896, %v2031, %v2035
      %v2037 = vshrl.u32 %v1892, 16
      %v2039 = vor.u32 %v2037, %v2035
      %v2041 = vshll.u32 %v1895, 16
      %v2043 = vrot.slane %v2041, 1
      %v2044 = vsel %vm1896, %v2039, %v2043
      %2045 = vrot.lane.b32.xlu0 %v1908, 8
      %v2046 = vpop.permute.xlu0 %2045
      %2047 = vrot.lane.b32.xlu0 %v1916, 8
      %v2048 = vpop.permute.xlu0 %2047
      %2049 = vrot.lane.b32.xlu0 %v1924, 8
      %v2050 = vpop.permute.xlu0 %2049
      %2051 = vrot.lane.b32.xlu0 %v1932, 8
      %v2052 = vpop.permute.xlu0 %2051
      %2053 = vrot.lane.b32.xlu0 %v1940, 8
      %v2054 = vpop.permute.xlu0 %2053
      %2055 = vrot.lane.b32.xlu0 %v1948, 8
      %v2056 = vpop.permute.xlu0 %2055
      %2057 = vrot.lane.b32.xlu0 %v1956, 8
      %v2058 = vpop.permute.xlu0 %2057
      %2059 = vrot.lane.b32.xlu0 %v1964, 8
      %v2060 = vpop.permute.xlu0 %2059
      %2061 = vrot.lane.b32.xlu0 %v1972, 8
      %v2062 = vpop.permute.xlu0 %2061
      %2063 = vrot.lane.b32.xlu0 %v1980, 8
      %v2064 = vpop.permute.xlu0 %2063
      %2065 = vrot.lane.b32.xlu0 %v1988, 8
      %v2066 = vpop.permute.xlu0 %2065
      %2067 = vrot.lane.b32.xlu0 %v1996, 8
      %v2068 = vpop.permute.xlu0 %2067
      %2069 = vrot.lane.b32.xlu0 %v2004, 8
      %v2070 = vpop.permute.xlu0 %2069
      %2071 = vrot.lane.b32.xlu0 %v2012, 8
      %v2072 = vpop.permute.xlu0 %2071
      %2073 = vrot.lane.b32.xlu0 %v2020, 8
      %v2074 = vpop.permute.xlu0 %2073
      %2075 = vrot.lane.b32.xlu0 %v2028, 8
      %v2076 = vpop.permute.xlu0 %2075
      %2077 = vrot.lane.b32.xlu0 %v2036, 8
      %v2078 = vpop.permute.xlu0 %2077
      %2079 = vrot.lane.b32.xlu0 %v2044, 8
      %v2080 = vpop.permute.xlu0 %2079
      %v2082 = vunpack.c.l.b16 %v1790
      %v2083 = vpack.c.b16 %v1840, %v2082
      %vm2084 = vcmask 1046528
      %v2085 = vrot.slane %v2083, 1
      %v2086 = vrot.slane %v1876, 1
      %v2087 = vsel %vm2084, %v2085, %v2086
      %v2088 = vrot.slane %v1877, 1
      %v2089 = vsel %vm2084, %v2086, %v2088
      %v2090 = vrot.slane %v1878, 1
      %v2091 = vsel %vm2084, %v2088, %v2090
      %v2092 = vrot.slane %v1879, 1
      %v2093 = vsel %vm2084, %v2090, %v2092
      %v2094 = vrot.slane %v1880, 1
      %v2095 = vsel %vm2084, %v2092, %v2094
      %v2096 = vrot.slane %v1881, 1
      %v2097 = vsel %vm2084, %v2094, %v2096
      %v2098 = vrot.slane %v1882, 1
      %v2099 = vsel %vm2084, %v2096, %v2098
      %v2100 = vrot.slane %v1883, 1
      %v2101 = vsel %vm2084, %v2098, %v2100
      %v2102 = vrot.slane %v1884, 1
      %v2103 = vsel %vm2084, %v2100, %v2102
      %v2104 = vrot.slane %v1885, 1
      %v2105 = vsel %vm2084, %v2102, %v2104
      %v2106 = vrot.slane %v1886, 1
      %v2107 = vsel %vm2084, %v2104, %v2106
      %v2108 = vrot.slane %v1887, 1
      %v2109 = vsel %vm2084, %v2106, %v2108
      %v2110 = vrot.slane %v1888, 1
      %v2111 = vsel %vm2084, %v2108, %v2110
      %v2112 = vrot.slane %v1889, 1
      %v2113 = vsel %vm2084, %v2110, %v2112
      %v2114 = vrot.slane %v1890, 1
      %v2115 = vsel %vm2084, %v2112, %v2114
      %v2116 = vrot.slane %v1891, 1
      %v2117 = vsel %vm2084, %v2114, %v2116
      %v2118 = vrot.slane %v1892, 1
      %v2119 = vsel %vm2084, %v2116, %v2118
      %v2120 = vrot.slane %v1895, 1
      %v2121 = vsel %vm2084, %v2118, %v2120
      %2122 = vrot.lane.b32.xlu0 %v2087, 16
      %v2123 = vpop.permute.xlu0 %2122
      %2124 = vrot.lane.b32.xlu0 %v2089, 16
      %v2125 = vpop.permute.xlu0 %2124
      %2126 = vrot.lane.b32.xlu0 %v2091, 16
      %v2127 = vpop.permute.xlu0 %2126
      %2128 = vrot.lane.b32.xlu0 %v2093, 16
      %v2129 = vpop.permute.xlu0 %2128
      %2130 = vrot.lane.b32.xlu0 %v2095, 16
      %v2131 = vpop.permute.xlu0 %2130
      %2132 = vrot.lane.b32.xlu0 %v2097, 16
      %v2133 = vpop.permute.xlu0 %2132
      %2134 = vrot.lane.b32.xlu0 %v2099, 16
      %v2135 = vpop.permute.xlu0 %2134
      %2136 = vrot.lane.b32.xlu0 %v2101, 16
      %v2137 = vpop.permute.xlu0 %2136
      %2138 = vrot.lane.b32.xlu0 %v2103, 16
      %v2139 = vpop.permute.xlu0 %2138
      %2140 = vrot.lane.b32.xlu0 %v2105, 16
      %v2141 = vpop.permute.xlu0 %2140
      %2142 = vrot.lane.b32.xlu0 %v2107, 16
      %v2143 = vpop.permute.xlu0 %2142
      %2144 = vrot.lane.b32.xlu0 %v2109, 16
      %v2145 = vpop.permute.xlu0 %2144
      %2146 = vrot.lane.b32.xlu0 %v2111, 16
      %v2147 = vpop.permute.xlu0 %2146
      %2148 = vrot.lane.b32.xlu0 %v2113, 16
      %v2149 = vpop.permute.xlu0 %2148
      %2150 = vrot.lane.b32.xlu0 %v2115, 16
      %v2151 = vpop.permute.xlu0 %2150
      %2152 = vrot.lane.b32.xlu0 %v2117, 16
      %v2153 = vpop.permute.xlu0 %2152
      %2154 = vrot.lane.b32.xlu0 %v2119, 16
      %v2155 = vpop.permute.xlu0 %2154
      %2156 = vrot.lane.b32.xlu0 %v2121, 16
      %v2157 = vpop.permute.xlu0 %2156
      %v2162 = vunpack.c.l.b16 %v1791
      %v2163 = vunpack.c.l.b16 %v1792
      %v2164 = vunpack.c.l.b16 %v1793
      %v2165 = vunpack.c.l.b16 %v1794
      %v2166 = vpack.c.b16 %v1842, %v2162
      %v2167 = vpack.c.b16 %v2164, %v2163
      %v2168 = vpack.c.b16 %v2165, %v2165
      %v2169 = vrot.slane %v2166, 1
      %v2170 = vsel %vm2084, %v2169, %v2088
      %v2171 = vrot.slane %v2167, 1
      %v2172 = vsel %vm2084, %v2118, %v2171
      %v2173 = vrot.slane %v2168, 1
      %v2174 = vsel %vm2084, %v2171, %v2173
      %2175 = vrot.lane.b32.xlu0 %v2170, 24
      %v2176 = vpop.permute.xlu0 %2175
      %2177 = vrot.lane.b32.xlu0 %v2091, 24
      %v2178 = vpop.permute.xlu0 %2177
      %2179 = vrot.lane.b32.xlu0 %v2093, 24
      %v2180 = vpop.permute.xlu0 %2179
      %2181 = vrot.lane.b32.xlu0 %v2095, 24
      %v2182 = vpop.permute.xlu0 %2181
      %2183 = vrot.lane.b32.xlu0 %v2097, 24
      %v2184 = vpop.permute.xlu0 %2183
      %2185 = vrot.lane.b32.xlu0 %v2099, 24
      %v2186 = vpop.permute.xlu0 %2185
      %2187 = vrot.lane.b32.xlu0 %v2101, 24
      %v2188 = vpop.permute.xlu0 %2187
      %2189 = vrot.lane.b32.xlu0 %v2103, 24
      %v2190 = vpop.permute.xlu0 %2189
      %2191 = vrot.lane.b32.xlu0 %v2105, 24
      %v2192 = vpop.permute.xlu0 %2191
      %2193 = vrot.lane.b32.xlu0 %v2107, 24
      %v2194 = vpop.permute.xlu0 %2193
      %2195 = vrot.lane.b32.xlu0 %v2109, 24
      %v2196 = vpop.permute.xlu0 %2195
      %2197 = vrot.lane.b32.xlu0 %v2111, 24
      %v2198 = vpop.permute.xlu0 %2197
      %2199 = vrot.lane.b32.xlu0 %v2113, 24
      %v2200 = vpop.permute.xlu0 %2199
      %2201 = vrot.lane.b32.xlu0 %v2115, 24
      %v2202 = vpop.permute.xlu0 %2201
      %2203 = vrot.lane.b32.xlu0 %v2117, 24
      %v2204 = vpop.permute.xlu0 %2203
      %2205 = vrot.lane.b32.xlu0 %v2119, 24
      %v2206 = vpop.permute.xlu0 %2205
      %2207 = vrot.lane.b32.xlu0 %v2172, 24
      %v2208 = vpop.permute.xlu0 %2207
      %2209 = vrot.lane.b32.xlu0 %v2174, 24
      %v2210 = vpop.permute.xlu0 %2209
      %v2212 = vunpack.c.l.b16 %v1795
      %v2213 = vpack.c.b16 %v2212, %v2212
      %vm2214 = vsmask.f32 6400
      %v2216 = vshrl.u32 %v2166, 16
      %v2218 = vrot.slane %v2216, 1
      %v2219 = vshll.u32 %v2166, 16
      %v2221 = vrot.slane %v2219, 2
      %v2222 = vor.u32 %v2218, %v2221
      %v2223 = vrot.slane %v1917, 1
      %v2224 = vrot.slane %v1913, 2
      %v2225 = vor.u32 %v2223, %v2224
      %v2226 = vsel %vm2214, %v2222, %v2225
      %v2227 = vrot.slane %v1925, 1
      %v2228 = vrot.slane %v1921, 2
      %v2229 = vor.u32 %v2227, %v2228
      %v2230 = vsel %vm2214, %v2225, %v2229
      %v2231 = vrot.slane %v1933, 1
      %v2232 = vrot.slane %v1929, 2
      %v2233 = vor.u32 %v2231, %v2232
      %v2234 = vsel %vm2214, %v2229, %v2233
      %v2235 = vrot.slane %v1941, 1
      %v2236 = vrot.slane %v1937, 2
      %v2237 = vor.u32 %v2235, %v2236
      %v2238 = vsel %vm2214, %v2233, %v2237
      %v2239 = vrot.slane %v1949, 1
      %v2240 = vrot.slane %v1945, 2
      %v2241 = vor.u32 %v2239, %v2240
      %v2242 = vsel %vm2214, %v2237, %v2241
      %v2243 = vrot.slane %v1957, 1
      %v2244 = vrot.slane %v1953, 2
      %v2245 = vor.u32 %v2243, %v2244
      %v2246 = vsel %vm2214, %v2241, %v2245
      %v2247 = vrot.slane %v1965, 1
      %v2248 = vrot.slane %v1961, 2
      %v2249 = vor.u32 %v2247, %v2248
      %v2250 = vsel %vm2214, %v2245, %v2249
      %v2251 = vrot.slane %v1973, 1
      %v2252 = vrot.slane %v1969, 2
      %v2253 = vor.u32 %v2251, %v2252
      %v2254 = vsel %vm2214, %v2249, %v2253
      %v2255 = vrot.slane %v1981, 1
      %v2256 = vrot.slane %v1977, 2
      %v2257 = vor.u32 %v2255, %v2256
      %v2258 = vsel %vm2214, %v2253, %v2257
      %v2259 = vrot.slane %v1989, 1
      %v2260 = vrot.slane %v1985, 2
      %v2261 = vor.u32 %v2259, %v2260
      %v2262 = vsel %vm2214, %v2257, %v2261
      %v2263 = vrot.slane %v1997, 1
      %v2264 = vrot.slane %v1993, 2
      %v2265 = vor.u32 %v2263, %v2264
      %v2266 = vsel %vm2214, %v2261, %v2265
      %v2267 = vrot.slane %v2005, 1
      %v2268 = vrot.slane %v2001, 2
      %v2269 = vor.u32 %v2267, %v2268
      %v2270 = vsel %vm2214, %v2265, %v2269
      %v2271 = vrot.slane %v2013, 1
      %v2272 = vrot.slane %v2009, 2
      %v2273 = vor.u32 %v2271, %v2272
      %v2274 = vsel %vm2214, %v2269, %v2273
      %v2275 = vrot.slane %v2021, 1
      %v2276 = vrot.slane %v2017, 2
      %v2277 = vor.u32 %v2275, %v2276
      %v2278 = vsel %vm2214, %v2273, %v2277
      %v2279 = vrot.slane %v2029, 1
      %v2280 = vrot.slane %v2025, 2
      %v2281 = vor.u32 %v2279, %v2280
      %v2282 = vsel %vm2214, %v2277, %v2281
      %v2283 = vrot.slane %v2037, 1
      %v2284 = vrot.slane %v2033, 2
      %v2285 = vor.u32 %v2283, %v2284
      %v2286 = vsel %vm2214, %v2281, %v2285
      %v2288 = vshrl.u32 %v2167, 16
      %v2290 = vrot.slane %v2288, 1
      %v2291 = vshll.u32 %v2167, 16
      %v2293 = vrot.slane %v2291, 2
      %v2294 = vor.u32 %v2290, %v2293
      %v2295 = vsel %vm2214, %v2285, %v2294
      %v2297 = vshrl.u32 %v2213, 16
      %v2299 = vrot.slane %v2297, 1
      %v2300 = vshll.u32 %v2213, 16
      %v2302 = vrot.slane %v2300, 2
      %v2303 = vor.u32 %v2299, %v2302
      %v2304 = vsel %vm2214, %v2294, %v2303
      %2305 = vrot.lane.b32.xlu0 %v2226, 32
      %v2306 = vpop.permute.xlu0 %2305
      %2307 = vrot.lane.b32.xlu0 %v2230, 32
      %v2308 = vpop.permute.xlu0 %2307
      %2309 = vrot.lane.b32.xlu0 %v2234, 32
      %v2310 = vpop.permute.xlu0 %2309
      %2311 = vrot.lane.b32.xlu0 %v2238, 32
      %v2312 = vpop.permute.xlu0 %2311
      %2313 = vrot.lane.b32.xlu0 %v2242, 32
      %v2314 = vpop.permute.xlu0 %2313
      %2315 = vrot.lane.b32.xlu0 %v2246, 32
      %v2316 = vpop.permute.xlu0 %2315
      %2317 = vrot.lane.b32.xlu0 %v2250, 32
      %v2318 = vpop.permute.xlu0 %2317
      %2319 = vrot.lane.b32.xlu0 %v2254, 32
      %v2320 = vpop.permute.xlu0 %2319
      %2321 = vrot.lane.b32.xlu0 %v2258, 32
      %v2322 = vpop.permute.xlu0 %2321
      %2323 = vrot.lane.b32.xlu0 %v2262, 32
      %v2324 = vpop.permute.xlu0 %2323
      %2325 = vrot.lane.b32.xlu0 %v2266, 32
      %v2326 = vpop.permute.xlu0 %2325
      %2327 = vrot.lane.b32.xlu0 %v2270, 32
      %v2328 = vpop.permute.xlu0 %2327
      %2329 = vrot.lane.b32.xlu0 %v2274, 32
      %v2330 = vpop.permute.xlu0 %2329
      %2331 = vrot.lane.b32.xlu0 %v2278, 32
      %v2332 = vpop.permute.xlu0 %2331
      %2333 = vrot.lane.b32.xlu0 %v2282, 32
      %v2334 = vpop.permute.xlu0 %2333
      %2335 = vrot.lane.b32.xlu0 %v2286, 32
      %v2336 = vpop.permute.xlu0 %2335
      %2337 = vrot.lane.b32.xlu0 %v2295, 32
      %v2338 = vpop.permute.xlu0 %2337
      %2339 = vrot.lane.b32.xlu0 %v2304, 32
      %v2340 = vpop.permute.xlu0 %2339
      %v2342 = vunpack.c.l.b16 %v1796
      %v2343 = vpack.c.b16 %v1842, %v2342
      %vm2344 = vcmask 1045504
      %v2345 = vrot.slane %v2343, 2
      %v2346 = vrot.slane %v1877, 2
      %v2347 = vsel %vm2344, %v2345, %v2346
      %v2348 = vrot.slane %v1878, 2
      %v2349 = vsel %vm2344, %v2346, %v2348
      %v2350 = vrot.slane %v1879, 2
      %v2351 = vsel %vm2344, %v2348, %v2350
      %v2352 = vrot.slane %v1880, 2
      %v2353 = vsel %vm2344, %v2350, %v2352
      %v2354 = vrot.slane %v1881, 2
      %v2355 = vsel %vm2344, %v2352, %v2354
      %v2356 = vrot.slane %v1882, 2
      %v2357 = vsel %vm2344, %v2354, %v2356
      %v2358 = vrot.slane %v1883, 2
      %v2359 = vsel %vm2344, %v2356, %v2358
      %v2360 = vrot.slane %v1884, 2
      %v2361 = vsel %vm2344, %v2358, %v2360
      %v2362 = vrot.slane %v1885, 2
      %v2363 = vsel %vm2344, %v2360, %v2362
      %v2364 = vrot.slane %v1886, 2
      %v2365 = vsel %vm2344, %v2362, %v2364
      %v2366 = vrot.slane %v1887, 2
      %v2367 = vsel %vm2344, %v2364, %v2366
      %v2368 = vrot.slane %v1888, 2
      %v2369 = vsel %vm2344, %v2366, %v2368
      %v2370 = vrot.slane %v1889, 2
      %v2371 = vsel %vm2344, %v2368, %v2370
      %v2372 = vrot.slane %v1890, 2
      %v2373 = vsel %vm2344, %v2370, %v2372
      %v2374 = vrot.slane %v1891, 2
      %v2375 = vsel %vm2344, %v2372, %v2374
      %v2376 = vrot.slane %v1892, 2
      %v2377 = vsel %vm2344, %v2374, %v2376
      %v2378 = vrot.slane %v2167, 2
      %v2379 = vsel %vm2344, %v2376, %v2378
      %v2380 = vrot.slane %v2213, 2
      %v2381 = vsel %vm2344, %v2378, %v2380
      %2382 = vrot.lane.b32.xlu0 %v2347, 40
      %v2383 = vpop.permute.xlu0 %2382
      %2384 = vrot.lane.b32.xlu0 %v2349, 40
      %v2385 = vpop.permute.xlu0 %2384
      %2386 = vrot.lane.b32.xlu0 %v2351, 40
      %v2387 = vpop.permute.xlu0 %2386
      %2388 = vrot.lane.b32.xlu0 %v2353, 40
      %v2389 = vpop.permute.xlu0 %2388
      %2390 = vrot.lane.b32.xlu0 %v2355, 40
      %v2391 = vpop.permute.xlu0 %2390
      %2392 = vrot.lane.b32.xlu0 %v2357, 40
      %v2393 = vpop.permute.xlu0 %2392
      %2394 = vrot.lane.b32.xlu0 %v2359, 40
      %v2395 = vpop.permute.xlu0 %2394
      %2396 = vrot.lane.b32.xlu0 %v2361, 40
      %v2397 = vpop.permute.xlu0 %2396
      %2398 = vrot.lane.b32.xlu0 %v2363, 40
      %v2399 = vpop.permute.xlu0 %2398
      %2400 = vrot.lane.b32.xlu0 %v2365, 40
      %v2401 = vpop.permute.xlu0 %2400
      %2402 = vrot.lane.b32.xlu0 %v2367, 40
      %v2403 = vpop.permute.xlu0 %2402
      %2404 = vrot.lane.b32.xlu0 %v2369, 40
      %v2405 = vpop.permute.xlu0 %2404
      %2406 = vrot.lane.b32.xlu0 %v2371, 40
      %v2407 = vpop.permute.xlu0 %2406
      %2408 = vrot.lane.b32.xlu0 %v2373, 40
      %v2409 = vpop.permute.xlu0 %2408
      %2410 = vrot.lane.b32.xlu0 %v2375, 40
      %v2411 = vpop.permute.xlu0 %2410
      %2412 = vrot.lane.b32.xlu0 %v2377, 40
      %v2413 = vpop.permute.xlu0 %2412
      %2414 = vrot.lane.b32.xlu0 %v2379, 40
      %v2415 = vpop.permute.xlu0 %2414
      %2416 = vrot.lane.b32.xlu0 %v2381, 40
      %v2417 = vpop.permute.xlu0 %2416
      %v2422 = vunpack.c.l.b16 %v1797
      %v2423 = vunpack.c.l.b16 %v1798
      %v2424 = vunpack.c.l.b16 %v1799
      %v2425 = vunpack.c.l.b16 %v1800
      %v2426 = vpack.c.b16 %v1844, %v2422
      %v2427 = vpack.c.b16 %v2424, %v2423
      %v2428 = vpack.c.b16 %v2425, %v2425
      %v2429 = vrot.slane %v2426, 2
      %v2430 = vsel %vm2344, %v2429, %v2348
      %v2431 = vrot.slane %v2427, 2
      %v2432 = vsel %vm2344, %v2378, %v2431
      %v2433 = vrot.slane %v2428, 2
      %v2434 = vsel %vm2344, %v2431, %v2433
      %2435 = vrot.lane.b32.xlu0 %v2430, 48
      %v2436 = vpop.permute.xlu0 %2435
      %2437 = vrot.lane.b32.xlu0 %v2351, 48
      %v2438 = vpop.permute.xlu0 %2437
      %2439 = vrot.lane.b32.xlu0 %v2353, 48
      %v2440 = vpop.permute.xlu0 %2439
      %2441 = vrot.lane.b32.xlu0 %v2355, 48
      %v2442 = vpop.permute.xlu0 %2441
      %2443 = vrot.lane.b32.xlu0 %v2357, 48
      %v2444 = vpop.permute.xlu0 %2443
      %2445 = vrot.lane.b32.xlu0 %v2359, 48
      %v2446 = vpop.permute.xlu0 %2445
      %2447 = vrot.lane.b32.xlu0 %v2361, 48
      %v2448 = vpop.permute.xlu0 %2447
      %2449 = vrot.lane.b32.xlu0 %v2363, 48
      %v2450 = vpop.permute.xlu0 %2449
      %2451 = vrot.lane.b32.xlu0 %v2365, 48
      %v2452 = vpop.permute.xlu0 %2451
      %2453 = vrot.lane.b32.xlu0 %v2367, 48
      %v2454 = vpop.permute.xlu0 %2453
      %2455 = vrot.lane.b32.xlu0 %v2369, 48
      %v2456 = vpop.permute.xlu0 %2455
      %2457 = vrot.lane.b32.xlu0 %v2371, 48
      %v2458 = vpop.permute.xlu0 %2457
      %2459 = vrot.lane.b32.xlu0 %v2373, 48
      %v2460 = vpop.permute.xlu0 %2459
      %2461 = vrot.lane.b32.xlu0 %v2375, 48
      %v2462 = vpop.permute.xlu0 %2461
      %2463 = vrot.lane.b32.xlu0 %v2377, 48
      %v2464 = vpop.permute.xlu0 %2463
      %2465 = vrot.lane.b32.xlu0 %v2379, 48
      %v2466 = vpop.permute.xlu0 %2465
      %2467 = vrot.lane.b32.xlu0 %v2432, 48
      %v2468 = vpop.permute.xlu0 %2467
      %2469 = vrot.lane.b32.xlu0 %v2434, 48
      %v2470 = vpop.permute.xlu0 %2469
      %v2472 = vunpack.c.l.b16 %v1801
      %v2473 = vpack.c.b16 %v2472, %v2472
      %vm2474 = vsmask.f32 5376
      %v2476 = vshrl.u32 %v2426, 16
      %v2478 = vrot.slane %v2476, 2
      %v2479 = vshll.u32 %v2426, 16
      %v2481 = vrot.slane %v2479, 3
      %v2482 = vor.u32 %v2478, %v2481
      %v2483 = vrot.slane %v1925, 2
      %v2484 = vrot.slane %v1921, 3
      %v2485 = vor.u32 %v2483, %v2484
      %v2486 = vsel %vm2474, %v2482, %v2485
      %v2487 = vrot.slane %v1933, 2
      %v2488 = vrot.slane %v1929, 3
      %v2489 = vor.u32 %v2487, %v2488
      %v2490 = vsel %vm2474, %v2485, %v2489
      %v2491 = vrot.slane %v1941, 2
      %v2492 = vrot.slane %v1937, 3
      %v2493 = vor.u32 %v2491, %v2492
      %v2494 = vsel %vm2474, %v2489, %v2493
      %v2495 = vrot.slane %v1949, 2
      %v2496 = vrot.slane %v1945, 3
      %v2497 = vor.u32 %v2495, %v2496
      %v2498 = vsel %vm2474, %v2493, %v2497
      %v2499 = vrot.slane %v1957, 2
      %v2500 = vrot.slane %v1953, 3
      %v2501 = vor.u32 %v2499, %v2500
      %v2502 = vsel %vm2474, %v2497, %v2501
      %v2503 = vrot.slane %v1965, 2
      %v2504 = vrot.slane %v1961, 3
      %v2505 = vor.u32 %v2503, %v2504
      %v2506 = vsel %vm2474, %v2501, %v2505
      %v2507 = vrot.slane %v1973, 2
      %v2508 = vrot.slane %v1969, 3
      %v2509 = vor.u32 %v2507, %v2508
      %v2510 = vsel %vm2474, %v2505, %v2509
      %v2511 = vrot.slane %v1981, 2
      %v2512 = vrot.slane %v1977, 3
      %v2513 = vor.u32 %v2511, %v2512
      %v2514 = vsel %vm2474, %v2509, %v2513
      %v2515 = vrot.slane %v1989, 2
      %v2516 = vrot.slane %v1985, 3
      %v2517 = vor.u32 %v2515, %v2516
      %v2518 = vsel %vm2474, %v2513, %v2517
      %v2519 = vrot.slane %v1997, 2
      %v2520 = vrot.slane %v1993, 3
      %v2521 = vor.u32 %v2519, %v2520
      %v2522 = vsel %vm2474, %v2517, %v2521
      %v2523 = vrot.slane %v2005, 2
      %v2524 = vrot.slane %v2001, 3
      %v2525 = vor.u32 %v2523, %v2524
      %v2526 = vsel %vm2474, %v2521, %v2525
      %v2527 = vrot.slane %v2013, 2
      %v2528 = vrot.slane %v2009, 3
      %v2529 = vor.u32 %v2527, %v2528
      %v2530 = vsel %vm2474, %v2525, %v2529
      %v2531 = vrot.slane %v2021, 2
      %v2532 = vrot.slane %v2017, 3
      %v2533 = vor.u32 %v2531, %v2532
      %v2534 = vsel %vm2474, %v2529, %v2533
      %v2535 = vrot.slane %v2029, 2
      %v2536 = vrot.slane %v2025, 3
      %v2537 = vor.u32 %v2535, %v2536
      %v2538 = vsel %vm2474, %v2533, %v2537
      %v2539 = vrot.slane %v2037, 2
      %v2540 = vrot.slane %v2033, 3
      %v2541 = vor.u32 %v2539, %v2540
      %v2542 = vsel %vm2474, %v2537, %v2541
      %v2543 = vrot.slane %v2288, 2
      %v2544 = vrot.slane %v2291, 3
      %v2545 = vor.u32 %v2543, %v2544
      %v2546 = vsel %vm2474, %v2541, %v2545
      %v2548 = vshrl.u32 %v2427, 16
      %v2550 = vrot.slane %v2548, 2
      %v2551 = vshll.u32 %v2427, 16
      %v2553 = vrot.slane %v2551, 3
      %v2554 = vor.u32 %v2550, %v2553
      %v2555 = vsel %vm2474, %v2545, %v2554
      %v2557 = vshrl.u32 %v2473, 16
      %v2559 = vrot.slane %v2557, 2
      %v2560 = vshll.u32 %v2473, 16
      %v2562 = vrot.slane %v2560, 3
      %v2563 = vor.u32 %v2559, %v2562
      %v2564 = vsel %vm2474, %v2554, %v2563
      %2565 = vrot.lane.b32.xlu0 %v2486, 56
      %v2566 = vpop.permute.xlu0 %2565
      %2567 = vrot.lane.b32.xlu0 %v2490, 56
      %v2568 = vpop.permute.xlu0 %2567
      %2569 = vrot.lane.b32.xlu0 %v2494, 56
      %v2570 = vpop.permute.xlu0 %2569
      %2571 = vrot.lane.b32.xlu0 %v2498, 56
      %v2572 = vpop.permute.xlu0 %2571
      %2573 = vrot.lane.b32.xlu0 %v2502, 56
      %v2574 = vpop.permute.xlu0 %2573
      %2575 = vrot.lane.b32.xlu0 %v2506, 56
      %v2576 = vpop.permute.xlu0 %2575
      %2577 = vrot.lane.b32.xlu0 %v2510, 56
      %v2578 = vpop.permute.xlu0 %2577
      %2579 = vrot.lane.b32.xlu0 %v2514, 56
      %v2580 = vpop.permute.xlu0 %2579
      %2581 = vrot.lane.b32.xlu0 %v2518, 56
      %v2582 = vpop.permute.xlu0 %2581
      %2583 = vrot.lane.b32.xlu0 %v2522, 56
      %v2584 = vpop.permute.xlu0 %2583
      %2585 = vrot.lane.b32.xlu0 %v2526, 56
      %v2586 = vpop.permute.xlu0 %2585
      %2587 = vrot.lane.b32.xlu0 %v2530, 56
      %v2588 = vpop.permute.xlu0 %2587
      %2589 = vrot.lane.b32.xlu0 %v2534, 56
      %v2590 = vpop.permute.xlu0 %2589
      %2591 = vrot.lane.b32.xlu0 %v2538, 56
      %v2592 = vpop.permute.xlu0 %2591
      %2593 = vrot.lane.b32.xlu0 %v2542, 56
      %v2594 = vpop.permute.xlu0 %2593
      %2595 = vrot.lane.b32.xlu0 %v2546, 56
      %v2596 = vpop.permute.xlu0 %2595
      %2597 = vrot.lane.b32.xlu0 %v2555, 56
      %v2598 = vpop.permute.xlu0 %2597
      %2599 = vrot.lane.b32.xlu0 %v2564, 56
      %v2600 = vpop.permute.xlu0 %2599
      %v2602 = vunpack.c.l.b16 %v1802
      %v2603 = vpack.c.b16 %v1844, %v2602
      %vm2604 = vcmask 1044480
      %v2605 = vrot.slane %v2603, 3
      %v2606 = vrot.slane %v1878, 3
      %v2607 = vsel %vm2604, %v2605, %v2606
      %v2608 = vrot.slane %v1879, 3
      %v2609 = vsel %vm2604, %v2606, %v2608
      %v2610 = vrot.slane %v1880, 3
      %v2611 = vsel %vm2604, %v2608, %v2610
      %v2612 = vrot.slane %v1881, 3
      %v2613 = vsel %vm2604, %v2610, %v2612
      %v2614 = vrot.slane %v1882, 3
      %v2615 = vsel %vm2604, %v2612, %v2614
      %v2616 = vrot.slane %v1883, 3
      %v2617 = vsel %vm2604, %v2614, %v2616
      %v2618 = vrot.slane %v1884, 3
      %v2619 = vsel %vm2604, %v2616, %v2618
      %v2620 = vrot.slane %v1885, 3
      %v2621 = vsel %vm2604, %v2618, %v2620
      %v2622 = vrot.slane %v1886, 3
      %v2623 = vsel %vm2604, %v2620, %v2622
      %v2624 = vrot.slane %v1887, 3
      %v2625 = vsel %vm2604, %v2622, %v2624
      %v2626 = vrot.slane %v1888, 3
      %v2627 = vsel %vm2604, %v2624, %v2626
      %v2628 = vrot.slane %v1889, 3
      %v2629 = vsel %vm2604, %v2626, %v2628
      %v2630 = vrot.slane %v1890, 3
      %v2631 = vsel %vm2604, %v2628, %v2630
      %v2632 = vrot.slane %v1891, 3
      %v2633 = vsel %vm2604, %v2630, %v2632
      %v2634 = vrot.slane %v1892, 3
      %v2635 = vsel %vm2604, %v2632, %v2634
      %v2636 = vrot.slane %v2167, 3
      %v2637 = vsel %vm2604, %v2634, %v2636
      %v2638 = vrot.slane %v2427, 3
      %v2639 = vsel %vm2604, %v2636, %v2638
      %v2640 = vrot.slane %v2473, 3
      %v2641 = vsel %vm2604, %v2638, %v2640
      %2642 = vrot.lane.b32.xlu0 %v2607, 64
      %v2643 = vpop.permute.xlu0 %2642
      %2644 = vrot.lane.b32.xlu0 %v2609, 64
      %v2645 = vpop.permute.xlu0 %2644
      %2646 = vrot.lane.b32.xlu0 %v2611, 64
      %v2647 = vpop.permute.xlu0 %2646
      %2648 = vrot.lane.b32.xlu0 %v2613, 64
      %v2649 = vpop.permute.xlu0 %2648
      %2650 = vrot.lane.b32.xlu0 %v2615, 64
      %v2651 = vpop.permute.xlu0 %2650
      %2652 = vrot.lane.b32.xlu0 %v2617, 64
      %v2653 = vpop.permute.xlu0 %2652
      %2654 = vrot.lane.b32.xlu0 %v2619, 64
      %v2655 = vpop.permute.xlu0 %2654
      %2656 = vrot.lane.b32.xlu0 %v2621, 64
      %v2657 = vpop.permute.xlu0 %2656
      %2658 = vrot.lane.b32.xlu0 %v2623, 64
      %v2659 = vpop.permute.xlu0 %2658
      %2660 = vrot.lane.b32.xlu0 %v2625, 64
      %v2661 = vpop.permute.xlu0 %2660
      %2662 = vrot.lane.b32.xlu0 %v2627, 64
      %v2663 = vpop.permute.xlu0 %2662
      %2664 = vrot.lane.b32.xlu0 %v2629, 64
      %v2665 = vpop.permute.xlu0 %2664
      %2666 = vrot.lane.b32.xlu0 %v2631, 64
      %v2667 = vpop.permute.xlu0 %2666
      %2668 = vrot.lane.b32.xlu0 %v2633, 64
      %v2669 = vpop.permute.xlu0 %2668
      %2670 = vrot.lane.b32.xlu0 %v2635, 64
      %v2671 = vpop.permute.xlu0 %2670
      %2672 = vrot.lane.b32.xlu0 %v2637, 64
      %v2673 = vpop.permute.xlu0 %2672
      %2674 = vrot.lane.b32.xlu0 %v2639, 64
      %v2675 = vpop.permute.xlu0 %2674
      %2676 = vrot.lane.b32.xlu0 %v2641, 64
      %v2677 = vpop.permute.xlu0 %2676
      %vm2678 = vcmask 64512
      %v2680 = vsel %vm2678, %v1875, %v2046
      %v2682 = vsel %vm2678, %v1876, %v2048
      %v2684 = vsel %vm2678, %v1877, %v2050
      %v2686 = vsel %vm2678, %v1878, %v2052
      %v2688 = vsel %vm2678, %v1879, %v2054
      %v2690 = vsel %vm2678, %v1880, %v2056
      %v2692 = vsel %vm2678, %v1881, %v2058
      %v2694 = vsel %vm2678, %v1882, %v2060
      %v2696 = vsel %vm2678, %v1883, %v2062
      %v2698 = vsel %vm2678, %v1884, %v2064
      %v2700 = vsel %vm2678, %v1885, %v2066
      %v2702 = vsel %vm2678, %v1886, %v2068
      %v2704 = vsel %vm2678, %v1887, %v2070
      %v2706 = vsel %vm2678, %v1888, %v2072
      %v2708 = vsel %vm2678, %v1889, %v2074
      %v2710 = vsel %vm2678, %v1890, %v2076
      %v2712 = vsel %vm2678, %v1891, %v2078
      %v2714 = vsel %vm2678, %v1892, %v2080
      %vm2715 = vcmask 130048
      %v2717 = vsel %vm2715, %v2680, %v2123
      %v2719 = vsel %vm2715, %v2682, %v2125
      %v2721 = vsel %vm2715, %v2684, %v2127
      %v2723 = vsel %vm2715, %v2686, %v2129
      %v2725 = vsel %vm2715, %v2688, %v2131
      %v2727 = vsel %vm2715, %v2690, %v2133
      %v2729 = vsel %vm2715, %v2692, %v2135
      %v2731 = vsel %vm2715, %v2694, %v2137
      %v2733 = vsel %vm2715, %v2696, %v2139
      %v2735 = vsel %vm2715, %v2698, %v2141
      %v2737 = vsel %vm2715, %v2700, %v2143
      %v2739 = vsel %vm2715, %v2702, %v2145
      %v2741 = vsel %vm2715, %v2704, %v2147
      %v2743 = vsel %vm2715, %v2706, %v2149
      %v2745 = vsel %vm2715, %v2708, %v2151
      %v2747 = vsel %vm2715, %v2710, %v2153
      %v2749 = vsel %vm2715, %v2712, %v2155
      %v2751 = vsel %vm2715, %v2714, %v2157
      %vm2752 = vcmask 195584
      %v2754 = vsel %vm2752, %v2717, %v2176
      %v2756 = vsel %vm2752, %v2719, %v2178
      %v2758 = vsel %vm2752, %v2721, %v2180
      %v2760 = vsel %vm2752, %v2723, %v2182
      %v2762 = vsel %vm2752, %v2725, %v2184
      %v2764 = vsel %vm2752, %v2727, %v2186
      %v2766 = vsel %vm2752, %v2729, %v2188
      %v2768 = vsel %vm2752, %v2731, %v2190
      %v2770 = vsel %vm2752, %v2733, %v2192
      %v2772 = vsel %vm2752, %v2735, %v2194
      %v2774 = vsel %vm2752, %v2737, %v2196
      %v2776 = vsel %vm2752, %v2739, %v2198
      %v2778 = vsel %vm2752, %v2741, %v2200
      %v2780 = vsel %vm2752, %v2743, %v2202
      %v2782 = vsel %vm2752, %v2745, %v2204
      %v2784 = vsel %vm2752, %v2747, %v2206
      %v2786 = vsel %vm2752, %v2749, %v2208
      %v2788 = vsel %vm2752, %v2751, %v2210
      %vm2789 = vcmask 261120
      %v2791 = vsel %vm2789, %v2754, %v2306
      %v2793 = vsel %vm2789, %v2756, %v2308
      %v2795 = vsel %vm2789, %v2758, %v2310
      %v2797 = vsel %vm2789, %v2760, %v2312
      %v2799 = vsel %vm2789, %v2762, %v2314
      %v2801 = vsel %vm2789, %v2764, %v2316
      %v2803 = vsel %vm2789, %v2766, %v2318
      %v2805 = vsel %vm2789, %v2768, %v2320
      %v2807 = vsel %vm2789, %v2770, %v2322
      %v2809 = vsel %vm2789, %v2772, %v2324
      %v2811 = vsel %vm2789, %v2774, %v2326
      %v2813 = vsel %vm2789, %v2776, %v2328
      %v2815 = vsel %vm2789, %v2778, %v2330
      %v2817 = vsel %vm2789, %v2780, %v2332
      %v2819 = vsel %vm2789, %v2782, %v2334
      %v2821 = vsel %vm2789, %v2784, %v2336
      %v2823 = vsel %vm2789, %v2786, %v2338
      %v2825 = vsel %vm2789, %v2788, %v2340
      %vm2826 = vcmask 326656
      %v2828 = vsel %vm2826, %v2791, %v2383
      %v2830 = vsel %vm2826, %v2793, %v2385
      %v2832 = vsel %vm2826, %v2795, %v2387
      %v2834 = vsel %vm2826, %v2797, %v2389
      %v2836 = vsel %vm2826, %v2799, %v2391
      %v2838 = vsel %vm2826, %v2801, %v2393
      %v2840 = vsel %vm2826, %v2803, %v2395
      %v2842 = vsel %vm2826, %v2805, %v2397
      %v2844 = vsel %vm2826, %v2807, %v2399
      %v2846 = vsel %vm2826, %v2809, %v2401
      %v2848 = vsel %vm2826, %v2811, %v2403
      %v2850 = vsel %vm2826, %v2813, %v2405
      %v2852 = vsel %vm2826, %v2815, %v2407
      %v2854 = vsel %vm2826, %v2817, %v2409
      %v2856 = vsel %vm2826, %v2819, %v2411
      %v2858 = vsel %vm2826, %v2821, %v2413
      %v2860 = vsel %vm2826, %v2823, %v2415
      %v2862 = vsel %vm2826, %v2825, %v2417
      %vm2863 = vcmask 392192
      %v2865 = vsel %vm2863, %v2828, %v2436
      %v2867 = vsel %vm2863, %v2830, %v2438
      %v2869 = vsel %vm2863, %v2832, %v2440
      %v2871 = vsel %vm2863, %v2834, %v2442
      %v2873 = vsel %vm2863, %v2836, %v2444
      %v2875 = vsel %vm2863, %v2838, %v2446
      %v2877 = vsel %vm2863, %v2840, %v2448
      %v2879 = vsel %vm2863, %v2842, %v2450
      %v2881 = vsel %vm2863, %v2844, %v2452
      %v2883 = vsel %vm2863, %v2846, %v2454
      %v2885 = vsel %vm2863, %v2848, %v2456
      %v2887 = vsel %vm2863, %v2850, %v2458
      %v2889 = vsel %vm2863, %v2852, %v2460
      %v2891 = vsel %vm2863, %v2854, %v2462
      %v2893 = vsel %vm2863, %v2856, %v2464
      %v2895 = vsel %vm2863, %v2858, %v2466
      %v2897 = vsel %vm2863, %v2860, %v2468
      %v2899 = vsel %vm2863, %v2862, %v2470
      %vm2900 = vcmask 457728
      %v2902 = vsel %vm2900, %v2865, %v2566
      %v2904 = vsel %vm2900, %v2867, %v2568
      %v2906 = vsel %vm2900, %v2869, %v2570
      %v2908 = vsel %vm2900, %v2871, %v2572
      %v2910 = vsel %vm2900, %v2873, %v2574
      %v2912 = vsel %vm2900, %v2875, %v2576
      %v2914 = vsel %vm2900, %v2877, %v2578
      %v2916 = vsel %vm2900, %v2879, %v2580
      %v2918 = vsel %vm2900, %v2881, %v2582
      %v2920 = vsel %vm2900, %v2883, %v2584
      %v2922 = vsel %vm2900, %v2885, %v2586
      %v2924 = vsel %vm2900, %v2887, %v2588
      %v2926 = vsel %vm2900, %v2889, %v2590
      %v2928 = vsel %vm2900, %v2891, %v2592
      %v2930 = vsel %vm2900, %v2893, %v2594
      %v2932 = vsel %vm2900, %v2895, %v2596
      %v2934 = vsel %vm2900, %v2897, %v2598
      %v2936 = vsel %vm2900, %v2899, %v2600
      %vm2937 = vcmask 523264
      %v2939 = vsel %vm2937, %v2902, %v2643
      %v2941 = vsel %vm2937, %v2904, %v2645
      %v2943 = vsel %vm2937, %v2906, %v2647
      %v2945 = vsel %vm2937, %v2908, %v2649
      %v2947 = vsel %vm2937, %v2910, %v2651
      %v2949 = vsel %vm2937, %v2912, %v2653
      %v2951 = vsel %vm2937, %v2914, %v2655
      %v2953 = vsel %vm2937, %v2916, %v2657
      %v2955 = vsel %vm2937, %v2918, %v2659
      %v2957 = vsel %vm2937, %v2920, %v2661
      %v2959 = vsel %vm2937, %v2922, %v2663
      %v2961 = vsel %vm2937, %v2924, %v2665
      %v2963 = vsel %vm2937, %v2926, %v2667
      %v2965 = vsel %vm2937, %v2928, %v2669
      %v2967 = vsel %vm2937, %v2930, %v2671
      %v2969 = vsel %vm2937, %v2932, %v2673
      %v2971 = vsel %vm2937, %v2934, %v2675
      %v2973 = vsel %vm2937, %v2936, %v2677
      %vm2974 = vcmask 588800
      %v2976 = vsel %vm2974, %v2939, 0
      %v2978 = vsel %vm2974, %v2941, 0
      %v2980 = vsel %vm2974, %v2943, 0
      %v2982 = vsel %vm2974, %v2945, 0
      %v2984 = vsel %vm2974, %v2947, 0
      %v2986 = vsel %vm2974, %v2949, 0
      %v2988 = vsel %vm2974, %v2951, 0
      %v2990 = vsel %vm2974, %v2953, 0
      %v2992 = vsel %vm2974, %v2955, 0
      %v2994 = vsel %vm2974, %v2957, 0
      %v2996 = vsel %vm2974, %v2959, 0
      %v2998 = vsel %vm2974, %v2961, 0
      %v3000 = vsel %vm2974, %v2963, 0
      %v3002 = vsel %vm2974, %v2965, 0
      %v3004 = vsel %vm2974, %v2967, 0
      %v3006 = vsel %vm2974, %v2969, 0
      %v3008 = vsel %vm2974, %v2971, 0
      %v3010 = vsel %vm2974, %v2973, 0
      %v3012 = vld [vmem:[%s2] sm:$0xf]
      %v3013 = vld [vmem:[%s2 + $0x4] sm:$0xf]
      %v3014 = vld [vmem:[%s2 + $0x8] sm:$0xf]
      %v3015 = vld [vmem:[%s2 + $0xc] sm:$0xf]
      %v3016 = vld [vmem:[%s2 + $0x10] sm:$0xf]
      %v3017 = vld [vmem:[%s2 + $0x14] sm:$0xf]
      %v3018 = vld [vmem:[%s2 + $0x18] sm:$0xf]
      %v3019 = vld [vmem:[%s2 + $0x1c] sm:$0xf]
      %v3020 = vld [vmem:[%s2 + $0x20] sm:$0xf]
      %v3021 = vld [vmem:[%s2 + $0x24] sm:$0xf]
      %v3022 = vld [vmem:[%s2 + $0x28] sm:$0xf]
      %v3023 = vld [vmem:[%s2 + $0x2c] sm:$0xf]
      %v3024 = vld [vmem:[%s2 + $0x30] sm:$0xf]
      %v3025 = vld [vmem:[%s2 + $0x34] sm:$0xf]
      %v3026 = vld [vmem:[%s2 + $0x38] sm:$0xf]
      %v3027 = vld [vmem:[%s2 + $0x3c] sm:$0xf]
      %v3044 = vunpack.c.l.b16 %v3012
      %v3045 = vunpack.c.l.b16 %v3013
      %v3046 = vunpack.c.l.b16 %v3014
      %v3047 = vunpack.c.l.b16 %v3015
      %v3048 = vunpack.c.l.b16 %v3016
      %v3049 = vunpack.c.l.b16 %v3017
      %v3050 = vunpack.c.l.b16 %v3018
      %v3051 = vunpack.c.l.b16 %v3019
      %v3052 = vunpack.c.l.b16 %v3020
      %v3053 = vunpack.c.l.b16 %v3021
      %v3054 = vunpack.c.l.b16 %v3022
      %v3055 = vunpack.c.l.b16 %v3023
      %v3056 = vunpack.c.l.b16 %v3024
      %v3057 = vunpack.c.l.b16 %v3025
      %v3058 = vunpack.c.l.b16 %v3026
      %v3059 = vunpack.c.l.b16 %v3027
      %v3060 = vpack.c.b16 %v3045, %v3044
      %v3061 = vpack.c.b16 %v3047, %v3046
      %v3062 = vpack.c.b16 %v3049, %v3048
      %v3063 = vpack.c.b16 %v3051, %v3050
      %v3064 = vpack.c.b16 %v3053, %v3052
      %v3065 = vpack.c.b16 %v3055, %v3054
      %v3066 = vpack.c.b16 %v3057, %v3056
      %v3067 = vpack.c.b16 %v3059, %v3058
      %3076 = vmatprep.subr.bf16.mxu0 0
      %3077 = vmatpush1.bf16.msra.mxu0 %v3067
      %3078 = vmatprep.subr.bf16.mxu0 0
      %3079 = vmatpush1.bf16.msra.mxu0 %v3066
      %3080 = vmatprep.subr.bf16.mxu0 0
      %3081 = vmatpush1.bf16.msra.mxu0 %v3065
      %3082 = vmatprep.subr.bf16.mxu0 0
      %3083 = vmatpush1.bf16.msra.mxu0 %v3064
      %3084 = vmatprep.subr.bf16.mxu0 0
      %3085 = vmatpush1.bf16.msra.mxu0 %v3063
      %3086 = vmatprep.subr.bf16.mxu0 0
      %3087 = vmatpush1.bf16.msra.mxu0 %v3062
      %3088 = vmatprep.subr.bf16.mxu0 0
      %3089 = vmatpush1.bf16.msra.mxu0 %v3061
      %3090 = vmatprep.subr.bf16.mxu0 0
      %3091 = vmatpush1.bf16.msra.mxu0 %v3060
      %3092 = vmatprep.subr.bf16.mxu0 0
      %3093 = vmatpush2.bf16.msra.mxu0 0
      %3094 = vmatprep.subr.bf16.mxu0 0
      %3095 = vmatpush2.bf16.msra.mxu0 0
      %3096 = vmatprep.subr.bf16.mxu0 0
      %3097 = vmatpush2.bf16.msra.mxu0 0
      %3098 = vmatprep.subr.bf16.mxu0 0
      %3099 = vmatpush2.bf16.msra.mxu0 0
      %3100 = vmatprep.subr.bf16.mxu0 0
      %3101 = vmatpush2.bf16.msra.mxu0 0
      %3102 = vmatprep.subr.bf16.mxu0 0
      %3103 = vmatpush2.bf16.msra.mxu0 0
      %3104 = vmatprep.subr.bf16.mxu0 0
      %3105 = vmatpush2.bf16.msra.mxu0 0
      %3106 = vmatprep.subr.bf16.mxu0 0
      %3107 = vmatpush2.bf16.msra.mxu0 0
      %3108 = vmatprep.mubr.bf16.mxu0 0
      %3109 = vmatmul.mubr.bf16.gmra.mxu0 %v2976
      %v3110 = vpop.f32.mrf.mxu0
      %v3111 = vadd.f32 0.0, %v3110
      %v3112 = vpop.f32.mrf.mxu0
      %v3113 = vpop.f32.mrf.mxu0
      %v3114 = vadd.f32 0.0, %v3113
      %v3115 = vpop.f32.mrf.mxu0
      %3116 = vmatprep.mubr.bf16.mxu0 0
      %3117 = vmatmul.mubr.bf16.gmra.mxu0 %v2978
      %v3118 = vpop.f32.mrf.mxu0
      %v3119 = vadd.f32 0.0, %v3118
      %v3120 = vpop.f32.mrf.mxu0
      %v3121 = vpop.f32.mrf.mxu0
      %v3122 = vadd.f32 0.0, %v3121
      %v3123 = vpop.f32.mrf.mxu0
      %3124 = vmatprep.mubr.bf16.mxu0 0
      %3125 = vmatmul.mubr.bf16.gmra.mxu0 %v2980
      %v3126 = vpop.f32.mrf.mxu0
      %v3127 = vadd.f32 0.0, %v3126
      %v3128 = vpop.f32.mrf.mxu0
      %v3129 = vpop.f32.mrf.mxu0
      %v3130 = vadd.f32 0.0, %v3129
      %v3131 = vpop.f32.mrf.mxu0
      %3132 = vmatprep.mubr.bf16.mxu0 0
      %3133 = vmatmul.mubr.bf16.gmra.mxu0 %v2982
      %v3134 = vpop.f32.mrf.mxu0
      %v3135 = vadd.f32 0.0, %v3134
      %v3136 = vpop.f32.mrf.mxu0
      %v3137 = vpop.f32.mrf.mxu0
      %v3138 = vadd.f32 0.0, %v3137
      %v3139 = vpop.f32.mrf.mxu0
      %3140 = vmatprep.mubr.bf16.mxu0 0
      %3141 = vmatmul.mubr.bf16.gmra.mxu0 %v2984
      %v3142 = vpop.f32.mrf.mxu0
      %v3143 = vadd.f32 0.0, %v3142
      %v3144 = vpop.f32.mrf.mxu0
      %v3145 = vpop.f32.mrf.mxu0
      %v3146 = vadd.f32 0.0, %v3145
      %v3147 = vpop.f32.mrf.mxu0
      %3148 = vmatprep.mubr.bf16.mxu0 0
      %3149 = vmatmul.mubr.bf16.gmra.mxu0 %v2986
      %v3150 = vpop.f32.mrf.mxu0
      %v3151 = vadd.f32 0.0, %v3150
      %v3152 = vpop.f32.mrf.mxu0
      %v3153 = vpop.f32.mrf.mxu0
      %v3154 = vadd.f32 0.0, %v3153
      %v3155 = vpop.f32.mrf.mxu0
      %3156 = vmatprep.mubr.bf16.mxu0 0
      %3157 = vmatmul.mubr.bf16.gmra.mxu0 %v2988
      %v3158 = vpop.f32.mrf.mxu0
      %v3159 = vadd.f32 0.0, %v3158
      %v3160 = vpop.f32.mrf.mxu0
      %v3161 = vpop.f32.mrf.mxu0
      %v3162 = vadd.f32 0.0, %v3161
      %v3163 = vpop.f32.mrf.mxu0
      %3164 = vmatprep.mubr.bf16.mxu0 0
      %3165 = vmatmul.mubr.bf16.gmra.mxu0 %v2990
      %v3166 = vpop.f32.mrf.mxu0
      %v3167 = vadd.f32 0.0, %v3166
      %v3168 = vpop.f32.mrf.mxu0
      %v3169 = vpop.f32.mrf.mxu0
      %v3170 = vadd.f32 0.0, %v3169
      %v3171 = vpop.f32.mrf.mxu0
      %3172 = vmatprep.mubr.bf16.mxu0 0
      %3173 = vmatmul.mubr.bf16.gmra.mxu0 %v2992
      %v3174 = vpop.f32.mrf.mxu0
      %v3175 = vadd.f32 0.0, %v3174
      %v3176 = vpop.f32.mrf.mxu0
      %v3177 = vpop.f32.mrf.mxu0
      %v3178 = vadd.f32 0.0, %v3177
      %v3179 = vpop.f32.mrf.mxu0
      %3180 = vmatprep.mubr.bf16.mxu0 0
      %3181 = vmatmul.mubr.bf16.gmra.mxu0 %v2994
      %v3182 = vpop.f32.mrf.mxu0
      %v3183 = vadd.f32 0.0, %v3182
      %v3184 = vpop.f32.mrf.mxu0
      %v3185 = vpop.f32.mrf.mxu0
      %v3186 = vadd.f32 0.0, %v3185
      %v3187 = vpop.f32.mrf.mxu0
      %3188 = vmatprep.mubr.bf16.mxu0 0
      %3189 = vmatmul.mubr.bf16.gmra.mxu0 %v2996
      %v3190 = vpop.f32.mrf.mxu0
      %v3191 = vadd.f32 0.0, %v3190
      %v3192 = vpop.f32.mrf.mxu0
      %v3193 = vpop.f32.mrf.mxu0
      %v3194 = vadd.f32 0.0, %v3193
      %v3195 = vpop.f32.mrf.mxu0
      %3196 = vmatprep.mubr.bf16.mxu0 0
      %3197 = vmatmul.mubr.bf16.gmra.mxu0 %v2998
      %v3198 = vpop.f32.mrf.mxu0
      %v3199 = vadd.f32 0.0, %v3198
      %v3200 = vpop.f32.mrf.mxu0
      %v3201 = vpop.f32.mrf.mxu0
      %v3202 = vadd.f32 0.0, %v3201
      %v3203 = vpop.f32.mrf.mxu0
      %3204 = vmatprep.mubr.bf16.mxu0 0
      %3205 = vmatmul.mubr.bf16.gmra.mxu0 %v3000
      %v3206 = vpop.f32.mrf.mxu0
      %v3207 = vadd.f32 0.0, %v3206
      %v3208 = vpop.f32.mrf.mxu0
      %v3209 = vpop.f32.mrf.mxu0
      %v3210 = vadd.f32 0.0, %v3209
      %v3211 = vpop.f32.mrf.mxu0
      %3212 = vmatprep.mubr.bf16.mxu0 0
      %3213 = vmatmul.mubr.bf16.gmra.mxu0 %v3002
      %v3214 = vpop.f32.mrf.mxu0
      %v3215 = vadd.f32 0.0, %v3214
      %v3216 = vpop.f32.mrf.mxu0
      %v3217 = vpop.f32.mrf.mxu0
      %v3218 = vadd.f32 0.0, %v3217
      %v3219 = vpop.f32.mrf.mxu0
      %3220 = vmatprep.mubr.bf16.mxu0 0
      %3221 = vmatmul.mubr.bf16.gmra.mxu0 %v3004
      %v3222 = vpop.f32.mrf.mxu0
      %v3223 = vadd.f32 0.0, %v3222
      %v3224 = vpop.f32.mrf.mxu0
      %v3225 = vpop.f32.mrf.mxu0
      %v3226 = vadd.f32 0.0, %v3225
      %v3227 = vpop.f32.mrf.mxu0
      %3228 = vmatprep.mubr.bf16.mxu0 0
      %3229 = vmatmul.mubr.bf16.gmra.mxu0 %v3006
      %v3230 = vpop.f32.mrf.mxu0
      %v3231 = vadd.f32 0.0, %v3230
      %v3232 = vpop.f32.mrf.mxu0
      %v3233 = vpop.f32.mrf.mxu0
      %v3234 = vadd.f32 0.0, %v3233
      %v3235 = vpop.f32.mrf.mxu0
      %3236 = vmatprep.mubr.bf16.mxu0 0
      %3237 = vmatmul.mubr.bf16.gmra.mxu0 %v3008
      %v3238 = vpop.f32.mrf.mxu0
      %v3239 = vadd.f32 0.0, %v3238
      %v3240 = vpop.f32.mrf.mxu0
      %v3241 = vpop.f32.mrf.mxu0
      %v3242 = vadd.f32 0.0, %v3241
      %v3243 = vpop.f32.mrf.mxu0
      %3244 = vmatprep.mubr.bf16.mxu0 0
      %3245 = vmatmul.mubr.bf16.gmra.mxu0 %v3010
      %v3246 = vpop.f32.mrf.mxu0
      %v3247 = vadd.f32 0.0, %v3246
      %v3248 = vpop.f32.mrf.mxu0
      %v3249 = vpop.f32.mrf.mxu0
      %v3250 = vadd.f32 0.0, %v3249
      %v3251 = vpop.f32.mrf.mxu0
      %3252 = vdwg.mxu0
      %v3253 = vpack.c.bf16 %v3114, %v3111
      %v3254 = vpack.c.bf16 %v3122, %v3119
      %v3255 = vpack.c.bf16 %v3130, %v3127
      %v3256 = vpack.c.bf16 %v3138, %v3135
      %v3257 = vpack.c.bf16 %v3146, %v3143
      %v3258 = vpack.c.bf16 %v3154, %v3151
      %v3259 = vpack.c.bf16 %v3162, %v3159
      %v3260 = vpack.c.bf16 %v3170, %v3167
      %v3261 = vpack.c.bf16 %v3178, %v3175
      %v3262 = vpack.c.bf16 %v3186, %v3183
      %v3263 = vpack.c.bf16 %v3194, %v3191
      %v3264 = vpack.c.bf16 %v3202, %v3199
      %v3265 = vpack.c.bf16 %v3210, %v3207
      %v3266 = vpack.c.bf16 %v3218, %v3215
      %v3267 = vpack.c.bf16 %v3226, %v3223
      %v3268 = vpack.c.bf16 %v3234, %v3231
      %v3269 = vpack.c.bf16 %v3242, %v3239
      %v3270 = vpack.c.bf16 %v3250, %v3247
      %v3289 = vunpack.c.l.b16 %v3253
      %v3290 = vunpack.c.h.b16 %v3253
      %v3291 = vunpack.c.l.b16 %v3254
      %v3292 = vunpack.c.h.b16 %v3254
      %v3293 = vunpack.c.l.b16 %v3255
      %v3294 = vunpack.c.h.b16 %v3255
      %v3295 = vunpack.c.l.b16 %v3256
      %v3296 = vunpack.c.h.b16 %v3256
      %v3297 = vunpack.c.l.b16 %v3257
      %v3298 = vunpack.c.h.b16 %v3257
      %v3299 = vunpack.c.l.b16 %v3258
      %v3300 = vunpack.c.h.b16 %v3258
      %v3301 = vunpack.c.l.b16 %v3259
      %v3302 = vunpack.c.h.b16 %v3259
      %v3303 = vunpack.c.l.b16 %v3260
      %v3304 = vunpack.c.h.b16 %v3260
      %v3305 = vunpack.c.l.b16 %v3261
      %v3306 = vunpack.c.h.b16 %v3261
      %v3307 = vunpack.c.l.b16 %v3262
      %v3308 = vunpack.c.h.b16 %v3262
      %v3309 = vunpack.c.l.b16 %v3263
      %v3310 = vunpack.c.h.b16 %v3263
      %v3311 = vunpack.c.l.b16 %v3264
      %v3312 = vunpack.c.h.b16 %v3264
      %v3313 = vunpack.c.l.b16 %v3265
      %v3314 = vunpack.c.h.b16 %v3265
      %v3315 = vunpack.c.l.b16 %v3266
      %v3316 = vunpack.c.h.b16 %v3266
      %v3317 = vunpack.c.l.b16 %v3267
      %v3318 = vunpack.c.h.b16 %v3267
      %v3319 = vunpack.c.l.b16 %v3268
      %v3320 = vunpack.c.h.b16 %v3268
      %v3321 = vunpack.c.l.b16 %v3269
      %v3322 = vunpack.c.h.b16 %v3269
      %v3323 = vunpack.c.l.b16 %v3270
      %v3324 = vunpack.c.h.b16 %v3270
      %v3325 = vpack.c.b16 %v3289, %v3289
      %v3326 = vpack.c.b16 %v3290, %v3290
      %v3327 = vpack.c.b16 %v3291, %v3291
      %v3328 = vpack.c.b16 %v3292, %v3292
      %v3329 = vpack.c.b16 %v3293, %v3293
      %v3330 = vpack.c.b16 %v3294, %v3294
      %v3331 = vpack.c.b16 %v3295, %v3295
      %v3332 = vpack.c.b16 %v3296, %v3296
      %v3333 = vpack.c.b16 %v3297, %v3297
      %v3334 = vpack.c.b16 %v3298, %v3298
      %v3335 = vpack.c.b16 %v3299, %v3299
      %v3336 = vpack.c.b16 %v3300, %v3300
      %v3337 = vpack.c.b16 %v3301, %v3301
      %v3338 = vpack.c.b16 %v3302, %v3302
      %v3339 = vpack.c.b16 %v3303, %v3303
      %v3340 = vpack.c.b16 %v3304, %v3304
      %v3341 = vpack.c.b16 %v3305, %v3305
      %v3342 = vpack.c.b16 %v3306, %v3306
      %v3343 = vpack.c.b16 %v3307, %v3307
      %v3344 = vpack.c.b16 %v3308, %v3308
      %v3345 = vpack.c.b16 %v3309, %v3309
      %v3346 = vpack.c.b16 %v3310, %v3310
      %v3347 = vpack.c.b16 %v3311, %v3311
      %v3348 = vpack.c.b16 %v3312, %v3312
      %v3349 = vpack.c.b16 %v3313, %v3313
      %v3350 = vpack.c.b16 %v3314, %v3314
      %v3351 = vpack.c.b16 %v3315, %v3315
      %v3352 = vpack.c.b16 %v3316, %v3316
      %v3353 = vpack.c.b16 %v3317, %v3317
      %v3354 = vpack.c.b16 %v3318, %v3318
      %v3355 = vpack.c.b16 %v3319, %v3319
      %v3356 = vpack.c.b16 %v3320, %v3320
      %v3357 = vpack.c.b16 %v3321, %v3321
      %v3358 = vpack.c.b16 %v3322, %v3322
      %v3359 = vpack.c.b16 %v3323, %v3323
      %v3360 = vpack.c.b16 %v3324, %v3324
      %3397 = vst.msk [vmem:[%s204] sm:$0xf] %vm1157, %v3325
      %3398 = vst.msk [vmem:[%s204 + $0x4] sm:$0xf] %vm1157, %v3326
      %3399 = vst.msk [vmem:[%s204 + $0x8] sm:$0xf] %vm1157, %v3327
      %3400 = vst.msk [vmem:[%s204 + $0xc] sm:$0xf] %vm1157, %v3328
      %3401 = vst.msk [vmem:[%s204 + $0x10] sm:$0xf] %vm1157, %v3329
      %3402 = vst.msk [vmem:[%s204 + $0x14] sm:$0xf] %vm1157, %v3330
      %3403 = vst.msk [vmem:[%s204 + $0x18] sm:$0xf] %vm1157, %v3331
      %3404 = vst.msk [vmem:[%s204 + $0x1c] sm:$0xf] %vm1157, %v3332
      %3405 = vst.msk [vmem:[%s204 + $0x20] sm:$0xf] %vm1157, %v3333
      %3406 = vst.msk [vmem:[%s204 + $0x24] sm:$0xf] %vm1157, %v3334
      %3407 = vst.msk [vmem:[%s204 + $0x28] sm:$0xf] %vm1157, %v3335
      %3408 = vst.msk [vmem:[%s204 + $0x2c] sm:$0xf] %vm1157, %v3336
      %3409 = vst.msk [vmem:[%s204 + $0x30] sm:$0xf] %vm1157, %v3337
      %3410 = vst.msk [vmem:[%s204 + $0x34] sm:$0xf] %vm1157, %v3338
      %3411 = vst.msk [vmem:[%s204 + $0x38] sm:$0xf] %vm1157, %v3339
      %3412 = vst.msk [vmem:[%s204 + $0x3c] sm:$0xf] %vm1157, %v3340
      %3413 = vst.msk [vmem:[%s204 + $0x40] sm:$0xf] %vm1157, %v3341
      %3414 = vst.msk [vmem:[%s204 + $0x44] sm:$0xf] %vm1157, %v3342
      %3415 = vst.msk [vmem:[%s204 + $0x48] sm:$0xf] %vm1157, %v3343
      %3416 = vst.msk [vmem:[%s204 + $0x4c] sm:$0xf] %vm1157, %v3344
      %3417 = vst.msk [vmem:[%s204 + $0x50] sm:$0xf] %vm1157, %v3345
      %3418 = vst.msk [vmem:[%s204 + $0x54] sm:$0xf] %vm1157, %v3346
      %3419 = vst.msk [vmem:[%s204 + $0x58] sm:$0xf] %vm1157, %v3347
      %3420 = vst.msk [vmem:[%s204 + $0x5c] sm:$0xf] %vm1157, %v3348
      %3421 = vst.msk [vmem:[%s204 + $0x60] sm:$0xf] %vm1157, %v3349
      %3422 = vst.msk [vmem:[%s204 + $0x64] sm:$0xf] %vm1157, %v3350
      %3423 = vst.msk [vmem:[%s204 + $0x68] sm:$0xf] %vm1157, %v3351
      %3424 = vst.msk [vmem:[%s204 + $0x6c] sm:$0xf] %vm1157, %v3352
      %3425 = vst.msk [vmem:[%s204 + $0x70] sm:$0xf] %vm1157, %v3353
      %3426 = vst.msk [vmem:[%s204 + $0x74] sm:$0xf] %vm1157, %v3354
      %3427 = vst.msk [vmem:[%s204 + $0x78] sm:$0xf] %vm1157, %v3355
      %3428 = vst.msk [vmem:[%s204 + $0x7c] sm:$0xf] %vm1157, %v3356
      %3429 = vst.msk [vmem:[%s204 + $0x80] sm:$0xf] %vm1157, %v3357
      %3430 = vst.msk [vmem:[%s204 + $0x84] sm:$0xf] %vm1157, %v3358
      %3431 = vst.msk [vmem:[%s204 + $0x88] sm:$0xf] %vm1157, %v3359
      %3432 = vst.msk [vmem:[%s204 + $0x8c] sm:$0xf] %vm1157, %v3360
      %v3433 = vmul.f32 %v3111, %v895
      %v3434 = vmul.f32 %v3114, %v896
      %v3435 = vmul.f32 %v3119, %v897
      %v3436 = vmul.f32 %v3122, %v898
      %v3437 = vmul.f32 %v3127, %v899
      %v3438 = vmul.f32 %v3130, %v900
      %v3439 = vmul.f32 %v3135, %v901
      %v3440 = vmul.f32 %v3138, %v902
      %v3441 = vmul.f32 %v3143, %v903
      %v3442 = vmul.f32 %v3146, %v904
      %v3443 = vmul.f32 %v3151, %v905
      %v3444 = vmul.f32 %v3154, %v906
      %v3445 = vmul.f32 %v3159, %v907
      %v3446 = vmul.f32 %v3162, %v908
      %v3447 = vmul.f32 %v3167, %v909
      %v3448 = vmul.f32 %v3170, %v910
      %v3449 = vmul.f32 %v3175, %v911
      %v3450 = vmul.f32 %v3178, %v912
      %v3451 = vmul.f32 %v3183, %v913
      %v3452 = vmul.f32 %v3186, %v914
      %v3453 = vmul.f32 %v3191, %v915
      %v3454 = vmul.f32 %v3194, %v916
      %v3455 = vmul.f32 %v3199, %v917
      %v3456 = vmul.f32 %v3202, %v918
      %v3457 = vmul.f32 %v3207, %v919
      %v3458 = vmul.f32 %v3210, %v920
      %v3459 = vmul.f32 %v3215, %v921
      %v3460 = vmul.f32 %v3218, %v922
      %v3461 = vmul.f32 %v3223, %v923
      %v3462 = vmul.f32 %v3226, %v924
      %v3463 = vmul.f32 %v3231, %v925
      %v3464 = vmul.f32 %v3234, %v926
      %v3465 = vmul.f32 %v3239, %v927
      %v3466 = vmul.f32 %v3242, %v928
      %v3467 = vmul.f32 %v3247, %v929
      %v3468 = vmul.f32 %v3250, %v930
      %v3469 = vsel %vm2678, %v3433, 0.0
      %v3470 = vsel %vm2678, %v3434, 0.0
      %v3471 = vadd.f32 %v3469, %v3470
      %v3472 = vsel %vm2678, %v3435, 0.0
      %v3473 = vadd.f32 %v3471, %v3472
      %v3474 = vsel %vm2678, %v3436, 0.0
      %v3475 = vadd.f32 %v3473, %v3474
      %v3476 = vsel %vm2678, %v3437, 0.0
      %v3477 = vadd.f32 %v3475, %v3476
      %v3478 = vsel %vm2678, %v3438, 0.0
      %v3479 = vadd.f32 %v3477, %v3478
      %v3480 = vsel %vm2678, %v3439, 0.0
      %v3481 = vadd.f32 %v3479, %v3480
      %v3482 = vsel %vm2678, %v3440, 0.0
      %v3483 = vadd.f32 %v3481, %v3482
      %v3484 = vsel %vm2678, %v3441, 0.0
      %v3485 = vadd.f32 %v3483, %v3484
      %v3486 = vsel %vm2678, %v3442, 0.0
      %v3487 = vadd.f32 %v3485, %v3486
      %v3488 = vsel %vm2678, %v3443, 0.0
      %v3489 = vadd.f32 %v3487, %v3488
      %v3490 = vsel %vm2678, %v3444, 0.0
      %v3491 = vadd.f32 %v3489, %v3490
      %v3492 = vsel %vm2678, %v3445, 0.0
      %v3493 = vadd.f32 %v3491, %v3492
      %v3494 = vsel %vm2678, %v3446, 0.0
      %v3495 = vadd.f32 %v3493, %v3494
      %v3496 = vsel %vm2678, %v3447, 0.0
      %v3497 = vadd.f32 %v3495, %v3496
      %v3498 = vsel %vm2678, %v3448, 0.0
      %v3499 = vadd.f32 %v3497, %v3498
      %v3500 = vsel %vm2678, %v3449, 0.0
      %v3501 = vadd.f32 %v3499, %v3500
      %v3502 = vsel %vm2678, %v3450, 0.0
      %v3503 = vadd.f32 %v3501, %v3502
      %v3504 = vsel %vm2678, %v3451, 0.0
      %v3505 = vadd.f32 %v3503, %v3504
      %v3506 = vsel %vm2678, %v3452, 0.0
      %v3507 = vadd.f32 %v3505, %v3506
      %v3508 = vsel %vm2678, %v3453, 0.0
      %v3509 = vadd.f32 %v3507, %v3508
      %v3510 = vsel %vm2678, %v3454, 0.0
      %v3511 = vadd.f32 %v3509, %v3510
      %v3512 = vsel %vm2678, %v3455, 0.0
      %v3513 = vadd.f32 %v3511, %v3512
      %v3514 = vsel %vm2678, %v3456, 0.0
      %v3515 = vadd.f32 %v3513, %v3514
      %v3516 = vsel %vm2678, %v3457, 0.0
      %v3517 = vadd.f32 %v3515, %v3516
      %v3518 = vsel %vm2678, %v3458, 0.0
      %v3519 = vadd.f32 %v3517, %v3518
      %v3520 = vsel %vm2678, %v3459, 0.0
      %v3521 = vadd.f32 %v3519, %v3520
      %v3522 = vsel %vm2678, %v3460, 0.0
      %v3523 = vadd.f32 %v3521, %v3522
      %v3524 = vsel %vm2678, %v3461, 0.0
      %v3525 = vadd.f32 %v3523, %v3524
      %v3526 = vsel %vm2678, %v3462, 0.0
      %v3527 = vadd.f32 %v3525, %v3526
      %v3528 = vsel %vm2678, %v3463, 0.0
      %v3529 = vadd.f32 %v3527, %v3528
      %v3530 = vsel %vm2678, %v3464, 0.0
      %v3531 = vadd.f32 %v3529, %v3530
      %v3532 = vsel %vm2678, %v3465, 0.0
      %v3533 = vadd.f32 %v3531, %v3532
      %v3534 = vsel %vm2678, %v3466, 0.0
      %v3535 = vadd.f32 %v3533, %v3534
      %v3536 = vsel %vm2678, %v3467, 0.0
      %v3537 = vadd.f32 %v3535, %v3536
      %v3538 = vsel %vm2678, %v3468, 0.0
      %v3539 = vadd.f32 %v3537, %v3538
      %v3540 = vrot.slane %v3539, 4
      %v3541 = vadd.f32 %v3539, %v3540
      %v3542 = vrot.slane %v3541, 2
      %v3543 = vadd.f32 %v3541, %v3542
      %v3544 = vrot.slane %v3543, 1
      %v3545 = vadd.f32 %v3543, %v3544
      %v3546 = vmul.f32 %v3111, %v3111
      %v3547 = vmul.f32 %v3114, %v3114
      %v3548 = vmul.f32 %v3119, %v3119
      %v3549 = vmul.f32 %v3122, %v3122
      %v3550 = vmul.f32 %v3127, %v3127
      %v3551 = vmul.f32 %v3130, %v3130
      %v3552 = vmul.f32 %v3135, %v3135
      %v3553 = vmul.f32 %v3138, %v3138
      %v3554 = vmul.f32 %v3143, %v3143
      %v3555 = vmul.f32 %v3146, %v3146
      %v3556 = vmul.f32 %v3151, %v3151
      %v3557 = vmul.f32 %v3154, %v3154
      %v3558 = vmul.f32 %v3159, %v3159
      %v3559 = vmul.f32 %v3162, %v3162
      %v3560 = vmul.f32 %v3167, %v3167
      %v3561 = vmul.f32 %v3170, %v3170
      %v3562 = vmul.f32 %v3175, %v3175
      %v3563 = vmul.f32 %v3178, %v3178
      %v3564 = vmul.f32 %v3183, %v3183
      %v3565 = vmul.f32 %v3186, %v3186
      %v3566 = vmul.f32 %v3191, %v3191
      %v3567 = vmul.f32 %v3194, %v3194
      %v3568 = vmul.f32 %v3199, %v3199
      %v3569 = vmul.f32 %v3202, %v3202
      %v3570 = vmul.f32 %v3207, %v3207
      %v3571 = vmul.f32 %v3210, %v3210
      %v3572 = vmul.f32 %v3215, %v3215
      %v3573 = vmul.f32 %v3218, %v3218
      %v3574 = vmul.f32 %v3223, %v3223
      %v3575 = vmul.f32 %v3226, %v3226
      %v3576 = vmul.f32 %v3231, %v3231
      %v3577 = vmul.f32 %v3234, %v3234
      %v3578 = vmul.f32 %v3239, %v3239
      %v3579 = vmul.f32 %v3242, %v3242
      %v3580 = vmul.f32 %v3247, %v3247
      %v3581 = vmul.f32 %v3250, %v3250
      %v3582 = vmul.f32 %v3546, %v895
      %v3583 = vmul.f32 %v3547, %v896
      %v3584 = vmul.f32 %v3548, %v897
      %v3585 = vmul.f32 %v3549, %v898
      %v3586 = vmul.f32 %v3550, %v899
      %v3587 = vmul.f32 %v3551, %v900
      %v3588 = vmul.f32 %v3552, %v901
      %v3589 = vmul.f32 %v3553, %v902
      %v3590 = vmul.f32 %v3554, %v903
      %v3591 = vmul.f32 %v3555, %v904
      %v3592 = vmul.f32 %v3556, %v905
      %v3593 = vmul.f32 %v3557, %v906
      %v3594 = vmul.f32 %v3558, %v907
      %v3595 = vmul.f32 %v3559, %v908
      %v3596 = vmul.f32 %v3560, %v909
      %v3597 = vmul.f32 %v3561, %v910
      %v3598 = vmul.f32 %v3562, %v911
      %v3599 = vmul.f32 %v3563, %v912
      %v3600 = vmul.f32 %v3564, %v913
      %v3601 = vmul.f32 %v3565, %v914
      %v3602 = vmul.f32 %v3566, %v915
      %v3603 = vmul.f32 %v3567, %v916
      %v3604 = vmul.f32 %v3568, %v917
      %v3605 = vmul.f32 %v3569, %v918
      %v3606 = vmul.f32 %v3570, %v919
      %v3607 = vmul.f32 %v3571, %v920
      %v3608 = vmul.f32 %v3572, %v921
      %v3609 = vmul.f32 %v3573, %v922
      %v3610 = vmul.f32 %v3574, %v923
      %v3611 = vmul.f32 %v3575, %v924
      %v3612 = vmul.f32 %v3576, %v925
      %v3613 = vmul.f32 %v3577, %v926
      %v3614 = vmul.f32 %v3578, %v927
      %v3615 = vmul.f32 %v3579, %v928
      %v3616 = vmul.f32 %v3580, %v929
      %v3617 = vmul.f32 %v3581, %v930
      %v3618 = vsel %vm2678, %v3582, 0.0
      %v3619 = vsel %vm2678, %v3583, 0.0
      %v3620 = vadd.f32 %v3618, %v3619
      %v3621 = vsel %vm2678, %v3584, 0.0
      %v3622 = vadd.f32 %v3620, %v3621
      %v3623 = vsel %vm2678, %v3585, 0.0
      %v3624 = vadd.f32 %v3622, %v3623
      %v3625 = vsel %vm2678, %v3586, 0.0
      %v3626 = vadd.f32 %v3624, %v3625
      %v3627 = vsel %vm2678, %v3587, 0.0
      %v3628 = vadd.f32 %v3626, %v3627
      %v3629 = vsel %vm2678, %v3588, 0.0
      %v3630 = vadd.f32 %v3628, %v3629
      %v3631 = vsel %vm2678, %v3589, 0.0
      %v3632 = vadd.f32 %v3630, %v3631
      %v3633 = vsel %vm2678, %v3590, 0.0
      %v3634 = vadd.f32 %v3632, %v3633
      %v3635 = vsel %vm2678, %v3591, 0.0
      %v3636 = vadd.f32 %v3634, %v3635
      %v3637 = vsel %vm2678, %v3592, 0.0
      %v3638 = vadd.f32 %v3636, %v3637
      %v3639 = vsel %vm2678, %v3593, 0.0
      %v3640 = vadd.f32 %v3638, %v3639
      %v3641 = vsel %vm2678, %v3594, 0.0
      %v3642 = vadd.f32 %v3640, %v3641
      %v3643 = vsel %vm2678, %v3595, 0.0
      %v3644 = vadd.f32 %v3642, %v3643
      %v3645 = vsel %vm2678, %v3596, 0.0
      %v3646 = vadd.f32 %v3644, %v3645
      %v3647 = vsel %vm2678, %v3597, 0.0
      %v3648 = vadd.f32 %v3646, %v3647
      %v3649 = vsel %vm2678, %v3598, 0.0
      %v3650 = vadd.f32 %v3648, %v3649
      %v3651 = vsel %vm2678, %v3599, 0.0
      %v3652 = vadd.f32 %v3650, %v3651
      %v3653 = vsel %vm2678, %v3600, 0.0
      %v3654 = vadd.f32 %v3652, %v3653
      %v3655 = vsel %vm2678, %v3601, 0.0
      %v3656 = vadd.f32 %v3654, %v3655
      %v3657 = vsel %vm2678, %v3602, 0.0
      %v3658 = vadd.f32 %v3656, %v3657
      %v3659 = vsel %vm2678, %v3603, 0.0
      %v3660 = vadd.f32 %v3658, %v3659
      %v3661 = vsel %vm2678, %v3604, 0.0
      %v3662 = vadd.f32 %v3660, %v3661
      %v3663 = vsel %vm2678, %v3605, 0.0
      %v3664 = vadd.f32 %v3662, %v3663
      %v3665 = vsel %vm2678, %v3606, 0.0
      %v3666 = vadd.f32 %v3664, %v3665
      %v3667 = vsel %vm2678, %v3607, 0.0
      %v3668 = vadd.f32 %v3666, %v3667
      %v3669 = vsel %vm2678, %v3608, 0.0
      %v3670 = vadd.f32 %v3668, %v3669
      %v3671 = vsel %vm2678, %v3609, 0.0
      %v3672 = vadd.f32 %v3670, %v3671
      %v3673 = vsel %vm2678, %v3610, 0.0
      %v3674 = vadd.f32 %v3672, %v3673
      %v3675 = vsel %vm2678, %v3611, 0.0
      %v3676 = vadd.f32 %v3674, %v3675
      %v3677 = vsel %vm2678, %v3612, 0.0
      %v3678 = vadd.f32 %v3676, %v3677
      %v3679 = vsel %vm2678, %v3613, 0.0
      %v3680 = vadd.f32 %v3678, %v3679
      %v3681 = vsel %vm2678, %v3614, 0.0
      %v3682 = vadd.f32 %v3680, %v3681
      %v3683 = vsel %vm2678, %v3615, 0.0
      %v3684 = vadd.f32 %v3682, %v3683
      %v3685 = vsel %vm2678, %v3616, 0.0
      %v3686 = vadd.f32 %v3684, %v3685
      %v3687 = vsel %vm2678, %v3617, 0.0
      %v3688 = vadd.f32 %v3686, %v3687
      %v3689 = vrot.slane %v3688, 4
      %v3690 = vadd.f32 %v3688, %v3689
      %v3691 = vrot.slane %v3690, 2
      %v3692 = vadd.f32 %v3690, %v3691
      %v3693 = vrot.slane %v3692, 1
      %v3694 = vadd.f32 %v3692, %v3693
      %vm3695 = vcmask 1040384
      %v3696 = vsel %vm3695, %v3545, %v3694
      %vm3697 = vcmask 58368
      %3698 = vst.msk [vmem:[%s208] sm:$0x3] %vm3697, %v3696
      %p3699 = scmp.lt.s32.totalorder %s16, 1
      %s3700 = scalar_select %p3699, %s16, 1
      %s3701 = smul.addr %s3700, 36
      %s3702 = smul.addr %s3701, 4
      %s3703 = scalar_lea.vmem %s3, %s3702
      %p3704 = scmp.lt.s32.totalorder %s16, 1
      %s3705 = scalar_select %p3704, %s16, 1
      %s3706 = smul.addr %s3705, 2
      %s3707 = scalar_lea.vmem %s4, %s3706
      // Predicated region
      $region33: #{double_conv2d_bn_forward.4} parent=31 // pred_check
        %p3708 = pneg %p102
      $region34: #{double_conv2d_bn_forward.4} parent=31 // pred_check_branch
        %3710 = sbr.rel (%p3708) target = $region36
      $region35: #{double_conv2d_bn_forward.4} parent=31 // pred_region
        _
      $region36: #{double_conv2d_bn_forward.4} parent=31 // pred_fallthru
        _
      // Predicated region
      $region37: #{double_conv2d_bn_forward.4} parent=31 // pred_check
        %p3711 = pneg %p128
      $region38: #{double_conv2d_bn_forward.4} parent=31 // pred_check_branch
        %3713 = sbr.rel (%p3711) target = $region40
      $region39: #{double_conv2d_bn_forward.4} parent=31 // pred_region
        _
      $region40: #{double_conv2d_bn_forward.4} parent=31 // pred_fallthru
        _
    $region32: #{double_conv2d_bn_forward.4} parent=5 // pred_fallthru
      _
    %p3714 = scmp.le.s32.totalorder 2, %s11
    // Predicated region
    $region41: #{double_conv2d_bn_forward.4} parent=5 // pred_check
      %p3715 = pneg %p3714
    $region42: #{double_conv2d_bn_forward.4} parent=5 // pred_check_branch
      %3717 = sbr.rel (%p3715) target = $region44
    $region43: #{double_conv2d_bn_forward.4} parent=5 // pred_region
      %s3718 = ssub.s32 %s11, 2
      // Predicated region
      $region45: #{double_conv2d_bn_forward.4} parent=43 // pred_check
        %p3719 = pneg %p108
      $region46: #{double_conv2d_bn_forward.4} parent=43 // pred_check_branch
        %3721 = sbr.rel (%p3719) target = $region48
      $region47: #{double_conv2d_bn_forward.4} parent=43 // pred_region
        %p3722 = scmp.lt.s32.totalorder %s17, 1
        %s3723 = scalar_select %p3722, %s17, 1
        %s3724 = smul.addr %s3723, 36
        %s3725 = smul.addr %s3724, 4
        %s3726 = scalar_lea.vmem %s3, %s3725
      $region48: #{double_conv2d_bn_forward.4} parent=43 // pred_fallthru
        _
      // Predicated region
      $region49: #{double_conv2d_bn_forward.4} parent=43 // pred_check
        %p3727 = pneg %p134
      $region50: #{double_conv2d_bn_forward.4} parent=43 // pred_check_branch
        %3729 = sbr.rel (%p3727) target = $region52
      $region51: #{double_conv2d_bn_forward.4} parent=43 // pred_region
        %p3730 = scmp.lt.s32.totalorder %s17, 1
        %s3731 = scalar_select %p3730, %s17, 1
        %s3732 = smul.addr %s3731, 2
        %s3733 = scalar_lea.vmem %s4, %s3732
      $region52: #{double_conv2d_bn_forward.4} parent=43 // pred_fallthru
        _
    $region44: #{double_conv2d_bn_forward.4} parent=5 // pred_fallthru
      _
  $region6: #{double_conv2d_bn_forward.4} parent=0 // loop_footer
    %s15 = sadd.s32 1, %s11
  $region7: #{double_conv2d_bn_forward.4} parent=0 // loop_footer_branch
    %10 = sbr.rel target = $region3
  $region8: #{double_conv2d_bn_forward.4} parent=0 // loop_exit
    _

</llo_original>
